<compile_context>
chip_gen: v7x
topology: tpu7x:2x2x1
jax: 0.10.0
libtpu: 0.0.40
codegen_flags: <defaults>
</compile_context>

<pallas_src>
import functools

import numpy as np
import jax
import jax.numpy as jnp
from jax.experimental import pallas as pl
from jax.experimental.pallas import tpu as pltpu


# ----------------------------- Pallas kernels ------------------------------

def _enc_conv_relu_pool_kernel(x_ref, w_ref, b_ref, o_ref):
    """Fused Conv3x3(pad=1)+bias+ReLU+MaxPool2 for one tile of pooled rows.

    x_ref: (tm, 16*Cin) bf16      stride-2 4x4 patches of the zero-padded input
    w_ref: (4, 16*Cin, Cout) bf16 per-pooling-phase embedded 3x3 weights
    b_ref: (1, Cout) f32
    o_ref: (tm, Cout) bf16        pooled activations
    """
    x = x_ref[...]
    b = b_ref[...]
    out = None
    for p in range(4):                       # 4 pooling phases, unrolled
        y = jnp.dot(x, w_ref[p], preferred_element_type=jnp.float32)
        y = jnp.maximum(y + b, 0.0)
        out = y if out is None else jnp.maximum(out, y)
    o_ref[...] = out.astype(o_ref.dtype)


def _dec_convt_relu_kernel(x_ref, w_ref, b_ref, o_ref):
    """Fused ConvTranspose4x4(stride2,pad1)+bias+ReLU via phase decomposition.

    x_ref: (tm, 9*Cin) bf16       3x3 patches of the zero-padded input
    w_ref: (9*Cin, 4*Cout) bf16   4 sub-pixel phase weights, lane-concatenated
    b_ref: (1, 4*Cout) f32
    o_ref: (tm, 4*Cout)           4 output phases per input position (lane dense)
    """
    y = jnp.dot(x_ref[...], w_ref[...], preferred_element_type=jnp.float32)
    o_ref[...] = jnp.maximum(y + b_ref[...], 0.0).astype(o_ref.dtype)


def _fc_reparam_kernel(h_ref, wmu_ref, wlv_ref, bmu_ref, blv_ref, eps_ref,
                       mu_ref, lv_ref, z_ref):
    """Fused fc_mu + fc_logvar + reparameterize: z = mu + eps * exp(0.5*logvar)."""
    h = h_ref[...]
    mu = jnp.dot(h, wmu_ref[...], preferred_element_type=jnp.float32) + bmu_ref[...]
    lv = jnp.dot(h, wlv_ref[...], preferred_element_type=jnp.float32) + blv_ref[...]
    mu_ref[...] = mu
    lv_ref[...] = lv
    z_ref[...] = mu + eps_ref[...] * jnp.exp(0.5 * lv)


# ------------------------------ wrappers ------------------------------------

_PARALLEL = pltpu.CompilerParams(dimension_semantics=("parallel",))


def _pick_tm(m, target=512):
    """Row-tile size: full array for small M, otherwise a divisor near 512."""
    if m <= target:
        return m
    for t in (target, 256, 128, 64, 32, 16):
        if m % t == 0:
            return t
    return m


def _patch_slab(xp, taps, stride, ho, wo):
    """(B,Hp,Wp,C) padded NHWC -> (B*ho*wo, taps*taps*C) bf16 patch slab.

    Row ordering: (b, out_h, out_w); column ordering: (tap_h, tap_w, channel).
    """
    b = xp.shape[0]
    c = xp.shape[-1]
    pieces = []
    for th in range(taps):
        for tw in range(taps):
            pieces.append(xp[:, th:th + stride * ho:stride,
                             tw:tw + stride * wo:stride, :])
    pat = jnp.stack(pieces, axis=3)                        # (B,ho,wo,T*T,C)
    return pat.reshape(b * ho * wo, taps * taps * c).astype(jnp.bfloat16)


def encoder_layer(x, w_packed, bias):
    """x: (B,H,W,Cin) NHWC -> (B,H//2,W//2,Cout) bf16 (conv+relu+pool fused)."""
    B, H, W, _ = x.shape
    Cout = w_packed.shape[-1]
    Ho, Wo = H // 2, W // 2
    xp = jnp.pad(x, ((0, 0), (1, 1), (1, 1), (0, 0)))
    cols = _patch_slab(xp, taps=4, stride=2, ho=Ho, wo=Wo)   # (M, 16*Cin)
    M, K = cols.shape
    tm = _pick_tm(M)
    out = pl.pallas_call(
        _enc_conv_relu_pool_kernel,
        out_shape=jax.ShapeDtypeStruct((M, Cout), jnp.bfloat16),
        grid=(M // tm,),
        in_specs=[
            pl.BlockSpec((tm, K), lambda i: (i, 0)),
            pl.BlockSpec((4, K, Cout), lambda i: (0, 0, 0)),
            pl.BlockSpec((1, Cout), lambda i: (0, 0)),
        ],
        out_specs=pl.BlockSpec((tm, Cout), lambda i: (i, 0)),
        compiler_params=_PARALLEL,
    )(cols, w_packed, bias)
    return out.reshape(B, Ho, Wo, Cout)


def decoder_layer(x, w_packed, bias4, out_dtype=jnp.bfloat16):
    """x: (B,H,W,Cin) NHWC -> (B,2H,2W,Cp) (conv-transpose + relu fused)."""
    B, H, W, _ = x.shape
    four_cp = w_packed.shape[-1]
    Cp = four_cp // 4
    xp = jnp.pad(x, ((0, 0), (1, 1), (1, 1), (0, 0)))
    cols = _patch_slab(xp, taps=3, stride=1, ho=H, wo=W)     # (M, 9*Cin)
    M, K = cols.shape
    tm = _pick_tm(M)
    y = pl.pallas_call(
        _dec_convt_relu_kernel,
        out_shape=jax.ShapeDtypeStruct((M, four_cp), out_dtype),
        grid=(M // tm,),
        in_specs=[
            pl.BlockSpec((tm, K), lambda i: (i, 0)),
            pl.BlockSpec((K, four_cp), lambda i: (0, 0)),
            pl.BlockSpec((1, four_cp), lambda i: (0, 0)),
        ],
        out_specs=pl.BlockSpec((tm, four_cp), lambda i: (i, 0)),
        compiler_params=_PARALLEL,
    )(cols, w_packed, bias4)
    # pixel-shuffle the 4 sub-pixel phases onto the 2x upsampled grid (XLA glue)
    y = y.reshape(B, H, W, 2, 2, Cp)
    y = jnp.transpose(y, (0, 1, 3, 2, 4, 5)).reshape(B, 2 * H, 2 * W, Cp)
    return y


def fc_reparameterize(hidden, wmu, wlv, bmu, blv, eps):
    B = hidden.shape[0]
    L = wmu.shape[-1]
    vmem = functools.partial(pl.BlockSpec, memory_space=pltpu.MemorySpace.VMEM)
    mu, logvar, z = pl.pallas_call(
        _fc_reparam_kernel,
        out_shape=tuple(jax.ShapeDtypeStruct((B, L), jnp.float32) for _ in range(3)),
        in_specs=[vmem() for _ in range(6)],
        out_specs=tuple(vmem() for _ in range(3)),
    )(hidden.astype(jnp.bfloat16), wmu, wlv, bmu, blv, eps)
    return mu, logvar, z


# ------------------------- weight packing (at init) -------------------------

def _pack_encoder_weight(w):
    """PyTorch Conv2d weight (Cout,Cin,3,3) -> (4, 16*Cin, Cout) bf16.

    Phase p = 2*ph + pw selects the conv output at (2m+ph, 2n+pw); its 3x3
    taps are embedded into the 4x4 stride-2 patch (tap (th,tw) uses kernel
    element (th-ph, tw-pw) when valid, else 0)."""
    w = np.asarray(w, np.float32)
    Cout, Cin = w.shape[0], w.shape[1]
    wp = np.zeros((4, 16 * Cin, Cout), np.float32)
    for ph in range(2):
        for pw in range(2):
            p = 2 * ph + pw
            for th in range(4):
                for tw in range(4):
                    kh, kw = th - ph, tw - pw
                    if 0 <= kh < 3 and 0 <= kw < 3:
                        r = (4 * th + tw) * Cin
                        wp[p, r:r + Cin, :] = w[:, :, kh, kw].T
    return jnp.asarray(wp).astype(jnp.bfloat16)


# output phase -> {patch tap (on the 1-padded input) : conv-transpose kernel tap}
_CT_TAP = ({0: 3, 1: 1}, {1: 2, 2: 0})


def _pack_decoder_weight(w, cout_pad):
    """PyTorch ConvTranspose2d weight (Cin,Cout,4,4) -> (9*Cin, 4*cout_pad) bf16.

    Sub-pixel decomposition of the 4x4/stride-2 kernel: output (2m+ph, 2n+pw)
    is a 2x2-tap conv of the 1-padded input, embedded into the 3x3 patch."""
    w = np.asarray(w, np.float32)
    Cin, Cout = w.shape[0], w.shape[1]
    wp = np.zeros((9 * Cin, 4 * cout_pad), np.float32)
    for ph in range(2):
        for pw in range(2):
            p = 2 * ph + pw
            for th in range(3):
                for tw in range(3):
                    if th in _CT_TAP[ph] and tw in _CT_TAP[pw]:
                        kh, kw = _CT_TAP[ph][th], _CT_TAP[pw][tw]
                        r = (3 * th + tw) * Cin
                        c = p * cout_pad
                        wp[r:r + Cin, c:c + Cout] = w[:, :, kh, kw]
    return jnp.asarray(wp).astype(jnp.bfloat16)


def _pack_decoder_bias(b, cout_pad):
    b = np.asarray(b, np.float32)
    bp = np.zeros((1, 4 * cout_pad), np.float32)
    for p in range(4):
        bp[0, p * cout_pad:p * cout_pad + b.shape[0]] = b
    return jnp.asarray(bp)


def init_params(key, in_channels=3, out_channels=32, latent_channels=32,
                encoder_channels=(32, 64, 128), decoder_channels=(128, 64, 32)):
    enc_ch = [in_channels] + list(encoder_channels) + [out_channels]
    dec_ch = [out_channels] + list(decoder_channels) + [in_channels]
    n_layers = (len(enc_ch) - 1) + (len(dec_ch) - 1)
    keys = iter(jax.random.split(key, 2 * n_layers + 4))

    params = {"enc": [], "dec": []}
    for i in range(len(enc_ch) - 1):        # Conv2d(k=3,p=1): weight (Cout,Cin,3,3)
        w = 0.05 * jax.random.normal(next(keys), (enc_ch[i + 1], enc_ch[i], 3, 3), jnp.float32)
        b = 0.05 * jax.random.normal(next(keys), (enc_ch[i + 1],), jnp.float32)
        params["enc"].append((_pack_encoder_weight(w), b.reshape(1, -1)))

    n_dec = len(dec_ch) - 1
    for i in range(n_dec):                  # ConvTranspose2d(k=4,s=2,p=1): (Cin,Cout,4,4)
        cin, cout = dec_ch[i], dec_ch[i + 1]
        w = 0.05 * jax.random.normal(next(keys), (cin, cout, 4, 4), jnp.float32)
        b = 0.05 * jax.random.normal(next(keys), (cout,), jnp.float32)
        # lane-dense stores: pad the FINAL layer's Cout (3) up to 32 so 4*Cout = 128
        cout_pad = cout if i < n_dec - 1 else ((cout + 31) // 32) * 32
        params["dec"].append((_pack_decoder_weight(w, cout_pad),
                              _pack_decoder_bias(b, cout_pad)))

    # nn.Linear(out_channels, latent): weight (latent, out_channels); pre-transpose.
    wmu = 0.05 * jax.random.normal(next(keys), (latent_channels, out_channels), jnp.float32)
    bmu = 0.05 * jax.random.normal(next(keys), (latent_channels,), jnp.float32)
    wlv = 0.05 * jax.random.normal(next(keys), (latent_channels, out_channels), jnp.float32)
    blv = 0.05 * jax.random.normal(next(keys), (latent_channels,), jnp.float32)
    params["fc_mu_w"] = wmu.T.astype(jnp.bfloat16)
    params["fc_mu_b"] = bmu.reshape(1, -1)
    params["fc_logvar_w"] = wlv.T.astype(jnp.bfloat16)
    params["fc_logvar_b"] = blv.reshape(1, -1)
    return params


# ------------------------------- VAE forward --------------------------------

def vae_forward(params, x_nchw, eps_key):
    """PyTorch-equivalent VAE forward. x_nchw: (B, C, 16, 16) NCHW."""
    in_ch = x_nchw.shape[1]
    x = jnp.transpose(x_nchw, (0, 2, 3, 1)).astype(jnp.bfloat16)    # NHWC
    h = x
    for wp, b in params["enc"]:
        h = encoder_layer(h, wp, b)          # Conv3x3 + ReLU + MaxPool2 (fused)

    B = h.shape[0]
    c = h.shape[-1]                          # = out_channels, spatial is 1x1
    hidden = h.reshape(B, -1)                # (B, out_channels)

    L = params["fc_mu_w"].shape[-1]
    eps = jax.random.normal(eps_key, (B, L), jnp.float32)           # randn_like(std)
    mu, logvar, z = fc_reparameterize(hidden, params["fc_mu_w"], params["fc_logvar_w"],
                                      params["fc_mu_b"], params["fc_logvar_b"], eps)

    d = z.reshape(B, 1, 1, c).astype(jnp.bfloat16)                  # z.view(b, c, 1, -1)
    n_dec = len(params["dec"])
    for i, (wp, b4) in enumerate(params["dec"]):
        out_dtype = jnp.float32 if i == n_dec - 1 else jnp.bfloat16
        d = decoder_layer(d, wp, b4, out_dtype=out_dtype)           # ConvT4x4 s2 + ReLU
    recon = jnp.transpose(d, (0, 3, 1, 2))[:, :in_ch]               # NCHW, drop lane pad
    return recon, mu, logvar


if __name__ == "__main__":
    key = jax.random.PRNGKey(0)
    pkey, xkey, ekey = jax.random.split(key, 3)

    params = init_params(pkey)
    # Spatial must be 16x16 so the encoder output is (B, 32, 1, 1) -> fc on 32.
    x = jax.random.normal(xkey, (2, 3, 16, 16), jnp.float32)

    fwd = jax.jit(vae_forward)
    recon, mu, logvar = jax.block_until_ready(fwd(params, x, ekey))

    assert recon.shape == (2, 3, 16, 16), recon.shape
    assert mu.shape == (2, 32), mu.shape
    assert logvar.shape == (2, 32), logvar.shape
    assert recon.dtype == jnp.float32
    assert bool(jnp.all(jnp.isfinite(recon)))
    assert bool(jnp.all(jnp.isfinite(mu))) and bool(jnp.all(jnp.isfinite(logvar)))
    print("KERNEL_OK")
</pallas_src>

<mosaic_0001>
module attributes {stable_mosaic.version = 11 : i64} {
  func.func @_enc_conv_relu_pool_kernel(%arg0: i32, %arg1: memref<128x48xbf16, #tpu.memory_space<vmem>>, %arg2: memref<4x48x32xbf16, #tpu.memory_space<vmem>>, %arg3: memref<1x32xf32, #tpu.memory_space<vmem>>, %arg4: memref<128x32xbf16, #tpu.memory_space<vmem>>) attributes {dimension_semantics = [#tpu.dimension_semantics<parallel>], iteration_bounds = array<i64: 1>, scalar_prefetch = 0 : i64, scratch_operands = 0 : i64, tpu.core_type = #tpu.core_type<tc>, window_params = [{transform_indices = @transform_0, window_bounds = array<i64: 128, 48>}, {pipeline_mode = #tpu.pipeline_mode<synchronous>, transform_indices = @transform_1, window_bounds = array<i64: 4, 48, 32>}, {pipeline_mode = #tpu.pipeline_mode<synchronous>, transform_indices = @transform_2, window_bounds = array<i64: 1, 32>}, {transform_indices = @transform_3, window_bounds = array<i64: 128, 32>}]} {
    %c0 = arith.constant 0 : index
    %c0_0 = arith.constant 0 : index
    %0 = vector.load %arg1[%c0, %c0_0] : memref<128x48xbf16, #tpu.memory_space<vmem>>, vector<128x48xbf16>
    %c0_1 = arith.constant 0 : index
    %c0_2 = arith.constant 0 : index
    %1 = vector.load %arg3[%c0_1, %c0_2] : memref<1x32xf32, #tpu.memory_space<vmem>>, vector<1x32xf32>
    %c0_3 = arith.constant 0 : index
    %c0_4 = arith.constant 0 : index
    %c0_5 = arith.constant 0 : index
    %2 = vector.load %arg2[%c0_3, %c0_4, %c0_5] : memref<4x48x32xbf16, #tpu.memory_space<vmem>>, vector<1x48x32xbf16>
    %3 = vector.shape_cast %2 : vector<1x48x32xbf16> to vector<48x32xbf16>
    %cst = arith.constant dense<0.000000e+00> : vector<128x32xf32>
    %4 = tpu.matmul %0, %3, %cst {dimension_numbers = #tpu.dot_dimension_numbers<[1], [0], [0], [1], [0, 0, 1, 1], [], []>} : vector<128x48xbf16>, vector<48x32xbf16>, vector<128x32xf32> -> vector<128x32xf32>
    %5 = vector.broadcast %1 : vector<1x32xf32> to vector<128x32xf32>
    %6 = arith.addf %4, %5 : vector<128x32xf32>
    %cst_6 = arith.constant 0.000000e+00 : f32
    %7 = vector.broadcast %cst_6 : f32 to vector<128x32xf32>
    %8 = arith.maximumf %6, %7 : vector<128x32xf32>
    %c1 = arith.constant 1 : index
    %c0_7 = arith.constant 0 : index
    %c0_8 = arith.constant 0 : index
    %9 = vector.load %arg2[%c1, %c0_7, %c0_8] : memref<4x48x32xbf16, #tpu.memory_space<vmem>>, vector<1x48x32xbf16>
    %10 = vector.shape_cast %9 : vector<1x48x32xbf16> to vector<48x32xbf16>
    %cst_9 = arith.constant dense<0.000000e+00> : vector<128x32xf32>
    %11 = tpu.matmul %0, %10, %cst_9 {dimension_numbers = #tpu.dot_dimension_numbers<[1], [0], [0], [1], [0, 0, 1, 1], [], []>} : vector<128x48xbf16>, vector<48x32xbf16>, vector<128x32xf32> -> vector<128x32xf32>
    %12 = vector.broadcast %1 : vector<1x32xf32> to vector<128x32xf32>
    %13 = arith.addf %11, %12 : vector<128x32xf32>
    %cst_10 = arith.constant 0.000000e+00 : f32
    %14 = vector.broadcast %cst_10 : f32 to vector<128x32xf32>
    %15 = arith.maximumf %13, %14 : vector<128x32xf32>
    %16 = arith.maximumf %8, %15 : vector<128x32xf32>
    %c2 = arith.constant 2 : index
    %c0_11 = arith.constant 0 : index
    %c0_12 = arith.constant 0 : index
    %17 = vector.load %arg2[%c2, %c0_11, %c0_12] : memref<4x48x32xbf16, #tpu.memory_space<vmem>>, vector<1x48x32xbf16>
    %18 = vector.shape_cast %17 : vector<1x48x32xbf16> to vector<48x32xbf16>
    %cst_13 = arith.constant dense<0.000000e+00> : vector<128x32xf32>
    %19 = tpu.matmul %0, %18, %cst_13 {dimension_numbers = #tpu.dot_dimension_numbers<[1], [0], [0], [1], [0, 0, 1, 1], [], []>} : vector<128x48xbf16>, vector<48x32xbf16>, vector<128x32xf32> -> vector<128x32xf32>
    %20 = vector.broadcast %1 : vector<1x32xf32> to vector<128x32xf32>
    %21 = arith.addf %19, %20 : vector<128x32xf32>
    %cst_14 = arith.constant 0.000000e+00 : f32
    %22 = vector.broadcast %cst_14 : f32 to vector<128x32xf32>
    %23 = arith.maximumf %21, %22 : vector<128x32xf32>
    %24 = arith.maximumf %16, %23 : vector<128x32xf32>
    %c3 = arith.constant 3 : index
    %c0_15 = arith.constant 0 : index
    %c0_16 = arith.constant 0 : index
    %25 = vector.load %arg2[%c3, %c0_15, %c0_16] : memref<4x48x32xbf16, #tpu.memory_space<vmem>>, vector<1x48x32xbf16>
    %26 = vector.shape_cast %25 : vector<1x48x32xbf16> to vector<48x32xbf16>
    %cst_17 = arith.constant dense<0.000000e+00> : vector<128x32xf32>
    %27 = tpu.matmul %0, %26, %cst_17 {dimension_numbers = #tpu.dot_dimension_numbers<[1], [0], [0], [1], [0, 0, 1, 1], [], []>} : vector<128x48xbf16>, vector<48x32xbf16>, vector<128x32xf32> -> vector<128x32xf32>
    %28 = vector.broadcast %1 : vector<1x32xf32> to vector<128x32xf32>
    %29 = arith.addf %27, %28 : vector<128x32xf32>
    %cst_18 = arith.constant 0.000000e+00 : f32
    %30 = vector.broadcast %cst_18 : f32 to vector<128x32xf32>
    %31 = arith.maximumf %29, %30 : vector<128x32xf32>
    %32 = arith.maximumf %24, %31 : vector<128x32xf32>
    %33 = arith.truncf %32 : vector<128x32xf32> to vector<128x32xbf16>
    %c0_19 = arith.constant 0 : index
    %c0_20 = arith.constant 0 : index
    %34 = vector.load %arg4[%c0_19, %c0_20] : memref<128x32xbf16, #tpu.memory_space<vmem>>, vector<128x32xbf16>
    tpu.vector_store %arg4[%c0_19, %c0_20], %33 {strides = array<i32>} : memref<128x32xbf16, #tpu.memory_space<vmem>>, vector<128x32xbf16>,
    return
  }
  func.func @transform_0(%arg0: i32) -> (i32, i32) {
    %c0_i32 = arith.constant 0 : i32
    %c0_i32_0 = arith.constant 0 : i32
    return %arg0, %c0_i32 : i32, i32
  }
  func.func @transform_1(%arg0: i32) -> (i32, i32, i32) {
    %c0_i32 = arith.constant 0 : i32
    %c0_i32_0 = arith.constant 0 : i32
    %c0_i32_1 = arith.constant 0 : i32
    %c0_i32_2 = arith.constant 0 : i32
    return %c0_i32, %c0_i32_0, %c0_i32_1 : i32, i32, i32
  }
  func.func @transform_2(%arg0: i32) -> (i32, i32) {
    %c0_i32 = arith.constant 0 : i32
    %c0_i32_0 = arith.constant 0 : i32
    %c0_i32_1 = arith.constant 0 : i32
    return %c0_i32, %c0_i32_0 : i32, i32
  }
  func.func @transform_3(%arg0: i32) -> (i32, i32) {
    %c0_i32 = arith.constant 0 : i32
    %c0_i32_0 = arith.constant 0 : i32
    return %arg0, %c0_i32 : i32, i32
  }
}

module attributes {stable_mosaic.version = 11 : i64} {
  func.func @_enc_conv_relu_pool_kernel(%arg0: i32, %arg1: memref<32x512xbf16, #tpu.memory_space<vmem>>, %arg2: memref<4x512x64xbf16, #tpu.memory_space<vmem>>, %arg3: memref<1x64xf32, #tpu.memory_space<vmem>>, %arg4: memref<32x64xbf16, #tpu.memory_space<vmem>>) attributes {dimension_semantics = [#tpu.dimension_semantics<parallel>], iteration_bounds = array<i64: 1>, scalar_prefetch = 0 : i64, scratch_operands = 0 : i64, tpu.core_type = #tpu.core_type<tc>, window_params = [{transform_indices = @transform_0, window_bounds = array<i64: 32, 512>}, {pipeline_mode = #tpu.pipeline_mode<synchronous>, transform_indices = @transform_1, window_bounds = array<i64: 4, 512, 64>}, {pipeline_mode = #tpu.pipeline_mode<synchronous>, transform_indices = @transform_2, window_bounds = array<i64: 1, 64>}, {transform_indices = @transform_3, window_bounds = array<i64: 32, 64>}]} {
    %c0 = arith.constant 0 : index
    %c0_0 = arith.constant 0 : index
    %0 = vector.load %arg1[%c0, %c0_0] : memref<32x512xbf16, #tpu.memory_space<vmem>>, vector<32x512xbf16>
    %c0_1 = arith.constant 0 : index
    %c0_2 = arith.constant 0 : index
    %1 = vector.load %arg3[%c0_1, %c0_2] : memref<1x64xf32, #tpu.memory_space<vmem>>, vector<1x64xf32>
    %c0_3 = arith.constant 0 : index
    %c0_4 = arith.constant 0 : index
    %c0_5 = arith.constant 0 : index
    %2 = vector.load %arg2[%c0_3, %c0_4, %c0_5] : memref<4x512x64xbf16, #tpu.memory_space<vmem>>, vector<1x512x64xbf16>
    %3 = vector.shape_cast %2 : vector<1x512x64xbf16> to vector<512x64xbf16>
    %cst = arith.constant dense<0.000000e+00> : vector<32x64xf32>
    %4 = tpu.matmul %0, %3, %cst {dimension_numbers = #tpu.dot_dimension_numbers<[1], [0], [0], [1], [0, 0, 1, 1], [], []>} : vector<32x512xbf16>, vector<512x64xbf16>, vector<32x64xf32> -> vector<32x64xf32>
    %5 = vector.broadcast %1 : vector<1x64xf32> to vector<32x64xf32>
    %6 = arith.addf %4, %5 : vector<32x64xf32>
    %cst_6 = arith.constant 0.000000e+00 : f32
    %7 = vector.broadcast %cst_6 : f32 to vector<32x64xf32>
    %8 = arith.maximumf %6, %7 : vector<32x64xf32>
    %c1 = arith.constant 1 : index
    %c0_7 = arith.constant 0 : index
    %c0_8 = arith.constant 0 : index
    %9 = vector.load %arg2[%c1, %c0_7, %c0_8] : memref<4x512x64xbf16, #tpu.memory_space<vmem>>, vector<1x512x64xbf16>
    %10 = vector.shape_cast %9 : vector<1x512x64xbf16> to vector<512x64xbf16>
    %cst_9 = arith.constant dense<0.000000e+00> : vector<32x64xf32>
    %11 = tpu.matmul %0, %10, %cst_9 {dimension_numbers = #tpu.dot_dimension_numbers<[1], [0], [0], [1], [0, 0, 1, 1], [], []>} : vector<32x512xbf16>, vector<512x64xbf16>, vector<32x64xf32> -> vector<32x64xf32>
    %12 = vector.broadcast %1 : vector<1x64xf32> to vector<32x64xf32>
    %13 = arith.addf %11, %12 : vector<32x64xf32>
    %cst_10 = arith.constant 0.000000e+00 : f32
    %14 = vector.broadcast %cst_10 : f32 to vector<32x64xf32>
    %15 = arith.maximumf %13, %14 : vector<32x64xf32>
    %16 = arith.maximumf %8, %15 : vector<32x64xf32>
    %c2 = arith.constant 2 : index
    %c0_11 = arith.constant 0 : index
    %c0_12 = arith.constant 0 : index
    %17 = vector.load %arg2[%c2, %c0_11, %c0_12] : memref<4x512x64xbf16, #tpu.memory_space<vmem>>, vector<1x512x64xbf16>
    %18 = vector.shape_cast %17 : vector<1x512x64xbf16> to vector<512x64xbf16>
    %cst_13 = arith.constant dense<0.000000e+00> : vector<32x64xf32>
    %19 = tpu.matmul %0, %18, %cst_13 {dimension_numbers = #tpu.dot_dimension_numbers<[1], [0], [0], [1], [0, 0, 1, 1], [], []>} : vector<32x512xbf16>, vector<512x64xbf16>, vector<32x64xf32> -> vector<32x64xf32>
    %20 = vector.broadcast %1 : vector<1x64xf32> to vector<32x64xf32>
    %21 = arith.addf %19, %20 : vector<32x64xf32>
    %cst_14 = arith.constant 0.000000e+00 : f32
    %22 = vector.broadcast %cst_14 : f32 to vector<32x64xf32>
    %23 = arith.maximumf %21, %22 : vector<32x64xf32>
    %24 = arith.maximumf %16, %23 : vector<32x64xf32>
    %c3 = arith.constant 3 : index
    %c0_15 = arith.constant 0 : index
    %c0_16 = arith.constant 0 : index
    %25 = vector.load %arg2[%c3, %c0_15, %c0_16] : memref<4x512x64xbf16, #tpu.memory_space<vmem>>, vector<1x512x64xbf16>
    %26 = vector.shape_cast %25 : vector<1x512x64xbf16> to vector<512x64xbf16>
    %cst_17 = arith.constant dense<0.000000e+00> : vector<32x64xf32>
    %27 = tpu.matmul %0, %26, %cst_17 {dimension_numbers = #tpu.dot_dimension_numbers<[1], [0], [0], [1], [0, 0, 1, 1], [], []>} : vector<32x512xbf16>, vector<512x64xbf16>, vector<32x64xf32> -> vector<32x64xf32>
    %28 = vector.broadcast %1 : vector<1x64xf32> to vector<32x64xf32>
    %29 = arith.addf %27, %28 : vector<32x64xf32>
    %cst_18 = arith.constant 0.000000e+00 : f32
    %30 = vector.broadcast %cst_18 : f32 to vector<32x64xf32>
    %31 = arith.maximumf %29, %30 : vector<32x64xf32>
    %32 = arith.maximumf %24, %31 : vector<32x64xf32>
    %33 = arith.truncf %32 : vector<32x64xf32> to vector<32x64xbf16>
    %c0_19 = arith.constant 0 : index
    %c0_20 = arith.constant 0 : index
    %34 = vector.load %arg4[%c0_19, %c0_20] : memref<32x64xbf16, #tpu.memory_space<vmem>>, vector<32x64xbf16>
    tpu.vector_store %arg4[%c0_19, %c0_20], %33 {strides = array<i32>} : memref<32x64xbf16, #tpu.memory_space<vmem>>, vector<32x64xbf16>,
    return
  }
  func.func @transform_0(%arg0: i32) -> (i32, i32) {
    %c0_i32 = arith.constant 0 : i32
    %c0_i32_0 = arith.constant 0 : i32
    return %arg0, %c0_i32 : i32, i32
  }
  func.func @transform_1(%arg0: i32) -> (i32, i32, i32) {
    %c0_i32 = arith.constant 0 : i32
    %c0_i32_0 = arith.constant 0 : i32
    %c0_i32_1 = arith.constant 0 : i32
    %c0_i32_2 = arith.constant 0 : i32
    return %c0_i32, %c0_i32_0, %c0_i32_1 : i32, i32, i32
  }
  func.func @transform_2(%arg0: i32) -> (i32, i32) {
    %c0_i32 = arith.constant 0 : i32
    %c0_i32_0 = arith.constant 0 : i32
    %c0_i32_1 = arith.constant 0 : i32
    return %c0_i32, %c0_i32_0 : i32, i32
  }
  func.func @transform_3(%arg0: i32) -> (i32, i32) {
    %c0_i32 = arith.constant 0 : i32
    %c0_i32_0 = arith.constant 0 : i32
    return %arg0, %c0_i32 : i32, i32
  }
}

module attributes {stable_mosaic.version = 11 : i64} {
  func.func @_enc_conv_relu_pool_kernel(%arg0: i32, %arg1: memref<8x1024xbf16, #tpu.memory_space<vmem>>, %arg2: memref<4x1024x128xbf16, #tpu.memory_space<vmem>>, %arg3: memref<1x128xf32, #tpu.memory_space<vmem>>, %arg4: memref<8x128xbf16, #tpu.memory_space<vmem>>) attributes {dimension_semantics = [#tpu.dimension_semantics<parallel>], iteration_bounds = array<i64: 1>, scalar_prefetch = 0 : i64, scratch_operands = 0 : i64, tpu.core_type = #tpu.core_type<tc>, window_params = [{transform_indices = @transform_0, window_bounds = array<i64: 8, 1024>}, {pipeline_mode = #tpu.pipeline_mode<synchronous>, transform_indices = @transform_1, window_bounds = array<i64: 4, 1024, 128>}, {pipeline_mode = #tpu.pipeline_mode<synchronous>, transform_indices = @transform_2, window_bounds = array<i64: 1, 128>}, {transform_indices = @transform_3, window_bounds = array<i64: 8, 128>}]} {
    %c0 = arith.constant 0 : index
    %c0_0 = arith.constant 0 : index
    %0 = vector.load %arg1[%c0, %c0_0] : memref<8x1024xbf16, #tpu.memory_space<vmem>>, vector<8x1024xbf16>
    %c0_1 = arith.constant 0 : index
    %c0_2 = arith.constant 0 : index
    %1 = vector.load %arg3[%c0_1, %c0_2] : memref<1x128xf32, #tpu.memory_space<vmem>>, vector<1x128xf32>
    %c0_3 = arith.constant 0 : index
    %c0_4 = arith.constant 0 : index
    %c0_5 = arith.constant 0 : index
    %2 = vector.load %arg2[%c0_3, %c0_4, %c0_5] : memref<4x1024x128xbf16, #tpu.memory_space<vmem>>, vector<1x1024x128xbf16>
    %3 = vector.shape_cast %2 : vector<1x1024x128xbf16> to vector<1024x128xbf16>
    %cst = arith.constant dense<0.000000e+00> : vector<8x128xf32>
    %4 = tpu.matmul %0, %3, %cst {dimension_numbers = #tpu.dot_dimension_numbers<[1], [0], [0], [1], [0, 0, 1, 1], [], []>} : vector<8x1024xbf16>, vector<1024x128xbf16>, vector<8x128xf32> -> vector<8x128xf32>
    %5 = vector.broadcast %1 : vector<1x128xf32> to vector<8x128xf32>
    %6 = arith.addf %4, %5 : vector<8x128xf32>
    %cst_6 = arith.constant 0.000000e+00 : f32
    %7 = vector.broadcast %cst_6 : f32 to vector<8x128xf32>
    %8 = arith.maximumf %6, %7 : vector<8x128xf32>
    %c1 = arith.constant 1 : index
    %c0_7 = arith.constant 0 : index
    %c0_8 = arith.constant 0 : index
    %9 = vector.load %arg2[%c1, %c0_7, %c0_8] : memref<4x1024x128xbf16, #tpu.memory_space<vmem>>, vector<1x1024x128xbf16>
    %10 = vector.shape_cast %9 : vector<1x1024x128xbf16> to vector<1024x128xbf16>
    %cst_9 = arith.constant dense<0.000000e+00> : vector<8x128xf32>
    %11 = tpu.matmul %0, %10, %cst_9 {dimension_numbers = #tpu.dot_dimension_numbers<[1], [0], [0], [1], [0, 0, 1, 1], [], []>} : vector<8x1024xbf16>, vector<1024x128xbf16>, vector<8x128xf32> -> vector<8x128xf32>
    %12 = vector.broadcast %1 : vector<1x128xf32> to vector<8x128xf32>
    %13 = arith.addf %11, %12 : vector<8x128xf32>
    %cst_10 = arith.constant 0.000000e+00 : f32
    %14 = vector.broadcast %cst_10 : f32 to vector<8x128xf32>
    %15 = arith.maximumf %13, %14 : vector<8x128xf32>
    %16 = arith.maximumf %8, %15 : vector<8x128xf32>
    %c2 = arith.constant 2 : index
    %c0_11 = arith.constant 0 : index
    %c0_12 = arith.constant 0 : index
    %17 = vector.load %arg2[%c2, %c0_11, %c0_12] : memref<4x1024x128xbf16, #tpu.memory_space<vmem>>, vector<1x1024x128xbf16>
    %18 = vector.shape_cast %17 : vector<1x1024x128xbf16> to vector<1024x128xbf16>
    %cst_13 = arith.constant dense<0.000000e+00> : vector<8x128xf32>
    %19 = tpu.matmul %0, %18, %cst_13 {dimension_numbers = #tpu.dot_dimension_numbers<[1], [0], [0], [1], [0, 0, 1, 1], [], []>} : vector<8x1024xbf16>, vector<1024x128xbf16>, vector<8x128xf32> -> vector<8x128xf32>
    %20 = vector.broadcast %1 : vector<1x128xf32> to vector<8x128xf32>
    %21 = arith.addf %19, %20 : vector<8x128xf32>
    %cst_14 = arith.constant 0.000000e+00 : f32
    %22 = vector.broadcast %cst_14 : f32 to vector<8x128xf32>
    %23 = arith.maximumf %21, %22 : vector<8x128xf32>
    %24 = arith.maximumf %16, %23 : vector<8x128xf32>
    %c3 = arith.constant 3 : index
    %c0_15 = arith.constant 0 : index
    %c0_16 = arith.constant 0 : index
    %25 = vector.load %arg2[%c3, %c0_15, %c0_16] : memref<4x1024x128xbf16, #tpu.memory_space<vmem>>, vector<1x1024x128xbf16>
    %26 = vector.shape_cast %25 : vector<1x1024x128xbf16> to vector<1024x128xbf16>
    %cst_17 = arith.constant dense<0.000000e+00> : vector<8x128xf32>
    %27 = tpu.matmul %0, %26, %cst_17 {dimension_numbers = #tpu.dot_dimension_numbers<[1], [0], [0], [1], [0, 0, 1, 1], [], []>} : vector<8x1024xbf16>, vector<1024x128xbf16>, vector<8x128xf32> -> vector<8x128xf32>
    %28 = vector.broadcast %1 : vector<1x128xf32> to vector<8x128xf32>
    %29 = arith.addf %27, %28 : vector<8x128xf32>
    %cst_18 = arith.constant 0.000000e+00 : f32
    %30 = vector.broadcast %cst_18 : f32 to vector<8x128xf32>
    %31 = arith.maximumf %29, %30 : vector<8x128xf32>
    %32 = arith.maximumf %24, %31 : vector<8x128xf32>
    %33 = arith.truncf %32 : vector<8x128xf32> to vector<8x128xbf16>
    %c0_19 = arith.constant 0 : index
    %c0_20 = arith.constant 0 : index
    %34 = vector.load %arg4[%c0_19, %c0_20] : memref<8x128xbf16, #tpu.memory_space<vmem>>, vector<8x128xbf16>
    tpu.vector_store %arg4[%c0_19, %c0_20], %33 {strides = array<i32>} : memref<8x128xbf16, #tpu.memory_space<vmem>>, vector<8x128xbf16>,
    return
  }
  func.func @transform_0(%arg0: i32) -> (i32, i32) {
    %c0_i32 = arith.constant 0 : i32
    %c0_i32_0 = arith.constant 0 : i32
    return %arg0, %c0_i32 : i32, i32
  }
  func.func @transform_1(%arg0: i32) -> (i32, i32, i32) {
    %c0_i32 = arith.constant 0 : i32
    %c0_i32_0 = arith.constant 0 : i32
    %c0_i32_1 = arith.constant 0 : i32
    %c0_i32_2 = arith.constant 0 : i32
    return %c0_i32, %c0_i32_0, %c0_i32_1 : i32, i32, i32
  }
  func.func @transform_2(%arg0: i32) -> (i32, i32) {
    %c0_i32 = arith.constant 0 : i32
    %c0_i32_0 = arith.constant 0 : i32
    %c0_i32_1 = arith.constant 0 : i32
    return %c0_i32, %c0_i32_0 : i32, i32
  }
  func.func @transform_3(%arg0: i32) -> (i32, i32) {
    %c0_i32 = arith.constant 0 : i32
    %c0_i32_0 = arith.constant 0 : i32
    return %arg0, %c0_i32 : i32, i32
  }
}

module attributes {stable_mosaic.version = 11 : i64} {
  func.func @_enc_conv_relu_pool_kernel(%arg0: i32, %arg1: memref<2x2048xbf16, #tpu.memory_space<vmem>>, %arg2: memref<4x2048x32xbf16, #tpu.memory_space<vmem>>, %arg3: memref<1x32xf32, #tpu.memory_space<vmem>>, %arg4: memref<2x32xbf16, #tpu.memory_space<vmem>>) attributes {dimension_semantics = [#tpu.dimension_semantics<parallel>], iteration_bounds = array<i64: 1>, scalar_prefetch = 0 : i64, scratch_operands = 0 : i64, tpu.core_type = #tpu.core_type<tc>, window_params = [{transform_indices = @transform_0, window_bounds = array<i64: 2, 2048>}, {pipeline_mode = #tpu.pipeline_mode<synchronous>, transform_indices = @transform_1, window_bounds = array<i64: 4, 2048, 32>}, {pipeline_mode = #tpu.pipeline_mode<synchronous>, transform_indices = @transform_2, window_bounds = array<i64: 1, 32>}, {transform_indices = @transform_3, window_bounds = array<i64: 2, 32>}]} {
    %c0 = arith.constant 0 : index
    %c0_0 = arith.constant 0 : index
    %0 = vector.load %arg1[%c0, %c0_0] : memref<2x2048xbf16, #tpu.memory_space<vmem>>, vector<2x2048xbf16>
    %c0_1 = arith.constant 0 : index
    %c0_2 = arith.constant 0 : index
    %1 = vector.load %arg3[%c0_1, %c0_2] : memref<1x32xf32, #tpu.memory_space<vmem>>, vector<1x32xf32>
    %c0_3 = arith.constant 0 : index
    %c0_4 = arith.constant 0 : index
    %c0_5 = arith.constant 0 : index
    %2 = vector.load %arg2[%c0_3, %c0_4, %c0_5] : memref<4x2048x32xbf16, #tpu.memory_space<vmem>>, vector<1x2048x32xbf16>
    %3 = vector.shape_cast %2 : vector<1x2048x32xbf16> to vector<2048x32xbf16>
    %cst = arith.constant dense<0.000000e+00> : vector<2x32xf32>
    %4 = tpu.matmul %0, %3, %cst {dimension_numbers = #tpu.dot_dimension_numbers<[1], [0], [0], [1], [0, 0, 1, 1], [], []>} : vector<2x2048xbf16>, vector<2048x32xbf16>, vector<2x32xf32> -> vector<2x32xf32>
    %5 = vector.broadcast %1 : vector<1x32xf32> to vector<2x32xf32>
    %6 = arith.addf %4, %5 : vector<2x32xf32>
    %cst_6 = arith.constant 0.000000e+00 : f32
    %7 = vector.broadcast %cst_6 : f32 to vector<2x32xf32>
    %8 = arith.maximumf %6, %7 : vector<2x32xf32>
    %c1 = arith.constant 1 : index
    %c0_7 = arith.constant 0 : index
    %c0_8 = arith.constant 0 : index
    %9 = vector.load %arg2[%c1, %c0_7, %c0_8] : memref<4x2048x32xbf16, #tpu.memory_space<vmem>>, vector<1x2048x32xbf16>
    %10 = vector.shape_cast %9 : vector<1x2048x32xbf16> to vector<2048x32xbf16>
    %cst_9 = arith.constant dense<0.000000e+00> : vector<2x32xf32>
    %11 = tpu.matmul %0, %10, %cst_9 {dimension_numbers = #tpu.dot_dimension_numbers<[1], [0], [0], [1], [0, 0, 1, 1], [], []>} : vector<2x2048xbf16>, vector<2048x32xbf16>, vector<2x32xf32> -> vector<2x32xf32>
    %12 = vector.broadcast %1 : vector<1x32xf32> to vector<2x32xf32>
    %13 = arith.addf %11, %12 : vector<2x32xf32>
    %cst_10 = arith.constant 0.000000e+00 : f32
    %14 = vector.broadcast %cst_10 : f32 to vector<2x32xf32>
    %15 = arith.maximumf %13, %14 : vector<2x32xf32>
    %16 = arith.maximumf %8, %15 : vector<2x32xf32>
    %c2 = arith.constant 2 : index
    %c0_11 = arith.constant 0 : index
    %c0_12 = arith.constant 0 : index
    %17 = vector.load %arg2[%c2, %c0_11, %c0_12] : memref<4x2048x32xbf16, #tpu.memory_space<vmem>>, vector<1x2048x32xbf16>
    %18 = vector.shape_cast %17 : vector<1x2048x32xbf16> to vector<2048x32xbf16>
    %cst_13 = arith.constant dense<0.000000e+00> : vector<2x32xf32>
    %19 = tpu.matmul %0, %18, %cst_13 {dimension_numbers = #tpu.dot_dimension_numbers<[1], [0], [0], [1], [0, 0, 1, 1], [], []>} : vector<2x2048xbf16>, vector<2048x32xbf16>, vector<2x32xf32> -> vector<2x32xf32>
    %20 = vector.broadcast %1 : vector<1x32xf32> to vector<2x32xf32>
    %21 = arith.addf %19, %20 : vector<2x32xf32>
    %cst_14 = arith.constant 0.000000e+00 : f32
    %22 = vector.broadcast %cst_14 : f32 to vector<2x32xf32>
    %23 = arith.maximumf %21, %22 : vector<2x32xf32>
    %24 = arith.maximumf %16, %23 : vector<2x32xf32>
    %c3 = arith.constant 3 : index
    %c0_15 = arith.constant 0 : index
    %c0_16 = arith.constant 0 : index
    %25 = vector.load %arg2[%c3, %c0_15, %c0_16] : memref<4x2048x32xbf16, #tpu.memory_space<vmem>>, vector<1x2048x32xbf16>
    %26 = vector.shape_cast %25 : vector<1x2048x32xbf16> to vector<2048x32xbf16>
    %cst_17 = arith.constant dense<0.000000e+00> : vector<2x32xf32>
    %27 = tpu.matmul %0, %26, %cst_17 {dimension_numbers = #tpu.dot_dimension_numbers<[1], [0], [0], [1], [0, 0, 1, 1], [], []>} : vector<2x2048xbf16>, vector<2048x32xbf16>, vector<2x32xf32> -> vector<2x32xf32>
    %28 = vector.broadcast %1 : vector<1x32xf32> to vector<2x32xf32>
    %29 = arith.addf %27, %28 : vector<2x32xf32>
    %cst_18 = arith.constant 0.000000e+00 : f32
    %30 = vector.broadcast %cst_18 : f32 to vector<2x32xf32>
    %31 = arith.maximumf %29, %30 : vector<2x32xf32>
    %32 = arith.maximumf %24, %31 : vector<2x32xf32>
    %33 = arith.truncf %32 : vector<2x32xf32> to vector<2x32xbf16>
    %c0_19 = arith.constant 0 : index
    %c0_20 = arith.constant 0 : index
    %34 = vector.load %arg4[%c0_19, %c0_20] : memref<2x32xbf16, #tpu.memory_space<vmem>>, vector<2x32xbf16>
    tpu.vector_store %arg4[%c0_19, %c0_20], %33 {strides = array<i32>} : memref<2x32xbf16, #tpu.memory_space<vmem>>, vector<2x32xbf16>,
    return
  }
  func.func @transform_0(%arg0: i32) -> (i32, i32) {
    %c0_i32 = arith.constant 0 : i32
    %c0_i32_0 = arith.constant 0 : i32
    return %arg0, %c0_i32 : i32, i32
  }
  func.func @transform_1(%arg0: i32) -> (i32, i32, i32) {
    %c0_i32 = arith.constant 0 : i32
    %c0_i32_0 = arith.constant 0 : i32
    %c0_i32_1 = arith.constant 0 : i32
    %c0_i32_2 = arith.constant 0 : i32
    return %c0_i32, %c0_i32_0, %c0_i32_1 : i32, i32, i32
  }
  func.func @transform_2(%arg0: i32) -> (i32, i32) {
    %c0_i32 = arith.constant 0 : i32
    %c0_i32_0 = arith.constant 0 : i32
    %c0_i32_1 = arith.constant 0 : i32
    return %c0_i32, %c0_i32_0 : i32, i32
  }
  func.func @transform_3(%arg0: i32) -> (i32, i32) {
    %c0_i32 = arith.constant 0 : i32
    %c0_i32_0 = arith.constant 0 : i32
    return %arg0, %c0_i32 : i32, i32
  }
}

module attributes {stable_mosaic.version = 11 : i64} {
  func.func @_fc_reparam_kernel(%arg0: memref<2x32xbf16, #tpu.memory_space<vmem>>, %arg1: memref<32x32xbf16, #tpu.memory_space<vmem>>, %arg2: memref<32x32xbf16, #tpu.memory_space<vmem>>, %arg3: memref<1x32xf32, #tpu.memory_space<vmem>>, %arg4: memref<1x32xf32, #tpu.memory_space<vmem>>, %arg5: memref<2x32xf32, #tpu.memory_space<vmem>>, %arg6: memref<2x32xf32, #tpu.memory_space<vmem>>, %arg7: memref<2x32xf32, #tpu.memory_space<vmem>>, %arg8: memref<2x32xf32, #tpu.memory_space<vmem>>) attributes {dimension_semantics = [], scalar_prefetch = 0 : i64, scratch_operands = 0 : i64, tpu.core_type = #tpu.core_type<tc>} {
    %c0 = arith.constant 0 : index
    %c0_0 = arith.constant 0 : index
    %0 = vector.load %arg0[%c0, %c0_0] : memref<2x32xbf16, #tpu.memory_space<vmem>>, vector<2x32xbf16>
    %c0_1 = arith.constant 0 : index
    %c0_2 = arith.constant 0 : index
    %1 = vector.load %arg1[%c0_1, %c0_2] : memref<32x32xbf16, #tpu.memory_space<vmem>>, vector<32x32xbf16>
    %cst = arith.constant dense<0.000000e+00> : vector<2x32xf32>
    %2 = tpu.matmul %0, %1, %cst {dimension_numbers = #tpu.dot_dimension_numbers<[1], [0], [0], [1], [0, 0, 1, 1], [], []>} : vector<2x32xbf16>, vector<32x32xbf16>, vector<2x32xf32> -> vector<2x32xf32>
    %c0_3 = arith.constant 0 : index
    %c0_4 = arith.constant 0 : index
    %3 = vector.load %arg3[%c0_3, %c0_4] : memref<1x32xf32, #tpu.memory_space<vmem>>, vector<1x32xf32>
    %4 = vector.broadcast %3 : vector<1x32xf32> to vector<2x32xf32>
    %5 = arith.addf %2, %4 : vector<2x32xf32>
    %c0_5 = arith.constant 0 : index
    %c0_6 = arith.constant 0 : index
    %6 = vector.load %arg2[%c0_5, %c0_6] : memref<32x32xbf16, #tpu.memory_space<vmem>>, vector<32x32xbf16>
    %cst_7 = arith.constant dense<0.000000e+00> : vector<2x32xf32>
    %7 = tpu.matmul %0, %6, %cst_7 {dimension_numbers = #tpu.dot_dimension_numbers<[1], [0], [0], [1], [0, 0, 1, 1], [], []>} : vector<2x32xbf16>, vector<32x32xbf16>, vector<2x32xf32> -> vector<2x32xf32>
    %c0_8 = arith.constant 0 : index
    %c0_9 = arith.constant 0 : index
    %8 = vector.load %arg4[%c0_8, %c0_9] : memref<1x32xf32, #tpu.memory_space<vmem>>, vector<1x32xf32>
    %9 = vector.broadcast %8 : vector<1x32xf32> to vector<2x32xf32>
    %10 = arith.addf %7, %9 : vector<2x32xf32>
    %c0_10 = arith.constant 0 : index
    %c0_11 = arith.constant 0 : index
    %11 = vector.load %arg6[%c0_10, %c0_11] : memref<2x32xf32, #tpu.memory_space<vmem>>, vector<2x32xf32>
    tpu.vector_store %arg6[%c0_10, %c0_11], %5 {strides = array<i32>} : memref<2x32xf32, #tpu.memory_space<vmem>>, vector<2x32xf32>,
    %c0_12 = arith.constant 0 : index
    %c0_13 = arith.constant 0 : index
    %12 = vector.load %arg7[%c0_12, %c0_13] : memref<2x32xf32, #tpu.memory_space<vmem>>, vector<2x32xf32>
    tpu.vector_store %arg7[%c0_12, %c0_13], %10 {strides = array<i32>} : memref<2x32xf32, #tpu.memory_space<vmem>>, vector<2x32xf32>,
    %c0_14 = arith.constant 0 : index
    %c0_15 = arith.constant 0 : index
    %13 = vector.load %arg5[%c0_14, %c0_15] : memref<2x32xf32, #tpu.memory_space<vmem>>, vector<2x32xf32>
    %cst_16 = arith.constant 5.000000e-01 : f32
    %14 = vector.broadcast %cst_16 : f32 to vector<2x32xf32>
    %15 = arith.mulf %14, %10 : vector<2x32xf32>
    %16 = math.exp %15 : vector<2x32xf32>
    %17 = arith.mulf %13, %16 : vector<2x32xf32>
    %18 = arith.addf %5, %17 : vector<2x32xf32>
    %c0_17 = arith.constant 0 : index
    %c0_18 = arith.constant 0 : index
    %19 = vector.load %arg8[%c0_17, %c0_18] : memref<2x32xf32, #tpu.memory_space<vmem>>, vector<2x32xf32>
    tpu.vector_store %arg8[%c0_17, %c0_18], %18 {strides = array<i32>} : memref<2x32xf32, #tpu.memory_space<vmem>>, vector<2x32xf32>,
    return
  }
}

module attributes {stable_mosaic.version = 11 : i64} {
  func.func @_dec_convt_relu_kernel(%arg0: i32, %arg1: memref<2x288xbf16, #tpu.memory_space<vmem>>, %arg2: memref<288x512xbf16, #tpu.memory_space<vmem>>, %arg3: memref<1x512xf32, #tpu.memory_space<vmem>>, %arg4: memref<2x512xbf16, #tpu.memory_space<vmem>>) attributes {dimension_semantics = [#tpu.dimension_semantics<parallel>], iteration_bounds = array<i64: 1>, scalar_prefetch = 0 : i64, scratch_operands = 0 : i64, tpu.core_type = #tpu.core_type<tc>, window_params = [{transform_indices = @transform_0, window_bounds = array<i64: 2, 288>}, {pipeline_mode = #tpu.pipeline_mode<synchronous>, transform_indices = @transform_1, window_bounds = array<i64: 288, 512>}, {pipeline_mode = #tpu.pipeline_mode<synchronous>, transform_indices = @transform_2, window_bounds = array<i64: 1, 512>}, {transform_indices = @transform_3, window_bounds = array<i64: 2, 512>}]} {
    %c0 = arith.constant 0 : index
    %c0_0 = arith.constant 0 : index
    %0 = vector.load %arg1[%c0, %c0_0] : memref<2x288xbf16, #tpu.memory_space<vmem>>, vector<2x288xbf16>
    %c0_1 = arith.constant 0 : index
    %c0_2 = arith.constant 0 : index
    %1 = vector.load %arg2[%c0_1, %c0_2] : memref<288x512xbf16, #tpu.memory_space<vmem>>, vector<288x512xbf16>
    %cst = arith.constant dense<0.000000e+00> : vector<2x512xf32>
    %2 = tpu.matmul %0, %1, %cst {dimension_numbers = #tpu.dot_dimension_numbers<[1], [0], [0], [1], [0, 0, 1, 1], [], []>} : vector<2x288xbf16>, vector<288x512xbf16>, vector<2x512xf32> -> vector<2x512xf32>
    %c0_3 = arith.constant 0 : index
    %c0_4 = arith.constant 0 : index
    %3 = vector.load %arg3[%c0_3, %c0_4] : memref<1x512xf32, #tpu.memory_space<vmem>>, vector<1x512xf32>
    %4 = vector.broadcast %3 : vector<1x512xf32> to vector<2x512xf32>
    %5 = arith.addf %2, %4 : vector<2x512xf32>
    %cst_5 = arith.constant 0.000000e+00 : f32
    %6 = vector.broadcast %cst_5 : f32 to vector<2x512xf32>
    %7 = arith.maximumf %5, %6 : vector<2x512xf32>
    %8 = arith.truncf %7 : vector<2x512xf32> to vector<2x512xbf16>
    %c0_6 = arith.constant 0 : index
    %c0_7 = arith.constant 0 : index
    %9 = vector.load %arg4[%c0_6, %c0_7] : memref<2x512xbf16, #tpu.memory_space<vmem>>, vector<2x512xbf16>
    tpu.vector_store %arg4[%c0_6, %c0_7], %8 {strides = array<i32>} : memref<2x512xbf16, #tpu.memory_space<vmem>>, vector<2x512xbf16>,
    return
  }
  func.func @transform_0(%arg0: i32) -> (i32, i32) {
    %c0_i32 = arith.constant 0 : i32
    %c0_i32_0 = arith.constant 0 : i32
    return %arg0, %c0_i32 : i32, i32
  }
  func.func @transform_1(%arg0: i32) -> (i32, i32) {
    %c0_i32 = arith.constant 0 : i32
    %c0_i32_0 = arith.constant 0 : i32
    %c0_i32_1 = arith.constant 0 : i32
    return %c0_i32, %c0_i32_0 : i32, i32
  }
  func.func @transform_2(%arg0: i32) -> (i32, i32) {
    %c0_i32 = arith.constant 0 : i32
    %c0_i32_0 = arith.constant 0 : i32
    %c0_i32_1 = arith.constant 0 : i32
    return %c0_i32, %c0_i32_0 : i32, i32
  }
  func.func @transform_3(%arg0: i32) -> (i32, i32) {
    %c0_i32 = arith.constant 0 : i32
    %c0_i32_0 = arith.constant 0 : i32
    return %arg0, %c0_i32 : i32, i32
  }
}

module attributes {stable_mosaic.version = 11 : i64} {
  func.func @_dec_convt_relu_kernel(%arg0: i32, %arg1: memref<8x1152xbf16, #tpu.memory_space<vmem>>, %arg2: memref<1152x256xbf16, #tpu.memory_space<vmem>>, %arg3: memref<1x256xf32, #tpu.memory_space<vmem>>, %arg4: memref<8x256xbf16, #tpu.memory_space<vmem>>) attributes {dimension_semantics = [#tpu.dimension_semantics<parallel>], iteration_bounds = array<i64: 1>, scalar_prefetch = 0 : i64, scratch_operands = 0 : i64, tpu.core_type = #tpu.core_type<tc>, window_params = [{transform_indices = @transform_0, window_bounds = array<i64: 8, 1152>}, {pipeline_mode = #tpu.pipeline_mode<synchronous>, transform_indices = @transform_1, window_bounds = array<i64: 1152, 256>}, {pipeline_mode = #tpu.pipeline_mode<synchronous>, transform_indices = @transform_2, window_bounds = array<i64: 1, 256>}, {transform_indices = @transform_3, window_bounds = array<i64: 8, 256>}]} {
    %c0 = arith.constant 0 : index
    %c0_0 = arith.constant 0 : index
    %0 = vector.load %arg1[%c0, %c0_0] : memref<8x1152xbf16, #tpu.memory_space<vmem>>, vector<8x1152xbf16>
    %c0_1 = arith.constant 0 : index
    %c0_2 = arith.constant 0 : index
    %1 = vector.load %arg2[%c0_1, %c0_2] : memref<1152x256xbf16, #tpu.memory_space<vmem>>, vector<1152x256xbf16>
    %cst = arith.constant dense<0.000000e+00> : vector<8x256xf32>
    %2 = tpu.matmul %0, %1, %cst {dimension_numbers = #tpu.dot_dimension_numbers<[1], [0], [0], [1], [0, 0, 1, 1], [], []>} : vector<8x1152xbf16>, vector<1152x256xbf16>, vector<8x256xf32> -> vector<8x256xf32>
    %c0_3 = arith.constant 0 : index
    %c0_4 = arith.constant 0 : index
    %3 = vector.load %arg3[%c0_3, %c0_4] : memref<1x256xf32, #tpu.memory_space<vmem>>, vector<1x256xf32>
    %4 = vector.broadcast %3 : vector<1x256xf32> to vector<8x256xf32>
    %5 = arith.addf %2, %4 : vector<8x256xf32>
    %cst_5 = arith.constant 0.000000e+00 : f32
    %6 = vector.broadcast %cst_5 : f32 to vector<8x256xf32>
    %7 = arith.maximumf %5, %6 : vector<8x256xf32>
    %8 = arith.truncf %7 : vector<8x256xf32> to vector<8x256xbf16>
    %c0_6 = arith.constant 0 : index
    %c0_7 = arith.constant 0 : index
    %9 = vector.load %arg4[%c0_6, %c0_7] : memref<8x256xbf16, #tpu.memory_space<vmem>>, vector<8x256xbf16>
    tpu.vector_store %arg4[%c0_6, %c0_7], %8 {strides = array<i32>} : memref<8x256xbf16, #tpu.memory_space<vmem>>, vector<8x256xbf16>,
    return
  }
  func.func @transform_0(%arg0: i32) -> (i32, i32) {
    %c0_i32 = arith.constant 0 : i32
    %c0_i32_0 = arith.constant 0 : i32
    return %arg0, %c0_i32 : i32, i32
  }
  func.func @transform_1(%arg0: i32) -> (i32, i32) {
    %c0_i32 = arith.constant 0 : i32
    %c0_i32_0 = arith.constant 0 : i32
    %c0_i32_1 = arith.constant 0 : i32
    return %c0_i32, %c0_i32_0 : i32, i32
  }
  func.func @transform_2(%arg0: i32) -> (i32, i32) {
    %c0_i32 = arith.constant 0 : i32
    %c0_i32_0 = arith.constant 0 : i32
    %c0_i32_1 = arith.constant 0 : i32
    return %c0_i32, %c0_i32_0 : i32, i32
  }
  func.func @transform_3(%arg0: i32) -> (i32, i32) {
    %c0_i32 = arith.constant 0 : i32
    %c0_i32_0 = arith.constant 0 : i32
    return %arg0, %c0_i32 : i32, i32
  }
}

module attributes {stable_mosaic.version = 11 : i64} {
  func.func @_dec_convt_relu_kernel(%arg0: i32, %arg1: memref<32x576xbf16, #tpu.memory_space<vmem>>, %arg2: memref<576x128xbf16, #tpu.memory_space<vmem>>, %arg3: memref<1x128xf32, #tpu.memory_space<vmem>>, %arg4: memref<32x128xbf16, #tpu.memory_space<vmem>>) attributes {dimension_semantics = [#tpu.dimension_semantics<parallel>], iteration_bounds = array<i64: 1>, scalar_prefetch = 0 : i64, scratch_operands = 0 : i64, tpu.core_type = #tpu.core_type<tc>, window_params = [{transform_indices = @transform_0, window_bounds = array<i64: 32, 576>}, {pipeline_mode = #tpu.pipeline_mode<synchronous>, transform_indices = @transform_1, window_bounds = array<i64: 576, 128>}, {pipeline_mode = #tpu.pipeline_mode<synchronous>, transform_indices = @transform_2, window_bounds = array<i64: 1, 128>}, {transform_indices = @transform_3, window_bounds = array<i64: 32, 128>}]} {
    %c0 = arith.constant 0 : index
    %c0_0 = arith.constant 0 : index
    %0 = vector.load %arg1[%c0, %c0_0] : memref<32x576xbf16, #tpu.memory_space<vmem>>, vector<32x576xbf16>
    %c0_1 = arith.constant 0 : index
    %c0_2 = arith.constant 0 : index
    %1 = vector.load %arg2[%c0_1, %c0_2] : memref<576x128xbf16, #tpu.memory_space<vmem>>, vector<576x128xbf16>
    %cst = arith.constant dense<0.000000e+00> : vector<32x128xf32>
    %2 = tpu.matmul %0, %1, %cst {dimension_numbers = #tpu.dot_dimension_numbers<[1], [0], [0], [1], [0, 0, 1, 1], [], []>} : vector<32x576xbf16>, vector<576x128xbf16>, vector<32x128xf32> -> vector<32x128xf32>
    %c0_3 = arith.constant 0 : index
    %c0_4 = arith.constant 0 : index
    %3 = vector.load %arg3[%c0_3, %c0_4] : memref<1x128xf32, #tpu.memory_space<vmem>>, vector<1x128xf32>
    %4 = vector.broadcast %3 : vector<1x128xf32> to vector<32x128xf32>
    %5 = arith.addf %2, %4 : vector<32x128xf32>
    %cst_5 = arith.constant 0.000000e+00 : f32
    %6 = vector.broadcast %cst_5 : f32 to vector<32x128xf32>
    %7 = arith.maximumf %5, %6 : vector<32x128xf32>
    %8 = arith.truncf %7 : vector<32x128xf32> to vector<32x128xbf16>
    %c0_6 = arith.constant 0 : index
    %c0_7 = arith.constant 0 : index
    %9 = vector.load %arg4[%c0_6, %c0_7] : memref<32x128xbf16, #tpu.memory_space<vmem>>, vector<32x128xbf16>
    tpu.vector_store %arg4[%c0_6, %c0_7], %8 {strides = array<i32>} : memref<32x128xbf16, #tpu.memory_space<vmem>>, vector<32x128xbf16>,
    return
  }
  func.func @transform_0(%arg0: i32) -> (i32, i32) {
    %c0_i32 = arith.constant 0 : i32
    %c0_i32_0 = arith.constant 0 : i32
    return %arg0, %c0_i32 : i32, i32
  }
  func.func @transform_1(%arg0: i32) -> (i32, i32) {
    %c0_i32 = arith.constant 0 : i32
    %c0_i32_0 = arith.constant 0 : i32
    %c0_i32_1 = arith.constant 0 : i32
    return %c0_i32, %c0_i32_0 : i32, i32
  }
  func.func @transform_2(%arg0: i32) -> (i32, i32) {
    %c0_i32 = arith.constant 0 : i32
    %c0_i32_0 = arith.constant 0 : i32
    %c0_i32_1 = arith.constant 0 : i32
    return %c0_i32, %c0_i32_0 : i32, i32
  }
  func.func @transform_3(%arg0: i32) -> (i32, i32) {
    %c0_i32 = arith.constant 0 : i32
    %c0_i32_0 = arith.constant 0 : i32
    return %arg0, %c0_i32 : i32, i32
  }
}

module attributes {stable_mosaic.version = 11 : i64} {
  func.func @_dec_convt_relu_kernel(%arg0: i32, %arg1: memref<128x288xbf16, #tpu.memory_space<vmem>>, %arg2: memref<288x128xbf16, #tpu.memory_space<vmem>>, %arg3: memref<1x128xf32, #tpu.memory_space<vmem>>, %arg4: memref<128x128xf32, #tpu.memory_space<vmem>>) attributes {dimension_semantics = [#tpu.dimension_semantics<parallel>], iteration_bounds = array<i64: 1>, scalar_prefetch = 0 : i64, scratch_operands = 0 : i64, tpu.core_type = #tpu.core_type<tc>, window_params = [{transform_indices = @transform_0, window_bounds = array<i64: 128, 288>}, {pipeline_mode = #tpu.pipeline_mode<synchronous>, transform_indices = @transform_1, window_bounds = array<i64: 288, 128>}, {pipeline_mode = #tpu.pipeline_mode<synchronous>, transform_indices = @transform_2, window_bounds = array<i64: 1, 128>}, {transform_indices = @transform_3, window_bounds = array<i64: 128, 128>}]} {
    %c0 = arith.constant 0 : index
    %c0_0 = arith.constant 0 : index
    %0 = vector.load %arg1[%c0, %c0_0] : memref<128x288xbf16, #tpu.memory_space<vmem>>, vector<128x288xbf16>
    %c0_1 = arith.constant 0 : index
    %c0_2 = arith.constant 0 : index
    %1 = vector.load %arg2[%c0_1, %c0_2] : memref<288x128xbf16, #tpu.memory_space<vmem>>, vector<288x128xbf16>
    %cst = arith.constant dense<0.000000e+00> : vector<128x128xf32>
    %2 = tpu.matmul %0, %1, %cst {dimension_numbers = #tpu.dot_dimension_numbers<[1], [0], [0], [1], [0, 0, 1, 1], [], []>} : vector<128x288xbf16>, vector<288x128xbf16>, vector<128x128xf32> -> vector<128x128xf32>
    %c0_3 = arith.constant 0 : index
    %c0_4 = arith.constant 0 : index
    %3 = vector.load %arg3[%c0_3, %c0_4] : memref<1x128xf32, #tpu.memory_space<vmem>>, vector<1x128xf32>
    %4 = vector.broadcast %3 : vector<1x128xf32> to vector<128x128xf32>
    %5 = arith.addf %2, %4 : vector<128x128xf32>
    %cst_5 = arith.constant 0.000000e+00 : f32
    %6 = vector.broadcast %cst_5 : f32 to vector<128x128xf32>
    %7 = arith.maximumf %5, %6 : vector<128x128xf32>
    %c0_6 = arith.constant 0 : index
    %c0_7 = arith.constant 0 : index
    %8 = vector.load %arg4[%c0_6, %c0_7] : memref<128x128xf32, #tpu.memory_space<vmem>>, vector<128x128xf32>
    tpu.vector_store %arg4[%c0_6, %c0_7], %7 {strides = array<i32>} : memref<128x128xf32, #tpu.memory_space<vmem>>, vector<128x128xf32>,
    return
  }
  func.func @transform_0(%arg0: i32) -> (i32, i32) {
    %c0_i32 = arith.constant 0 : i32
    %c0_i32_0 = arith.constant 0 : i32
    return %arg0, %c0_i32 : i32, i32
  }
  func.func @transform_1(%arg0: i32) -> (i32, i32) {
    %c0_i32 = arith.constant 0 : i32
    %c0_i32_0 = arith.constant 0 : i32
    %c0_i32_1 = arith.constant 0 : i32
    return %c0_i32, %c0_i32_0 : i32, i32
  }
  func.func @transform_2(%arg0: i32) -> (i32, i32) {
    %c0_i32 = arith.constant 0 : i32
    %c0_i32_0 = arith.constant 0 : i32
    %c0_i32_1 = arith.constant 0 : i32
    return %c0_i32, %c0_i32_0 : i32, i32
  }
  func.func @transform_3(%arg0: i32) -> (i32, i32) {
    %c0_i32 = arith.constant 0 : i32
    %c0_i32_0 = arith.constant 0 : i32
    return %arg0, %c0_i32 : i32, i32
  }
}

</mosaic_0001>

<llo_original>
// kernel: vae_forward.9
$region0: #{vae_forward.9}
  #allocation0 [shape = 'u32[]', space=smem, size = 0x4, offset = 0x4, fixed_abs, tag = 'smem constant byte address 0x4 - core index']
  #allocation1 [shape = 'u32[144,128]{1,0:T(1,128)}', space=vmem, size = 0x12000, scoped, tag = 'internal scratch']
  %s0 = inlined_call_operand.vmem [shape: bf16[128,48], index: 0, kind: input, shape index: {}]
  %s1 = inlined_call_operand.vmem [shape: bf16[4,48,32], index: 1, kind: input, shape index: {}]
  %s2 = inlined_call_operand.hbm [shape: f32[1,32], index: 2, kind: input, shape index: {}]
  %s3 = inlined_call_operand.vmem [shape: bf16[128,32], index: 3, kind: output, shape index: {}]
  %s4 = sld [smem:[#allocation0]]
  $region26: #{vae_forward.9} parent=0
    _
  %s6 = ssub.s32 1, %s4
  %s7 = scalar_select 0, %s6, %s4
  $region1: #{vae_forward.9} parent=0
    #allocation2 [shape = 'u8[512]{0}', space=vmem, size = 0x400, scoped, tag = 'input window, operand 2, single buffered']
    #allocation3 [shape = 's32[1]{0}', space=sflag, size = 0x4, scoped, tag = 'scoped memory for vae_forward.9']
    %8 = vsyncpa [#allocation3], 0
    // Predicated region
    $region2: #{vae_forward.9} parent=1 // pred_check
      _
    $region3: #{vae_forward.9} parent=1 // pred_check_branch
      %10 = sbr.rel (0) target = $region5
    $region4: #{vae_forward.9} parent=1 // pred_region
      _
    $region5: #{vae_forward.9} parent=1 // pred_fallthru
      _
    // Predicated region
    $region6: #{vae_forward.9} parent=1 // pred_check
      _
    $region7: #{vae_forward.9} parent=1 // pred_check_branch
      %12 = sbr.rel (0) target = $region9
    $region8: #{vae_forward.9} parent=1 // pred_region
      _
    $region9: #{vae_forward.9} parent=1 // pred_fallthru
      _
    // Predicated region
    $region10: #{vae_forward.9} parent=1 // pred_check
      _
    $region11: #{vae_forward.9} parent=1 // pred_check_branch
      %14 = sbr.rel (0) target = $region13
    $region12: #{vae_forward.9} parent=1 // pred_region
      %s16 = ssub.s32 16, 16
      %17 = vsyncadd [#allocation3], %s16
      %s19 = sshll.u32 [#allocation2], 4
      %s20 = int_to_ptr.vmem [resolvable:$true] %s19
      %22 = dma.hbm_to_vmem [thread:$0]  %s2, 16, %s20, [#allocation3]
    $region13: #{vae_forward.9} parent=1 // pred_fallthru
      _
    // Predicated region
    $region14: #{vae_forward.9} parent=1 // pred_check
      _
    $region15: #{vae_forward.9} parent=1 // pred_check_branch
      %24 = sbr.rel (0) target = $region17
    $region16: #{vae_forward.9} parent=1 // pred_region
      %25 = dma.done [#allocation3], 16
    $region17: #{vae_forward.9} parent=1 // pred_fallthru
      _
    %v27 = vld [vmem:[%s0] sm:$0xf]
    %v28 = vld [vmem:[%s0 + $0x4] sm:$0xf]
    %v29 = vld [vmem:[%s0 + $0x8] sm:$0xf]
    %v30 = vld [vmem:[%s0 + $0xc] sm:$0xf]
    %v31 = vld [vmem:[%s0 + $0x10] sm:$0xf]
    %v32 = vld [vmem:[%s0 + $0x14] sm:$0xf]
    %v33 = vld [vmem:[%s0 + $0x18] sm:$0xf]
    %v34 = vld [vmem:[%s0 + $0x1c] sm:$0xf]
    %v35 = vld [vmem:[%s0 + $0x20] sm:$0xf]
    %v36 = vld [vmem:[%s0 + $0x24] sm:$0xf]
    %v37 = vld [vmem:[%s0 + $0x28] sm:$0xf]
    %v38 = vld [vmem:[%s0 + $0x2c] sm:$0xf]
    %v39 = vld [vmem:[%s0 + $0x30] sm:$0xf]
    %v40 = vld [vmem:[%s0 + $0x34] sm:$0xf]
    %v41 = vld [vmem:[%s0 + $0x38] sm:$0xf]
    %v42 = vld [vmem:[%s0 + $0x3c] sm:$0xf]
    %v43 = vld [vmem:[#allocation2] sm:$0x1]
    %v44 = vld [vmem:[%s1] sm:$0xf]
    %v45 = vld [vmem:[%s1 + $0x4] sm:$0xf]
    %v46 = vld [vmem:[%s1 + $0x8] sm:$0xf]
    %v47 = vld [vmem:[%s1 + $0xc] sm:$0xf]
    %v48 = vld [vmem:[%s1 + $0x10] sm:$0xf]
    %v49 = vld [vmem:[%s1 + $0x14] sm:$0xf]
    %v51 = vlaneseq
    %v52 = vshrl.u32 %v51, 7
    %v53 = vsub.s32 0, %v52
    %v54 = vrot.slane %v43, %v53
    %v72 = vunpack.c.l.b16 %v27
    %v73 = vunpack.c.l.b16 %v28
    %v74 = vunpack.c.l.b16 %v29
    %v75 = vunpack.c.l.b16 %v30
    %v76 = vunpack.c.l.b16 %v31
    %v77 = vunpack.c.l.b16 %v32
    %v78 = vunpack.c.l.b16 %v33
    %v79 = vunpack.c.l.b16 %v34
    %v80 = vunpack.c.l.b16 %v35
    %v81 = vunpack.c.l.b16 %v36
    %v82 = vunpack.c.l.b16 %v37
    %v83 = vunpack.c.l.b16 %v38
    %v84 = vunpack.c.l.b16 %v39
    %v85 = vunpack.c.l.b16 %v40
    %v86 = vunpack.c.l.b16 %v41
    %v87 = vunpack.c.l.b16 %v42
    %v88 = vpack.c.b16 %v73, %v72
    %v89 = vpack.c.b16 %v75, %v74
    %v90 = vpack.c.b16 %v77, %v76
    %v91 = vpack.c.b16 %v79, %v78
    %v92 = vpack.c.b16 %v81, %v80
    %v93 = vpack.c.b16 %v83, %v82
    %v94 = vpack.c.b16 %v85, %v84
    %v95 = vpack.c.b16 %v87, %v86
    %v102 = vunpack.c.l.b16 %v44
    %v103 = vunpack.c.l.b16 %v45
    %v104 = vunpack.c.l.b16 %v46
    %v105 = vunpack.c.l.b16 %v47
    %v106 = vunpack.c.l.b16 %v48
    %v107 = vunpack.c.l.b16 %v49
    %v108 = vpack.c.b16 %v103, %v102
    %v109 = vpack.c.b16 %v105, %v104
    %v110 = vpack.c.b16 %v107, %v106
    %vm114 = vcmask 392192
    %v116 = vsel %vm114, %v88, 0
    %v119 = vsel %vm114, %v89, 0
    %v122 = vsel %vm114, %v90, 0
    %v125 = vsel %vm114, %v91, 0
    %v128 = vsel %vm114, %v92, 0
    %v131 = vsel %vm114, %v93, 0
    %v134 = vsel %vm114, %v94, 0
    %v137 = vsel %vm114, %v95, 0
    %139 = vmatprep.subr.bf16.mxu0 0
    %140 = vmatpush1.bf16.msra.mxu0 %v108
    %141 = vmatprep.subr.bf16.mxu0 0
    %142 = vmatpush1.bf16.msra.mxu0 %v109
    %143 = vmatprep.subr.bf16.mxu0 0
    %144 = vmatpush1.bf16.msra.mxu0 %v110
    %145 = vmatprep.subr.bf16.mxu0 0
    %146 = vmatpush1.bf16.msra.mxu0 0
    %147 = vmatprep.subr.bf16.mxu0 0
    %148 = vmatpush1.bf16.msra.mxu0 0
    %149 = vmatprep.subr.bf16.mxu0 0
    %150 = vmatpush1.bf16.msra.mxu0 0
    %151 = vmatprep.subr.bf16.mxu0 0
    %152 = vmatpush1.bf16.msra.mxu0 0
    %153 = vmatprep.subr.bf16.mxu0 0
    %154 = vmatpush1.bf16.msra.mxu0 0
    %155 = vmatprep.subr.bf16.mxu0 0
    %156 = vmatpush1.bf16.msra.mxu0 0
    %157 = vmatprep.subr.bf16.mxu0 0
    %158 = vmatpush1.bf16.msra.mxu0 0
    %159 = vmatprep.subr.bf16.mxu0 0
    %160 = vmatpush1.bf16.msra.mxu0 0
    %161 = vmatprep.subr.bf16.mxu0 0
    %162 = vmatpush1.bf16.msra.mxu0 0
    %163 = vmatprep.subr.bf16.mxu0 0
    %164 = vmatpush1.bf16.msra.mxu0 0
    %165 = vmatprep.subr.bf16.mxu0 0
    %166 = vmatpush1.bf16.msra.mxu0 0
    %167 = vmatprep.subr.bf16.mxu0 0
    %168 = vmatpush1.bf16.msra.mxu0 0
    %169 = vmatprep.subr.bf16.mxu0 0
    %170 = vmatpush1.bf16.msra.mxu0 0
    %171 = vmatprep.mubr.bf16.mxu0 0
    %172 = vmatmul.mubr.bf16.gmra.mrb[0].mxu0 %v116
    %v173 = vpop.f32.mrb[0].mxu0
    %v174 = vadd.f32 %v54, %v173
    %v175 = vpop.f32.mrb[0].mxu0
    %v176 = vpop.f32.mrb[0].mxu0
    %v177 = vadd.f32 %v54, %v176
    %v178 = vpop.f32.mrb[0].mxu0
    %179 = vmatprep.mubr.bf16.mxu0 0
    %180 = vmatmul.mubr.bf16.gmra.mrb[0].mxu0 %v119
    %v181 = vpop.f32.mrb[0].mxu0
    %v182 = vadd.f32 %v54, %v181
    %v183 = vpop.f32.mrb[0].mxu0
    %v184 = vpop.f32.mrb[0].mxu0
    %v185 = vadd.f32 %v54, %v184
    %v186 = vpop.f32.mrb[0].mxu0
    %187 = vmatprep.mubr.bf16.mxu0 0
    %188 = vmatmul.mubr.bf16.gmra.mrb[0].mxu0 %v122
    %v189 = vpop.f32.mrb[0].mxu0
    %v190 = vadd.f32 %v54, %v189
    %v191 = vpop.f32.mrb[0].mxu0
    %v192 = vpop.f32.mrb[0].mxu0
    %v193 = vadd.f32 %v54, %v192
    %v194 = vpop.f32.mrb[0].mxu0
    %195 = vmatprep.mubr.bf16.mxu0 0
    %196 = vmatmul.mubr.bf16.gmra.mrb[0].mxu0 %v125
    %v197 = vpop.f32.mrb[0].mxu0
    %v198 = vadd.f32 %v54, %v197
    %v199 = vpop.f32.mrb[0].mxu0
    %v200 = vpop.f32.mrb[0].mxu0
    %v201 = vadd.f32 %v54, %v200
    %v202 = vpop.f32.mrb[0].mxu0
    %203 = vmatprep.mubr.bf16.mxu0 0
    %204 = vmatmul.mubr.bf16.gmra.mrb[0].mxu0 %v128
    %v205 = vpop.f32.mrb[0].mxu0
    %v206 = vadd.f32 %v54, %v205
    %v207 = vpop.f32.mrb[0].mxu0
    %v208 = vpop.f32.mrb[0].mxu0
    %v209 = vadd.f32 %v54, %v208
    %v210 = vpop.f32.mrb[0].mxu0
    %211 = vmatprep.mubr.bf16.mxu0 0
    %212 = vmatmul.mubr.bf16.gmra.mrb[0].mxu0 %v131
    %v213 = vpop.f32.mrb[0].mxu0
    %v214 = vadd.f32 %v54, %v213
    %v215 = vpop.f32.mrb[0].mxu0
    %v216 = vpop.f32.mrb[0].mxu0
    %v217 = vadd.f32 %v54, %v216
    %v218 = vpop.f32.mrb[0].mxu0
    %219 = vmatprep.mubr.bf16.mxu0 0
    %220 = vmatmul.mubr.bf16.gmra.mrb[0].mxu0 %v134
    %v221 = vpop.f32.mrb[0].mxu0
    %v222 = vadd.f32 %v54, %v221
    %v223 = vpop.f32.mrb[0].mxu0
    %v224 = vpop.f32.mrb[0].mxu0
    %v225 = vadd.f32 %v54, %v224
    %v226 = vpop.f32.mrb[0].mxu0
    %227 = vmatprep.mubr.bf16.mxu0 0
    %228 = vmatmul.mubr.bf16.gmra.mrb[0].mxu0 %v137
    %v229 = vpop.f32.mrb[0].mxu0
    %v230 = vadd.f32 %v54, %v229
    %v231 = vpop.f32.mrb[0].mxu0
    %v232 = vpop.f32.mrb[0].mxu0
    %v233 = vadd.f32 %v54, %v232
    %v234 = vpop.f32.mrb[0].mxu0
    %235 = vdwg.mxu0
    %v236 = vmax.f32 %v174, 0.0
    %v237 = vmax.f32 %v177, 0.0
    %v238 = vmax.f32 %v182, 0.0
    %v239 = vmax.f32 %v185, 0.0
    %v240 = vmax.f32 %v190, 0.0
    %v241 = vmax.f32 %v193, 0.0
    %v242 = vmax.f32 %v198, 0.0
    %v243 = vmax.f32 %v201, 0.0
    %v244 = vmax.f32 %v206, 0.0
    %v245 = vmax.f32 %v209, 0.0
    %v246 = vmax.f32 %v214, 0.0
    %v247 = vmax.f32 %v217, 0.0
    %v248 = vmax.f32 %v222, 0.0
    %v249 = vmax.f32 %v225, 0.0
    %v250 = vmax.f32 %v230, 0.0
    %v251 = vmax.f32 %v233, 0.0
    %s252 = scalar_lea.vmem %s1, 24
    %v253 = vld [vmem:[%s252] sm:$0xf]
    %v254 = vld [vmem:[%s252 + $0x4] sm:$0xf]
    %v255 = vld [vmem:[%s252 + $0x8] sm:$0xf]
    %v256 = vld [vmem:[%s252 + $0xc] sm:$0xf]
    %v257 = vld [vmem:[%s252 + $0x10] sm:$0xf]
    %v258 = vld [vmem:[%s252 + $0x14] sm:$0xf]
    %v265 = vunpack.c.l.b16 %v253
    %v266 = vunpack.c.l.b16 %v254
    %v267 = vunpack.c.l.b16 %v255
    %v268 = vunpack.c.l.b16 %v256
    %v269 = vunpack.c.l.b16 %v257
    %v270 = vunpack.c.l.b16 %v258
    %v271 = vpack.c.b16 %v266, %v265
    %v272 = vpack.c.b16 %v268, %v267
    %v273 = vpack.c.b16 %v270, %v269
    %277 = vmatprep.subr.bf16.mxu0 0
    %278 = vmatpush1.bf16.msra.mxu0 %v271
    %279 = vmatprep.subr.bf16.mxu0 0
    %280 = vmatpush1.bf16.msra.mxu0 %v272
    %281 = vmatprep.subr.bf16.mxu0 0
    %282 = vmatpush1.bf16.msra.mxu0 %v273
    %283 = vmatprep.subr.bf16.mxu0 0
    %284 = vmatpush1.bf16.msra.mxu0 0
    %285 = vmatprep.subr.bf16.mxu0 0
    %286 = vmatpush1.bf16.msra.mxu0 0
    %287 = vmatprep.subr.bf16.mxu0 0
    %288 = vmatpush1.bf16.msra.mxu0 0
    %289 = vmatprep.subr.bf16.mxu0 0
    %290 = vmatpush1.bf16.msra.mxu0 0
    %291 = vmatprep.subr.bf16.mxu0 0
    %292 = vmatpush1.bf16.msra.mxu0 0
    %293 = vmatprep.subr.bf16.mxu0 0
    %294 = vmatpush1.bf16.msra.mxu0 0
    %295 = vmatprep.subr.bf16.mxu0 0
    %296 = vmatpush1.bf16.msra.mxu0 0
    %297 = vmatprep.subr.bf16.mxu0 0
    %298 = vmatpush1.bf16.msra.mxu0 0
    %299 = vmatprep.subr.bf16.mxu0 0
    %300 = vmatpush1.bf16.msra.mxu0 0
    %301 = vmatprep.subr.bf16.mxu0 0
    %302 = vmatpush1.bf16.msra.mxu0 0
    %303 = vmatprep.subr.bf16.mxu0 0
    %304 = vmatpush1.bf16.msra.mxu0 0
    %305 = vmatprep.subr.bf16.mxu0 0
    %306 = vmatpush1.bf16.msra.mxu0 0
    %307 = vmatprep.subr.bf16.mxu0 0
    %308 = vmatpush1.bf16.msra.mxu0 0
    %309 = vmatprep.mubr.bf16.mxu0 0
    %310 = vmatmul.mubr.bf16.gmra.mrb[0].mxu0 %v116
    %v311 = vpop.f32.mrb[0].mxu0
    %v312 = vadd.f32 %v54, %v311
    %v313 = vpop.f32.mrb[0].mxu0
    %v314 = vpop.f32.mrb[0].mxu0
    %v315 = vadd.f32 %v54, %v314
    %v316 = vpop.f32.mrb[0].mxu0
    %317 = vmatprep.mubr.bf16.mxu0 0
    %318 = vmatmul.mubr.bf16.gmra.mrb[0].mxu0 %v119
    %v319 = vpop.f32.mrb[0].mxu0
    %v320 = vadd.f32 %v54, %v319
    %v321 = vpop.f32.mrb[0].mxu0
    %v322 = vpop.f32.mrb[0].mxu0
    %v323 = vadd.f32 %v54, %v322
    %v324 = vpop.f32.mrb[0].mxu0
    %325 = vmatprep.mubr.bf16.mxu0 0
    %326 = vmatmul.mubr.bf16.gmra.mrb[0].mxu0 %v122
    %v327 = vpop.f32.mrb[0].mxu0
    %v328 = vadd.f32 %v54, %v327
    %v329 = vpop.f32.mrb[0].mxu0
    %v330 = vpop.f32.mrb[0].mxu0
    %v331 = vadd.f32 %v54, %v330
    %v332 = vpop.f32.mrb[0].mxu0
    %333 = vmatprep.mubr.bf16.mxu0 0
    %334 = vmatmul.mubr.bf16.gmra.mrb[0].mxu0 %v125
    %v335 = vpop.f32.mrb[0].mxu0
    %v336 = vadd.f32 %v54, %v335
    %v337 = vpop.f32.mrb[0].mxu0
    %v338 = vpop.f32.mrb[0].mxu0
    %v339 = vadd.f32 %v54, %v338
    %v340 = vpop.f32.mrb[0].mxu0
    %341 = vmatprep.mubr.bf16.mxu0 0
    %342 = vmatmul.mubr.bf16.gmra.mrb[0].mxu0 %v128
    %v343 = vpop.f32.mrb[0].mxu0
    %v344 = vadd.f32 %v54, %v343
    %v345 = vpop.f32.mrb[0].mxu0
    %v346 = vpop.f32.mrb[0].mxu0
    %v347 = vadd.f32 %v54, %v346
    %v348 = vpop.f32.mrb[0].mxu0
    %349 = vmatprep.mubr.bf16.mxu0 0
    %350 = vmatmul.mubr.bf16.gmra.mrb[0].mxu0 %v131
    %v351 = vpop.f32.mrb[0].mxu0
    %v352 = vadd.f32 %v54, %v351
    %v353 = vpop.f32.mrb[0].mxu0
    %v354 = vpop.f32.mrb[0].mxu0
    %v355 = vadd.f32 %v54, %v354
    %v356 = vpop.f32.mrb[0].mxu0
    %357 = vmatprep.mubr.bf16.mxu0 0
    %358 = vmatmul.mubr.bf16.gmra.mrb[0].mxu0 %v134
    %v359 = vpop.f32.mrb[0].mxu0
    %v360 = vadd.f32 %v54, %v359
    %v361 = vpop.f32.mrb[0].mxu0
    %v362 = vpop.f32.mrb[0].mxu0
    %v363 = vadd.f32 %v54, %v362
    %v364 = vpop.f32.mrb[0].mxu0
    %365 = vmatprep.mubr.bf16.mxu0 0
    %366 = vmatmul.mubr.bf16.gmra.mrb[0].mxu0 %v137
    %v367 = vpop.f32.mrb[0].mxu0
    %v368 = vadd.f32 %v54, %v367
    %v369 = vpop.f32.mrb[0].mxu0
    %v370 = vpop.f32.mrb[0].mxu0
    %v371 = vadd.f32 %v54, %v370
    %v372 = vpop.f32.mrb[0].mxu0
    %373 = vdwg.mxu0
    %v374 = vmax.f32 %v312, 0.0
    %v375 = vmax.f32 %v315, 0.0
    %v376 = vmax.f32 %v320, 0.0
    %v377 = vmax.f32 %v323, 0.0
    %v378 = vmax.f32 %v328, 0.0
    %v379 = vmax.f32 %v331, 0.0
    %v380 = vmax.f32 %v336, 0.0
    %v381 = vmax.f32 %v339, 0.0
    %v382 = vmax.f32 %v344, 0.0
    %v383 = vmax.f32 %v347, 0.0
    %v384 = vmax.f32 %v352, 0.0
    %v385 = vmax.f32 %v355, 0.0
    %v386 = vmax.f32 %v360, 0.0
    %v387 = vmax.f32 %v363, 0.0
    %v388 = vmax.f32 %v368, 0.0
    %v389 = vmax.f32 %v371, 0.0
    %v390 = vmax.f32 %v236, %v374
    %v391 = vmax.f32 %v237, %v375
    %v392 = vmax.f32 %v238, %v376
    %v393 = vmax.f32 %v239, %v377
    %v394 = vmax.f32 %v240, %v378
    %v395 = vmax.f32 %v241, %v379
    %v396 = vmax.f32 %v242, %v380
    %v397 = vmax.f32 %v243, %v381
    %v398 = vmax.f32 %v244, %v382
    %v399 = vmax.f32 %v245, %v383
    %v400 = vmax.f32 %v246, %v384
    %v401 = vmax.f32 %v247, %v385
    %v402 = vmax.f32 %v248, %v386
    %v403 = vmax.f32 %v249, %v387
    %v404 = vmax.f32 %v250, %v388
    %v405 = vmax.f32 %v251, %v389
    %s406 = scalar_lea.vmem %s1, 48
    %v407 = vld [vmem:[%s406] sm:$0xf]
    %v408 = vld [vmem:[%s406 + $0x4] sm:$0xf]
    %v409 = vld [vmem:[%s406 + $0x8] sm:$0xf]
    %v410 = vld [vmem:[%s406 + $0xc] sm:$0xf]
    %v411 = vld [vmem:[%s406 + $0x10] sm:$0xf]
    %v412 = vld [vmem:[%s406 + $0x14] sm:$0xf]
    %v419 = vunpack.c.l.b16 %v407
    %v420 = vunpack.c.l.b16 %v408
    %v421 = vunpack.c.l.b16 %v409
    %v422 = vunpack.c.l.b16 %v410
    %v423 = vunpack.c.l.b16 %v411
    %v424 = vunpack.c.l.b16 %v412
    %v425 = vpack.c.b16 %v420, %v419
    %v426 = vpack.c.b16 %v422, %v421
    %v427 = vpack.c.b16 %v424, %v423
    %431 = vmatprep.subr.bf16.mxu0 0
    %432 = vmatpush1.bf16.msra.mxu0 %v425
    %433 = vmatprep.subr.bf16.mxu0 0
    %434 = vmatpush1.bf16.msra.mxu0 %v426
    %435 = vmatprep.subr.bf16.mxu0 0
    %436 = vmatpush1.bf16.msra.mxu0 %v427
    %437 = vmatprep.subr.bf16.mxu0 0
    %438 = vmatpush1.bf16.msra.mxu0 0
    %439 = vmatprep.subr.bf16.mxu0 0
    %440 = vmatpush1.bf16.msra.mxu0 0
    %441 = vmatprep.subr.bf16.mxu0 0
    %442 = vmatpush1.bf16.msra.mxu0 0
    %443 = vmatprep.subr.bf16.mxu0 0
    %444 = vmatpush1.bf16.msra.mxu0 0
    %445 = vmatprep.subr.bf16.mxu0 0
    %446 = vmatpush1.bf16.msra.mxu0 0
    %447 = vmatprep.subr.bf16.mxu0 0
    %448 = vmatpush1.bf16.msra.mxu0 0
    %449 = vmatprep.subr.bf16.mxu0 0
    %450 = vmatpush1.bf16.msra.mxu0 0
    %451 = vmatprep.subr.bf16.mxu0 0
    %452 = vmatpush1.bf16.msra.mxu0 0
    %453 = vmatprep.subr.bf16.mxu0 0
    %454 = vmatpush1.bf16.msra.mxu0 0
    %455 = vmatprep.subr.bf16.mxu0 0
    %456 = vmatpush1.bf16.msra.mxu0 0
    %457 = vmatprep.subr.bf16.mxu0 0
    %458 = vmatpush1.bf16.msra.mxu0 0
    %459 = vmatprep.subr.bf16.mxu0 0
    %460 = vmatpush1.bf16.msra.mxu0 0
    %461 = vmatprep.subr.bf16.mxu0 0
    %462 = vmatpush1.bf16.msra.mxu0 0
    %463 = vmatprep.mubr.bf16.mxu0 0
    %464 = vmatmul.mubr.bf16.gmra.mrb[0].mxu0 %v116
    %v465 = vpop.f32.mrb[0].mxu0
    %v466 = vadd.f32 %v54, %v465
    %v467 = vpop.f32.mrb[0].mxu0
    %v468 = vpop.f32.mrb[0].mxu0
    %v469 = vadd.f32 %v54, %v468
    %v470 = vpop.f32.mrb[0].mxu0
    %471 = vmatprep.mubr.bf16.mxu0 0
    %472 = vmatmul.mubr.bf16.gmra.mrb[0].mxu0 %v119
    %v473 = vpop.f32.mrb[0].mxu0
    %v474 = vadd.f32 %v54, %v473
    %v475 = vpop.f32.mrb[0].mxu0
    %v476 = vpop.f32.mrb[0].mxu0
    %v477 = vadd.f32 %v54, %v476
    %v478 = vpop.f32.mrb[0].mxu0
    %479 = vmatprep.mubr.bf16.mxu0 0
    %480 = vmatmul.mubr.bf16.gmra.mrb[0].mxu0 %v122
    %v481 = vpop.f32.mrb[0].mxu0
    %v482 = vadd.f32 %v54, %v481
    %v483 = vpop.f32.mrb[0].mxu0
    %v484 = vpop.f32.mrb[0].mxu0
    %v485 = vadd.f32 %v54, %v484
    %v486 = vpop.f32.mrb[0].mxu0
    %487 = vmatprep.mubr.bf16.mxu0 0
    %488 = vmatmul.mubr.bf16.gmra.mrb[0].mxu0 %v125
    %v489 = vpop.f32.mrb[0].mxu0
    %v490 = vadd.f32 %v54, %v489
    %v491 = vpop.f32.mrb[0].mxu0
    %v492 = vpop.f32.mrb[0].mxu0
    %v493 = vadd.f32 %v54, %v492
    %v494 = vpop.f32.mrb[0].mxu0
    %495 = vmatprep.mubr.bf16.mxu0 0
    %496 = vmatmul.mubr.bf16.gmra.mrb[0].mxu0 %v128
    %v497 = vpop.f32.mrb[0].mxu0
    %v498 = vadd.f32 %v54, %v497
    %v499 = vpop.f32.mrb[0].mxu0
    %v500 = vpop.f32.mrb[0].mxu0
    %v501 = vadd.f32 %v54, %v500
    %v502 = vpop.f32.mrb[0].mxu0
    %503 = vmatprep.mubr.bf16.mxu0 0
    %504 = vmatmul.mubr.bf16.gmra.mrb[0].mxu0 %v131
    %v505 = vpop.f32.mrb[0].mxu0
    %v506 = vadd.f32 %v54, %v505
    %v507 = vpop.f32.mrb[0].mxu0
    %v508 = vpop.f32.mrb[0].mxu0
    %v509 = vadd.f32 %v54, %v508
    %v510 = vpop.f32.mrb[0].mxu0
    %511 = vmatprep.mubr.bf16.mxu0 0
    %512 = vmatmul.mubr.bf16.gmra.mrb[0].mxu0 %v134
    %v513 = vpop.f32.mrb[0].mxu0
    %v514 = vadd.f32 %v54, %v513
    %v515 = vpop.f32.mrb[0].mxu0
    %v516 = vpop.f32.mrb[0].mxu0
    %v517 = vadd.f32 %v54, %v516
    %v518 = vpop.f32.mrb[0].mxu0
    %519 = vmatprep.mubr.bf16.mxu0 0
    %520 = vmatmul.mubr.bf16.gmra.mrb[0].mxu0 %v137
    %v521 = vpop.f32.mrb[0].mxu0
    %v522 = vadd.f32 %v54, %v521
    %v523 = vpop.f32.mrb[0].mxu0
    %v524 = vpop.f32.mrb[0].mxu0
    %v525 = vadd.f32 %v54, %v524
    %v526 = vpop.f32.mrb[0].mxu0
    %527 = vdwg.mxu0
    %v528 = vmax.f32 %v466, 0.0
    %v529 = vmax.f32 %v469, 0.0
    %v530 = vmax.f32 %v474, 0.0
    %v531 = vmax.f32 %v477, 0.0
    %v532 = vmax.f32 %v482, 0.0
    %v533 = vmax.f32 %v485, 0.0
    %v534 = vmax.f32 %v490, 0.0
    %v535 = vmax.f32 %v493, 0.0
    %v536 = vmax.f32 %v498, 0.0
    %v537 = vmax.f32 %v501, 0.0
    %v538 = vmax.f32 %v506, 0.0
    %v539 = vmax.f32 %v509, 0.0
    %v540 = vmax.f32 %v514, 0.0
    %v541 = vmax.f32 %v517, 0.0
    %v542 = vmax.f32 %v522, 0.0
    %v543 = vmax.f32 %v525, 0.0
    %v544 = vmax.f32 %v390, %v528
    %v545 = vmax.f32 %v391, %v529
    %v546 = vmax.f32 %v392, %v530
    %v547 = vmax.f32 %v393, %v531
    %v548 = vmax.f32 %v394, %v532
    %v549 = vmax.f32 %v395, %v533
    %v550 = vmax.f32 %v396, %v534
    %v551 = vmax.f32 %v397, %v535
    %v552 = vmax.f32 %v398, %v536
    %v553 = vmax.f32 %v399, %v537
    %v554 = vmax.f32 %v400, %v538
    %v555 = vmax.f32 %v401, %v539
    %v556 = vmax.f32 %v402, %v540
    %v557 = vmax.f32 %v403, %v541
    %v558 = vmax.f32 %v404, %v542
    %v559 = vmax.f32 %v405, %v543
    %s560 = scalar_lea.vmem %s1, 72
    %v561 = vld [vmem:[%s560] sm:$0xf]
    %v562 = vld [vmem:[%s560 + $0x4] sm:$0xf]
    %v563 = vld [vmem:[%s560 + $0x8] sm:$0xf]
    %v564 = vld [vmem:[%s560 + $0xc] sm:$0xf]
    %v565 = vld [vmem:[%s560 + $0x10] sm:$0xf]
    %v566 = vld [vmem:[%s560 + $0x14] sm:$0xf]
    %v573 = vunpack.c.l.b16 %v561
    %v574 = vunpack.c.l.b16 %v562
    %v575 = vunpack.c.l.b16 %v563
    %v576 = vunpack.c.l.b16 %v564
    %v577 = vunpack.c.l.b16 %v565
    %v578 = vunpack.c.l.b16 %v566
    %v579 = vpack.c.b16 %v574, %v573
    %v580 = vpack.c.b16 %v576, %v575
    %v581 = vpack.c.b16 %v578, %v577
    %585 = vmatprep.subr.bf16.mxu0 0
    %586 = vmatpush1.bf16.msra.mxu0 %v579
    %587 = vmatprep.subr.bf16.mxu0 0
    %588 = vmatpush1.bf16.msra.mxu0 %v580
    %589 = vmatprep.subr.bf16.mxu0 0
    %590 = vmatpush1.bf16.msra.mxu0 %v581
    %591 = vmatprep.subr.bf16.mxu0 0
    %592 = vmatpush1.bf16.msra.mxu0 0
    %593 = vmatprep.subr.bf16.mxu0 0
    %594 = vmatpush1.bf16.msra.mxu0 0
    %595 = vmatprep.subr.bf16.mxu0 0
    %596 = vmatpush1.bf16.msra.mxu0 0
    %597 = vmatprep.subr.bf16.mxu0 0
    %598 = vmatpush1.bf16.msra.mxu0 0
    %599 = vmatprep.subr.bf16.mxu0 0
    %600 = vmatpush1.bf16.msra.mxu0 0
    %601 = vmatprep.subr.bf16.mxu0 0
    %602 = vmatpush1.bf16.msra.mxu0 0
    %603 = vmatprep.subr.bf16.mxu0 0
    %604 = vmatpush1.bf16.msra.mxu0 0
    %605 = vmatprep.subr.bf16.mxu0 0
    %606 = vmatpush1.bf16.msra.mxu0 0
    %607 = vmatprep.subr.bf16.mxu0 0
    %608 = vmatpush1.bf16.msra.mxu0 0
    %609 = vmatprep.subr.bf16.mxu0 0
    %610 = vmatpush1.bf16.msra.mxu0 0
    %611 = vmatprep.subr.bf16.mxu0 0
    %612 = vmatpush1.bf16.msra.mxu0 0
    %613 = vmatprep.subr.bf16.mxu0 0
    %614 = vmatpush1.bf16.msra.mxu0 0
    %615 = vmatprep.subr.bf16.mxu0 0
    %616 = vmatpush1.bf16.msra.mxu0 0
    %617 = vmatprep.mubr.bf16.mxu0 0
    %618 = vmatmul.mubr.bf16.gmra.mrb[0].mxu0 %v116
    %v619 = vpop.f32.mrb[0].mxu0
    %v620 = vadd.f32 %v54, %v619
    %v621 = vpop.f32.mrb[0].mxu0
    %v622 = vpop.f32.mrb[0].mxu0
    %v623 = vadd.f32 %v54, %v622
    %v624 = vpop.f32.mrb[0].mxu0
    %625 = vmatprep.mubr.bf16.mxu0 0
    %626 = vmatmul.mubr.bf16.gmra.mrb[0].mxu0 %v119
    %v627 = vpop.f32.mrb[0].mxu0
    %v628 = vadd.f32 %v54, %v627
    %v629 = vpop.f32.mrb[0].mxu0
    %v630 = vpop.f32.mrb[0].mxu0
    %v631 = vadd.f32 %v54, %v630
    %v632 = vpop.f32.mrb[0].mxu0
    %633 = vmatprep.mubr.bf16.mxu0 0
    %634 = vmatmul.mubr.bf16.gmra.mrb[0].mxu0 %v122
    %v635 = vpop.f32.mrb[0].mxu0
    %v636 = vadd.f32 %v54, %v635
    %v637 = vpop.f32.mrb[0].mxu0
    %v638 = vpop.f32.mrb[0].mxu0
    %v639 = vadd.f32 %v54, %v638
    %v640 = vpop.f32.mrb[0].mxu0
    %641 = vmatprep.mubr.bf16.mxu0 0
    %642 = vmatmul.mubr.bf16.gmra.mrb[0].mxu0 %v125
    %v643 = vpop.f32.mrb[0].mxu0
    %v644 = vadd.f32 %v54, %v643
    %v645 = vpop.f32.mrb[0].mxu0
    %v646 = vpop.f32.mrb[0].mxu0
    %v647 = vadd.f32 %v54, %v646
    %v648 = vpop.f32.mrb[0].mxu0
    %649 = vmatprep.mubr.bf16.mxu0 0
    %650 = vmatmul.mubr.bf16.gmra.mrb[0].mxu0 %v128
    %v651 = vpop.f32.mrb[0].mxu0
    %v652 = vadd.f32 %v54, %v651
    %v653 = vpop.f32.mrb[0].mxu0
    %v654 = vpop.f32.mrb[0].mxu0
    %v655 = vadd.f32 %v54, %v654
    %v656 = vpop.f32.mrb[0].mxu0
    %657 = vmatprep.mubr.bf16.mxu0 0
    %658 = vmatmul.mubr.bf16.gmra.mrb[0].mxu0 %v131
    %v659 = vpop.f32.mrb[0].mxu0
    %v660 = vadd.f32 %v54, %v659
    %v661 = vpop.f32.mrb[0].mxu0
    %v662 = vpop.f32.mrb[0].mxu0
    %v663 = vadd.f32 %v54, %v662
    %v664 = vpop.f32.mrb[0].mxu0
    %665 = vmatprep.mubr.bf16.mxu0 0
    %666 = vmatmul.mubr.bf16.gmra.mrb[0].mxu0 %v134
    %v667 = vpop.f32.mrb[0].mxu0
    %v668 = vadd.f32 %v54, %v667
    %v669 = vpop.f32.mrb[0].mxu0
    %v670 = vpop.f32.mrb[0].mxu0
    %v671 = vadd.f32 %v54, %v670
    %v672 = vpop.f32.mrb[0].mxu0
    %673 = vmatprep.mubr.bf16.mxu0 0
    %674 = vmatmul.mubr.bf16.gmra.mrb[0].mxu0 %v137
    %v675 = vpop.f32.mrb[0].mxu0
    %v676 = vadd.f32 %v54, %v675
    %v677 = vpop.f32.mrb[0].mxu0
    %v678 = vpop.f32.mrb[0].mxu0
    %v679 = vadd.f32 %v54, %v678
    %v680 = vpop.f32.mrb[0].mxu0
    %681 = vdwg.mxu0
    %v682 = vmax.f32 %v620, 0.0
    %v683 = vmax.f32 %v623, 0.0
    %v684 = vmax.f32 %v628, 0.0
    %v685 = vmax.f32 %v631, 0.0
    %v686 = vmax.f32 %v636, 0.0
    %v687 = vmax.f32 %v639, 0.0
    %v688 = vmax.f32 %v644, 0.0
    %v689 = vmax.f32 %v647, 0.0
    %v690 = vmax.f32 %v652, 0.0
    %v691 = vmax.f32 %v655, 0.0
    %v692 = vmax.f32 %v660, 0.0
    %v693 = vmax.f32 %v663, 0.0
    %v694 = vmax.f32 %v668, 0.0
    %v695 = vmax.f32 %v671, 0.0
    %v696 = vmax.f32 %v676, 0.0
    %v697 = vmax.f32 %v679, 0.0
    %v698 = vmax.f32 %v544, %v682
    %v699 = vmax.f32 %v545, %v683
    %v700 = vmax.f32 %v546, %v684
    %v701 = vmax.f32 %v547, %v685
    %v702 = vmax.f32 %v548, %v686
    %v703 = vmax.f32 %v549, %v687
    %v704 = vmax.f32 %v550, %v688
    %v705 = vmax.f32 %v551, %v689
    %v706 = vmax.f32 %v552, %v690
    %v707 = vmax.f32 %v553, %v691
    %v708 = vmax.f32 %v554, %v692
    %v709 = vmax.f32 %v555, %v693
    %v710 = vmax.f32 %v556, %v694
    %v711 = vmax.f32 %v557, %v695
    %v712 = vmax.f32 %v558, %v696
    %v713 = vmax.f32 %v559, %v697
    %v714 = vpack.c.bf16 %v699, %v698
    %v715 = vpack.c.bf16 %v701, %v700
    %v716 = vpack.c.bf16 %v703, %v702
    %v717 = vpack.c.bf16 %v705, %v704
    %v718 = vpack.c.bf16 %v707, %v706
    %v719 = vpack.c.bf16 %v709, %v708
    %v720 = vpack.c.bf16 %v711, %v710
    %v721 = vpack.c.bf16 %v713, %v712
    %v730 = vunpack.c.l.b16 %v714
    %v731 = vunpack.c.h.b16 %v714
    %v732 = vunpack.c.l.b16 %v715
    %v733 = vunpack.c.h.b16 %v715
    %v734 = vunpack.c.l.b16 %v716
    %v735 = vunpack.c.h.b16 %v716
    %v736 = vunpack.c.l.b16 %v717
    %v737 = vunpack.c.h.b16 %v717
    %v738 = vunpack.c.l.b16 %v718
    %v739 = vunpack.c.h.b16 %v718
    %v740 = vunpack.c.l.b16 %v719
    %v741 = vunpack.c.h.b16 %v719
    %v742 = vunpack.c.l.b16 %v720
    %v743 = vunpack.c.h.b16 %v720
    %v744 = vunpack.c.l.b16 %v721
    %v745 = vunpack.c.h.b16 %v721
    %v746 = vpack.c.b16 %v730, %v730
    %v747 = vpack.c.b16 %v731, %v731
    %v748 = vpack.c.b16 %v732, %v732
    %v749 = vpack.c.b16 %v733, %v733
    %v750 = vpack.c.b16 %v734, %v734
    %v751 = vpack.c.b16 %v735, %v735
    %v752 = vpack.c.b16 %v736, %v736
    %v753 = vpack.c.b16 %v737, %v737
    %v754 = vpack.c.b16 %v738, %v738
    %v755 = vpack.c.b16 %v739, %v739
    %v756 = vpack.c.b16 %v740, %v740
    %v757 = vpack.c.b16 %v741, %v741
    %v758 = vpack.c.b16 %v742, %v742
    %v759 = vpack.c.b16 %v743, %v743
    %v760 = vpack.c.b16 %v744, %v744
    %v761 = vpack.c.b16 %v745, %v745
    %vm778 = vcmask 257024
    %779 = vst.msk [vmem:[%s3] sm:$0xf] %vm778, %v746
    %780 = vst.msk [vmem:[%s3 + $0x4] sm:$0xf] %vm778, %v747
    %781 = vst.msk [vmem:[%s3 + $0x8] sm:$0xf] %vm778, %v748
    %782 = vst.msk [vmem:[%s3 + $0xc] sm:$0xf] %vm778, %v749
    %783 = vst.msk [vmem:[%s3 + $0x10] sm:$0xf] %vm778, %v750
    %784 = vst.msk [vmem:[%s3 + $0x14] sm:$0xf] %vm778, %v751
    %785 = vst.msk [vmem:[%s3 + $0x18] sm:$0xf] %vm778, %v752
    %786 = vst.msk [vmem:[%s3 + $0x1c] sm:$0xf] %vm778, %v753
    %787 = vst.msk [vmem:[%s3 + $0x20] sm:$0xf] %vm778, %v754
    %788 = vst.msk [vmem:[%s3 + $0x24] sm:$0xf] %vm778, %v755
    %789 = vst.msk [vmem:[%s3 + $0x28] sm:$0xf] %vm778, %v756
    %790 = vst.msk [vmem:[%s3 + $0x2c] sm:$0xf] %vm778, %v757
    %791 = vst.msk [vmem:[%s3 + $0x30] sm:$0xf] %vm778, %v758
    %792 = vst.msk [vmem:[%s3 + $0x34] sm:$0xf] %vm778, %v759
    %793 = vst.msk [vmem:[%s3 + $0x38] sm:$0xf] %vm778, %v760
    %794 = vst.msk [vmem:[%s3 + $0x3c] sm:$0xf] %vm778, %v761
    // Predicated region
    $region18: #{vae_forward.9} parent=1 // pred_check
      _
    $region19: #{vae_forward.9} parent=1 // pred_check_branch
      %796 = sbr.rel (0) target = $region21
    $region20: #{vae_forward.9} parent=1 // pred_region
      _
    $region21: #{vae_forward.9} parent=1 // pred_fallthru
      _
    // Predicated region
    $region22: #{vae_forward.9} parent=1 // pred_check
      _
    $region23: #{vae_forward.9} parent=1 // pred_check_branch
      %798 = sbr.rel (0) target = $region25
    $region24: #{vae_forward.9} parent=1 // pred_region
      _
    $region25: #{vae_forward.9} parent=1 // pred_fallthru
      _
    %799 = vsyncpa [#allocation3], 1

// kernel: vae_forward.10
$region0: #{vae_forward.10}
  #allocation0 [shape = 'u32[]', space=smem, size = 0x4, offset = 0x4, fixed_abs, tag = 'smem constant byte address 0x4 - core index']
  #allocation1 [shape = 'u32[144,128]{1,0:T(1,128)}', space=vmem, size = 0x12000, scoped, tag = 'internal scratch']
  %s0 = inlined_call_operand.vmem [shape: bf16[32,512], index: 0, kind: input, shape index: {}]
  %s1 = inlined_call_operand.vmem [shape: bf16[4,512,64], index: 1, kind: input, shape index: {}]
  %s2 = inlined_call_operand.vmem [shape: f32[1,64], index: 2, kind: input, shape index: {}]
  %s3 = inlined_call_operand.vmem [shape: bf16[32,64], index: 3, kind: output, shape index: {}]
  %s4 = sld [smem:[#allocation0]]
  $region22: #{vae_forward.10} parent=0
    _
  %s6 = ssub.s32 1, %s4
  %s7 = scalar_select 0, %s6, %s4
  // Predicated region
  $region2: #{vae_forward.10} parent=0 // pred_check
    _
  $region3: #{vae_forward.10} parent=0 // pred_check_branch
    %9 = sbr.rel (0) target = $region5
  $region4: #{vae_forward.10} parent=0 // pred_region
    _
  $region5: #{vae_forward.10} parent=0 // pred_fallthru
    _
  // Predicated region
  $region6: #{vae_forward.10} parent=0 // pred_check
    _
  $region7: #{vae_forward.10} parent=0 // pred_check_branch
    %11 = sbr.rel (0) target = $region9
  $region8: #{vae_forward.10} parent=0 // pred_region
    _
  $region9: #{vae_forward.10} parent=0 // pred_fallthru
    _
  // Predicated region
  $region10: #{vae_forward.10} parent=0 // pred_check
    _
  $region11: #{vae_forward.10} parent=0 // pred_check_branch
    %13 = sbr.rel (0) target = $region13
  $region12: #{vae_forward.10} parent=0 // pred_region
    _
  $region13: #{vae_forward.10} parent=0 // pred_fallthru
    _
  %v15 = vld [vmem:[%s0] sm:$0xff]
  %v16 = vld [vmem:[%s0 + $0x8] sm:$0xff]
  %v17 = vld [vmem:[%s0 + $0x10] sm:$0xff]
  %v18 = vld [vmem:[%s0 + $0x18] sm:$0xff]
  %v19 = vld [vmem:[%s0 + $0x20] sm:$0xff]
  %v20 = vld [vmem:[%s0 + $0x28] sm:$0xff]
  %v21 = vld [vmem:[%s0 + $0x30] sm:$0xff]
  %v22 = vld [vmem:[%s0 + $0x38] sm:$0xff]
  %v23 = vld [vmem:[%s2] sm:$0x1]
  %v24 = vld [vmem:[%s1] sm:$0xf]
  %v25 = vld [vmem:[%s1 + $0x4] sm:$0xf]
  %v26 = vld [vmem:[%s1 + $0x8] sm:$0xf]
  %v27 = vld [vmem:[%s1 + $0xc] sm:$0xf]
  %v28 = vld [vmem:[%s1 + $0x10] sm:$0xf]
  %v29 = vld [vmem:[%s1 + $0x14] sm:$0xf]
  %v30 = vld [vmem:[%s1 + $0x18] sm:$0xf]
  %v31 = vld [vmem:[%s1 + $0x1c] sm:$0xf]
  %v32 = vld [vmem:[%s1 + $0x20] sm:$0xf]
  %v33 = vld [vmem:[%s1 + $0x24] sm:$0xf]
  %v34 = vld [vmem:[%s1 + $0x28] sm:$0xf]
  %v35 = vld [vmem:[%s1 + $0x2c] sm:$0xf]
  %v36 = vld [vmem:[%s1 + $0x30] sm:$0xf]
  %v37 = vld [vmem:[%s1 + $0x34] sm:$0xf]
  %v38 = vld [vmem:[%s1 + $0x38] sm:$0xf]
  %v39 = vld [vmem:[%s1 + $0x3c] sm:$0xf]
  %v40 = vld [vmem:[%s1 + $0x40] sm:$0xf]
  %v41 = vld [vmem:[%s1 + $0x44] sm:$0xf]
  %v42 = vld [vmem:[%s1 + $0x48] sm:$0xf]
  %v43 = vld [vmem:[%s1 + $0x4c] sm:$0xf]
  %v44 = vld [vmem:[%s1 + $0x50] sm:$0xf]
  %v45 = vld [vmem:[%s1 + $0x54] sm:$0xf]
  %v46 = vld [vmem:[%s1 + $0x58] sm:$0xf]
  %v47 = vld [vmem:[%s1 + $0x5c] sm:$0xf]
  %v48 = vld [vmem:[%s1 + $0x60] sm:$0xf]
  %v49 = vld [vmem:[%s1 + $0x64] sm:$0xf]
  %v50 = vld [vmem:[%s1 + $0x68] sm:$0xf]
  %v51 = vld [vmem:[%s1 + $0x6c] sm:$0xf]
  %v52 = vld [vmem:[%s1 + $0x70] sm:$0xf]
  %v53 = vld [vmem:[%s1 + $0x74] sm:$0xf]
  %v54 = vld [vmem:[%s1 + $0x78] sm:$0xf]
  %v55 = vld [vmem:[%s1 + $0x7c] sm:$0xf]
  %v56 = vld [vmem:[%s1 + $0x80] sm:$0xf]
  %v57 = vld [vmem:[%s1 + $0x84] sm:$0xf]
  %v58 = vld [vmem:[%s1 + $0x88] sm:$0xf]
  %v59 = vld [vmem:[%s1 + $0x8c] sm:$0xf]
  %v60 = vld [vmem:[%s1 + $0x90] sm:$0xf]
  %v61 = vld [vmem:[%s1 + $0x94] sm:$0xf]
  %v62 = vld [vmem:[%s1 + $0x98] sm:$0xf]
  %v63 = vld [vmem:[%s1 + $0x9c] sm:$0xf]
  %v64 = vld [vmem:[%s1 + $0xa0] sm:$0xf]
  %v65 = vld [vmem:[%s1 + $0xa4] sm:$0xf]
  %v66 = vld [vmem:[%s1 + $0xa8] sm:$0xf]
  %v67 = vld [vmem:[%s1 + $0xac] sm:$0xf]
  %v68 = vld [vmem:[%s1 + $0xb0] sm:$0xf]
  %v69 = vld [vmem:[%s1 + $0xb4] sm:$0xf]
  %v70 = vld [vmem:[%s1 + $0xb8] sm:$0xf]
  %v71 = vld [vmem:[%s1 + $0xbc] sm:$0xf]
  %v72 = vld [vmem:[%s1 + $0xc0] sm:$0xf]
  %v73 = vld [vmem:[%s1 + $0xc4] sm:$0xf]
  %v74 = vld [vmem:[%s1 + $0xc8] sm:$0xf]
  %v75 = vld [vmem:[%s1 + $0xcc] sm:$0xf]
  %v76 = vld [vmem:[%s1 + $0xd0] sm:$0xf]
  %v77 = vld [vmem:[%s1 + $0xd4] sm:$0xf]
  %v78 = vld [vmem:[%s1 + $0xd8] sm:$0xf]
  %v79 = vld [vmem:[%s1 + $0xdc] sm:$0xf]
  %v80 = vld [vmem:[%s1 + $0xe0] sm:$0xf]
  %v81 = vld [vmem:[%s1 + $0xe4] sm:$0xf]
  %v82 = vld [vmem:[%s1 + $0xe8] sm:$0xf]
  %v83 = vld [vmem:[%s1 + $0xec] sm:$0xf]
  %v84 = vld [vmem:[%s1 + $0xf0] sm:$0xf]
  %v85 = vld [vmem:[%s1 + $0xf4] sm:$0xf]
  %v86 = vld [vmem:[%s1 + $0xf8] sm:$0xf]
  %v87 = vld [vmem:[%s1 + $0xfc] sm:$0xf]
  %v89 = vlaneseq
  %v90 = vshrl.u32 %v89, 7
  %v91 = vsub.s32 0, %v90
  %v92 = vrot.slane %v23, %v91
  %v102 = vunpack.c.l.b16 %v15
  %v103 = vunpack.c.h.b16 %v15
  %v104 = vunpack.c.l.b16 %v16
  %v105 = vunpack.c.h.b16 %v16
  %v106 = vunpack.c.l.b16 %v17
  %v107 = vunpack.c.h.b16 %v17
  %v108 = vunpack.c.l.b16 %v18
  %v109 = vunpack.c.h.b16 %v18
  %v110 = vunpack.c.l.b16 %v19
  %v111 = vunpack.c.h.b16 %v19
  %v112 = vunpack.c.l.b16 %v20
  %v113 = vunpack.c.h.b16 %v20
  %v114 = vunpack.c.l.b16 %v21
  %v115 = vunpack.c.h.b16 %v21
  %v116 = vunpack.c.l.b16 %v22
  %v117 = vunpack.c.h.b16 %v22
  %v118 = vpack.c.b16 %v106, %v102
  %v119 = vpack.c.b16 %v107, %v103
  %v120 = vpack.c.b16 %v108, %v104
  %v121 = vpack.c.b16 %v109, %v105
  %v122 = vpack.c.b16 %v114, %v110
  %v123 = vpack.c.b16 %v115, %v111
  %v124 = vpack.c.b16 %v116, %v112
  %v125 = vpack.c.b16 %v117, %v113
  %v198 = vunpack.c.l.b16 %v24
  %v199 = vunpack.c.l.b16 %v25
  %v200 = vunpack.c.l.b16 %v26
  %v201 = vunpack.c.l.b16 %v27
  %v202 = vunpack.c.l.b16 %v28
  %v203 = vunpack.c.l.b16 %v29
  %v204 = vunpack.c.l.b16 %v30
  %v205 = vunpack.c.l.b16 %v31
  %v206 = vunpack.c.l.b16 %v32
  %v207 = vunpack.c.l.b16 %v33
  %v208 = vunpack.c.l.b16 %v34
  %v209 = vunpack.c.l.b16 %v35
  %v210 = vunpack.c.l.b16 %v36
  %v211 = vunpack.c.l.b16 %v37
  %v212 = vunpack.c.l.b16 %v38
  %v213 = vunpack.c.l.b16 %v39
  %v214 = vunpack.c.l.b16 %v40
  %v215 = vunpack.c.l.b16 %v41
  %v216 = vunpack.c.l.b16 %v42
  %v217 = vunpack.c.l.b16 %v43
  %v218 = vunpack.c.l.b16 %v44
  %v219 = vunpack.c.l.b16 %v45
  %v220 = vunpack.c.l.b16 %v46
  %v221 = vunpack.c.l.b16 %v47
  %v222 = vunpack.c.l.b16 %v48
  %v223 = vunpack.c.l.b16 %v49
  %v224 = vunpack.c.l.b16 %v50
  %v225 = vunpack.c.l.b16 %v51
  %v226 = vunpack.c.l.b16 %v52
  %v227 = vunpack.c.l.b16 %v53
  %v228 = vunpack.c.l.b16 %v54
  %v229 = vunpack.c.l.b16 %v55
  %v230 = vunpack.c.l.b16 %v56
  %v231 = vunpack.c.l.b16 %v57
  %v232 = vunpack.c.l.b16 %v58
  %v233 = vunpack.c.l.b16 %v59
  %v234 = vunpack.c.l.b16 %v60
  %v235 = vunpack.c.l.b16 %v61
  %v236 = vunpack.c.l.b16 %v62
  %v237 = vunpack.c.l.b16 %v63
  %v238 = vunpack.c.l.b16 %v64
  %v239 = vunpack.c.l.b16 %v65
  %v240 = vunpack.c.l.b16 %v66
  %v241 = vunpack.c.l.b16 %v67
  %v242 = vunpack.c.l.b16 %v68
  %v243 = vunpack.c.l.b16 %v69
  %v244 = vunpack.c.l.b16 %v70
  %v245 = vunpack.c.l.b16 %v71
  %v246 = vunpack.c.l.b16 %v72
  %v247 = vunpack.c.l.b16 %v73
  %v248 = vunpack.c.l.b16 %v74
  %v249 = vunpack.c.l.b16 %v75
  %v250 = vunpack.c.l.b16 %v76
  %v251 = vunpack.c.l.b16 %v77
  %v252 = vunpack.c.l.b16 %v78
  %v253 = vunpack.c.l.b16 %v79
  %v254 = vunpack.c.l.b16 %v80
  %v255 = vunpack.c.l.b16 %v81
  %v256 = vunpack.c.l.b16 %v82
  %v257 = vunpack.c.l.b16 %v83
  %v258 = vunpack.c.l.b16 %v84
  %v259 = vunpack.c.l.b16 %v85
  %v260 = vunpack.c.l.b16 %v86
  %v261 = vunpack.c.l.b16 %v87
  %v262 = vpack.c.b16 %v199, %v198
  %v263 = vpack.c.b16 %v201, %v200
  %v264 = vpack.c.b16 %v203, %v202
  %v265 = vpack.c.b16 %v205, %v204
  %v266 = vpack.c.b16 %v207, %v206
  %v267 = vpack.c.b16 %v209, %v208
  %v268 = vpack.c.b16 %v211, %v210
  %v269 = vpack.c.b16 %v213, %v212
  %v270 = vpack.c.b16 %v215, %v214
  %v271 = vpack.c.b16 %v217, %v216
  %v272 = vpack.c.b16 %v219, %v218
  %v273 = vpack.c.b16 %v221, %v220
  %v274 = vpack.c.b16 %v223, %v222
  %v275 = vpack.c.b16 %v225, %v224
  %v276 = vpack.c.b16 %v227, %v226
  %v277 = vpack.c.b16 %v229, %v228
  %v278 = vpack.c.b16 %v231, %v230
  %v279 = vpack.c.b16 %v233, %v232
  %v280 = vpack.c.b16 %v235, %v234
  %v281 = vpack.c.b16 %v237, %v236
  %v282 = vpack.c.b16 %v239, %v238
  %v283 = vpack.c.b16 %v241, %v240
  %v284 = vpack.c.b16 %v243, %v242
  %v285 = vpack.c.b16 %v245, %v244
  %v286 = vpack.c.b16 %v247, %v246
  %v287 = vpack.c.b16 %v249, %v248
  %v288 = vpack.c.b16 %v251, %v250
  %v289 = vpack.c.b16 %v253, %v252
  %v290 = vpack.c.b16 %v255, %v254
  %v291 = vpack.c.b16 %v257, %v256
  %v292 = vpack.c.b16 %v259, %v258
  %v293 = vpack.c.b16 %v261, %v260
  %326 = vmatprep.subr.bf16.mxu0 0
  %327 = vmatpush1.bf16.msra.mxu0 %v262
  %328 = vmatprep.subr.bf16.mxu0 0
  %329 = vmatpush1.bf16.msra.mxu0 %v263
  %330 = vmatprep.subr.bf16.mxu0 0
  %331 = vmatpush1.bf16.msra.mxu0 %v264
  %332 = vmatprep.subr.bf16.mxu0 0
  %333 = vmatpush1.bf16.msra.mxu0 %v265
  %334 = vmatprep.subr.bf16.mxu0 0
  %335 = vmatpush1.bf16.msra.mxu0 %v266
  %336 = vmatprep.subr.bf16.mxu0 0
  %337 = vmatpush1.bf16.msra.mxu0 %v267
  %338 = vmatprep.subr.bf16.mxu0 0
  %339 = vmatpush1.bf16.msra.mxu0 %v268
  %340 = vmatprep.subr.bf16.mxu0 0
  %341 = vmatpush1.bf16.msra.mxu0 %v269
  %342 = vmatprep.subr.bf16.mxu0 0
  %343 = vmatpush1.bf16.msra.mxu0 %v270
  %344 = vmatprep.subr.bf16.mxu0 0
  %345 = vmatpush1.bf16.msra.mxu0 %v271
  %346 = vmatprep.subr.bf16.mxu0 0
  %347 = vmatpush1.bf16.msra.mxu0 %v272
  %348 = vmatprep.subr.bf16.mxu0 0
  %349 = vmatpush1.bf16.msra.mxu0 %v273
  %350 = vmatprep.subr.bf16.mxu0 0
  %351 = vmatpush1.bf16.msra.mxu0 %v274
  %352 = vmatprep.subr.bf16.mxu0 0
  %353 = vmatpush1.bf16.msra.mxu0 %v275
  %354 = vmatprep.subr.bf16.mxu0 0
  %355 = vmatpush1.bf16.msra.mxu0 %v276
  %356 = vmatprep.subr.bf16.mxu0 0
  %357 = vmatpush1.bf16.msra.mxu0 %v277
  %358 = vmatprep.mubr.bf16.mxu0 %v119
  %359 = vmatmul.mubr.bf16.gmra.mrb[0].mxu0 %v118
  %v360 = vpop.f32.mrb[0].mxu0
  %v361 = vadd.f32 %v92, %v360
  %v362 = vpop.f32.mrb[0].mxu0
  %v363 = vpop.f32.mrb[0].mxu0
  %v364 = vadd.f32 %v92, %v363
  %v365 = vpop.f32.mrb[0].mxu0
  %366 = vmatprep.mubr.bf16.mxu0 %v123
  %367 = vmatmul.mubr.bf16.gmra.mrb[0].mxu0 %v122
  %v368 = vpop.f32.mrb[0].mxu0
  %v369 = vadd.f32 %v92, %v368
  %v370 = vpop.f32.mrb[0].mxu0
  %v371 = vpop.f32.mrb[0].mxu0
  %v372 = vadd.f32 %v92, %v371
  %v373 = vpop.f32.mrb[0].mxu0
  %374 = vdwg.mxu0
  %375 = vmatprep.subr.bf16.mxu0 0
  %376 = vmatpush1.bf16.msra.mxu0 %v278
  %377 = vmatprep.subr.bf16.mxu0 0
  %378 = vmatpush1.bf16.msra.mxu0 %v279
  %379 = vmatprep.subr.bf16.mxu0 0
  %380 = vmatpush1.bf16.msra.mxu0 %v280
  %381 = vmatprep.subr.bf16.mxu0 0
  %382 = vmatpush1.bf16.msra.mxu0 %v281
  %383 = vmatprep.subr.bf16.mxu0 0
  %384 = vmatpush1.bf16.msra.mxu0 %v282
  %385 = vmatprep.subr.bf16.mxu0 0
  %386 = vmatpush1.bf16.msra.mxu0 %v283
  %387 = vmatprep.subr.bf16.mxu0 0
  %388 = vmatpush1.bf16.msra.mxu0 %v284
  %389 = vmatprep.subr.bf16.mxu0 0
  %390 = vmatpush1.bf16.msra.mxu0 %v285
  %391 = vmatprep.subr.bf16.mxu0 0
  %392 = vmatpush1.bf16.msra.mxu0 %v286
  %393 = vmatprep.subr.bf16.mxu0 0
  %394 = vmatpush1.bf16.msra.mxu0 %v287
  %395 = vmatprep.subr.bf16.mxu0 0
  %396 = vmatpush1.bf16.msra.mxu0 %v288
  %397 = vmatprep.subr.bf16.mxu0 0
  %398 = vmatpush1.bf16.msra.mxu0 %v289
  %399 = vmatprep.subr.bf16.mxu0 0
  %400 = vmatpush1.bf16.msra.mxu0 %v290
  %401 = vmatprep.subr.bf16.mxu0 0
  %402 = vmatpush1.bf16.msra.mxu0 %v291
  %403 = vmatprep.subr.bf16.mxu0 0
  %404 = vmatpush1.bf16.msra.mxu0 %v292
  %405 = vmatprep.subr.bf16.mxu0 0
  %406 = vmatpush1.bf16.msra.mxu0 %v293
  %407 = vmatprep.mubr.bf16.mxu0 %v121
  %408 = vmatmul.mubr.bf16.gmra.mrb[0].mxu0 %v120
  %v409 = vpop.f32.mrb[0].mxu0
  %v410 = vadd.f32 %v361, %v409
  %v411 = vpop.f32.mrb[0].mxu0
  %v412 = vpop.f32.mrb[0].mxu0
  %v413 = vadd.f32 %v364, %v412
  %v414 = vpop.f32.mrb[0].mxu0
  %415 = vmatprep.mubr.bf16.mxu0 %v125
  %416 = vmatmul.mubr.bf16.gmra.mrb[0].mxu0 %v124
  %v417 = vpop.f32.mrb[0].mxu0
  %v418 = vadd.f32 %v369, %v417
  %v419 = vpop.f32.mrb[0].mxu0
  %v420 = vpop.f32.mrb[0].mxu0
  %v421 = vadd.f32 %v372, %v420
  %v422 = vpop.f32.mrb[0].mxu0
  %423 = vdwg.mxu0
  %v424 = vmax.f32 %v410, 0.0
  %v425 = vmax.f32 %v413, 0.0
  %v426 = vmax.f32 %v418, 0.0
  %v427 = vmax.f32 %v421, 0.0
  %s428 = scalar_lea.vmem %s1, 256
  %v429 = vld [vmem:[%s428] sm:$0xf]
  %v430 = vld [vmem:[%s428 + $0x4] sm:$0xf]
  %v431 = vld [vmem:[%s428 + $0x8] sm:$0xf]
  %v432 = vld [vmem:[%s428 + $0xc] sm:$0xf]
  %v433 = vld [vmem:[%s428 + $0x10] sm:$0xf]
  %v434 = vld [vmem:[%s428 + $0x14] sm:$0xf]
  %v435 = vld [vmem:[%s428 + $0x18] sm:$0xf]
  %v436 = vld [vmem:[%s428 + $0x1c] sm:$0xf]
  %v437 = vld [vmem:[%s428 + $0x20] sm:$0xf]
  %v438 = vld [vmem:[%s428 + $0x24] sm:$0xf]
  %v439 = vld [vmem:[%s428 + $0x28] sm:$0xf]
  %v440 = vld [vmem:[%s428 + $0x2c] sm:$0xf]
  %v441 = vld [vmem:[%s428 + $0x30] sm:$0xf]
  %v442 = vld [vmem:[%s428 + $0x34] sm:$0xf]
  %v443 = vld [vmem:[%s428 + $0x38] sm:$0xf]
  %v444 = vld [vmem:[%s428 + $0x3c] sm:$0xf]
  %v445 = vld [vmem:[%s428 + $0x40] sm:$0xf]
  %v446 = vld [vmem:[%s428 + $0x44] sm:$0xf]
  %v447 = vld [vmem:[%s428 + $0x48] sm:$0xf]
  %v448 = vld [vmem:[%s428 + $0x4c] sm:$0xf]
  %v449 = vld [vmem:[%s428 + $0x50] sm:$0xf]
  %v450 = vld [vmem:[%s428 + $0x54] sm:$0xf]
  %v451 = vld [vmem:[%s428 + $0x58] sm:$0xf]
  %v452 = vld [vmem:[%s428 + $0x5c] sm:$0xf]
  %v453 = vld [vmem:[%s428 + $0x60] sm:$0xf]
  %v454 = vld [vmem:[%s428 + $0x64] sm:$0xf]
  %v455 = vld [vmem:[%s428 + $0x68] sm:$0xf]
  %v456 = vld [vmem:[%s428 + $0x6c] sm:$0xf]
  %v457 = vld [vmem:[%s428 + $0x70] sm:$0xf]
  %v458 = vld [vmem:[%s428 + $0x74] sm:$0xf]
  %v459 = vld [vmem:[%s428 + $0x78] sm:$0xf]
  %v460 = vld [vmem:[%s428 + $0x7c] sm:$0xf]
  %v461 = vld [vmem:[%s428 + $0x80] sm:$0xf]
  %v462 = vld [vmem:[%s428 + $0x84] sm:$0xf]
  %v463 = vld [vmem:[%s428 + $0x88] sm:$0xf]
  %v464 = vld [vmem:[%s428 + $0x8c] sm:$0xf]
  %v465 = vld [vmem:[%s428 + $0x90] sm:$0xf]
  %v466 = vld [vmem:[%s428 + $0x94] sm:$0xf]
  %v467 = vld [vmem:[%s428 + $0x98] sm:$0xf]
  %v468 = vld [vmem:[%s428 + $0x9c] sm:$0xf]
  %v469 = vld [vmem:[%s428 + $0xa0] sm:$0xf]
  %v470 = vld [vmem:[%s428 + $0xa4] sm:$0xf]
  %v471 = vld [vmem:[%s428 + $0xa8] sm:$0xf]
  %v472 = vld [vmem:[%s428 + $0xac] sm:$0xf]
  %v473 = vld [vmem:[%s428 + $0xb0] sm:$0xf]
  %v474 = vld [vmem:[%s428 + $0xb4] sm:$0xf]
  %v475 = vld [vmem:[%s428 + $0xb8] sm:$0xf]
  %v476 = vld [vmem:[%s428 + $0xbc] sm:$0xf]
  %v477 = vld [vmem:[%s428 + $0xc0] sm:$0xf]
  %v478 = vld [vmem:[%s428 + $0xc4] sm:$0xf]
  %v479 = vld [vmem:[%s428 + $0xc8] sm:$0xf]
  %v480 = vld [vmem:[%s428 + $0xcc] sm:$0xf]
  %v481 = vld [vmem:[%s428 + $0xd0] sm:$0xf]
  %v482 = vld [vmem:[%s428 + $0xd4] sm:$0xf]
  %v483 = vld [vmem:[%s428 + $0xd8] sm:$0xf]
  %v484 = vld [vmem:[%s428 + $0xdc] sm:$0xf]
  %v485 = vld [vmem:[%s428 + $0xe0] sm:$0xf]
  %v486 = vld [vmem:[%s428 + $0xe4] sm:$0xf]
  %v487 = vld [vmem:[%s428 + $0xe8] sm:$0xf]
  %v488 = vld [vmem:[%s428 + $0xec] sm:$0xf]
  %v489 = vld [vmem:[%s428 + $0xf0] sm:$0xf]
  %v490 = vld [vmem:[%s428 + $0xf4] sm:$0xf]
  %v491 = vld [vmem:[%s428 + $0xf8] sm:$0xf]
  %v492 = vld [vmem:[%s428 + $0xfc] sm:$0xf]
  %v557 = vunpack.c.l.b16 %v429
  %v558 = vunpack.c.l.b16 %v430
  %v559 = vunpack.c.l.b16 %v431
  %v560 = vunpack.c.l.b16 %v432
  %v561 = vunpack.c.l.b16 %v433
  %v562 = vunpack.c.l.b16 %v434
  %v563 = vunpack.c.l.b16 %v435
  %v564 = vunpack.c.l.b16 %v436
  %v565 = vunpack.c.l.b16 %v437
  %v566 = vunpack.c.l.b16 %v438
  %v567 = vunpack.c.l.b16 %v439
  %v568 = vunpack.c.l.b16 %v440
  %v569 = vunpack.c.l.b16 %v441
  %v570 = vunpack.c.l.b16 %v442
  %v571 = vunpack.c.l.b16 %v443
  %v572 = vunpack.c.l.b16 %v444
  %v573 = vunpack.c.l.b16 %v445
  %v574 = vunpack.c.l.b16 %v446
  %v575 = vunpack.c.l.b16 %v447
  %v576 = vunpack.c.l.b16 %v448
  %v577 = vunpack.c.l.b16 %v449
  %v578 = vunpack.c.l.b16 %v450
  %v579 = vunpack.c.l.b16 %v451
  %v580 = vunpack.c.l.b16 %v452
  %v581 = vunpack.c.l.b16 %v453
  %v582 = vunpack.c.l.b16 %v454
  %v583 = vunpack.c.l.b16 %v455
  %v584 = vunpack.c.l.b16 %v456
  %v585 = vunpack.c.l.b16 %v457
  %v586 = vunpack.c.l.b16 %v458
  %v587 = vunpack.c.l.b16 %v459
  %v588 = vunpack.c.l.b16 %v460
  %v589 = vunpack.c.l.b16 %v461
  %v590 = vunpack.c.l.b16 %v462
  %v591 = vunpack.c.l.b16 %v463
  %v592 = vunpack.c.l.b16 %v464
  %v593 = vunpack.c.l.b16 %v465
  %v594 = vunpack.c.l.b16 %v466
  %v595 = vunpack.c.l.b16 %v467
  %v596 = vunpack.c.l.b16 %v468
  %v597 = vunpack.c.l.b16 %v469
  %v598 = vunpack.c.l.b16 %v470
  %v599 = vunpack.c.l.b16 %v471
  %v600 = vunpack.c.l.b16 %v472
  %v601 = vunpack.c.l.b16 %v473
  %v602 = vunpack.c.l.b16 %v474
  %v603 = vunpack.c.l.b16 %v475
  %v604 = vunpack.c.l.b16 %v476
  %v605 = vunpack.c.l.b16 %v477
  %v606 = vunpack.c.l.b16 %v478
  %v607 = vunpack.c.l.b16 %v479
  %v608 = vunpack.c.l.b16 %v480
  %v609 = vunpack.c.l.b16 %v481
  %v610 = vunpack.c.l.b16 %v482
  %v611 = vunpack.c.l.b16 %v483
  %v612 = vunpack.c.l.b16 %v484
  %v613 = vunpack.c.l.b16 %v485
  %v614 = vunpack.c.l.b16 %v486
  %v615 = vunpack.c.l.b16 %v487
  %v616 = vunpack.c.l.b16 %v488
  %v617 = vunpack.c.l.b16 %v489
  %v618 = vunpack.c.l.b16 %v490
  %v619 = vunpack.c.l.b16 %v491
  %v620 = vunpack.c.l.b16 %v492
  %v621 = vpack.c.b16 %v558, %v557
  %v622 = vpack.c.b16 %v560, %v559
  %v623 = vpack.c.b16 %v562, %v561
  %v624 = vpack.c.b16 %v564, %v563
  %v625 = vpack.c.b16 %v566, %v565
  %v626 = vpack.c.b16 %v568, %v567
  %v627 = vpack.c.b16 %v570, %v569
  %v628 = vpack.c.b16 %v572, %v571
  %v629 = vpack.c.b16 %v574, %v573
  %v630 = vpack.c.b16 %v576, %v575
  %v631 = vpack.c.b16 %v578, %v577
  %v632 = vpack.c.b16 %v580, %v579
  %v633 = vpack.c.b16 %v582, %v581
  %v634 = vpack.c.b16 %v584, %v583
  %v635 = vpack.c.b16 %v586, %v585
  %v636 = vpack.c.b16 %v588, %v587
  %v637 = vpack.c.b16 %v590, %v589
  %v638 = vpack.c.b16 %v592, %v591
  %v639 = vpack.c.b16 %v594, %v593
  %v640 = vpack.c.b16 %v596, %v595
  %v641 = vpack.c.b16 %v598, %v597
  %v642 = vpack.c.b16 %v600, %v599
  %v643 = vpack.c.b16 %v602, %v601
  %v644 = vpack.c.b16 %v604, %v603
  %v645 = vpack.c.b16 %v606, %v605
  %v646 = vpack.c.b16 %v608, %v607
  %v647 = vpack.c.b16 %v610, %v609
  %v648 = vpack.c.b16 %v612, %v611
  %v649 = vpack.c.b16 %v614, %v613
  %v650 = vpack.c.b16 %v616, %v615
  %v651 = vpack.c.b16 %v618, %v617
  %v652 = vpack.c.b16 %v620, %v619
  %685 = vmatprep.subr.bf16.mxu0 0
  %686 = vmatpush1.bf16.msra.mxu0 %v621
  %687 = vmatprep.subr.bf16.mxu0 0
  %688 = vmatpush1.bf16.msra.mxu0 %v622
  %689 = vmatprep.subr.bf16.mxu0 0
  %690 = vmatpush1.bf16.msra.mxu0 %v623
  %691 = vmatprep.subr.bf16.mxu0 0
  %692 = vmatpush1.bf16.msra.mxu0 %v624
  %693 = vmatprep.subr.bf16.mxu0 0
  %694 = vmatpush1.bf16.msra.mxu0 %v625
  %695 = vmatprep.subr.bf16.mxu0 0
  %696 = vmatpush1.bf16.msra.mxu0 %v626
  %697 = vmatprep.subr.bf16.mxu0 0
  %698 = vmatpush1.bf16.msra.mxu0 %v627
  %699 = vmatprep.subr.bf16.mxu0 0
  %700 = vmatpush1.bf16.msra.mxu0 %v628
  %701 = vmatprep.subr.bf16.mxu0 0
  %702 = vmatpush1.bf16.msra.mxu0 %v629
  %703 = vmatprep.subr.bf16.mxu0 0
  %704 = vmatpush1.bf16.msra.mxu0 %v630
  %705 = vmatprep.subr.bf16.mxu0 0
  %706 = vmatpush1.bf16.msra.mxu0 %v631
  %707 = vmatprep.subr.bf16.mxu0 0
  %708 = vmatpush1.bf16.msra.mxu0 %v632
  %709 = vmatprep.subr.bf16.mxu0 0
  %710 = vmatpush1.bf16.msra.mxu0 %v633
  %711 = vmatprep.subr.bf16.mxu0 0
  %712 = vmatpush1.bf16.msra.mxu0 %v634
  %713 = vmatprep.subr.bf16.mxu0 0
  %714 = vmatpush1.bf16.msra.mxu0 %v635
  %715 = vmatprep.subr.bf16.mxu0 0
  %716 = vmatpush1.bf16.msra.mxu0 %v636
  %717 = vmatprep.mubr.bf16.mxu0 %v119
  %718 = vmatmul.mubr.bf16.gmra.mrb[0].mxu0 %v118
  %v719 = vpop.f32.mrb[0].mxu0
  %v720 = vadd.f32 %v92, %v719
  %v721 = vpop.f32.mrb[0].mxu0
  %v722 = vpop.f32.mrb[0].mxu0
  %v723 = vadd.f32 %v92, %v722
  %v724 = vpop.f32.mrb[0].mxu0
  %725 = vmatprep.mubr.bf16.mxu0 %v123
  %726 = vmatmul.mubr.bf16.gmra.mrb[0].mxu0 %v122
  %v727 = vpop.f32.mrb[0].mxu0
  %v728 = vadd.f32 %v92, %v727
  %v729 = vpop.f32.mrb[0].mxu0
  %v730 = vpop.f32.mrb[0].mxu0
  %v731 = vadd.f32 %v92, %v730
  %v732 = vpop.f32.mrb[0].mxu0
  %733 = vdwg.mxu0
  %734 = vmatprep.subr.bf16.mxu0 0
  %735 = vmatpush1.bf16.msra.mxu0 %v637
  %736 = vmatprep.subr.bf16.mxu0 0
  %737 = vmatpush1.bf16.msra.mxu0 %v638
  %738 = vmatprep.subr.bf16.mxu0 0
  %739 = vmatpush1.bf16.msra.mxu0 %v639
  %740 = vmatprep.subr.bf16.mxu0 0
  %741 = vmatpush1.bf16.msra.mxu0 %v640
  %742 = vmatprep.subr.bf16.mxu0 0
  %743 = vmatpush1.bf16.msra.mxu0 %v641
  %744 = vmatprep.subr.bf16.mxu0 0
  %745 = vmatpush1.bf16.msra.mxu0 %v642
  %746 = vmatprep.subr.bf16.mxu0 0
  %747 = vmatpush1.bf16.msra.mxu0 %v643
  %748 = vmatprep.subr.bf16.mxu0 0
  %749 = vmatpush1.bf16.msra.mxu0 %v644
  %750 = vmatprep.subr.bf16.mxu0 0
  %751 = vmatpush1.bf16.msra.mxu0 %v645
  %752 = vmatprep.subr.bf16.mxu0 0
  %753 = vmatpush1.bf16.msra.mxu0 %v646
  %754 = vmatprep.subr.bf16.mxu0 0
  %755 = vmatpush1.bf16.msra.mxu0 %v647
  %756 = vmatprep.subr.bf16.mxu0 0
  %757 = vmatpush1.bf16.msra.mxu0 %v648
  %758 = vmatprep.subr.bf16.mxu0 0
  %759 = vmatpush1.bf16.msra.mxu0 %v649
  %760 = vmatprep.subr.bf16.mxu0 0
  %761 = vmatpush1.bf16.msra.mxu0 %v650
  %762 = vmatprep.subr.bf16.mxu0 0
  %763 = vmatpush1.bf16.msra.mxu0 %v651
  %764 = vmatprep.subr.bf16.mxu0 0
  %765 = vmatpush1.bf16.msra.mxu0 %v652
  %766 = vmatprep.mubr.bf16.mxu0 %v121
  %767 = vmatmul.mubr.bf16.gmra.mrb[0].mxu0 %v120
  %v768 = vpop.f32.mrb[0].mxu0
  %v769 = vadd.f32 %v720, %v768
  %v770 = vpop.f32.mrb[0].mxu0
  %v771 = vpop.f32.mrb[0].mxu0
  %v772 = vadd.f32 %v723, %v771
  %v773 = vpop.f32.mrb[0].mxu0
  %774 = vmatprep.mubr.bf16.mxu0 %v125
  %775 = vmatmul.mubr.bf16.gmra.mrb[0].mxu0 %v124
  %v776 = vpop.f32.mrb[0].mxu0
  %v777 = vadd.f32 %v728, %v776
  %v778 = vpop.f32.mrb[0].mxu0
  %v779 = vpop.f32.mrb[0].mxu0
  %v780 = vadd.f32 %v731, %v779
  %v781 = vpop.f32.mrb[0].mxu0
  %782 = vdwg.mxu0
  %v783 = vmax.f32 %v769, 0.0
  %v784 = vmax.f32 %v772, 0.0
  %v785 = vmax.f32 %v777, 0.0
  %v786 = vmax.f32 %v780, 0.0
  %v787 = vmax.f32 %v424, %v783
  %v788 = vmax.f32 %v425, %v784
  %v789 = vmax.f32 %v426, %v785
  %v790 = vmax.f32 %v427, %v786
  %s791 = scalar_lea.vmem %s1, 512
  %v792 = vld [vmem:[%s791] sm:$0xf]
  %v793 = vld [vmem:[%s791 + $0x4] sm:$0xf]
  %v794 = vld [vmem:[%s791 + $0x8] sm:$0xf]
  %v795 = vld [vmem:[%s791 + $0xc] sm:$0xf]
  %v796 = vld [vmem:[%s791 + $0x10] sm:$0xf]
  %v797 = vld [vmem:[%s791 + $0x14] sm:$0xf]
  %v798 = vld [vmem:[%s791 + $0x18] sm:$0xf]
  %v799 = vld [vmem:[%s791 + $0x1c] sm:$0xf]
  %v800 = vld [vmem:[%s791 + $0x20] sm:$0xf]
  %v801 = vld [vmem:[%s791 + $0x24] sm:$0xf]
  %v802 = vld [vmem:[%s791 + $0x28] sm:$0xf]
  %v803 = vld [vmem:[%s791 + $0x2c] sm:$0xf]
  %v804 = vld [vmem:[%s791 + $0x30] sm:$0xf]
  %v805 = vld [vmem:[%s791 + $0x34] sm:$0xf]
  %v806 = vld [vmem:[%s791 + $0x38] sm:$0xf]
  %v807 = vld [vmem:[%s791 + $0x3c] sm:$0xf]
  %v808 = vld [vmem:[%s791 + $0x40] sm:$0xf]
  %v809 = vld [vmem:[%s791 + $0x44] sm:$0xf]
  %v810 = vld [vmem:[%s791 + $0x48] sm:$0xf]
  %v811 = vld [vmem:[%s791 + $0x4c] sm:$0xf]
  %v812 = vld [vmem:[%s791 + $0x50] sm:$0xf]
  %v813 = vld [vmem:[%s791 + $0x54] sm:$0xf]
  %v814 = vld [vmem:[%s791 + $0x58] sm:$0xf]
  %v815 = vld [vmem:[%s791 + $0x5c] sm:$0xf]
  %v816 = vld [vmem:[%s791 + $0x60] sm:$0xf]
  %v817 = vld [vmem:[%s791 + $0x64] sm:$0xf]
  %v818 = vld [vmem:[%s791 + $0x68] sm:$0xf]
  %v819 = vld [vmem:[%s791 + $0x6c] sm:$0xf]
  %v820 = vld [vmem:[%s791 + $0x70] sm:$0xf]
  %v821 = vld [vmem:[%s791 + $0x74] sm:$0xf]
  %v822 = vld [vmem:[%s791 + $0x78] sm:$0xf]
  %v823 = vld [vmem:[%s791 + $0x7c] sm:$0xf]
  %v824 = vld [vmem:[%s791 + $0x80] sm:$0xf]
  %v825 = vld [vmem:[%s791 + $0x84] sm:$0xf]
  %v826 = vld [vmem:[%s791 + $0x88] sm:$0xf]
  %v827 = vld [vmem:[%s791 + $0x8c] sm:$0xf]
  %v828 = vld [vmem:[%s791 + $0x90] sm:$0xf]
  %v829 = vld [vmem:[%s791 + $0x94] sm:$0xf]
  %v830 = vld [vmem:[%s791 + $0x98] sm:$0xf]
  %v831 = vld [vmem:[%s791 + $0x9c] sm:$0xf]
  %v832 = vld [vmem:[%s791 + $0xa0] sm:$0xf]
  %v833 = vld [vmem:[%s791 + $0xa4] sm:$0xf]
  %v834 = vld [vmem:[%s791 + $0xa8] sm:$0xf]
  %v835 = vld [vmem:[%s791 + $0xac] sm:$0xf]
  %v836 = vld [vmem:[%s791 + $0xb0] sm:$0xf]
  %v837 = vld [vmem:[%s791 + $0xb4] sm:$0xf]
  %v838 = vld [vmem:[%s791 + $0xb8] sm:$0xf]
  %v839 = vld [vmem:[%s791 + $0xbc] sm:$0xf]
  %v840 = vld [vmem:[%s791 + $0xc0] sm:$0xf]
  %v841 = vld [vmem:[%s791 + $0xc4] sm:$0xf]
  %v842 = vld [vmem:[%s791 + $0xc8] sm:$0xf]
  %v843 = vld [vmem:[%s791 + $0xcc] sm:$0xf]
  %v844 = vld [vmem:[%s791 + $0xd0] sm:$0xf]
  %v845 = vld [vmem:[%s791 + $0xd4] sm:$0xf]
  %v846 = vld [vmem:[%s791 + $0xd8] sm:$0xf]
  %v847 = vld [vmem:[%s791 + $0xdc] sm:$0xf]
  %v848 = vld [vmem:[%s791 + $0xe0] sm:$0xf]
  %v849 = vld [vmem:[%s791 + $0xe4] sm:$0xf]
  %v850 = vld [vmem:[%s791 + $0xe8] sm:$0xf]
  %v851 = vld [vmem:[%s791 + $0xec] sm:$0xf]
  %v852 = vld [vmem:[%s791 + $0xf0] sm:$0xf]
  %v853 = vld [vmem:[%s791 + $0xf4] sm:$0xf]
  %v854 = vld [vmem:[%s791 + $0xf8] sm:$0xf]
  %v855 = vld [vmem:[%s791 + $0xfc] sm:$0xf]
  %v920 = vunpack.c.l.b16 %v792
  %v921 = vunpack.c.l.b16 %v793
  %v922 = vunpack.c.l.b16 %v794
  %v923 = vunpack.c.l.b16 %v795
  %v924 = vunpack.c.l.b16 %v796
  %v925 = vunpack.c.l.b16 %v797
  %v926 = vunpack.c.l.b16 %v798
  %v927 = vunpack.c.l.b16 %v799
  %v928 = vunpack.c.l.b16 %v800
  %v929 = vunpack.c.l.b16 %v801
  %v930 = vunpack.c.l.b16 %v802
  %v931 = vunpack.c.l.b16 %v803
  %v932 = vunpack.c.l.b16 %v804
  %v933 = vunpack.c.l.b16 %v805
  %v934 = vunpack.c.l.b16 %v806
  %v935 = vunpack.c.l.b16 %v807
  %v936 = vunpack.c.l.b16 %v808
  %v937 = vunpack.c.l.b16 %v809
  %v938 = vunpack.c.l.b16 %v810
  %v939 = vunpack.c.l.b16 %v811
  %v940 = vunpack.c.l.b16 %v812
  %v941 = vunpack.c.l.b16 %v813
  %v942 = vunpack.c.l.b16 %v814
  %v943 = vunpack.c.l.b16 %v815
  %v944 = vunpack.c.l.b16 %v816
  %v945 = vunpack.c.l.b16 %v817
  %v946 = vunpack.c.l.b16 %v818
  %v947 = vunpack.c.l.b16 %v819
  %v948 = vunpack.c.l.b16 %v820
  %v949 = vunpack.c.l.b16 %v821
  %v950 = vunpack.c.l.b16 %v822
  %v951 = vunpack.c.l.b16 %v823
  %v952 = vunpack.c.l.b16 %v824
  %v953 = vunpack.c.l.b16 %v825
  %v954 = vunpack.c.l.b16 %v826
  %v955 = vunpack.c.l.b16 %v827
  %v956 = vunpack.c.l.b16 %v828
  %v957 = vunpack.c.l.b16 %v829
  %v958 = vunpack.c.l.b16 %v830
  %v959 = vunpack.c.l.b16 %v831
  %v960 = vunpack.c.l.b16 %v832
  %v961 = vunpack.c.l.b16 %v833
  %v962 = vunpack.c.l.b16 %v834
  %v963 = vunpack.c.l.b16 %v835
  %v964 = vunpack.c.l.b16 %v836
  %v965 = vunpack.c.l.b16 %v837
  %v966 = vunpack.c.l.b16 %v838
  %v967 = vunpack.c.l.b16 %v839
  %v968 = vunpack.c.l.b16 %v840
  %v969 = vunpack.c.l.b16 %v841
  %v970 = vunpack.c.l.b16 %v842
  %v971 = vunpack.c.l.b16 %v843
  %v972 = vunpack.c.l.b16 %v844
  %v973 = vunpack.c.l.b16 %v845
  %v974 = vunpack.c.l.b16 %v846
  %v975 = vunpack.c.l.b16 %v847
  %v976 = vunpack.c.l.b16 %v848
  %v977 = vunpack.c.l.b16 %v849
  %v978 = vunpack.c.l.b16 %v850
  %v979 = vunpack.c.l.b16 %v851
  %v980 = vunpack.c.l.b16 %v852
  %v981 = vunpack.c.l.b16 %v853
  %v982 = vunpack.c.l.b16 %v854
  %v983 = vunpack.c.l.b16 %v855
  %v984 = vpack.c.b16 %v921, %v920
  %v985 = vpack.c.b16 %v923, %v922
  %v986 = vpack.c.b16 %v925, %v924
  %v987 = vpack.c.b16 %v927, %v926
  %v988 = vpack.c.b16 %v929, %v928
  %v989 = vpack.c.b16 %v931, %v930
  %v990 = vpack.c.b16 %v933, %v932
  %v991 = vpack.c.b16 %v935, %v934
  %v992 = vpack.c.b16 %v937, %v936
  %v993 = vpack.c.b16 %v939, %v938
  %v994 = vpack.c.b16 %v941, %v940
  %v995 = vpack.c.b16 %v943, %v942
  %v996 = vpack.c.b16 %v945, %v944
  %v997 = vpack.c.b16 %v947, %v946
  %v998 = vpack.c.b16 %v949, %v948
  %v999 = vpack.c.b16 %v951, %v950
  %v1000 = vpack.c.b16 %v953, %v952
  %v1001 = vpack.c.b16 %v955, %v954
  %v1002 = vpack.c.b16 %v957, %v956
  %v1003 = vpack.c.b16 %v959, %v958
  %v1004 = vpack.c.b16 %v961, %v960
  %v1005 = vpack.c.b16 %v963, %v962
  %v1006 = vpack.c.b16 %v965, %v964
  %v1007 = vpack.c.b16 %v967, %v966
  %v1008 = vpack.c.b16 %v969, %v968
  %v1009 = vpack.c.b16 %v971, %v970
  %v1010 = vpack.c.b16 %v973, %v972
  %v1011 = vpack.c.b16 %v975, %v974
  %v1012 = vpack.c.b16 %v977, %v976
  %v1013 = vpack.c.b16 %v979, %v978
  %v1014 = vpack.c.b16 %v981, %v980
  %v1015 = vpack.c.b16 %v983, %v982
  %1048 = vmatprep.subr.bf16.mxu0 0
  %1049 = vmatpush1.bf16.msra.mxu0 %v984
  %1050 = vmatprep.subr.bf16.mxu0 0
  %1051 = vmatpush1.bf16.msra.mxu0 %v985
  %1052 = vmatprep.subr.bf16.mxu0 0
  %1053 = vmatpush1.bf16.msra.mxu0 %v986
  %1054 = vmatprep.subr.bf16.mxu0 0
  %1055 = vmatpush1.bf16.msra.mxu0 %v987
  %1056 = vmatprep.subr.bf16.mxu0 0
  %1057 = vmatpush1.bf16.msra.mxu0 %v988
  %1058 = vmatprep.subr.bf16.mxu0 0
  %1059 = vmatpush1.bf16.msra.mxu0 %v989
  %1060 = vmatprep.subr.bf16.mxu0 0
  %1061 = vmatpush1.bf16.msra.mxu0 %v990
  %1062 = vmatprep.subr.bf16.mxu0 0
  %1063 = vmatpush1.bf16.msra.mxu0 %v991
  %1064 = vmatprep.subr.bf16.mxu0 0
  %1065 = vmatpush1.bf16.msra.mxu0 %v992
  %1066 = vmatprep.subr.bf16.mxu0 0
  %1067 = vmatpush1.bf16.msra.mxu0 %v993
  %1068 = vmatprep.subr.bf16.mxu0 0
  %1069 = vmatpush1.bf16.msra.mxu0 %v994
  %1070 = vmatprep.subr.bf16.mxu0 0
  %1071 = vmatpush1.bf16.msra.mxu0 %v995
  %1072 = vmatprep.subr.bf16.mxu0 0
  %1073 = vmatpush1.bf16.msra.mxu0 %v996
  %1074 = vmatprep.subr.bf16.mxu0 0
  %1075 = vmatpush1.bf16.msra.mxu0 %v997
  %1076 = vmatprep.subr.bf16.mxu0 0
  %1077 = vmatpush1.bf16.msra.mxu0 %v998
  %1078 = vmatprep.subr.bf16.mxu0 0
  %1079 = vmatpush1.bf16.msra.mxu0 %v999
  %1080 = vmatprep.mubr.bf16.mxu0 %v119
  %1081 = vmatmul.mubr.bf16.gmra.mrb[0].mxu0 %v118
  %v1082 = vpop.f32.mrb[0].mxu0
  %v1083 = vadd.f32 %v92, %v1082
  %v1084 = vpop.f32.mrb[0].mxu0
  %v1085 = vpop.f32.mrb[0].mxu0
  %v1086 = vadd.f32 %v92, %v1085
  %v1087 = vpop.f32.mrb[0].mxu0
  %1088 = vmatprep.mubr.bf16.mxu0 %v123
  %1089 = vmatmul.mubr.bf16.gmra.mrb[0].mxu0 %v122
  %v1090 = vpop.f32.mrb[0].mxu0
  %v1091 = vadd.f32 %v92, %v1090
  %v1092 = vpop.f32.mrb[0].mxu0
  %v1093 = vpop.f32.mrb[0].mxu0
  %v1094 = vadd.f32 %v92, %v1093
  %v1095 = vpop.f32.mrb[0].mxu0
  %1096 = vdwg.mxu0
  %1097 = vmatprep.subr.bf16.mxu0 0
  %1098 = vmatpush1.bf16.msra.mxu0 %v1000
  %1099 = vmatprep.subr.bf16.mxu0 0
  %1100 = vmatpush1.bf16.msra.mxu0 %v1001
  %1101 = vmatprep.subr.bf16.mxu0 0
  %1102 = vmatpush1.bf16.msra.mxu0 %v1002
  %1103 = vmatprep.subr.bf16.mxu0 0
  %1104 = vmatpush1.bf16.msra.mxu0 %v1003
  %1105 = vmatprep.subr.bf16.mxu0 0
  %1106 = vmatpush1.bf16.msra.mxu0 %v1004
  %1107 = vmatprep.subr.bf16.mxu0 0
  %1108 = vmatpush1.bf16.msra.mxu0 %v1005
  %1109 = vmatprep.subr.bf16.mxu0 0
  %1110 = vmatpush1.bf16.msra.mxu0 %v1006
  %1111 = vmatprep.subr.bf16.mxu0 0
  %1112 = vmatpush1.bf16.msra.mxu0 %v1007
  %1113 = vmatprep.subr.bf16.mxu0 0
  %1114 = vmatpush1.bf16.msra.mxu0 %v1008
  %1115 = vmatprep.subr.bf16.mxu0 0
  %1116 = vmatpush1.bf16.msra.mxu0 %v1009
  %1117 = vmatprep.subr.bf16.mxu0 0
  %1118 = vmatpush1.bf16.msra.mxu0 %v1010
  %1119 = vmatprep.subr.bf16.mxu0 0
  %1120 = vmatpush1.bf16.msra.mxu0 %v1011
  %1121 = vmatprep.subr.bf16.mxu0 0
  %1122 = vmatpush1.bf16.msra.mxu0 %v1012
  %1123 = vmatprep.subr.bf16.mxu0 0
  %1124 = vmatpush1.bf16.msra.mxu0 %v1013
  %1125 = vmatprep.subr.bf16.mxu0 0
  %1126 = vmatpush1.bf16.msra.mxu0 %v1014
  %1127 = vmatprep.subr.bf16.mxu0 0
  %1128 = vmatpush1.bf16.msra.mxu0 %v1015
  %1129 = vmatprep.mubr.bf16.mxu0 %v121
  %1130 = vmatmul.mubr.bf16.gmra.mrb[0].mxu0 %v120
  %v1131 = vpop.f32.mrb[0].mxu0
  %v1132 = vadd.f32 %v1083, %v1131
  %v1133 = vpop.f32.mrb[0].mxu0
  %v1134 = vpop.f32.mrb[0].mxu0
  %v1135 = vadd.f32 %v1086, %v1134
  %v1136 = vpop.f32.mrb[0].mxu0
  %1137 = vmatprep.mubr.bf16.mxu0 %v125
  %1138 = vmatmul.mubr.bf16.gmra.mrb[0].mxu0 %v124
  %v1139 = vpop.f32.mrb[0].mxu0
  %v1140 = vadd.f32 %v1091, %v1139
  %v1141 = vpop.f32.mrb[0].mxu0
  %v1142 = vpop.f32.mrb[0].mxu0
  %v1143 = vadd.f32 %v1094, %v1142
  %v1144 = vpop.f32.mrb[0].mxu0
  %1145 = vdwg.mxu0
  %v1146 = vmax.f32 %v1132, 0.0
  %v1147 = vmax.f32 %v1135, 0.0
  %v1148 = vmax.f32 %v1140, 0.0
  %v1149 = vmax.f32 %v1143, 0.0
  %v1150 = vmax.f32 %v787, %v1146
  %v1151 = vmax.f32 %v788, %v1147
  %v1152 = vmax.f32 %v789, %v1148
  %v1153 = vmax.f32 %v790, %v1149
  %s1154 = scalar_lea.vmem %s1, 768
  %v1155 = vld [vmem:[%s1154] sm:$0xf]
  %v1156 = vld [vmem:[%s1154 + $0x4] sm:$0xf]
  %v1157 = vld [vmem:[%s1154 + $0x8] sm:$0xf]
  %v1158 = vld [vmem:[%s1154 + $0xc] sm:$0xf]
  %v1159 = vld [vmem:[%s1154 + $0x10] sm:$0xf]
  %v1160 = vld [vmem:[%s1154 + $0x14] sm:$0xf]
  %v1161 = vld [vmem:[%s1154 + $0x18] sm:$0xf]
  %v1162 = vld [vmem:[%s1154 + $0x1c] sm:$0xf]
  %v1163 = vld [vmem:[%s1154 + $0x20] sm:$0xf]
  %v1164 = vld [vmem:[%s1154 + $0x24] sm:$0xf]
  %v1165 = vld [vmem:[%s1154 + $0x28] sm:$0xf]
  %v1166 = vld [vmem:[%s1154 + $0x2c] sm:$0xf]
  %v1167 = vld [vmem:[%s1154 + $0x30] sm:$0xf]
  %v1168 = vld [vmem:[%s1154 + $0x34] sm:$0xf]
  %v1169 = vld [vmem:[%s1154 + $0x38] sm:$0xf]
  %v1170 = vld [vmem:[%s1154 + $0x3c] sm:$0xf]
  %v1171 = vld [vmem:[%s1154 + $0x40] sm:$0xf]
  %v1172 = vld [vmem:[%s1154 + $0x44] sm:$0xf]
  %v1173 = vld [vmem:[%s1154 + $0x48] sm:$0xf]
  %v1174 = vld [vmem:[%s1154 + $0x4c] sm:$0xf]
  %v1175 = vld [vmem:[%s1154 + $0x50] sm:$0xf]
  %v1176 = vld [vmem:[%s1154 + $0x54] sm:$0xf]
  %v1177 = vld [vmem:[%s1154 + $0x58] sm:$0xf]
  %v1178 = vld [vmem:[%s1154 + $0x5c] sm:$0xf]
  %v1179 = vld [vmem:[%s1154 + $0x60] sm:$0xf]
  %v1180 = vld [vmem:[%s1154 + $0x64] sm:$0xf]
  %v1181 = vld [vmem:[%s1154 + $0x68] sm:$0xf]
  %v1182 = vld [vmem:[%s1154 + $0x6c] sm:$0xf]
  %v1183 = vld [vmem:[%s1154 + $0x70] sm:$0xf]
  %v1184 = vld [vmem:[%s1154 + $0x74] sm:$0xf]
  %v1185 = vld [vmem:[%s1154 + $0x78] sm:$0xf]
  %v1186 = vld [vmem:[%s1154 + $0x7c] sm:$0xf]
  %v1187 = vld [vmem:[%s1154 + $0x80] sm:$0xf]
  %v1188 = vld [vmem:[%s1154 + $0x84] sm:$0xf]
  %v1189 = vld [vmem:[%s1154 + $0x88] sm:$0xf]
  %v1190 = vld [vmem:[%s1154 + $0x8c] sm:$0xf]
  %v1191 = vld [vmem:[%s1154 + $0x90] sm:$0xf]
  %v1192 = vld [vmem:[%s1154 + $0x94] sm:$0xf]
  %v1193 = vld [vmem:[%s1154 + $0x98] sm:$0xf]
  %v1194 = vld [vmem:[%s1154 + $0x9c] sm:$0xf]
  %v1195 = vld [vmem:[%s1154 + $0xa0] sm:$0xf]
  %v1196 = vld [vmem:[%s1154 + $0xa4] sm:$0xf]
  %v1197 = vld [vmem:[%s1154 + $0xa8] sm:$0xf]
  %v1198 = vld [vmem:[%s1154 + $0xac] sm:$0xf]
  %v1199 = vld [vmem:[%s1154 + $0xb0] sm:$0xf]
  %v1200 = vld [vmem:[%s1154 + $0xb4] sm:$0xf]
  %v1201 = vld [vmem:[%s1154 + $0xb8] sm:$0xf]
  %v1202 = vld [vmem:[%s1154 + $0xbc] sm:$0xf]
  %v1203 = vld [vmem:[%s1154 + $0xc0] sm:$0xf]
  %v1204 = vld [vmem:[%s1154 + $0xc4] sm:$0xf]
  %v1205 = vld [vmem:[%s1154 + $0xc8] sm:$0xf]
  %v1206 = vld [vmem:[%s1154 + $0xcc] sm:$0xf]
  %v1207 = vld [vmem:[%s1154 + $0xd0] sm:$0xf]
  %v1208 = vld [vmem:[%s1154 + $0xd4] sm:$0xf]
  %v1209 = vld [vmem:[%s1154 + $0xd8] sm:$0xf]
  %v1210 = vld [vmem:[%s1154 + $0xdc] sm:$0xf]
  %v1211 = vld [vmem:[%s1154 + $0xe0] sm:$0xf]
  %v1212 = vld [vmem:[%s1154 + $0xe4] sm:$0xf]
  %v1213 = vld [vmem:[%s1154 + $0xe8] sm:$0xf]
  %v1214 = vld [vmem:[%s1154 + $0xec] sm:$0xf]
  %v1215 = vld [vmem:[%s1154 + $0xf0] sm:$0xf]
  %v1216 = vld [vmem:[%s1154 + $0xf4] sm:$0xf]
  %v1217 = vld [vmem:[%s1154 + $0xf8] sm:$0xf]
  %v1218 = vld [vmem:[%s1154 + $0xfc] sm:$0xf]
  %v1283 = vunpack.c.l.b16 %v1155
  %v1284 = vunpack.c.l.b16 %v1156
  %v1285 = vunpack.c.l.b16 %v1157
  %v1286 = vunpack.c.l.b16 %v1158
  %v1287 = vunpack.c.l.b16 %v1159
  %v1288 = vunpack.c.l.b16 %v1160
  %v1289 = vunpack.c.l.b16 %v1161
  %v1290 = vunpack.c.l.b16 %v1162
  %v1291 = vunpack.c.l.b16 %v1163
  %v1292 = vunpack.c.l.b16 %v1164
  %v1293 = vunpack.c.l.b16 %v1165
  %v1294 = vunpack.c.l.b16 %v1166
  %v1295 = vunpack.c.l.b16 %v1167
  %v1296 = vunpack.c.l.b16 %v1168
  %v1297 = vunpack.c.l.b16 %v1169
  %v1298 = vunpack.c.l.b16 %v1170
  %v1299 = vunpack.c.l.b16 %v1171
  %v1300 = vunpack.c.l.b16 %v1172
  %v1301 = vunpack.c.l.b16 %v1173
  %v1302 = vunpack.c.l.b16 %v1174
  %v1303 = vunpack.c.l.b16 %v1175
  %v1304 = vunpack.c.l.b16 %v1176
  %v1305 = vunpack.c.l.b16 %v1177
  %v1306 = vunpack.c.l.b16 %v1178
  %v1307 = vunpack.c.l.b16 %v1179
  %v1308 = vunpack.c.l.b16 %v1180
  %v1309 = vunpack.c.l.b16 %v1181
  %v1310 = vunpack.c.l.b16 %v1182
  %v1311 = vunpack.c.l.b16 %v1183
  %v1312 = vunpack.c.l.b16 %v1184
  %v1313 = vunpack.c.l.b16 %v1185
  %v1314 = vunpack.c.l.b16 %v1186
  %v1315 = vunpack.c.l.b16 %v1187
  %v1316 = vunpack.c.l.b16 %v1188
  %v1317 = vunpack.c.l.b16 %v1189
  %v1318 = vunpack.c.l.b16 %v1190
  %v1319 = vunpack.c.l.b16 %v1191
  %v1320 = vunpack.c.l.b16 %v1192
  %v1321 = vunpack.c.l.b16 %v1193
  %v1322 = vunpack.c.l.b16 %v1194
  %v1323 = vunpack.c.l.b16 %v1195
  %v1324 = vunpack.c.l.b16 %v1196
  %v1325 = vunpack.c.l.b16 %v1197
  %v1326 = vunpack.c.l.b16 %v1198
  %v1327 = vunpack.c.l.b16 %v1199
  %v1328 = vunpack.c.l.b16 %v1200
  %v1329 = vunpack.c.l.b16 %v1201
  %v1330 = vunpack.c.l.b16 %v1202
  %v1331 = vunpack.c.l.b16 %v1203
  %v1332 = vunpack.c.l.b16 %v1204
  %v1333 = vunpack.c.l.b16 %v1205
  %v1334 = vunpack.c.l.b16 %v1206
  %v1335 = vunpack.c.l.b16 %v1207
  %v1336 = vunpack.c.l.b16 %v1208
  %v1337 = vunpack.c.l.b16 %v1209
  %v1338 = vunpack.c.l.b16 %v1210
  %v1339 = vunpack.c.l.b16 %v1211
  %v1340 = vunpack.c.l.b16 %v1212
  %v1341 = vunpack.c.l.b16 %v1213
  %v1342 = vunpack.c.l.b16 %v1214
  %v1343 = vunpack.c.l.b16 %v1215
  %v1344 = vunpack.c.l.b16 %v1216
  %v1345 = vunpack.c.l.b16 %v1217
  %v1346 = vunpack.c.l.b16 %v1218
  %v1347 = vpack.c.b16 %v1284, %v1283
  %v1348 = vpack.c.b16 %v1286, %v1285
  %v1349 = vpack.c.b16 %v1288, %v1287
  %v1350 = vpack.c.b16 %v1290, %v1289
  %v1351 = vpack.c.b16 %v1292, %v1291
  %v1352 = vpack.c.b16 %v1294, %v1293
  %v1353 = vpack.c.b16 %v1296, %v1295
  %v1354 = vpack.c.b16 %v1298, %v1297
  %v1355 = vpack.c.b16 %v1300, %v1299
  %v1356 = vpack.c.b16 %v1302, %v1301
  %v1357 = vpack.c.b16 %v1304, %v1303
  %v1358 = vpack.c.b16 %v1306, %v1305
  %v1359 = vpack.c.b16 %v1308, %v1307
  %v1360 = vpack.c.b16 %v1310, %v1309
  %v1361 = vpack.c.b16 %v1312, %v1311
  %v1362 = vpack.c.b16 %v1314, %v1313
  %v1363 = vpack.c.b16 %v1316, %v1315
  %v1364 = vpack.c.b16 %v1318, %v1317
  %v1365 = vpack.c.b16 %v1320, %v1319
  %v1366 = vpack.c.b16 %v1322, %v1321
  %v1367 = vpack.c.b16 %v1324, %v1323
  %v1368 = vpack.c.b16 %v1326, %v1325
  %v1369 = vpack.c.b16 %v1328, %v1327
  %v1370 = vpack.c.b16 %v1330, %v1329
  %v1371 = vpack.c.b16 %v1332, %v1331
  %v1372 = vpack.c.b16 %v1334, %v1333
  %v1373 = vpack.c.b16 %v1336, %v1335
  %v1374 = vpack.c.b16 %v1338, %v1337
  %v1375 = vpack.c.b16 %v1340, %v1339
  %v1376 = vpack.c.b16 %v1342, %v1341
  %v1377 = vpack.c.b16 %v1344, %v1343
  %v1378 = vpack.c.b16 %v1346, %v1345
  %1411 = vmatprep.subr.bf16.mxu0 0
  %1412 = vmatpush1.bf16.msra.mxu0 %v1347
  %1413 = vmatprep.subr.bf16.mxu0 0
  %1414 = vmatpush1.bf16.msra.mxu0 %v1348
  %1415 = vmatprep.subr.bf16.mxu0 0
  %1416 = vmatpush1.bf16.msra.mxu0 %v1349
  %1417 = vmatprep.subr.bf16.mxu0 0
  %1418 = vmatpush1.bf16.msra.mxu0 %v1350
  %1419 = vmatprep.subr.bf16.mxu0 0
  %1420 = vmatpush1.bf16.msra.mxu0 %v1351
  %1421 = vmatprep.subr.bf16.mxu0 0
  %1422 = vmatpush1.bf16.msra.mxu0 %v1352
  %1423 = vmatprep.subr.bf16.mxu0 0
  %1424 = vmatpush1.bf16.msra.mxu0 %v1353
  %1425 = vmatprep.subr.bf16.mxu0 0
  %1426 = vmatpush1.bf16.msra.mxu0 %v1354
  %1427 = vmatprep.subr.bf16.mxu0 0
  %1428 = vmatpush1.bf16.msra.mxu0 %v1355
  %1429 = vmatprep.subr.bf16.mxu0 0
  %1430 = vmatpush1.bf16.msra.mxu0 %v1356
  %1431 = vmatprep.subr.bf16.mxu0 0
  %1432 = vmatpush1.bf16.msra.mxu0 %v1357
  %1433 = vmatprep.subr.bf16.mxu0 0
  %1434 = vmatpush1.bf16.msra.mxu0 %v1358
  %1435 = vmatprep.subr.bf16.mxu0 0
  %1436 = vmatpush1.bf16.msra.mxu0 %v1359
  %1437 = vmatprep.subr.bf16.mxu0 0
  %1438 = vmatpush1.bf16.msra.mxu0 %v1360
  %1439 = vmatprep.subr.bf16.mxu0 0
  %1440 = vmatpush1.bf16.msra.mxu0 %v1361
  %1441 = vmatprep.subr.bf16.mxu0 0
  %1442 = vmatpush1.bf16.msra.mxu0 %v1362
  %1443 = vmatprep.mubr.bf16.mxu0 %v119
  %1444 = vmatmul.mubr.bf16.gmra.mrb[0].mxu0 %v118
  %v1445 = vpop.f32.mrb[0].mxu0
  %v1446 = vadd.f32 %v92, %v1445
  %v1447 = vpop.f32.mrb[0].mxu0
  %v1448 = vpop.f32.mrb[0].mxu0
  %v1449 = vadd.f32 %v92, %v1448
  %v1450 = vpop.f32.mrb[0].mxu0
  %1451 = vmatprep.mubr.bf16.mxu0 %v123
  %1452 = vmatmul.mubr.bf16.gmra.mrb[0].mxu0 %v122
  %v1453 = vpop.f32.mrb[0].mxu0
  %v1454 = vadd.f32 %v92, %v1453
  %v1455 = vpop.f32.mrb[0].mxu0
  %v1456 = vpop.f32.mrb[0].mxu0
  %v1457 = vadd.f32 %v92, %v1456
  %v1458 = vpop.f32.mrb[0].mxu0
  %1459 = vdwg.mxu0
  %1460 = vmatprep.subr.bf16.mxu0 0
  %1461 = vmatpush1.bf16.msra.mxu0 %v1363
  %1462 = vmatprep.subr.bf16.mxu0 0
  %1463 = vmatpush1.bf16.msra.mxu0 %v1364
  %1464 = vmatprep.subr.bf16.mxu0 0
  %1465 = vmatpush1.bf16.msra.mxu0 %v1365
  %1466 = vmatprep.subr.bf16.mxu0 0
  %1467 = vmatpush1.bf16.msra.mxu0 %v1366
  %1468 = vmatprep.subr.bf16.mxu0 0
  %1469 = vmatpush1.bf16.msra.mxu0 %v1367
  %1470 = vmatprep.subr.bf16.mxu0 0
  %1471 = vmatpush1.bf16.msra.mxu0 %v1368
  %1472 = vmatprep.subr.bf16.mxu0 0
  %1473 = vmatpush1.bf16.msra.mxu0 %v1369
  %1474 = vmatprep.subr.bf16.mxu0 0
  %1475 = vmatpush1.bf16.msra.mxu0 %v1370
  %1476 = vmatprep.subr.bf16.mxu0 0
  %1477 = vmatpush1.bf16.msra.mxu0 %v1371
  %1478 = vmatprep.subr.bf16.mxu0 0
  %1479 = vmatpush1.bf16.msra.mxu0 %v1372
  %1480 = vmatprep.subr.bf16.mxu0 0
  %1481 = vmatpush1.bf16.msra.mxu0 %v1373
  %1482 = vmatprep.subr.bf16.mxu0 0
  %1483 = vmatpush1.bf16.msra.mxu0 %v1374
  %1484 = vmatprep.subr.bf16.mxu0 0
  %1485 = vmatpush1.bf16.msra.mxu0 %v1375
  %1486 = vmatprep.subr.bf16.mxu0 0
  %1487 = vmatpush1.bf16.msra.mxu0 %v1376
  %1488 = vmatprep.subr.bf16.mxu0 0
  %1489 = vmatpush1.bf16.msra.mxu0 %v1377
  %1490 = vmatprep.subr.bf16.mxu0 0
  %1491 = vmatpush1.bf16.msra.mxu0 %v1378
  %1492 = vmatprep.mubr.bf16.mxu0 %v121
  %1493 = vmatmul.mubr.bf16.gmra.mrb[0].mxu0 %v120
  %v1494 = vpop.f32.mrb[0].mxu0
  %v1495 = vadd.f32 %v1446, %v1494
  %v1496 = vpop.f32.mrb[0].mxu0
  %v1497 = vpop.f32.mrb[0].mxu0
  %v1498 = vadd.f32 %v1449, %v1497
  %v1499 = vpop.f32.mrb[0].mxu0
  %1500 = vmatprep.mubr.bf16.mxu0 %v125
  %1501 = vmatmul.mubr.bf16.gmra.mrb[0].mxu0 %v124
  %v1502 = vpop.f32.mrb[0].mxu0
  %v1503 = vadd.f32 %v1454, %v1502
  %v1504 = vpop.f32.mrb[0].mxu0
  %v1505 = vpop.f32.mrb[0].mxu0
  %v1506 = vadd.f32 %v1457, %v1505
  %v1507 = vpop.f32.mrb[0].mxu0
  %1508 = vdwg.mxu0
  %v1509 = vmax.f32 %v1495, 0.0
  %v1510 = vmax.f32 %v1498, 0.0
  %v1511 = vmax.f32 %v1503, 0.0
  %v1512 = vmax.f32 %v1506, 0.0
  %v1513 = vmax.f32 %v1150, %v1509
  %v1514 = vmax.f32 %v1151, %v1510
  %v1515 = vmax.f32 %v1152, %v1511
  %v1516 = vmax.f32 %v1153, %v1512
  %v1517 = vpack.c.bf16 %v1514, %v1513
  %v1518 = vpack.c.bf16 %v1516, %v1515
  %v1521 = vunpack.c.l.b16 %v1517
  %v1522 = vunpack.c.h.b16 %v1517
  %v1523 = vunpack.c.l.b16 %v1518
  %v1524 = vunpack.c.h.b16 %v1518
  %v1525 = vpack.c.b16 %v1521, %v1521
  %v1526 = vpack.c.b16 %v1522, %v1522
  %v1527 = vpack.c.b16 %v1523, %v1523
  %v1528 = vpack.c.b16 %v1524, %v1524
  %vm1533 = vcmask 519168
  %1534 = vst.msk [vmem:[%s3] sm:$0xf] %vm1533, %v1525
  %1535 = vst.msk [vmem:[%s3 + $0x4] sm:$0xf] %vm1533, %v1526
  %1536 = vst.msk [vmem:[%s3 + $0x8] sm:$0xf] %vm1533, %v1527
  %1537 = vst.msk [vmem:[%s3 + $0xc] sm:$0xf] %vm1533, %v1528
  // Predicated region
  $region14: #{vae_forward.10} parent=0 // pred_check
    _
  $region15: #{vae_forward.10} parent=0 // pred_check_branch
    %1539 = sbr.rel (0) target = $region17
  $region16: #{vae_forward.10} parent=0 // pred_region
    _
  $region17: #{vae_forward.10} parent=0 // pred_fallthru
    _
  // Predicated region
  $region18: #{vae_forward.10} parent=0 // pred_check
    _
  $region19: #{vae_forward.10} parent=0 // pred_check_branch
    %1541 = sbr.rel (0) target = $region21
  $region20: #{vae_forward.10} parent=0 // pred_region
    _
  $region21: #{vae_forward.10} parent=0 // pred_fallthru
    _

// kernel: vae_forward.13
$region0: #{vae_forward.13}
  #allocation0 [shape = 'u32[]', space=smem, size = 0x4, offset = 0x4, fixed_abs, tag = 'smem constant byte address 0x4 - core index']
  #allocation1 [shape = 'u32[144,128]{1,0:T(1,128)}', space=vmem, size = 0x12000, scoped, tag = 'internal scratch']
  %s0 = inlined_call_operand.vmem [shape: bf16[2,32], index: 0, kind: input, shape index: {}]
  %s1 = inlined_call_operand.vmem [shape: bf16[32,32], index: 1, kind: input, shape index: {}]
  %s2 = inlined_call_operand.vmem [shape: bf16[32,32], index: 2, kind: input, shape index: {}]
  %s3 = inlined_call_operand.vmem [shape: f32[1,32], index: 3, kind: input, shape index: {}]
  %s4 = inlined_call_operand.vmem [shape: f32[1,32], index: 4, kind: input, shape index: {}]
  %s5 = inlined_call_operand.vmem [shape: f32[2,32], index: 5, kind: input, shape index: {}]
  %s6 = inlined_call_operand.hbm [shape: f32[2,32], index: 6, kind: output, shape index: {0}]
  %s7 = inlined_call_operand.hbm [shape: f32[2,32], index: 7, kind: output, shape index: {1}]
  %s8 = inlined_call_operand.vmem [shape: f32[2,32], index: 8, kind: output, shape index: {2}]
  %9 = xla_tuple %s6, %s7, %s8
  %s10 = sld [smem:[#allocation0]]
  $region50: #{vae_forward.13} parent=0
    _
  %s12 = ssub.s32 1, %s10
  %s13 = scalar_select 0, %s12, %s10
  $region1: #{vae_forward.13} parent=0
    #allocation2 [shape = 'u8[1024]{0}', space=vmem, size = 0x400, scoped, tag = 'output window, operand 0, single buffered']
    #allocation3 [shape = 's32[1]{0}', space=sflag, size = 0x4, scoped, tag = 'scoped memory for vae_forward.13']
    #allocation4 [shape = 'u8[1024]{0}', space=vmem, size = 0x400, scoped, tag = 'output window, operand 1, single buffered']
    #allocation5 [shape = 's32[1]{0}', space=sflag, size = 0x4, scoped, tag = 'scoped memory for vae_forward.13']
    %14 = vsyncpa [#allocation3], 0
    %15 = vsyncpa [#allocation5], 0
    // Predicated region
    $region2: #{vae_forward.13} parent=1 // pred_check
      _
    $region3: #{vae_forward.13} parent=1 // pred_check_branch
      %17 = sbr.rel (0) target = $region5
    $region4: #{vae_forward.13} parent=1 // pred_region
      _
    $region5: #{vae_forward.13} parent=1 // pred_fallthru
      _
    // Predicated region
    $region6: #{vae_forward.13} parent=1 // pred_check
      _
    $region7: #{vae_forward.13} parent=1 // pred_check_branch
      %19 = sbr.rel (0) target = $region9
    $region8: #{vae_forward.13} parent=1 // pred_region
      _
    $region9: #{vae_forward.13} parent=1 // pred_fallthru
      _
    // Predicated region
    $region10: #{vae_forward.13} parent=1 // pred_check
      _
    $region11: #{vae_forward.13} parent=1 // pred_check_branch
      %21 = sbr.rel (0) target = $region13
    $region12: #{vae_forward.13} parent=1 // pred_region
      _
    $region13: #{vae_forward.13} parent=1 // pred_fallthru
      _
    // Predicated region
    $region14: #{vae_forward.13} parent=1 // pred_check
      _
    $region15: #{vae_forward.13} parent=1 // pred_check_branch
      %23 = sbr.rel (0) target = $region17
    $region16: #{vae_forward.13} parent=1 // pred_region
      _
    $region17: #{vae_forward.13} parent=1 // pred_fallthru
      _
    // Predicated region
    $region18: #{vae_forward.13} parent=1 // pred_check
      _
    $region19: #{vae_forward.13} parent=1 // pred_check_branch
      %25 = sbr.rel (0) target = $region21
    $region20: #{vae_forward.13} parent=1 // pred_region
      _
    $region21: #{vae_forward.13} parent=1 // pred_fallthru
      _
    // Predicated region
    $region22: #{vae_forward.13} parent=1 // pred_check
      _
    $region23: #{vae_forward.13} parent=1 // pred_check_branch
      %27 = sbr.rel (0) target = $region25
    $region24: #{vae_forward.13} parent=1 // pred_region
      _
    $region25: #{vae_forward.13} parent=1 // pred_fallthru
      _
    %v29 = vld [vmem:[%s0] sm:$0x1]
    %v30 = vld [vmem:[%s1] sm:$0xf]
    %v31 = vld [vmem:[%s1 + $0x4] sm:$0xf]
    %v32 = vld [vmem:[%s1 + $0x8] sm:$0xf]
    %v33 = vld [vmem:[%s1 + $0xc] sm:$0xf]
    %v34 = vld [vmem:[%s3] sm:$0x1]
    %v36 = vlaneseq
    %v37 = vshrl.u32 %v36, 7
    %v38 = vsub.s32 0, %v37
    %v39 = vrot.slane %v34, %v38
    %v45 = vunpack.c.l.b16 %v30
    %v46 = vunpack.c.l.b16 %v31
    %v47 = vunpack.c.l.b16 %v32
    %v48 = vunpack.c.l.b16 %v33
    %v49 = vpack.c.b16 %v46, %v45
    %v50 = vpack.c.b16 %v48, %v47
    %vm53 = vcmask 261120
    %v55 = vsel %vm53, %v29, 0
    %57 = vmatprep.subr.bf16.mxu0 0
    %58 = vmatpush1.bf16.msra.mxu0 %v49
    %59 = vmatprep.subr.bf16.mxu0 0
    %60 = vmatpush1.bf16.msra.mxu0 %v50
    %61 = vmatprep.subr.bf16.mxu0 0
    %62 = vmatpush1.bf16.msra.mxu0 0
    %63 = vmatprep.subr.bf16.mxu0 0
    %64 = vmatpush1.bf16.msra.mxu0 0
    %65 = vmatprep.subr.bf16.mxu0 0
    %66 = vmatpush1.bf16.msra.mxu0 0
    %67 = vmatprep.subr.bf16.mxu0 0
    %68 = vmatpush1.bf16.msra.mxu0 0
    %69 = vmatprep.subr.bf16.mxu0 0
    %70 = vmatpush1.bf16.msra.mxu0 0
    %71 = vmatprep.subr.bf16.mxu0 0
    %72 = vmatpush1.bf16.msra.mxu0 0
    %73 = vmatprep.subr.bf16.mxu0 0
    %74 = vmatpush1.bf16.msra.mxu0 0
    %75 = vmatprep.subr.bf16.mxu0 0
    %76 = vmatpush1.bf16.msra.mxu0 0
    %77 = vmatprep.subr.bf16.mxu0 0
    %78 = vmatpush1.bf16.msra.mxu0 0
    %79 = vmatprep.subr.bf16.mxu0 0
    %80 = vmatpush1.bf16.msra.mxu0 0
    %81 = vmatprep.subr.bf16.mxu0 0
    %82 = vmatpush1.bf16.msra.mxu0 0
    %83 = vmatprep.subr.bf16.mxu0 0
    %84 = vmatpush1.bf16.msra.mxu0 0
    %85 = vmatprep.subr.bf16.mxu0 0
    %86 = vmatpush1.bf16.msra.mxu0 0
    %87 = vmatprep.subr.bf16.mxu0 0
    %88 = vmatpush1.bf16.msra.mxu0 0
    %89 = vmatprep.mubr.bf16.mxu0 0
    %90 = vmatmul.mubr.bf16.gmra.mrb[0].mxu0 %v55
    %v91 = vpop.f32.mrb[0].mxu0
    %v92 = vadd.f32 %v39, %v91
    %v93 = vpop.f32.mrb[0].mxu0
    %v94 = vpop.f32.mrb[0].mxu0
    %v95 = vpop.f32.mrb[0].mxu0
    %96 = vdwg.mxu0
    %v97 = vld [vmem:[%s2] sm:$0xf]
    %v98 = vld [vmem:[%s2 + $0x4] sm:$0xf]
    %v99 = vld [vmem:[%s2 + $0x8] sm:$0xf]
    %v100 = vld [vmem:[%s2 + $0xc] sm:$0xf]
    %v101 = vld [vmem:[%s4] sm:$0x1]
    %v103 = vlaneseq
    %v104 = vshrl.u32 %v103, 7
    %v105 = vsub.s32 0, %v104
    %v106 = vrot.slane %v101, %v105
    %v112 = vunpack.c.l.b16 %v97
    %v113 = vunpack.c.l.b16 %v98
    %v114 = vunpack.c.l.b16 %v99
    %v115 = vunpack.c.l.b16 %v100
    %v116 = vpack.c.b16 %v113, %v112
    %v117 = vpack.c.b16 %v115, %v114
    %120 = vmatprep.subr.bf16.mxu0 0
    %121 = vmatpush1.bf16.msra.mxu0 %v116
    %122 = vmatprep.subr.bf16.mxu0 0
    %123 = vmatpush1.bf16.msra.mxu0 %v117
    %124 = vmatprep.subr.bf16.mxu0 0
    %125 = vmatpush1.bf16.msra.mxu0 0
    %126 = vmatprep.subr.bf16.mxu0 0
    %127 = vmatpush1.bf16.msra.mxu0 0
    %128 = vmatprep.subr.bf16.mxu0 0
    %129 = vmatpush1.bf16.msra.mxu0 0
    %130 = vmatprep.subr.bf16.mxu0 0
    %131 = vmatpush1.bf16.msra.mxu0 0
    %132 = vmatprep.subr.bf16.mxu0 0
    %133 = vmatpush1.bf16.msra.mxu0 0
    %134 = vmatprep.subr.bf16.mxu0 0
    %135 = vmatpush1.bf16.msra.mxu0 0
    %136 = vmatprep.subr.bf16.mxu0 0
    %137 = vmatpush1.bf16.msra.mxu0 0
    %138 = vmatprep.subr.bf16.mxu0 0
    %139 = vmatpush1.bf16.msra.mxu0 0
    %140 = vmatprep.subr.bf16.mxu0 0
    %141 = vmatpush1.bf16.msra.mxu0 0
    %142 = vmatprep.subr.bf16.mxu0 0
    %143 = vmatpush1.bf16.msra.mxu0 0
    %144 = vmatprep.subr.bf16.mxu0 0
    %145 = vmatpush1.bf16.msra.mxu0 0
    %146 = vmatprep.subr.bf16.mxu0 0
    %147 = vmatpush1.bf16.msra.mxu0 0
    %148 = vmatprep.subr.bf16.mxu0 0
    %149 = vmatpush1.bf16.msra.mxu0 0
    %150 = vmatprep.subr.bf16.mxu0 0
    %151 = vmatpush1.bf16.msra.mxu0 0
    %152 = vmatprep.mubr.bf16.mxu0 0
    %153 = vmatmul.mubr.bf16.gmra.mrb[0].mxu0 %v55
    %v154 = vpop.f32.mrb[0].mxu0
    %v155 = vadd.f32 %v106, %v154
    %v156 = vpop.f32.mrb[0].mxu0
    %v157 = vpop.f32.mrb[0].mxu0
    %v158 = vpop.f32.mrb[0].mxu0
    %159 = vdwg.mxu0
    %vm160 = vcmask 254976
    %161 = vst.msk [vmem:[#allocation2] sm:$0x3] %vm160, %v92
    %162 = vst.msk [vmem:[#allocation4] sm:$0x3] %vm160, %v155
    %v163 = vld [vmem:[%s5] sm:$0x3]
    %v164 = vmul.f32 %v155, 0.5
    %v165 = vmul.f32 %v164, 1.442695
    %v166 = vpow.pop %v165
    %v167 = vmul.f32 %v163, %v166
    %v168 = vadd.f32 %v92, %v167
    %169 = vst.msk [vmem:[%s8] sm:$0x3] %vm160, %v168
    // Predicated region
    $region26: #{vae_forward.13} parent=1 // pred_check
      _
    $region27: #{vae_forward.13} parent=1 // pred_check_branch
      %171 = sbr.rel (0) target = $region29
    $region28: #{vae_forward.13} parent=1 // pred_region
      %s173 = ssub.s32 32, 32
      %174 = vsyncadd [#allocation3], %s173
      %s176 = sshll.u32 [#allocation2], 4
      %s177 = int_to_ptr.vmem [resolvable:$true] %s176
      %179 = dma.vmem_to_hbm [thread:$0]  %s177, 32, %s6, [#allocation3]
    $region29: #{vae_forward.13} parent=1 // pred_fallthru
      _
    // Predicated region
    $region30: #{vae_forward.13} parent=1 // pred_check
      _
    $region31: #{vae_forward.13} parent=1 // pred_check_branch
      %181 = sbr.rel (0) target = $region33
    $region32: #{vae_forward.13} parent=1 // pred_region
      %s183 = ssub.s32 32, 32
      %184 = vsyncadd [#allocation5], %s183
      %s186 = sshll.u32 [#allocation4], 4
      %s187 = int_to_ptr.vmem [resolvable:$true] %s186
      %189 = dma.vmem_to_hbm [thread:$0]  %s187, 32, %s7, [#allocation5]
    $region33: #{vae_forward.13} parent=1 // pred_fallthru
      _
    // Predicated region
    $region34: #{vae_forward.13} parent=1 // pred_check
      _
    $region35: #{vae_forward.13} parent=1 // pred_check_branch
      %191 = sbr.rel (0) target = $region37
    $region36: #{vae_forward.13} parent=1 // pred_region
      _
    $region37: #{vae_forward.13} parent=1 // pred_fallthru
      _
    // Predicated region
    $region38: #{vae_forward.13} parent=1 // pred_check
      _
    $region39: #{vae_forward.13} parent=1 // pred_check_branch
      %193 = sbr.rel (0) target = $region41
    $region40: #{vae_forward.13} parent=1 // pred_region
      %194 = dma.done [#allocation3], 32
    $region41: #{vae_forward.13} parent=1 // pred_fallthru
      _
    // Predicated region
    $region42: #{vae_forward.13} parent=1 // pred_check
      _
    $region43: #{vae_forward.13} parent=1 // pred_check_branch
      %196 = sbr.rel (0) target = $region45
    $region44: #{vae_forward.13} parent=1 // pred_region
      %197 = dma.done [#allocation5], 32
    $region45: #{vae_forward.13} parent=1 // pred_fallthru
      _
    // Predicated region
    $region46: #{vae_forward.13} parent=1 // pred_check
      _
    $region47: #{vae_forward.13} parent=1 // pred_check_branch
      %199 = sbr.rel (0) target = $region49
    $region48: #{vae_forward.13} parent=1 // pred_region
      _
    $region49: #{vae_forward.13} parent=1 // pred_fallthru
      _
    %200 = vsyncpa [#allocation3], 1
    %201 = vsyncpa [#allocation5], 1

// kernel: vae_forward.11
$region0: #{vae_forward.11}
  #allocation0 [shape = 'u32[]', space=smem, size = 0x4, offset = 0x4, fixed_abs, tag = 'smem constant byte address 0x4 - core index']
  #allocation1 [shape = 'u32[144,128]{1,0:T(1,128)}', space=vmem, size = 0x12000, scoped, tag = 'internal scratch']
  %s0 = inlined_call_operand.vmem [shape: bf16[8,1024], index: 0, kind: input, shape index: {}]
  %s1 = inlined_call_operand.vmem [shape: bf16[4,1024,128], index: 1, kind: input, shape index: {}]
  %s2 = inlined_call_operand.vmem [shape: f32[1,128], index: 2, kind: input, shape index: {}]
  %s3 = inlined_call_operand.vmem [shape: bf16[8,128], index: 3, kind: output, shape index: {}]
  %s4 = sld [smem:[#allocation0]]
  $region22: #{vae_forward.11} parent=0
    _
  %s6 = ssub.s32 1, %s4
  %s7 = scalar_select 0, %s6, %s4
  // Predicated region
  $region2: #{vae_forward.11} parent=0 // pred_check
    _
  $region3: #{vae_forward.11} parent=0 // pred_check_branch
    %9 = sbr.rel (0) target = $region5
  $region4: #{vae_forward.11} parent=0 // pred_region
    _
  $region5: #{vae_forward.11} parent=0 // pred_fallthru
    _
  // Predicated region
  $region6: #{vae_forward.11} parent=0 // pred_check
    _
  $region7: #{vae_forward.11} parent=0 // pred_check_branch
    %11 = sbr.rel (0) target = $region9
  $region8: #{vae_forward.11} parent=0 // pred_region
    _
  $region9: #{vae_forward.11} parent=0 // pred_fallthru
    _
  // Predicated region
  $region10: #{vae_forward.11} parent=0 // pred_check
    _
  $region11: #{vae_forward.11} parent=0 // pred_check_branch
    %13 = sbr.rel (0) target = $region13
  $region12: #{vae_forward.11} parent=0 // pred_region
    _
  $region13: #{vae_forward.11} parent=0 // pred_fallthru
    _
  %v15 = vld [vmem:[%s0] sm:$0xff]
  %v16 = vld [vmem:[%s0 + $0x8] sm:$0xff]
  %v17 = vld [vmem:[%s0 + $0x10] sm:$0xff]
  %v18 = vld [vmem:[%s0 + $0x18] sm:$0xff]
  %v19 = vld [vmem:[%s2] sm:$0x1]
  %v20 = vld [vmem:[%s1] sm:$0xf]
  %v21 = vld [vmem:[%s1 + $0x4] sm:$0xf]
  %v22 = vld [vmem:[%s1 + $0x8] sm:$0xf]
  %v23 = vld [vmem:[%s1 + $0xc] sm:$0xf]
  %v24 = vld [vmem:[%s1 + $0x10] sm:$0xf]
  %v25 = vld [vmem:[%s1 + $0x14] sm:$0xf]
  %v26 = vld [vmem:[%s1 + $0x18] sm:$0xf]
  %v27 = vld [vmem:[%s1 + $0x1c] sm:$0xf]
  %v28 = vld [vmem:[%s1 + $0x20] sm:$0xf]
  %v29 = vld [vmem:[%s1 + $0x24] sm:$0xf]
  %v30 = vld [vmem:[%s1 + $0x28] sm:$0xf]
  %v31 = vld [vmem:[%s1 + $0x2c] sm:$0xf]
  %v32 = vld [vmem:[%s1 + $0x30] sm:$0xf]
  %v33 = vld [vmem:[%s1 + $0x34] sm:$0xf]
  %v34 = vld [vmem:[%s1 + $0x38] sm:$0xf]
  %v35 = vld [vmem:[%s1 + $0x3c] sm:$0xf]
  %v36 = vld [vmem:[%s1 + $0x40] sm:$0xf]
  %v37 = vld [vmem:[%s1 + $0x44] sm:$0xf]
  %v38 = vld [vmem:[%s1 + $0x48] sm:$0xf]
  %v39 = vld [vmem:[%s1 + $0x4c] sm:$0xf]
  %v40 = vld [vmem:[%s1 + $0x50] sm:$0xf]
  %v41 = vld [vmem:[%s1 + $0x54] sm:$0xf]
  %v42 = vld [vmem:[%s1 + $0x58] sm:$0xf]
  %v43 = vld [vmem:[%s1 + $0x5c] sm:$0xf]
  %v44 = vld [vmem:[%s1 + $0x60] sm:$0xf]
  %v45 = vld [vmem:[%s1 + $0x64] sm:$0xf]
  %v46 = vld [vmem:[%s1 + $0x68] sm:$0xf]
  %v47 = vld [vmem:[%s1 + $0x6c] sm:$0xf]
  %v48 = vld [vmem:[%s1 + $0x70] sm:$0xf]
  %v49 = vld [vmem:[%s1 + $0x74] sm:$0xf]
  %v50 = vld [vmem:[%s1 + $0x78] sm:$0xf]
  %v51 = vld [vmem:[%s1 + $0x7c] sm:$0xf]
  %v52 = vld [vmem:[%s1 + $0x80] sm:$0xf]
  %v53 = vld [vmem:[%s1 + $0x84] sm:$0xf]
  %v54 = vld [vmem:[%s1 + $0x88] sm:$0xf]
  %v55 = vld [vmem:[%s1 + $0x8c] sm:$0xf]
  %v56 = vld [vmem:[%s1 + $0x90] sm:$0xf]
  %v57 = vld [vmem:[%s1 + $0x94] sm:$0xf]
  %v58 = vld [vmem:[%s1 + $0x98] sm:$0xf]
  %v59 = vld [vmem:[%s1 + $0x9c] sm:$0xf]
  %v60 = vld [vmem:[%s1 + $0xa0] sm:$0xf]
  %v61 = vld [vmem:[%s1 + $0xa4] sm:$0xf]
  %v62 = vld [vmem:[%s1 + $0xa8] sm:$0xf]
  %v63 = vld [vmem:[%s1 + $0xac] sm:$0xf]
  %v64 = vld [vmem:[%s1 + $0xb0] sm:$0xf]
  %v65 = vld [vmem:[%s1 + $0xb4] sm:$0xf]
  %v66 = vld [vmem:[%s1 + $0xb8] sm:$0xf]
  %v67 = vld [vmem:[%s1 + $0xbc] sm:$0xf]
  %v68 = vld [vmem:[%s1 + $0xc0] sm:$0xf]
  %v69 = vld [vmem:[%s1 + $0xc4] sm:$0xf]
  %v70 = vld [vmem:[%s1 + $0xc8] sm:$0xf]
  %v71 = vld [vmem:[%s1 + $0xcc] sm:$0xf]
  %v72 = vld [vmem:[%s1 + $0xd0] sm:$0xf]
  %v73 = vld [vmem:[%s1 + $0xd4] sm:$0xf]
  %v74 = vld [vmem:[%s1 + $0xd8] sm:$0xf]
  %v75 = vld [vmem:[%s1 + $0xdc] sm:$0xf]
  %v76 = vld [vmem:[%s1 + $0xe0] sm:$0xf]
  %v77 = vld [vmem:[%s1 + $0xe4] sm:$0xf]
  %v78 = vld [vmem:[%s1 + $0xe8] sm:$0xf]
  %v79 = vld [vmem:[%s1 + $0xec] sm:$0xf]
  %v80 = vld [vmem:[%s1 + $0xf0] sm:$0xf]
  %v81 = vld [vmem:[%s1 + $0xf4] sm:$0xf]
  %v82 = vld [vmem:[%s1 + $0xf8] sm:$0xf]
  %v83 = vld [vmem:[%s1 + $0xfc] sm:$0xf]
  %v84 = vld [vmem:[%s1 + $0x100] sm:$0xf]
  %v85 = vld [vmem:[%s1 + $0x104] sm:$0xf]
  %v86 = vld [vmem:[%s1 + $0x108] sm:$0xf]
  %v87 = vld [vmem:[%s1 + $0x10c] sm:$0xf]
  %v88 = vld [vmem:[%s1 + $0x110] sm:$0xf]
  %v89 = vld [vmem:[%s1 + $0x114] sm:$0xf]
  %v90 = vld [vmem:[%s1 + $0x118] sm:$0xf]
  %v91 = vld [vmem:[%s1 + $0x11c] sm:$0xf]
  %v92 = vld [vmem:[%s1 + $0x120] sm:$0xf]
  %v93 = vld [vmem:[%s1 + $0x124] sm:$0xf]
  %v94 = vld [vmem:[%s1 + $0x128] sm:$0xf]
  %v95 = vld [vmem:[%s1 + $0x12c] sm:$0xf]
  %v96 = vld [vmem:[%s1 + $0x130] sm:$0xf]
  %v97 = vld [vmem:[%s1 + $0x134] sm:$0xf]
  %v98 = vld [vmem:[%s1 + $0x138] sm:$0xf]
  %v99 = vld [vmem:[%s1 + $0x13c] sm:$0xf]
  %v100 = vld [vmem:[%s1 + $0x140] sm:$0xf]
  %v101 = vld [vmem:[%s1 + $0x144] sm:$0xf]
  %v102 = vld [vmem:[%s1 + $0x148] sm:$0xf]
  %v103 = vld [vmem:[%s1 + $0x14c] sm:$0xf]
  %v104 = vld [vmem:[%s1 + $0x150] sm:$0xf]
  %v105 = vld [vmem:[%s1 + $0x154] sm:$0xf]
  %v106 = vld [vmem:[%s1 + $0x158] sm:$0xf]
  %v107 = vld [vmem:[%s1 + $0x15c] sm:$0xf]
  %v108 = vld [vmem:[%s1 + $0x160] sm:$0xf]
  %v109 = vld [vmem:[%s1 + $0x164] sm:$0xf]
  %v110 = vld [vmem:[%s1 + $0x168] sm:$0xf]
  %v111 = vld [vmem:[%s1 + $0x16c] sm:$0xf]
  %v112 = vld [vmem:[%s1 + $0x170] sm:$0xf]
  %v113 = vld [vmem:[%s1 + $0x174] sm:$0xf]
  %v114 = vld [vmem:[%s1 + $0x178] sm:$0xf]
  %v115 = vld [vmem:[%s1 + $0x17c] sm:$0xf]
  %v116 = vld [vmem:[%s1 + $0x180] sm:$0xf]
  %v117 = vld [vmem:[%s1 + $0x184] sm:$0xf]
  %v118 = vld [vmem:[%s1 + $0x188] sm:$0xf]
  %v119 = vld [vmem:[%s1 + $0x18c] sm:$0xf]
  %v120 = vld [vmem:[%s1 + $0x190] sm:$0xf]
  %v121 = vld [vmem:[%s1 + $0x194] sm:$0xf]
  %v122 = vld [vmem:[%s1 + $0x198] sm:$0xf]
  %v123 = vld [vmem:[%s1 + $0x19c] sm:$0xf]
  %v124 = vld [vmem:[%s1 + $0x1a0] sm:$0xf]
  %v125 = vld [vmem:[%s1 + $0x1a4] sm:$0xf]
  %v126 = vld [vmem:[%s1 + $0x1a8] sm:$0xf]
  %v127 = vld [vmem:[%s1 + $0x1ac] sm:$0xf]
  %v128 = vld [vmem:[%s1 + $0x1b0] sm:$0xf]
  %v129 = vld [vmem:[%s1 + $0x1b4] sm:$0xf]
  %v130 = vld [vmem:[%s1 + $0x1b8] sm:$0xf]
  %v131 = vld [vmem:[%s1 + $0x1bc] sm:$0xf]
  %v132 = vld [vmem:[%s1 + $0x1c0] sm:$0xf]
  %v133 = vld [vmem:[%s1 + $0x1c4] sm:$0xf]
  %v134 = vld [vmem:[%s1 + $0x1c8] sm:$0xf]
  %v135 = vld [vmem:[%s1 + $0x1cc] sm:$0xf]
  %v136 = vld [vmem:[%s1 + $0x1d0] sm:$0xf]
  %v137 = vld [vmem:[%s1 + $0x1d4] sm:$0xf]
  %v138 = vld [vmem:[%s1 + $0x1d8] sm:$0xf]
  %v139 = vld [vmem:[%s1 + $0x1dc] sm:$0xf]
  %v140 = vld [vmem:[%s1 + $0x1e0] sm:$0xf]
  %v141 = vld [vmem:[%s1 + $0x1e4] sm:$0xf]
  %v142 = vld [vmem:[%s1 + $0x1e8] sm:$0xf]
  %v143 = vld [vmem:[%s1 + $0x1ec] sm:$0xf]
  %v144 = vld [vmem:[%s1 + $0x1f0] sm:$0xf]
  %v145 = vld [vmem:[%s1 + $0x1f4] sm:$0xf]
  %v146 = vld [vmem:[%s1 + $0x1f8] sm:$0xf]
  %v147 = vld [vmem:[%s1 + $0x1fc] sm:$0xf]
  %v149 = vlaneseq
  %v150 = vshrl.u32 %v149, 7
  %v151 = vsub.s32 0, %v150
  %v152 = vrot.slane %v19, %v151
  %v158 = vunpack.c.l.b16 %v15
  %v159 = vunpack.c.h.b16 %v15
  %v160 = vunpack.c.l.b16 %v16
  %v161 = vunpack.c.h.b16 %v16
  %v162 = vunpack.c.l.b16 %v17
  %v163 = vunpack.c.h.b16 %v17
  %v164 = vunpack.c.l.b16 %v18
  %v165 = vunpack.c.h.b16 %v18
  %v166 = vpack.c.b16 %v158, %v158
  %v167 = vpack.c.b16 %v159, %v159
  %v168 = vpack.c.b16 %v160, %v160
  %v169 = vpack.c.b16 %v161, %v161
  %v170 = vpack.c.b16 %v162, %v162
  %v171 = vpack.c.b16 %v163, %v163
  %v172 = vpack.c.b16 %v164, %v164
  %v173 = vpack.c.b16 %v165, %v165
  %v310 = vunpack.c.l.b16 %v20
  %v311 = vunpack.c.l.b16 %v21
  %v312 = vunpack.c.l.b16 %v22
  %v313 = vunpack.c.l.b16 %v23
  %v314 = vunpack.c.l.b16 %v24
  %v315 = vunpack.c.l.b16 %v25
  %v316 = vunpack.c.l.b16 %v26
  %v317 = vunpack.c.l.b16 %v27
  %v318 = vunpack.c.l.b16 %v28
  %v319 = vunpack.c.l.b16 %v29
  %v320 = vunpack.c.l.b16 %v30
  %v321 = vunpack.c.l.b16 %v31
  %v322 = vunpack.c.l.b16 %v32
  %v323 = vunpack.c.l.b16 %v33
  %v324 = vunpack.c.l.b16 %v34
  %v325 = vunpack.c.l.b16 %v35
  %v326 = vunpack.c.l.b16 %v36
  %v327 = vunpack.c.l.b16 %v37
  %v328 = vunpack.c.l.b16 %v38
  %v329 = vunpack.c.l.b16 %v39
  %v330 = vunpack.c.l.b16 %v40
  %v331 = vunpack.c.l.b16 %v41
  %v332 = vunpack.c.l.b16 %v42
  %v333 = vunpack.c.l.b16 %v43
  %v334 = vunpack.c.l.b16 %v44
  %v335 = vunpack.c.l.b16 %v45
  %v336 = vunpack.c.l.b16 %v46
  %v337 = vunpack.c.l.b16 %v47
  %v338 = vunpack.c.l.b16 %v48
  %v339 = vunpack.c.l.b16 %v49
  %v340 = vunpack.c.l.b16 %v50
  %v341 = vunpack.c.l.b16 %v51
  %v342 = vunpack.c.l.b16 %v52
  %v343 = vunpack.c.l.b16 %v53
  %v344 = vunpack.c.l.b16 %v54
  %v345 = vunpack.c.l.b16 %v55
  %v346 = vunpack.c.l.b16 %v56
  %v347 = vunpack.c.l.b16 %v57
  %v348 = vunpack.c.l.b16 %v58
  %v349 = vunpack.c.l.b16 %v59
  %v350 = vunpack.c.l.b16 %v60
  %v351 = vunpack.c.l.b16 %v61
  %v352 = vunpack.c.l.b16 %v62
  %v353 = vunpack.c.l.b16 %v63
  %v354 = vunpack.c.l.b16 %v64
  %v355 = vunpack.c.l.b16 %v65
  %v356 = vunpack.c.l.b16 %v66
  %v357 = vunpack.c.l.b16 %v67
  %v358 = vunpack.c.l.b16 %v68
  %v359 = vunpack.c.l.b16 %v69
  %v360 = vunpack.c.l.b16 %v70
  %v361 = vunpack.c.l.b16 %v71
  %v362 = vunpack.c.l.b16 %v72
  %v363 = vunpack.c.l.b16 %v73
  %v364 = vunpack.c.l.b16 %v74
  %v365 = vunpack.c.l.b16 %v75
  %v366 = vunpack.c.l.b16 %v76
  %v367 = vunpack.c.l.b16 %v77
  %v368 = vunpack.c.l.b16 %v78
  %v369 = vunpack.c.l.b16 %v79
  %v370 = vunpack.c.l.b16 %v80
  %v371 = vunpack.c.l.b16 %v81
  %v372 = vunpack.c.l.b16 %v82
  %v373 = vunpack.c.l.b16 %v83
  %v374 = vunpack.c.l.b16 %v84
  %v375 = vunpack.c.l.b16 %v85
  %v376 = vunpack.c.l.b16 %v86
  %v377 = vunpack.c.l.b16 %v87
  %v378 = vunpack.c.l.b16 %v88
  %v379 = vunpack.c.l.b16 %v89
  %v380 = vunpack.c.l.b16 %v90
  %v381 = vunpack.c.l.b16 %v91
  %v382 = vunpack.c.l.b16 %v92
  %v383 = vunpack.c.l.b16 %v93
  %v384 = vunpack.c.l.b16 %v94
  %v385 = vunpack.c.l.b16 %v95
  %v386 = vunpack.c.l.b16 %v96
  %v387 = vunpack.c.l.b16 %v97
  %v388 = vunpack.c.l.b16 %v98
  %v389 = vunpack.c.l.b16 %v99
  %v390 = vunpack.c.l.b16 %v100
  %v391 = vunpack.c.l.b16 %v101
  %v392 = vunpack.c.l.b16 %v102
  %v393 = vunpack.c.l.b16 %v103
  %v394 = vunpack.c.l.b16 %v104
  %v395 = vunpack.c.l.b16 %v105
  %v396 = vunpack.c.l.b16 %v106
  %v397 = vunpack.c.l.b16 %v107
  %v398 = vunpack.c.l.b16 %v108
  %v399 = vunpack.c.l.b16 %v109
  %v400 = vunpack.c.l.b16 %v110
  %v401 = vunpack.c.l.b16 %v111
  %v402 = vunpack.c.l.b16 %v112
  %v403 = vunpack.c.l.b16 %v113
  %v404 = vunpack.c.l.b16 %v114
  %v405 = vunpack.c.l.b16 %v115
  %v406 = vunpack.c.l.b16 %v116
  %v407 = vunpack.c.l.b16 %v117
  %v408 = vunpack.c.l.b16 %v118
  %v409 = vunpack.c.l.b16 %v119
  %v410 = vunpack.c.l.b16 %v120
  %v411 = vunpack.c.l.b16 %v121
  %v412 = vunpack.c.l.b16 %v122
  %v413 = vunpack.c.l.b16 %v123
  %v414 = vunpack.c.l.b16 %v124
  %v415 = vunpack.c.l.b16 %v125
  %v416 = vunpack.c.l.b16 %v126
  %v417 = vunpack.c.l.b16 %v127
  %v418 = vunpack.c.l.b16 %v128
  %v419 = vunpack.c.l.b16 %v129
  %v420 = vunpack.c.l.b16 %v130
  %v421 = vunpack.c.l.b16 %v131
  %v422 = vunpack.c.l.b16 %v132
  %v423 = vunpack.c.l.b16 %v133
  %v424 = vunpack.c.l.b16 %v134
  %v425 = vunpack.c.l.b16 %v135
  %v426 = vunpack.c.l.b16 %v136
  %v427 = vunpack.c.l.b16 %v137
  %v428 = vunpack.c.l.b16 %v138
  %v429 = vunpack.c.l.b16 %v139
  %v430 = vunpack.c.l.b16 %v140
  %v431 = vunpack.c.l.b16 %v141
  %v432 = vunpack.c.l.b16 %v142
  %v433 = vunpack.c.l.b16 %v143
  %v434 = vunpack.c.l.b16 %v144
  %v435 = vunpack.c.l.b16 %v145
  %v436 = vunpack.c.l.b16 %v146
  %v437 = vunpack.c.l.b16 %v147
  %v438 = vpack.c.b16 %v311, %v310
  %v439 = vpack.c.b16 %v313, %v312
  %v440 = vpack.c.b16 %v315, %v314
  %v441 = vpack.c.b16 %v317, %v316
  %v442 = vpack.c.b16 %v319, %v318
  %v443 = vpack.c.b16 %v321, %v320
  %v444 = vpack.c.b16 %v323, %v322
  %v445 = vpack.c.b16 %v325, %v324
  %v446 = vpack.c.b16 %v327, %v326
  %v447 = vpack.c.b16 %v329, %v328
  %v448 = vpack.c.b16 %v331, %v330
  %v449 = vpack.c.b16 %v333, %v332
  %v450 = vpack.c.b16 %v335, %v334
  %v451 = vpack.c.b16 %v337, %v336
  %v452 = vpack.c.b16 %v339, %v338
  %v453 = vpack.c.b16 %v341, %v340
  %v454 = vpack.c.b16 %v343, %v342
  %v455 = vpack.c.b16 %v345, %v344
  %v456 = vpack.c.b16 %v347, %v346
  %v457 = vpack.c.b16 %v349, %v348
  %v458 = vpack.c.b16 %v351, %v350
  %v459 = vpack.c.b16 %v353, %v352
  %v460 = vpack.c.b16 %v355, %v354
  %v461 = vpack.c.b16 %v357, %v356
  %v462 = vpack.c.b16 %v359, %v358
  %v463 = vpack.c.b16 %v361, %v360
  %v464 = vpack.c.b16 %v363, %v362
  %v465 = vpack.c.b16 %v365, %v364
  %v466 = vpack.c.b16 %v367, %v366
  %v467 = vpack.c.b16 %v369, %v368
  %v468 = vpack.c.b16 %v371, %v370
  %v469 = vpack.c.b16 %v373, %v372
  %v470 = vpack.c.b16 %v375, %v374
  %v471 = vpack.c.b16 %v377, %v376
  %v472 = vpack.c.b16 %v379, %v378
  %v473 = vpack.c.b16 %v381, %v380
  %v474 = vpack.c.b16 %v383, %v382
  %v475 = vpack.c.b16 %v385, %v384
  %v476 = vpack.c.b16 %v387, %v386
  %v477 = vpack.c.b16 %v389, %v388
  %v478 = vpack.c.b16 %v391, %v390
  %v479 = vpack.c.b16 %v393, %v392
  %v480 = vpack.c.b16 %v395, %v394
  %v481 = vpack.c.b16 %v397, %v396
  %v482 = vpack.c.b16 %v399, %v398
  %v483 = vpack.c.b16 %v401, %v400
  %v484 = vpack.c.b16 %v403, %v402
  %v485 = vpack.c.b16 %v405, %v404
  %v486 = vpack.c.b16 %v407, %v406
  %v487 = vpack.c.b16 %v409, %v408
  %v488 = vpack.c.b16 %v411, %v410
  %v489 = vpack.c.b16 %v413, %v412
  %v490 = vpack.c.b16 %v415, %v414
  %v491 = vpack.c.b16 %v417, %v416
  %v492 = vpack.c.b16 %v419, %v418
  %v493 = vpack.c.b16 %v421, %v420
  %v494 = vpack.c.b16 %v423, %v422
  %v495 = vpack.c.b16 %v425, %v424
  %v496 = vpack.c.b16 %v427, %v426
  %v497 = vpack.c.b16 %v429, %v428
  %v498 = vpack.c.b16 %v431, %v430
  %v499 = vpack.c.b16 %v433, %v432
  %v500 = vpack.c.b16 %v435, %v434
  %v501 = vpack.c.b16 %v437, %v436
  %566 = vmatprep.subr.bf16.mxu0 0
  %567 = vmatpush1.bf16.msra.mxu0 %v438
  %568 = vmatprep.subr.bf16.mxu0 0
  %569 = vmatpush1.bf16.msra.mxu0 %v439
  %570 = vmatprep.subr.bf16.mxu0 0
  %571 = vmatpush1.bf16.msra.mxu0 %v440
  %572 = vmatprep.subr.bf16.mxu0 0
  %573 = vmatpush1.bf16.msra.mxu0 %v441
  %574 = vmatprep.subr.bf16.mxu0 0
  %575 = vmatpush1.bf16.msra.mxu0 %v442
  %576 = vmatprep.subr.bf16.mxu0 0
  %577 = vmatpush1.bf16.msra.mxu0 %v443
  %578 = vmatprep.subr.bf16.mxu0 0
  %579 = vmatpush1.bf16.msra.mxu0 %v444
  %580 = vmatprep.subr.bf16.mxu0 0
  %581 = vmatpush1.bf16.msra.mxu0 %v445
  %582 = vmatprep.subr.bf16.mxu0 0
  %583 = vmatpush1.bf16.msra.mxu0 %v446
  %584 = vmatprep.subr.bf16.mxu0 0
  %585 = vmatpush1.bf16.msra.mxu0 %v447
  %586 = vmatprep.subr.bf16.mxu0 0
  %587 = vmatpush1.bf16.msra.mxu0 %v448
  %588 = vmatprep.subr.bf16.mxu0 0
  %589 = vmatpush1.bf16.msra.mxu0 %v449
  %590 = vmatprep.subr.bf16.mxu0 0
  %591 = vmatpush1.bf16.msra.mxu0 %v450
  %592 = vmatprep.subr.bf16.mxu0 0
  %593 = vmatpush1.bf16.msra.mxu0 %v451
  %594 = vmatprep.subr.bf16.mxu0 0
  %595 = vmatpush1.bf16.msra.mxu0 %v452
  %596 = vmatprep.subr.bf16.mxu0 0
  %597 = vmatpush1.bf16.msra.mxu0 %v453
  %598 = vmatprep.mubr.bf16.mxu0 %v167
  %599 = vmatmul.mubr.bf16.gmra.mrb[0].mxu0 %v166
  %v600 = vpop.f32.mrb[0].mxu0
  %v601 = vadd.f32 %v152, %v600
  %v602 = vpop.f32.mrb[0].mxu0
  %v603 = vpop.f32.mrb[0].mxu0
  %v604 = vpop.f32.mrb[0].mxu0
  %605 = vdwg.mxu0
  %606 = vmatprep.subr.bf16.mxu0 0
  %607 = vmatpush1.bf16.msra.mxu0 %v454
  %608 = vmatprep.subr.bf16.mxu0 0
  %609 = vmatpush1.bf16.msra.mxu0 %v455
  %610 = vmatprep.subr.bf16.mxu0 0
  %611 = vmatpush1.bf16.msra.mxu0 %v456
  %612 = vmatprep.subr.bf16.mxu0 0
  %613 = vmatpush1.bf16.msra.mxu0 %v457
  %614 = vmatprep.subr.bf16.mxu0 0
  %615 = vmatpush1.bf16.msra.mxu0 %v458
  %616 = vmatprep.subr.bf16.mxu0 0
  %617 = vmatpush1.bf16.msra.mxu0 %v459
  %618 = vmatprep.subr.bf16.mxu0 0
  %619 = vmatpush1.bf16.msra.mxu0 %v460
  %620 = vmatprep.subr.bf16.mxu0 0
  %621 = vmatpush1.bf16.msra.mxu0 %v461
  %622 = vmatprep.subr.bf16.mxu0 0
  %623 = vmatpush1.bf16.msra.mxu0 %v462
  %624 = vmatprep.subr.bf16.mxu0 0
  %625 = vmatpush1.bf16.msra.mxu0 %v463
  %626 = vmatprep.subr.bf16.mxu0 0
  %627 = vmatpush1.bf16.msra.mxu0 %v464
  %628 = vmatprep.subr.bf16.mxu0 0
  %629 = vmatpush1.bf16.msra.mxu0 %v465
  %630 = vmatprep.subr.bf16.mxu0 0
  %631 = vmatpush1.bf16.msra.mxu0 %v466
  %632 = vmatprep.subr.bf16.mxu0 0
  %633 = vmatpush1.bf16.msra.mxu0 %v467
  %634 = vmatprep.subr.bf16.mxu0 0
  %635 = vmatpush1.bf16.msra.mxu0 %v468
  %636 = vmatprep.subr.bf16.mxu0 0
  %637 = vmatpush1.bf16.msra.mxu0 %v469
  %638 = vmatprep.mubr.bf16.mxu0 %v169
  %639 = vmatmul.mubr.bf16.gmra.mrb[0].mxu0 %v168
  %v640 = vpop.f32.mrb[0].mxu0
  %v641 = vadd.f32 %v601, %v640
  %v642 = vpop.f32.mrb[0].mxu0
  %v643 = vpop.f32.mrb[0].mxu0
  %v644 = vpop.f32.mrb[0].mxu0
  %645 = vdwg.mxu0
  %646 = vmatprep.subr.bf16.mxu0 0
  %647 = vmatpush1.bf16.msra.mxu0 %v470
  %648 = vmatprep.subr.bf16.mxu0 0
  %649 = vmatpush1.bf16.msra.mxu0 %v471
  %650 = vmatprep.subr.bf16.mxu0 0
  %651 = vmatpush1.bf16.msra.mxu0 %v472
  %652 = vmatprep.subr.bf16.mxu0 0
  %653 = vmatpush1.bf16.msra.mxu0 %v473
  %654 = vmatprep.subr.bf16.mxu0 0
  %655 = vmatpush1.bf16.msra.mxu0 %v474
  %656 = vmatprep.subr.bf16.mxu0 0
  %657 = vmatpush1.bf16.msra.mxu0 %v475
  %658 = vmatprep.subr.bf16.mxu0 0
  %659 = vmatpush1.bf16.msra.mxu0 %v476
  %660 = vmatprep.subr.bf16.mxu0 0
  %661 = vmatpush1.bf16.msra.mxu0 %v477
  %662 = vmatprep.subr.bf16.mxu0 0
  %663 = vmatpush1.bf16.msra.mxu0 %v478
  %664 = vmatprep.subr.bf16.mxu0 0
  %665 = vmatpush1.bf16.msra.mxu0 %v479
  %666 = vmatprep.subr.bf16.mxu0 0
  %667 = vmatpush1.bf16.msra.mxu0 %v480
  %668 = vmatprep.subr.bf16.mxu0 0
  %669 = vmatpush1.bf16.msra.mxu0 %v481
  %670 = vmatprep.subr.bf16.mxu0 0
  %671 = vmatpush1.bf16.msra.mxu0 %v482
  %672 = vmatprep.subr.bf16.mxu0 0
  %673 = vmatpush1.bf16.msra.mxu0 %v483
  %674 = vmatprep.subr.bf16.mxu0 0
  %675 = vmatpush1.bf16.msra.mxu0 %v484
  %676 = vmatprep.subr.bf16.mxu0 0
  %677 = vmatpush1.bf16.msra.mxu0 %v485
  %678 = vmatprep.mubr.bf16.mxu0 %v171
  %679 = vmatmul.mubr.bf16.gmra.mrb[0].mxu0 %v170
  %v680 = vpop.f32.mrb[0].mxu0
  %v681 = vadd.f32 %v641, %v680
  %v682 = vpop.f32.mrb[0].mxu0
  %v683 = vpop.f32.mrb[0].mxu0
  %v684 = vpop.f32.mrb[0].mxu0
  %685 = vdwg.mxu0
  %686 = vmatprep.subr.bf16.mxu0 0
  %687 = vmatpush1.bf16.msra.mxu0 %v486
  %688 = vmatprep.subr.bf16.mxu0 0
  %689 = vmatpush1.bf16.msra.mxu0 %v487
  %690 = vmatprep.subr.bf16.mxu0 0
  %691 = vmatpush1.bf16.msra.mxu0 %v488
  %692 = vmatprep.subr.bf16.mxu0 0
  %693 = vmatpush1.bf16.msra.mxu0 %v489
  %694 = vmatprep.subr.bf16.mxu0 0
  %695 = vmatpush1.bf16.msra.mxu0 %v490
  %696 = vmatprep.subr.bf16.mxu0 0
  %697 = vmatpush1.bf16.msra.mxu0 %v491
  %698 = vmatprep.subr.bf16.mxu0 0
  %699 = vmatpush1.bf16.msra.mxu0 %v492
  %700 = vmatprep.subr.bf16.mxu0 0
  %701 = vmatpush1.bf16.msra.mxu0 %v493
  %702 = vmatprep.subr.bf16.mxu0 0
  %703 = vmatpush1.bf16.msra.mxu0 %v494
  %704 = vmatprep.subr.bf16.mxu0 0
  %705 = vmatpush1.bf16.msra.mxu0 %v495
  %706 = vmatprep.subr.bf16.mxu0 0
  %707 = vmatpush1.bf16.msra.mxu0 %v496
  %708 = vmatprep.subr.bf16.mxu0 0
  %709 = vmatpush1.bf16.msra.mxu0 %v497
  %710 = vmatprep.subr.bf16.mxu0 0
  %711 = vmatpush1.bf16.msra.mxu0 %v498
  %712 = vmatprep.subr.bf16.mxu0 0
  %713 = vmatpush1.bf16.msra.mxu0 %v499
  %714 = vmatprep.subr.bf16.mxu0 0
  %715 = vmatpush1.bf16.msra.mxu0 %v500
  %716 = vmatprep.subr.bf16.mxu0 0
  %717 = vmatpush1.bf16.msra.mxu0 %v501
  %718 = vmatprep.mubr.bf16.mxu0 %v173
  %719 = vmatmul.mubr.bf16.gmra.mrb[0].mxu0 %v172
  %v720 = vpop.f32.mrb[0].mxu0
  %v721 = vadd.f32 %v681, %v720
  %v722 = vpop.f32.mrb[0].mxu0
  %v723 = vpop.f32.mrb[0].mxu0
  %v724 = vpop.f32.mrb[0].mxu0
  %725 = vdwg.mxu0
  %v726 = vmax.f32 %v721, 0.0
  %s727 = scalar_lea.vmem %s1, 512
  %v728 = vld [vmem:[%s727] sm:$0xf]
  %v729 = vld [vmem:[%s727 + $0x4] sm:$0xf]
  %v730 = vld [vmem:[%s727 + $0x8] sm:$0xf]
  %v731 = vld [vmem:[%s727 + $0xc] sm:$0xf]
  %v732 = vld [vmem:[%s727 + $0x10] sm:$0xf]
  %v733 = vld [vmem:[%s727 + $0x14] sm:$0xf]
  %v734 = vld [vmem:[%s727 + $0x18] sm:$0xf]
  %v735 = vld [vmem:[%s727 + $0x1c] sm:$0xf]
  %v736 = vld [vmem:[%s727 + $0x20] sm:$0xf]
  %v737 = vld [vmem:[%s727 + $0x24] sm:$0xf]
  %v738 = vld [vmem:[%s727 + $0x28] sm:$0xf]
  %v739 = vld [vmem:[%s727 + $0x2c] sm:$0xf]
  %v740 = vld [vmem:[%s727 + $0x30] sm:$0xf]
  %v741 = vld [vmem:[%s727 + $0x34] sm:$0xf]
  %v742 = vld [vmem:[%s727 + $0x38] sm:$0xf]
  %v743 = vld [vmem:[%s727 + $0x3c] sm:$0xf]
  %v744 = vld [vmem:[%s727 + $0x40] sm:$0xf]
  %v745 = vld [vmem:[%s727 + $0x44] sm:$0xf]
  %v746 = vld [vmem:[%s727 + $0x48] sm:$0xf]
  %v747 = vld [vmem:[%s727 + $0x4c] sm:$0xf]
  %v748 = vld [vmem:[%s727 + $0x50] sm:$0xf]
  %v749 = vld [vmem:[%s727 + $0x54] sm:$0xf]
  %v750 = vld [vmem:[%s727 + $0x58] sm:$0xf]
  %v751 = vld [vmem:[%s727 + $0x5c] sm:$0xf]
  %v752 = vld [vmem:[%s727 + $0x60] sm:$0xf]
  %v753 = vld [vmem:[%s727 + $0x64] sm:$0xf]
  %v754 = vld [vmem:[%s727 + $0x68] sm:$0xf]
  %v755 = vld [vmem:[%s727 + $0x6c] sm:$0xf]
  %v756 = vld [vmem:[%s727 + $0x70] sm:$0xf]
  %v757 = vld [vmem:[%s727 + $0x74] sm:$0xf]
  %v758 = vld [vmem:[%s727 + $0x78] sm:$0xf]
  %v759 = vld [vmem:[%s727 + $0x7c] sm:$0xf]
  %v760 = vld [vmem:[%s727 + $0x80] sm:$0xf]
  %v761 = vld [vmem:[%s727 + $0x84] sm:$0xf]
  %v762 = vld [vmem:[%s727 + $0x88] sm:$0xf]
  %v763 = vld [vmem:[%s727 + $0x8c] sm:$0xf]
  %v764 = vld [vmem:[%s727 + $0x90] sm:$0xf]
  %v765 = vld [vmem:[%s727 + $0x94] sm:$0xf]
  %v766 = vld [vmem:[%s727 + $0x98] sm:$0xf]
  %v767 = vld [vmem:[%s727 + $0x9c] sm:$0xf]
  %v768 = vld [vmem:[%s727 + $0xa0] sm:$0xf]
  %v769 = vld [vmem:[%s727 + $0xa4] sm:$0xf]
  %v770 = vld [vmem:[%s727 + $0xa8] sm:$0xf]
  %v771 = vld [vmem:[%s727 + $0xac] sm:$0xf]
  %v772 = vld [vmem:[%s727 + $0xb0] sm:$0xf]
  %v773 = vld [vmem:[%s727 + $0xb4] sm:$0xf]
  %v774 = vld [vmem:[%s727 + $0xb8] sm:$0xf]
  %v775 = vld [vmem:[%s727 + $0xbc] sm:$0xf]
  %v776 = vld [vmem:[%s727 + $0xc0] sm:$0xf]
  %v777 = vld [vmem:[%s727 + $0xc4] sm:$0xf]
  %v778 = vld [vmem:[%s727 + $0xc8] sm:$0xf]
  %v779 = vld [vmem:[%s727 + $0xcc] sm:$0xf]
  %v780 = vld [vmem:[%s727 + $0xd0] sm:$0xf]
  %v781 = vld [vmem:[%s727 + $0xd4] sm:$0xf]
  %v782 = vld [vmem:[%s727 + $0xd8] sm:$0xf]
  %v783 = vld [vmem:[%s727 + $0xdc] sm:$0xf]
  %v784 = vld [vmem:[%s727 + $0xe0] sm:$0xf]
  %v785 = vld [vmem:[%s727 + $0xe4] sm:$0xf]
  %v786 = vld [vmem:[%s727 + $0xe8] sm:$0xf]
  %v787 = vld [vmem:[%s727 + $0xec] sm:$0xf]
  %v788 = vld [vmem:[%s727 + $0xf0] sm:$0xf]
  %v789 = vld [vmem:[%s727 + $0xf4] sm:$0xf]
  %v790 = vld [vmem:[%s727 + $0xf8] sm:$0xf]
  %v791 = vld [vmem:[%s727 + $0xfc] sm:$0xf]
  %v792 = vld [vmem:[%s727 + $0x100] sm:$0xf]
  %v793 = vld [vmem:[%s727 + $0x104] sm:$0xf]
  %v794 = vld [vmem:[%s727 + $0x108] sm:$0xf]
  %v795 = vld [vmem:[%s727 + $0x10c] sm:$0xf]
  %v796 = vld [vmem:[%s727 + $0x110] sm:$0xf]
  %v797 = vld [vmem:[%s727 + $0x114] sm:$0xf]
  %v798 = vld [vmem:[%s727 + $0x118] sm:$0xf]
  %v799 = vld [vmem:[%s727 + $0x11c] sm:$0xf]
  %v800 = vld [vmem:[%s727 + $0x120] sm:$0xf]
  %v801 = vld [vmem:[%s727 + $0x124] sm:$0xf]
  %v802 = vld [vmem:[%s727 + $0x128] sm:$0xf]
  %v803 = vld [vmem:[%s727 + $0x12c] sm:$0xf]
  %v804 = vld [vmem:[%s727 + $0x130] sm:$0xf]
  %v805 = vld [vmem:[%s727 + $0x134] sm:$0xf]
  %v806 = vld [vmem:[%s727 + $0x138] sm:$0xf]
  %v807 = vld [vmem:[%s727 + $0x13c] sm:$0xf]
  %v808 = vld [vmem:[%s727 + $0x140] sm:$0xf]
  %v809 = vld [vmem:[%s727 + $0x144] sm:$0xf]
  %v810 = vld [vmem:[%s727 + $0x148] sm:$0xf]
  %v811 = vld [vmem:[%s727 + $0x14c] sm:$0xf]
  %v812 = vld [vmem:[%s727 + $0x150] sm:$0xf]
  %v813 = vld [vmem:[%s727 + $0x154] sm:$0xf]
  %v814 = vld [vmem:[%s727 + $0x158] sm:$0xf]
  %v815 = vld [vmem:[%s727 + $0x15c] sm:$0xf]
  %v816 = vld [vmem:[%s727 + $0x160] sm:$0xf]
  %v817 = vld [vmem:[%s727 + $0x164] sm:$0xf]
  %v818 = vld [vmem:[%s727 + $0x168] sm:$0xf]
  %v819 = vld [vmem:[%s727 + $0x16c] sm:$0xf]
  %v820 = vld [vmem:[%s727 + $0x170] sm:$0xf]
  %v821 = vld [vmem:[%s727 + $0x174] sm:$0xf]
  %v822 = vld [vmem:[%s727 + $0x178] sm:$0xf]
  %v823 = vld [vmem:[%s727 + $0x17c] sm:$0xf]
  %v824 = vld [vmem:[%s727 + $0x180] sm:$0xf]
  %v825 = vld [vmem:[%s727 + $0x184] sm:$0xf]
  %v826 = vld [vmem:[%s727 + $0x188] sm:$0xf]
  %v827 = vld [vmem:[%s727 + $0x18c] sm:$0xf]
  %v828 = vld [vmem:[%s727 + $0x190] sm:$0xf]
  %v829 = vld [vmem:[%s727 + $0x194] sm:$0xf]
  %v830 = vld [vmem:[%s727 + $0x198] sm:$0xf]
  %v831 = vld [vmem:[%s727 + $0x19c] sm:$0xf]
  %v832 = vld [vmem:[%s727 + $0x1a0] sm:$0xf]
  %v833 = vld [vmem:[%s727 + $0x1a4] sm:$0xf]
  %v834 = vld [vmem:[%s727 + $0x1a8] sm:$0xf]
  %v835 = vld [vmem:[%s727 + $0x1ac] sm:$0xf]
  %v836 = vld [vmem:[%s727 + $0x1b0] sm:$0xf]
  %v837 = vld [vmem:[%s727 + $0x1b4] sm:$0xf]
  %v838 = vld [vmem:[%s727 + $0x1b8] sm:$0xf]
  %v839 = vld [vmem:[%s727 + $0x1bc] sm:$0xf]
  %v840 = vld [vmem:[%s727 + $0x1c0] sm:$0xf]
  %v841 = vld [vmem:[%s727 + $0x1c4] sm:$0xf]
  %v842 = vld [vmem:[%s727 + $0x1c8] sm:$0xf]
  %v843 = vld [vmem:[%s727 + $0x1cc] sm:$0xf]
  %v844 = vld [vmem:[%s727 + $0x1d0] sm:$0xf]
  %v845 = vld [vmem:[%s727 + $0x1d4] sm:$0xf]
  %v846 = vld [vmem:[%s727 + $0x1d8] sm:$0xf]
  %v847 = vld [vmem:[%s727 + $0x1dc] sm:$0xf]
  %v848 = vld [vmem:[%s727 + $0x1e0] sm:$0xf]
  %v849 = vld [vmem:[%s727 + $0x1e4] sm:$0xf]
  %v850 = vld [vmem:[%s727 + $0x1e8] sm:$0xf]
  %v851 = vld [vmem:[%s727 + $0x1ec] sm:$0xf]
  %v852 = vld [vmem:[%s727 + $0x1f0] sm:$0xf]
  %v853 = vld [vmem:[%s727 + $0x1f4] sm:$0xf]
  %v854 = vld [vmem:[%s727 + $0x1f8] sm:$0xf]
  %v855 = vld [vmem:[%s727 + $0x1fc] sm:$0xf]
  %v984 = vunpack.c.l.b16 %v728
  %v985 = vunpack.c.l.b16 %v729
  %v986 = vunpack.c.l.b16 %v730
  %v987 = vunpack.c.l.b16 %v731
  %v988 = vunpack.c.l.b16 %v732
  %v989 = vunpack.c.l.b16 %v733
  %v990 = vunpack.c.l.b16 %v734
  %v991 = vunpack.c.l.b16 %v735
  %v992 = vunpack.c.l.b16 %v736
  %v993 = vunpack.c.l.b16 %v737
  %v994 = vunpack.c.l.b16 %v738
  %v995 = vunpack.c.l.b16 %v739
  %v996 = vunpack.c.l.b16 %v740
  %v997 = vunpack.c.l.b16 %v741
  %v998 = vunpack.c.l.b16 %v742
  %v999 = vunpack.c.l.b16 %v743
  %v1000 = vunpack.c.l.b16 %v744
  %v1001 = vunpack.c.l.b16 %v745
  %v1002 = vunpack.c.l.b16 %v746
  %v1003 = vunpack.c.l.b16 %v747
  %v1004 = vunpack.c.l.b16 %v748
  %v1005 = vunpack.c.l.b16 %v749
  %v1006 = vunpack.c.l.b16 %v750
  %v1007 = vunpack.c.l.b16 %v751
  %v1008 = vunpack.c.l.b16 %v752
  %v1009 = vunpack.c.l.b16 %v753
  %v1010 = vunpack.c.l.b16 %v754
  %v1011 = vunpack.c.l.b16 %v755
  %v1012 = vunpack.c.l.b16 %v756
  %v1013 = vunpack.c.l.b16 %v757
  %v1014 = vunpack.c.l.b16 %v758
  %v1015 = vunpack.c.l.b16 %v759
  %v1016 = vunpack.c.l.b16 %v760
  %v1017 = vunpack.c.l.b16 %v761
  %v1018 = vunpack.c.l.b16 %v762
  %v1019 = vunpack.c.l.b16 %v763
  %v1020 = vunpack.c.l.b16 %v764
  %v1021 = vunpack.c.l.b16 %v765
  %v1022 = vunpack.c.l.b16 %v766
  %v1023 = vunpack.c.l.b16 %v767
  %v1024 = vunpack.c.l.b16 %v768
  %v1025 = vunpack.c.l.b16 %v769
  %v1026 = vunpack.c.l.b16 %v770
  %v1027 = vunpack.c.l.b16 %v771
  %v1028 = vunpack.c.l.b16 %v772
  %v1029 = vunpack.c.l.b16 %v773
  %v1030 = vunpack.c.l.b16 %v774
  %v1031 = vunpack.c.l.b16 %v775
  %v1032 = vunpack.c.l.b16 %v776
  %v1033 = vunpack.c.l.b16 %v777
  %v1034 = vunpack.c.l.b16 %v778
  %v1035 = vunpack.c.l.b16 %v779
  %v1036 = vunpack.c.l.b16 %v780
  %v1037 = vunpack.c.l.b16 %v781
  %v1038 = vunpack.c.l.b16 %v782
  %v1039 = vunpack.c.l.b16 %v783
  %v1040 = vunpack.c.l.b16 %v784
  %v1041 = vunpack.c.l.b16 %v785
  %v1042 = vunpack.c.l.b16 %v786
  %v1043 = vunpack.c.l.b16 %v787
  %v1044 = vunpack.c.l.b16 %v788
  %v1045 = vunpack.c.l.b16 %v789
  %v1046 = vunpack.c.l.b16 %v790
  %v1047 = vunpack.c.l.b16 %v791
  %v1048 = vunpack.c.l.b16 %v792
  %v1049 = vunpack.c.l.b16 %v793
  %v1050 = vunpack.c.l.b16 %v794
  %v1051 = vunpack.c.l.b16 %v795
  %v1052 = vunpack.c.l.b16 %v796
  %v1053 = vunpack.c.l.b16 %v797
  %v1054 = vunpack.c.l.b16 %v798
  %v1055 = vunpack.c.l.b16 %v799
  %v1056 = vunpack.c.l.b16 %v800
  %v1057 = vunpack.c.l.b16 %v801
  %v1058 = vunpack.c.l.b16 %v802
  %v1059 = vunpack.c.l.b16 %v803
  %v1060 = vunpack.c.l.b16 %v804
  %v1061 = vunpack.c.l.b16 %v805
  %v1062 = vunpack.c.l.b16 %v806
  %v1063 = vunpack.c.l.b16 %v807
  %v1064 = vunpack.c.l.b16 %v808
  %v1065 = vunpack.c.l.b16 %v809
  %v1066 = vunpack.c.l.b16 %v810
  %v1067 = vunpack.c.l.b16 %v811
  %v1068 = vunpack.c.l.b16 %v812
  %v1069 = vunpack.c.l.b16 %v813
  %v1070 = vunpack.c.l.b16 %v814
  %v1071 = vunpack.c.l.b16 %v815
  %v1072 = vunpack.c.l.b16 %v816
  %v1073 = vunpack.c.l.b16 %v817
  %v1074 = vunpack.c.l.b16 %v818
  %v1075 = vunpack.c.l.b16 %v819
  %v1076 = vunpack.c.l.b16 %v820
  %v1077 = vunpack.c.l.b16 %v821
  %v1078 = vunpack.c.l.b16 %v822
  %v1079 = vunpack.c.l.b16 %v823
  %v1080 = vunpack.c.l.b16 %v824
  %v1081 = vunpack.c.l.b16 %v825
  %v1082 = vunpack.c.l.b16 %v826
  %v1083 = vunpack.c.l.b16 %v827
  %v1084 = vunpack.c.l.b16 %v828
  %v1085 = vunpack.c.l.b16 %v829
  %v1086 = vunpack.c.l.b16 %v830
  %v1087 = vunpack.c.l.b16 %v831
  %v1088 = vunpack.c.l.b16 %v832
  %v1089 = vunpack.c.l.b16 %v833
  %v1090 = vunpack.c.l.b16 %v834
  %v1091 = vunpack.c.l.b16 %v835
  %v1092 = vunpack.c.l.b16 %v836
  %v1093 = vunpack.c.l.b16 %v837
  %v1094 = vunpack.c.l.b16 %v838
  %v1095 = vunpack.c.l.b16 %v839
  %v1096 = vunpack.c.l.b16 %v840
  %v1097 = vunpack.c.l.b16 %v841
  %v1098 = vunpack.c.l.b16 %v842
  %v1099 = vunpack.c.l.b16 %v843
  %v1100 = vunpack.c.l.b16 %v844
  %v1101 = vunpack.c.l.b16 %v845
  %v1102 = vunpack.c.l.b16 %v846
  %v1103 = vunpack.c.l.b16 %v847
  %v1104 = vunpack.c.l.b16 %v848
  %v1105 = vunpack.c.l.b16 %v849
  %v1106 = vunpack.c.l.b16 %v850
  %v1107 = vunpack.c.l.b16 %v851
  %v1108 = vunpack.c.l.b16 %v852
  %v1109 = vunpack.c.l.b16 %v853
  %v1110 = vunpack.c.l.b16 %v854
  %v1111 = vunpack.c.l.b16 %v855
  %v1112 = vpack.c.b16 %v985, %v984
  %v1113 = vpack.c.b16 %v987, %v986
  %v1114 = vpack.c.b16 %v989, %v988
  %v1115 = vpack.c.b16 %v991, %v990
  %v1116 = vpack.c.b16 %v993, %v992
  %v1117 = vpack.c.b16 %v995, %v994
  %v1118 = vpack.c.b16 %v997, %v996
  %v1119 = vpack.c.b16 %v999, %v998
  %v1120 = vpack.c.b16 %v1001, %v1000
  %v1121 = vpack.c.b16 %v1003, %v1002
  %v1122 = vpack.c.b16 %v1005, %v1004
  %v1123 = vpack.c.b16 %v1007, %v1006
  %v1124 = vpack.c.b16 %v1009, %v1008
  %v1125 = vpack.c.b16 %v1011, %v1010
  %v1126 = vpack.c.b16 %v1013, %v1012
  %v1127 = vpack.c.b16 %v1015, %v1014
  %v1128 = vpack.c.b16 %v1017, %v1016
  %v1129 = vpack.c.b16 %v1019, %v1018
  %v1130 = vpack.c.b16 %v1021, %v1020
  %v1131 = vpack.c.b16 %v1023, %v1022
  %v1132 = vpack.c.b16 %v1025, %v1024
  %v1133 = vpack.c.b16 %v1027, %v1026
  %v1134 = vpack.c.b16 %v1029, %v1028
  %v1135 = vpack.c.b16 %v1031, %v1030
  %v1136 = vpack.c.b16 %v1033, %v1032
  %v1137 = vpack.c.b16 %v1035, %v1034
  %v1138 = vpack.c.b16 %v1037, %v1036
  %v1139 = vpack.c.b16 %v1039, %v1038
  %v1140 = vpack.c.b16 %v1041, %v1040
  %v1141 = vpack.c.b16 %v1043, %v1042
  %v1142 = vpack.c.b16 %v1045, %v1044
  %v1143 = vpack.c.b16 %v1047, %v1046
  %v1144 = vpack.c.b16 %v1049, %v1048
  %v1145 = vpack.c.b16 %v1051, %v1050
  %v1146 = vpack.c.b16 %v1053, %v1052
  %v1147 = vpack.c.b16 %v1055, %v1054
  %v1148 = vpack.c.b16 %v1057, %v1056
  %v1149 = vpack.c.b16 %v1059, %v1058
  %v1150 = vpack.c.b16 %v1061, %v1060
  %v1151 = vpack.c.b16 %v1063, %v1062
  %v1152 = vpack.c.b16 %v1065, %v1064
  %v1153 = vpack.c.b16 %v1067, %v1066
  %v1154 = vpack.c.b16 %v1069, %v1068
  %v1155 = vpack.c.b16 %v1071, %v1070
  %v1156 = vpack.c.b16 %v1073, %v1072
  %v1157 = vpack.c.b16 %v1075, %v1074
  %v1158 = vpack.c.b16 %v1077, %v1076
  %v1159 = vpack.c.b16 %v1079, %v1078
  %v1160 = vpack.c.b16 %v1081, %v1080
  %v1161 = vpack.c.b16 %v1083, %v1082
  %v1162 = vpack.c.b16 %v1085, %v1084
  %v1163 = vpack.c.b16 %v1087, %v1086
  %v1164 = vpack.c.b16 %v1089, %v1088
  %v1165 = vpack.c.b16 %v1091, %v1090
  %v1166 = vpack.c.b16 %v1093, %v1092
  %v1167 = vpack.c.b16 %v1095, %v1094
  %v1168 = vpack.c.b16 %v1097, %v1096
  %v1169 = vpack.c.b16 %v1099, %v1098
  %v1170 = vpack.c.b16 %v1101, %v1100
  %v1171 = vpack.c.b16 %v1103, %v1102
  %v1172 = vpack.c.b16 %v1105, %v1104
  %v1173 = vpack.c.b16 %v1107, %v1106
  %v1174 = vpack.c.b16 %v1109, %v1108
  %v1175 = vpack.c.b16 %v1111, %v1110
  %1240 = vmatprep.subr.bf16.mxu0 0
  %1241 = vmatpush1.bf16.msra.mxu0 %v1112
  %1242 = vmatprep.subr.bf16.mxu0 0
  %1243 = vmatpush1.bf16.msra.mxu0 %v1113
  %1244 = vmatprep.subr.bf16.mxu0 0
  %1245 = vmatpush1.bf16.msra.mxu0 %v1114
  %1246 = vmatprep.subr.bf16.mxu0 0
  %1247 = vmatpush1.bf16.msra.mxu0 %v1115
  %1248 = vmatprep.subr.bf16.mxu0 0
  %1249 = vmatpush1.bf16.msra.mxu0 %v1116
  %1250 = vmatprep.subr.bf16.mxu0 0
  %1251 = vmatpush1.bf16.msra.mxu0 %v1117
  %1252 = vmatprep.subr.bf16.mxu0 0
  %1253 = vmatpush1.bf16.msra.mxu0 %v1118
  %1254 = vmatprep.subr.bf16.mxu0 0
  %1255 = vmatpush1.bf16.msra.mxu0 %v1119
  %1256 = vmatprep.subr.bf16.mxu0 0
  %1257 = vmatpush1.bf16.msra.mxu0 %v1120
  %1258 = vmatprep.subr.bf16.mxu0 0
  %1259 = vmatpush1.bf16.msra.mxu0 %v1121
  %1260 = vmatprep.subr.bf16.mxu0 0
  %1261 = vmatpush1.bf16.msra.mxu0 %v1122
  %1262 = vmatprep.subr.bf16.mxu0 0
  %1263 = vmatpush1.bf16.msra.mxu0 %v1123
  %1264 = vmatprep.subr.bf16.mxu0 0
  %1265 = vmatpush1.bf16.msra.mxu0 %v1124
  %1266 = vmatprep.subr.bf16.mxu0 0
  %1267 = vmatpush1.bf16.msra.mxu0 %v1125
  %1268 = vmatprep.subr.bf16.mxu0 0
  %1269 = vmatpush1.bf16.msra.mxu0 %v1126
  %1270 = vmatprep.subr.bf16.mxu0 0
  %1271 = vmatpush1.bf16.msra.mxu0 %v1127
  %1272 = vmatprep.mubr.bf16.mxu0 %v167
  %1273 = vmatmul.mubr.bf16.gmra.mrb[0].mxu0 %v166
  %v1274 = vpop.f32.mrb[0].mxu0
  %v1275 = vadd.f32 %v152, %v1274
  %v1276 = vpop.f32.mrb[0].mxu0
  %v1277 = vpop.f32.mrb[0].mxu0
  %v1278 = vpop.f32.mrb[0].mxu0
  %1279 = vdwg.mxu0
  %1280 = vmatprep.subr.bf16.mxu0 0
  %1281 = vmatpush1.bf16.msra.mxu0 %v1128
  %1282 = vmatprep.subr.bf16.mxu0 0
  %1283 = vmatpush1.bf16.msra.mxu0 %v1129
  %1284 = vmatprep.subr.bf16.mxu0 0
  %1285 = vmatpush1.bf16.msra.mxu0 %v1130
  %1286 = vmatprep.subr.bf16.mxu0 0
  %1287 = vmatpush1.bf16.msra.mxu0 %v1131
  %1288 = vmatprep.subr.bf16.mxu0 0
  %1289 = vmatpush1.bf16.msra.mxu0 %v1132
  %1290 = vmatprep.subr.bf16.mxu0 0
  %1291 = vmatpush1.bf16.msra.mxu0 %v1133
  %1292 = vmatprep.subr.bf16.mxu0 0
  %1293 = vmatpush1.bf16.msra.mxu0 %v1134
  %1294 = vmatprep.subr.bf16.mxu0 0
  %1295 = vmatpush1.bf16.msra.mxu0 %v1135
  %1296 = vmatprep.subr.bf16.mxu0 0
  %1297 = vmatpush1.bf16.msra.mxu0 %v1136
  %1298 = vmatprep.subr.bf16.mxu0 0
  %1299 = vmatpush1.bf16.msra.mxu0 %v1137
  %1300 = vmatprep.subr.bf16.mxu0 0
  %1301 = vmatpush1.bf16.msra.mxu0 %v1138
  %1302 = vmatprep.subr.bf16.mxu0 0
  %1303 = vmatpush1.bf16.msra.mxu0 %v1139
  %1304 = vmatprep.subr.bf16.mxu0 0
  %1305 = vmatpush1.bf16.msra.mxu0 %v1140
  %1306 = vmatprep.subr.bf16.mxu0 0
  %1307 = vmatpush1.bf16.msra.mxu0 %v1141
  %1308 = vmatprep.subr.bf16.mxu0 0
  %1309 = vmatpush1.bf16.msra.mxu0 %v1142
  %1310 = vmatprep.subr.bf16.mxu0 0
  %1311 = vmatpush1.bf16.msra.mxu0 %v1143
  %1312 = vmatprep.mubr.bf16.mxu0 %v169
  %1313 = vmatmul.mubr.bf16.gmra.mrb[0].mxu0 %v168
  %v1314 = vpop.f32.mrb[0].mxu0
  %v1315 = vadd.f32 %v1275, %v1314
  %v1316 = vpop.f32.mrb[0].mxu0
  %v1317 = vpop.f32.mrb[0].mxu0
  %v1318 = vpop.f32.mrb[0].mxu0
  %1319 = vdwg.mxu0
  %1320 = vmatprep.subr.bf16.mxu0 0
  %1321 = vmatpush1.bf16.msra.mxu0 %v1144
  %1322 = vmatprep.subr.bf16.mxu0 0
  %1323 = vmatpush1.bf16.msra.mxu0 %v1145
  %1324 = vmatprep.subr.bf16.mxu0 0
  %1325 = vmatpush1.bf16.msra.mxu0 %v1146
  %1326 = vmatprep.subr.bf16.mxu0 0
  %1327 = vmatpush1.bf16.msra.mxu0 %v1147
  %1328 = vmatprep.subr.bf16.mxu0 0
  %1329 = vmatpush1.bf16.msra.mxu0 %v1148
  %1330 = vmatprep.subr.bf16.mxu0 0
  %1331 = vmatpush1.bf16.msra.mxu0 %v1149
  %1332 = vmatprep.subr.bf16.mxu0 0
  %1333 = vmatpush1.bf16.msra.mxu0 %v1150
  %1334 = vmatprep.subr.bf16.mxu0 0
  %1335 = vmatpush1.bf16.msra.mxu0 %v1151
  %1336 = vmatprep.subr.bf16.mxu0 0
  %1337 = vmatpush1.bf16.msra.mxu0 %v1152
  %1338 = vmatprep.subr.bf16.mxu0 0
  %1339 = vmatpush1.bf16.msra.mxu0 %v1153
  %1340 = vmatprep.subr.bf16.mxu0 0
  %1341 = vmatpush1.bf16.msra.mxu0 %v1154
  %1342 = vmatprep.subr.bf16.mxu0 0
  %1343 = vmatpush1.bf16.msra.mxu0 %v1155
  %1344 = vmatprep.subr.bf16.mxu0 0
  %1345 = vmatpush1.bf16.msra.mxu0 %v1156
  %1346 = vmatprep.subr.bf16.mxu0 0
  %1347 = vmatpush1.bf16.msra.mxu0 %v1157
  %1348 = vmatprep.subr.bf16.mxu0 0
  %1349 = vmatpush1.bf16.msra.mxu0 %v1158
  %1350 = vmatprep.subr.bf16.mxu0 0
  %1351 = vmatpush1.bf16.msra.mxu0 %v1159
  %1352 = vmatprep.mubr.bf16.mxu0 %v171
  %1353 = vmatmul.mubr.bf16.gmra.mrb[0].mxu0 %v170
  %v1354 = vpop.f32.mrb[0].mxu0
  %v1355 = vadd.f32 %v1315, %v1354
  %v1356 = vpop.f32.mrb[0].mxu0
  %v1357 = vpop.f32.mrb[0].mxu0
  %v1358 = vpop.f32.mrb[0].mxu0
  %1359 = vdwg.mxu0
  %1360 = vmatprep.subr.bf16.mxu0 0
  %1361 = vmatpush1.bf16.msra.mxu0 %v1160
  %1362 = vmatprep.subr.bf16.mxu0 0
  %1363 = vmatpush1.bf16.msra.mxu0 %v1161
  %1364 = vmatprep.subr.bf16.mxu0 0
  %1365 = vmatpush1.bf16.msra.mxu0 %v1162
  %1366 = vmatprep.subr.bf16.mxu0 0
  %1367 = vmatpush1.bf16.msra.mxu0 %v1163
  %1368 = vmatprep.subr.bf16.mxu0 0
  %1369 = vmatpush1.bf16.msra.mxu0 %v1164
  %1370 = vmatprep.subr.bf16.mxu0 0
  %1371 = vmatpush1.bf16.msra.mxu0 %v1165
  %1372 = vmatprep.subr.bf16.mxu0 0
  %1373 = vmatpush1.bf16.msra.mxu0 %v1166
  %1374 = vmatprep.subr.bf16.mxu0 0
  %1375 = vmatpush1.bf16.msra.mxu0 %v1167
  %1376 = vmatprep.subr.bf16.mxu0 0
  %1377 = vmatpush1.bf16.msra.mxu0 %v1168
  %1378 = vmatprep.subr.bf16.mxu0 0
  %1379 = vmatpush1.bf16.msra.mxu0 %v1169
  %1380 = vmatprep.subr.bf16.mxu0 0
  %1381 = vmatpush1.bf16.msra.mxu0 %v1170
  %1382 = vmatprep.subr.bf16.mxu0 0
  %1383 = vmatpush1.bf16.msra.mxu0 %v1171
  %1384 = vmatprep.subr.bf16.mxu0 0
  %1385 = vmatpush1.bf16.msra.mxu0 %v1172
  %1386 = vmatprep.subr.bf16.mxu0 0
  %1387 = vmatpush1.bf16.msra.mxu0 %v1173
  %1388 = vmatprep.subr.bf16.mxu0 0
  %1389 = vmatpush1.bf16.msra.mxu0 %v1174
  %1390 = vmatprep.subr.bf16.mxu0 0
  %1391 = vmatpush1.bf16.msra.mxu0 %v1175
  %1392 = vmatprep.mubr.bf16.mxu0 %v173
  %1393 = vmatmul.mubr.bf16.gmra.mrb[0].mxu0 %v172
  %v1394 = vpop.f32.mrb[0].mxu0
  %v1395 = vadd.f32 %v1355, %v1394
  %v1396 = vpop.f32.mrb[0].mxu0
  %v1397 = vpop.f32.mrb[0].mxu0
  %v1398 = vpop.f32.mrb[0].mxu0
  %1399 = vdwg.mxu0
  %v1400 = vmax.f32 %v1395, 0.0
  %v1401 = vmax.f32 %v726, %v1400
  %s1402 = scalar_lea.vmem %s1, 1024
  %v1403 = vld [vmem:[%s1402] sm:$0xf]
  %v1404 = vld [vmem:[%s1402 + $0x4] sm:$0xf]
  %v1405 = vld [vmem:[%s1402 + $0x8] sm:$0xf]
  %v1406 = vld [vmem:[%s1402 + $0xc] sm:$0xf]
  %v1407 = vld [vmem:[%s1402 + $0x10] sm:$0xf]
  %v1408 = vld [vmem:[%s1402 + $0x14] sm:$0xf]
  %v1409 = vld [vmem:[%s1402 + $0x18] sm:$0xf]
  %v1410 = vld [vmem:[%s1402 + $0x1c] sm:$0xf]
  %v1411 = vld [vmem:[%s1402 + $0x20] sm:$0xf]
  %v1412 = vld [vmem:[%s1402 + $0x24] sm:$0xf]
  %v1413 = vld [vmem:[%s1402 + $0x28] sm:$0xf]
  %v1414 = vld [vmem:[%s1402 + $0x2c] sm:$0xf]
  %v1415 = vld [vmem:[%s1402 + $0x30] sm:$0xf]
  %v1416 = vld [vmem:[%s1402 + $0x34] sm:$0xf]
  %v1417 = vld [vmem:[%s1402 + $0x38] sm:$0xf]
  %v1418 = vld [vmem:[%s1402 + $0x3c] sm:$0xf]
  %v1419 = vld [vmem:[%s1402 + $0x40] sm:$0xf]
  %v1420 = vld [vmem:[%s1402 + $0x44] sm:$0xf]
  %v1421 = vld [vmem:[%s1402 + $0x48] sm:$0xf]
  %v1422 = vld [vmem:[%s1402 + $0x4c] sm:$0xf]
  %v1423 = vld [vmem:[%s1402 + $0x50] sm:$0xf]
  %v1424 = vld [vmem:[%s1402 + $0x54] sm:$0xf]
  %v1425 = vld [vmem:[%s1402 + $0x58] sm:$0xf]
  %v1426 = vld [vmem:[%s1402 + $0x5c] sm:$0xf]
  %v1427 = vld [vmem:[%s1402 + $0x60] sm:$0xf]
  %v1428 = vld [vmem:[%s1402 + $0x64] sm:$0xf]
  %v1429 = vld [vmem:[%s1402 + $0x68] sm:$0xf]
  %v1430 = vld [vmem:[%s1402 + $0x6c] sm:$0xf]
  %v1431 = vld [vmem:[%s1402 + $0x70] sm:$0xf]
  %v1432 = vld [vmem:[%s1402 + $0x74] sm:$0xf]
  %v1433 = vld [vmem:[%s1402 + $0x78] sm:$0xf]
  %v1434 = vld [vmem:[%s1402 + $0x7c] sm:$0xf]
  %v1435 = vld [vmem:[%s1402 + $0x80] sm:$0xf]
  %v1436 = vld [vmem:[%s1402 + $0x84] sm:$0xf]
  %v1437 = vld [vmem:[%s1402 + $0x88] sm:$0xf]
  %v1438 = vld [vmem:[%s1402 + $0x8c] sm:$0xf]
  %v1439 = vld [vmem:[%s1402 + $0x90] sm:$0xf]
  %v1440 = vld [vmem:[%s1402 + $0x94] sm:$0xf]
  %v1441 = vld [vmem:[%s1402 + $0x98] sm:$0xf]
  %v1442 = vld [vmem:[%s1402 + $0x9c] sm:$0xf]
  %v1443 = vld [vmem:[%s1402 + $0xa0] sm:$0xf]
  %v1444 = vld [vmem:[%s1402 + $0xa4] sm:$0xf]
  %v1445 = vld [vmem:[%s1402 + $0xa8] sm:$0xf]
  %v1446 = vld [vmem:[%s1402 + $0xac] sm:$0xf]
  %v1447 = vld [vmem:[%s1402 + $0xb0] sm:$0xf]
  %v1448 = vld [vmem:[%s1402 + $0xb4] sm:$0xf]
  %v1449 = vld [vmem:[%s1402 + $0xb8] sm:$0xf]
  %v1450 = vld [vmem:[%s1402 + $0xbc] sm:$0xf]
  %v1451 = vld [vmem:[%s1402 + $0xc0] sm:$0xf]
  %v1452 = vld [vmem:[%s1402 + $0xc4] sm:$0xf]
  %v1453 = vld [vmem:[%s1402 + $0xc8] sm:$0xf]
  %v1454 = vld [vmem:[%s1402 + $0xcc] sm:$0xf]
  %v1455 = vld [vmem:[%s1402 + $0xd0] sm:$0xf]
  %v1456 = vld [vmem:[%s1402 + $0xd4] sm:$0xf]
  %v1457 = vld [vmem:[%s1402 + $0xd8] sm:$0xf]
  %v1458 = vld [vmem:[%s1402 + $0xdc] sm:$0xf]
  %v1459 = vld [vmem:[%s1402 + $0xe0] sm:$0xf]
  %v1460 = vld [vmem:[%s1402 + $0xe4] sm:$0xf]
  %v1461 = vld [vmem:[%s1402 + $0xe8] sm:$0xf]
  %v1462 = vld [vmem:[%s1402 + $0xec] sm:$0xf]
  %v1463 = vld [vmem:[%s1402 + $0xf0] sm:$0xf]
  %v1464 = vld [vmem:[%s1402 + $0xf4] sm:$0xf]
  %v1465 = vld [vmem:[%s1402 + $0xf8] sm:$0xf]
  %v1466 = vld [vmem:[%s1402 + $0xfc] sm:$0xf]
  %v1467 = vld [vmem:[%s1402 + $0x100] sm:$0xf]
  %v1468 = vld [vmem:[%s1402 + $0x104] sm:$0xf]
  %v1469 = vld [vmem:[%s1402 + $0x108] sm:$0xf]
  %v1470 = vld [vmem:[%s1402 + $0x10c] sm:$0xf]
  %v1471 = vld [vmem:[%s1402 + $0x110] sm:$0xf]
  %v1472 = vld [vmem:[%s1402 + $0x114] sm:$0xf]
  %v1473 = vld [vmem:[%s1402 + $0x118] sm:$0xf]
  %v1474 = vld [vmem:[%s1402 + $0x11c] sm:$0xf]
  %v1475 = vld [vmem:[%s1402 + $0x120] sm:$0xf]
  %v1476 = vld [vmem:[%s1402 + $0x124] sm:$0xf]
  %v1477 = vld [vmem:[%s1402 + $0x128] sm:$0xf]
  %v1478 = vld [vmem:[%s1402 + $0x12c] sm:$0xf]
  %v1479 = vld [vmem:[%s1402 + $0x130] sm:$0xf]
  %v1480 = vld [vmem:[%s1402 + $0x134] sm:$0xf]
  %v1481 = vld [vmem:[%s1402 + $0x138] sm:$0xf]
  %v1482 = vld [vmem:[%s1402 + $0x13c] sm:$0xf]
  %v1483 = vld [vmem:[%s1402 + $0x140] sm:$0xf]
  %v1484 = vld [vmem:[%s1402 + $0x144] sm:$0xf]
  %v1485 = vld [vmem:[%s1402 + $0x148] sm:$0xf]
  %v1486 = vld [vmem:[%s1402 + $0x14c] sm:$0xf]
  %v1487 = vld [vmem:[%s1402 + $0x150] sm:$0xf]
  %v1488 = vld [vmem:[%s1402 + $0x154] sm:$0xf]
  %v1489 = vld [vmem:[%s1402 + $0x158] sm:$0xf]
  %v1490 = vld [vmem:[%s1402 + $0x15c] sm:$0xf]
  %v1491 = vld [vmem:[%s1402 + $0x160] sm:$0xf]
  %v1492 = vld [vmem:[%s1402 + $0x164] sm:$0xf]
  %v1493 = vld [vmem:[%s1402 + $0x168] sm:$0xf]
  %v1494 = vld [vmem:[%s1402 + $0x16c] sm:$0xf]
  %v1495 = vld [vmem:[%s1402 + $0x170] sm:$0xf]
  %v1496 = vld [vmem:[%s1402 + $0x174] sm:$0xf]
  %v1497 = vld [vmem:[%s1402 + $0x178] sm:$0xf]
  %v1498 = vld [vmem:[%s1402 + $0x17c] sm:$0xf]
  %v1499 = vld [vmem:[%s1402 + $0x180] sm:$0xf]
  %v1500 = vld [vmem:[%s1402 + $0x184] sm:$0xf]
  %v1501 = vld [vmem:[%s1402 + $0x188] sm:$0xf]
  %v1502 = vld [vmem:[%s1402 + $0x18c] sm:$0xf]
  %v1503 = vld [vmem:[%s1402 + $0x190] sm:$0xf]
  %v1504 = vld [vmem:[%s1402 + $0x194] sm:$0xf]
  %v1505 = vld [vmem:[%s1402 + $0x198] sm:$0xf]
  %v1506 = vld [vmem:[%s1402 + $0x19c] sm:$0xf]
  %v1507 = vld [vmem:[%s1402 + $0x1a0] sm:$0xf]
  %v1508 = vld [vmem:[%s1402 + $0x1a4] sm:$0xf]
  %v1509 = vld [vmem:[%s1402 + $0x1a8] sm:$0xf]
  %v1510 = vld [vmem:[%s1402 + $0x1ac] sm:$0xf]
  %v1511 = vld [vmem:[%s1402 + $0x1b0] sm:$0xf]
  %v1512 = vld [vmem:[%s1402 + $0x1b4] sm:$0xf]
  %v1513 = vld [vmem:[%s1402 + $0x1b8] sm:$0xf]
  %v1514 = vld [vmem:[%s1402 + $0x1bc] sm:$0xf]
  %v1515 = vld [vmem:[%s1402 + $0x1c0] sm:$0xf]
  %v1516 = vld [vmem:[%s1402 + $0x1c4] sm:$0xf]
  %v1517 = vld [vmem:[%s1402 + $0x1c8] sm:$0xf]
  %v1518 = vld [vmem:[%s1402 + $0x1cc] sm:$0xf]
  %v1519 = vld [vmem:[%s1402 + $0x1d0] sm:$0xf]
  %v1520 = vld [vmem:[%s1402 + $0x1d4] sm:$0xf]
  %v1521 = vld [vmem:[%s1402 + $0x1d8] sm:$0xf]
  %v1522 = vld [vmem:[%s1402 + $0x1dc] sm:$0xf]
  %v1523 = vld [vmem:[%s1402 + $0x1e0] sm:$0xf]
  %v1524 = vld [vmem:[%s1402 + $0x1e4] sm:$0xf]
  %v1525 = vld [vmem:[%s1402 + $0x1e8] sm:$0xf]
  %v1526 = vld [vmem:[%s1402 + $0x1ec] sm:$0xf]
  %v1527 = vld [vmem:[%s1402 + $0x1f0] sm:$0xf]
  %v1528 = vld [vmem:[%s1402 + $0x1f4] sm:$0xf]
  %v1529 = vld [vmem:[%s1402 + $0x1f8] sm:$0xf]
  %v1530 = vld [vmem:[%s1402 + $0x1fc] sm:$0xf]
  %v1659 = vunpack.c.l.b16 %v1403
  %v1660 = vunpack.c.l.b16 %v1404
  %v1661 = vunpack.c.l.b16 %v1405
  %v1662 = vunpack.c.l.b16 %v1406
  %v1663 = vunpack.c.l.b16 %v1407
  %v1664 = vunpack.c.l.b16 %v1408
  %v1665 = vunpack.c.l.b16 %v1409
  %v1666 = vunpack.c.l.b16 %v1410
  %v1667 = vunpack.c.l.b16 %v1411
  %v1668 = vunpack.c.l.b16 %v1412
  %v1669 = vunpack.c.l.b16 %v1413
  %v1670 = vunpack.c.l.b16 %v1414
  %v1671 = vunpack.c.l.b16 %v1415
  %v1672 = vunpack.c.l.b16 %v1416
  %v1673 = vunpack.c.l.b16 %v1417
  %v1674 = vunpack.c.l.b16 %v1418
  %v1675 = vunpack.c.l.b16 %v1419
  %v1676 = vunpack.c.l.b16 %v1420
  %v1677 = vunpack.c.l.b16 %v1421
  %v1678 = vunpack.c.l.b16 %v1422
  %v1679 = vunpack.c.l.b16 %v1423
  %v1680 = vunpack.c.l.b16 %v1424
  %v1681 = vunpack.c.l.b16 %v1425
  %v1682 = vunpack.c.l.b16 %v1426
  %v1683 = vunpack.c.l.b16 %v1427
  %v1684 = vunpack.c.l.b16 %v1428
  %v1685 = vunpack.c.l.b16 %v1429
  %v1686 = vunpack.c.l.b16 %v1430
  %v1687 = vunpack.c.l.b16 %v1431
  %v1688 = vunpack.c.l.b16 %v1432
  %v1689 = vunpack.c.l.b16 %v1433
  %v1690 = vunpack.c.l.b16 %v1434
  %v1691 = vunpack.c.l.b16 %v1435
  %v1692 = vunpack.c.l.b16 %v1436
  %v1693 = vunpack.c.l.b16 %v1437
  %v1694 = vunpack.c.l.b16 %v1438
  %v1695 = vunpack.c.l.b16 %v1439
  %v1696 = vunpack.c.l.b16 %v1440
  %v1697 = vunpack.c.l.b16 %v1441
  %v1698 = vunpack.c.l.b16 %v1442
  %v1699 = vunpack.c.l.b16 %v1443
  %v1700 = vunpack.c.l.b16 %v1444
  %v1701 = vunpack.c.l.b16 %v1445
  %v1702 = vunpack.c.l.b16 %v1446
  %v1703 = vunpack.c.l.b16 %v1447
  %v1704 = vunpack.c.l.b16 %v1448
  %v1705 = vunpack.c.l.b16 %v1449
  %v1706 = vunpack.c.l.b16 %v1450
  %v1707 = vunpack.c.l.b16 %v1451
  %v1708 = vunpack.c.l.b16 %v1452
  %v1709 = vunpack.c.l.b16 %v1453
  %v1710 = vunpack.c.l.b16 %v1454
  %v1711 = vunpack.c.l.b16 %v1455
  %v1712 = vunpack.c.l.b16 %v1456
  %v1713 = vunpack.c.l.b16 %v1457
  %v1714 = vunpack.c.l.b16 %v1458
  %v1715 = vunpack.c.l.b16 %v1459
  %v1716 = vunpack.c.l.b16 %v1460
  %v1717 = vunpack.c.l.b16 %v1461
  %v1718 = vunpack.c.l.b16 %v1462
  %v1719 = vunpack.c.l.b16 %v1463
  %v1720 = vunpack.c.l.b16 %v1464
  %v1721 = vunpack.c.l.b16 %v1465
  %v1722 = vunpack.c.l.b16 %v1466
  %v1723 = vunpack.c.l.b16 %v1467
  %v1724 = vunpack.c.l.b16 %v1468
  %v1725 = vunpack.c.l.b16 %v1469
  %v1726 = vunpack.c.l.b16 %v1470
  %v1727 = vunpack.c.l.b16 %v1471
  %v1728 = vunpack.c.l.b16 %v1472
  %v1729 = vunpack.c.l.b16 %v1473
  %v1730 = vunpack.c.l.b16 %v1474
  %v1731 = vunpack.c.l.b16 %v1475
  %v1732 = vunpack.c.l.b16 %v1476
  %v1733 = vunpack.c.l.b16 %v1477
  %v1734 = vunpack.c.l.b16 %v1478
  %v1735 = vunpack.c.l.b16 %v1479
  %v1736 = vunpack.c.l.b16 %v1480
  %v1737 = vunpack.c.l.b16 %v1481
  %v1738 = vunpack.c.l.b16 %v1482
  %v1739 = vunpack.c.l.b16 %v1483
  %v1740 = vunpack.c.l.b16 %v1484
  %v1741 = vunpack.c.l.b16 %v1485
  %v1742 = vunpack.c.l.b16 %v1486
  %v1743 = vunpack.c.l.b16 %v1487
  %v1744 = vunpack.c.l.b16 %v1488
  %v1745 = vunpack.c.l.b16 %v1489
  %v1746 = vunpack.c.l.b16 %v1490
  %v1747 = vunpack.c.l.b16 %v1491
  %v1748 = vunpack.c.l.b16 %v1492
  %v1749 = vunpack.c.l.b16 %v1493
  %v1750 = vunpack.c.l.b16 %v1494
  %v1751 = vunpack.c.l.b16 %v1495
  %v1752 = vunpack.c.l.b16 %v1496
  %v1753 = vunpack.c.l.b16 %v1497
  %v1754 = vunpack.c.l.b16 %v1498
  %v1755 = vunpack.c.l.b16 %v1499
  %v1756 = vunpack.c.l.b16 %v1500
  %v1757 = vunpack.c.l.b16 %v1501
  %v1758 = vunpack.c.l.b16 %v1502
  %v1759 = vunpack.c.l.b16 %v1503
  %v1760 = vunpack.c.l.b16 %v1504
  %v1761 = vunpack.c.l.b16 %v1505
  %v1762 = vunpack.c.l.b16 %v1506
  %v1763 = vunpack.c.l.b16 %v1507
  %v1764 = vunpack.c.l.b16 %v1508
  %v1765 = vunpack.c.l.b16 %v1509
  %v1766 = vunpack.c.l.b16 %v1510
  %v1767 = vunpack.c.l.b16 %v1511
  %v1768 = vunpack.c.l.b16 %v1512
  %v1769 = vunpack.c.l.b16 %v1513
  %v1770 = vunpack.c.l.b16 %v1514
  %v1771 = vunpack.c.l.b16 %v1515
  %v1772 = vunpack.c.l.b16 %v1516
  %v1773 = vunpack.c.l.b16 %v1517
  %v1774 = vunpack.c.l.b16 %v1518
  %v1775 = vunpack.c.l.b16 %v1519
  %v1776 = vunpack.c.l.b16 %v1520
  %v1777 = vunpack.c.l.b16 %v1521
  %v1778 = vunpack.c.l.b16 %v1522
  %v1779 = vunpack.c.l.b16 %v1523
  %v1780 = vunpack.c.l.b16 %v1524
  %v1781 = vunpack.c.l.b16 %v1525
  %v1782 = vunpack.c.l.b16 %v1526
  %v1783 = vunpack.c.l.b16 %v1527
  %v1784 = vunpack.c.l.b16 %v1528
  %v1785 = vunpack.c.l.b16 %v1529
  %v1786 = vunpack.c.l.b16 %v1530
  %v1787 = vpack.c.b16 %v1660, %v1659
  %v1788 = vpack.c.b16 %v1662, %v1661
  %v1789 = vpack.c.b16 %v1664, %v1663
  %v1790 = vpack.c.b16 %v1666, %v1665
  %v1791 = vpack.c.b16 %v1668, %v1667
  %v1792 = vpack.c.b16 %v1670, %v1669
  %v1793 = vpack.c.b16 %v1672, %v1671
  %v1794 = vpack.c.b16 %v1674, %v1673
  %v1795 = vpack.c.b16 %v1676, %v1675
  %v1796 = vpack.c.b16 %v1678, %v1677
  %v1797 = vpack.c.b16 %v1680, %v1679
  %v1798 = vpack.c.b16 %v1682, %v1681
  %v1799 = vpack.c.b16 %v1684, %v1683
  %v1800 = vpack.c.b16 %v1686, %v1685
  %v1801 = vpack.c.b16 %v1688, %v1687
  %v1802 = vpack.c.b16 %v1690, %v1689
  %v1803 = vpack.c.b16 %v1692, %v1691
  %v1804 = vpack.c.b16 %v1694, %v1693
  %v1805 = vpack.c.b16 %v1696, %v1695
  %v1806 = vpack.c.b16 %v1698, %v1697
  %v1807 = vpack.c.b16 %v1700, %v1699
  %v1808 = vpack.c.b16 %v1702, %v1701
  %v1809 = vpack.c.b16 %v1704, %v1703
  %v1810 = vpack.c.b16 %v1706, %v1705
  %v1811 = vpack.c.b16 %v1708, %v1707
  %v1812 = vpack.c.b16 %v1710, %v1709
  %v1813 = vpack.c.b16 %v1712, %v1711
  %v1814 = vpack.c.b16 %v1714, %v1713
  %v1815 = vpack.c.b16 %v1716, %v1715
  %v1816 = vpack.c.b16 %v1718, %v1717
  %v1817 = vpack.c.b16 %v1720, %v1719
  %v1818 = vpack.c.b16 %v1722, %v1721
  %v1819 = vpack.c.b16 %v1724, %v1723
  %v1820 = vpack.c.b16 %v1726, %v1725
  %v1821 = vpack.c.b16 %v1728, %v1727
  %v1822 = vpack.c.b16 %v1730, %v1729
  %v1823 = vpack.c.b16 %v1732, %v1731
  %v1824 = vpack.c.b16 %v1734, %v1733
  %v1825 = vpack.c.b16 %v1736, %v1735
  %v1826 = vpack.c.b16 %v1738, %v1737
  %v1827 = vpack.c.b16 %v1740, %v1739
  %v1828 = vpack.c.b16 %v1742, %v1741
  %v1829 = vpack.c.b16 %v1744, %v1743
  %v1830 = vpack.c.b16 %v1746, %v1745
  %v1831 = vpack.c.b16 %v1748, %v1747
  %v1832 = vpack.c.b16 %v1750, %v1749
  %v1833 = vpack.c.b16 %v1752, %v1751
  %v1834 = vpack.c.b16 %v1754, %v1753
  %v1835 = vpack.c.b16 %v1756, %v1755
  %v1836 = vpack.c.b16 %v1758, %v1757
  %v1837 = vpack.c.b16 %v1760, %v1759
  %v1838 = vpack.c.b16 %v1762, %v1761
  %v1839 = vpack.c.b16 %v1764, %v1763
  %v1840 = vpack.c.b16 %v1766, %v1765
  %v1841 = vpack.c.b16 %v1768, %v1767
  %v1842 = vpack.c.b16 %v1770, %v1769
  %v1843 = vpack.c.b16 %v1772, %v1771
  %v1844 = vpack.c.b16 %v1774, %v1773
  %v1845 = vpack.c.b16 %v1776, %v1775
  %v1846 = vpack.c.b16 %v1778, %v1777
  %v1847 = vpack.c.b16 %v1780, %v1779
  %v1848 = vpack.c.b16 %v1782, %v1781
  %v1849 = vpack.c.b16 %v1784, %v1783
  %v1850 = vpack.c.b16 %v1786, %v1785
  %1915 = vmatprep.subr.bf16.mxu0 0
  %1916 = vmatpush1.bf16.msra.mxu0 %v1787
  %1917 = vmatprep.subr.bf16.mxu0 0
  %1918 = vmatpush1.bf16.msra.mxu0 %v1788
  %1919 = vmatprep.subr.bf16.mxu0 0
  %1920 = vmatpush1.bf16.msra.mxu0 %v1789
  %1921 = vmatprep.subr.bf16.mxu0 0
  %1922 = vmatpush1.bf16.msra.mxu0 %v1790
  %1923 = vmatprep.subr.bf16.mxu0 0
  %1924 = vmatpush1.bf16.msra.mxu0 %v1791
  %1925 = vmatprep.subr.bf16.mxu0 0
  %1926 = vmatpush1.bf16.msra.mxu0 %v1792
  %1927 = vmatprep.subr.bf16.mxu0 0
  %1928 = vmatpush1.bf16.msra.mxu0 %v1793
  %1929 = vmatprep.subr.bf16.mxu0 0
  %1930 = vmatpush1.bf16.msra.mxu0 %v1794
  %1931 = vmatprep.subr.bf16.mxu0 0
  %1932 = vmatpush1.bf16.msra.mxu0 %v1795
  %1933 = vmatprep.subr.bf16.mxu0 0
  %1934 = vmatpush1.bf16.msra.mxu0 %v1796
  %1935 = vmatprep.subr.bf16.mxu0 0
  %1936 = vmatpush1.bf16.msra.mxu0 %v1797
  %1937 = vmatprep.subr.bf16.mxu0 0
  %1938 = vmatpush1.bf16.msra.mxu0 %v1798
  %1939 = vmatprep.subr.bf16.mxu0 0
  %1940 = vmatpush1.bf16.msra.mxu0 %v1799
  %1941 = vmatprep.subr.bf16.mxu0 0
  %1942 = vmatpush1.bf16.msra.mxu0 %v1800
  %1943 = vmatprep.subr.bf16.mxu0 0
  %1944 = vmatpush1.bf16.msra.mxu0 %v1801
  %1945 = vmatprep.subr.bf16.mxu0 0
  %1946 = vmatpush1.bf16.msra.mxu0 %v1802
  %1947 = vmatprep.mubr.bf16.mxu0 %v167
  %1948 = vmatmul.mubr.bf16.gmra.mrb[0].mxu0 %v166
  %v1949 = vpop.f32.mrb[0].mxu0
  %v1950 = vadd.f32 %v152, %v1949
  %v1951 = vpop.f32.mrb[0].mxu0
  %v1952 = vpop.f32.mrb[0].mxu0
  %v1953 = vpop.f32.mrb[0].mxu0
  %1954 = vdwg.mxu0
  %1955 = vmatprep.subr.bf16.mxu0 0
  %1956 = vmatpush1.bf16.msra.mxu0 %v1803
  %1957 = vmatprep.subr.bf16.mxu0 0
  %1958 = vmatpush1.bf16.msra.mxu0 %v1804
  %1959 = vmatprep.subr.bf16.mxu0 0
  %1960 = vmatpush1.bf16.msra.mxu0 %v1805
  %1961 = vmatprep.subr.bf16.mxu0 0
  %1962 = vmatpush1.bf16.msra.mxu0 %v1806
  %1963 = vmatprep.subr.bf16.mxu0 0
  %1964 = vmatpush1.bf16.msra.mxu0 %v1807
  %1965 = vmatprep.subr.bf16.mxu0 0
  %1966 = vmatpush1.bf16.msra.mxu0 %v1808
  %1967 = vmatprep.subr.bf16.mxu0 0
  %1968 = vmatpush1.bf16.msra.mxu0 %v1809
  %1969 = vmatprep.subr.bf16.mxu0 0
  %1970 = vmatpush1.bf16.msra.mxu0 %v1810
  %1971 = vmatprep.subr.bf16.mxu0 0
  %1972 = vmatpush1.bf16.msra.mxu0 %v1811
  %1973 = vmatprep.subr.bf16.mxu0 0
  %1974 = vmatpush1.bf16.msra.mxu0 %v1812
  %1975 = vmatprep.subr.bf16.mxu0 0
  %1976 = vmatpush1.bf16.msra.mxu0 %v1813
  %1977 = vmatprep.subr.bf16.mxu0 0
  %1978 = vmatpush1.bf16.msra.mxu0 %v1814
  %1979 = vmatprep.subr.bf16.mxu0 0
  %1980 = vmatpush1.bf16.msra.mxu0 %v1815
  %1981 = vmatprep.subr.bf16.mxu0 0
  %1982 = vmatpush1.bf16.msra.mxu0 %v1816
  %1983 = vmatprep.subr.bf16.mxu0 0
  %1984 = vmatpush1.bf16.msra.mxu0 %v1817
  %1985 = vmatprep.subr.bf16.mxu0 0
  %1986 = vmatpush1.bf16.msra.mxu0 %v1818
  %1987 = vmatprep.mubr.bf16.mxu0 %v169
  %1988 = vmatmul.mubr.bf16.gmra.mrb[0].mxu0 %v168
  %v1989 = vpop.f32.mrb[0].mxu0
  %v1990 = vadd.f32 %v1950, %v1989
  %v1991 = vpop.f32.mrb[0].mxu0
  %v1992 = vpop.f32.mrb[0].mxu0
  %v1993 = vpop.f32.mrb[0].mxu0
  %1994 = vdwg.mxu0
  %1995 = vmatprep.subr.bf16.mxu0 0
  %1996 = vmatpush1.bf16.msra.mxu0 %v1819
  %1997 = vmatprep.subr.bf16.mxu0 0
  %1998 = vmatpush1.bf16.msra.mxu0 %v1820
  %1999 = vmatprep.subr.bf16.mxu0 0
  %2000 = vmatpush1.bf16.msra.mxu0 %v1821
  %2001 = vmatprep.subr.bf16.mxu0 0
  %2002 = vmatpush1.bf16.msra.mxu0 %v1822
  %2003 = vmatprep.subr.bf16.mxu0 0
  %2004 = vmatpush1.bf16.msra.mxu0 %v1823
  %2005 = vmatprep.subr.bf16.mxu0 0
  %2006 = vmatpush1.bf16.msra.mxu0 %v1824
  %2007 = vmatprep.subr.bf16.mxu0 0
  %2008 = vmatpush1.bf16.msra.mxu0 %v1825
  %2009 = vmatprep.subr.bf16.mxu0 0
  %2010 = vmatpush1.bf16.msra.mxu0 %v1826
  %2011 = vmatprep.subr.bf16.mxu0 0
  %2012 = vmatpush1.bf16.msra.mxu0 %v1827
  %2013 = vmatprep.subr.bf16.mxu0 0
  %2014 = vmatpush1.bf16.msra.mxu0 %v1828
  %2015 = vmatprep.subr.bf16.mxu0 0
  %2016 = vmatpush1.bf16.msra.mxu0 %v1829
  %2017 = vmatprep.subr.bf16.mxu0 0
  %2018 = vmatpush1.bf16.msra.mxu0 %v1830
  %2019 = vmatprep.subr.bf16.mxu0 0
  %2020 = vmatpush1.bf16.msra.mxu0 %v1831
  %2021 = vmatprep.subr.bf16.mxu0 0
  %2022 = vmatpush1.bf16.msra.mxu0 %v1832
  %2023 = vmatprep.subr.bf16.mxu0 0
  %2024 = vmatpush1.bf16.msra.mxu0 %v1833
  %2025 = vmatprep.subr.bf16.mxu0 0
  %2026 = vmatpush1.bf16.msra.mxu0 %v1834
  %2027 = vmatprep.mubr.bf16.mxu0 %v171
  %2028 = vmatmul.mubr.bf16.gmra.mrb[0].mxu0 %v170
  %v2029 = vpop.f32.mrb[0].mxu0
  %v2030 = vadd.f32 %v1990, %v2029
  %v2031 = vpop.f32.mrb[0].mxu0
  %v2032 = vpop.f32.mrb[0].mxu0
  %v2033 = vpop.f32.mrb[0].mxu0
  %2034 = vdwg.mxu0
  %2035 = vmatprep.subr.bf16.mxu0 0
  %2036 = vmatpush1.bf16.msra.mxu0 %v1835
  %2037 = vmatprep.subr.bf16.mxu0 0
  %2038 = vmatpush1.bf16.msra.mxu0 %v1836
  %2039 = vmatprep.subr.bf16.mxu0 0
  %2040 = vmatpush1.bf16.msra.mxu0 %v1837
  %2041 = vmatprep.subr.bf16.mxu0 0
  %2042 = vmatpush1.bf16.msra.mxu0 %v1838
  %2043 = vmatprep.subr.bf16.mxu0 0
  %2044 = vmatpush1.bf16.msra.mxu0 %v1839
  %2045 = vmatprep.subr.bf16.mxu0 0
  %2046 = vmatpush1.bf16.msra.mxu0 %v1840
  %2047 = vmatprep.subr.bf16.mxu0 0
  %2048 = vmatpush1.bf16.msra.mxu0 %v1841
  %2049 = vmatprep.subr.bf16.mxu0 0
  %2050 = vmatpush1.bf16.msra.mxu0 %v1842
  %2051 = vmatprep.subr.bf16.mxu0 0
  %2052 = vmatpush1.bf16.msra.mxu0 %v1843
  %2053 = vmatprep.subr.bf16.mxu0 0
  %2054 = vmatpush1.bf16.msra.mxu0 %v1844
  %2055 = vmatprep.subr.bf16.mxu0 0
  %2056 = vmatpush1.bf16.msra.mxu0 %v1845
  %2057 = vmatprep.subr.bf16.mxu0 0
  %2058 = vmatpush1.bf16.msra.mxu0 %v1846
  %2059 = vmatprep.subr.bf16.mxu0 0
  %2060 = vmatpush1.bf16.msra.mxu0 %v1847
  %2061 = vmatprep.subr.bf16.mxu0 0
  %2062 = vmatpush1.bf16.msra.mxu0 %v1848
  %2063 = vmatprep.subr.bf16.mxu0 0
  %2064 = vmatpush1.bf16.msra.mxu0 %v1849
  %2065 = vmatprep.subr.bf16.mxu0 0
  %2066 = vmatpush1.bf16.msra.mxu0 %v1850
  %2067 = vmatprep.mubr.bf16.mxu0 %v173
  %2068 = vmatmul.mubr.bf16.gmra.mrb[0].mxu0 %v172
  %v2069 = vpop.f32.mrb[0].mxu0
  %v2070 = vadd.f32 %v2030, %v2069
  %v2071 = vpop.f32.mrb[0].mxu0
  %v2072 = vpop.f32.mrb[0].mxu0
  %v2073 = vpop.f32.mrb[0].mxu0
  %2074 = vdwg.mxu0
  %v2075 = vmax.f32 %v2070, 0.0
  %v2076 = vmax.f32 %v1401, %v2075
  %s2077 = scalar_lea.vmem %s1, 1536
  %v2078 = vld [vmem:[%s2077] sm:$0xf]
  %v2079 = vld [vmem:[%s2077 + $0x4] sm:$0xf]
  %v2080 = vld [vmem:[%s2077 + $0x8] sm:$0xf]
  %v2081 = vld [vmem:[%s2077 + $0xc] sm:$0xf]
  %v2082 = vld [vmem:[%s2077 + $0x10] sm:$0xf]
  %v2083 = vld [vmem:[%s2077 + $0x14] sm:$0xf]
  %v2084 = vld [vmem:[%s2077 + $0x18] sm:$0xf]
  %v2085 = vld [vmem:[%s2077 + $0x1c] sm:$0xf]
  %v2086 = vld [vmem:[%s2077 + $0x20] sm:$0xf]
  %v2087 = vld [vmem:[%s2077 + $0x24] sm:$0xf]
  %v2088 = vld [vmem:[%s2077 + $0x28] sm:$0xf]
  %v2089 = vld [vmem:[%s2077 + $0x2c] sm:$0xf]
  %v2090 = vld [vmem:[%s2077 + $0x30] sm:$0xf]
  %v2091 = vld [vmem:[%s2077 + $0x34] sm:$0xf]
  %v2092 = vld [vmem:[%s2077 + $0x38] sm:$0xf]
  %v2093 = vld [vmem:[%s2077 + $0x3c] sm:$0xf]
  %v2094 = vld [vmem:[%s2077 + $0x40] sm:$0xf]
  %v2095 = vld [vmem:[%s2077 + $0x44] sm:$0xf]
  %v2096 = vld [vmem:[%s2077 + $0x48] sm:$0xf]
  %v2097 = vld [vmem:[%s2077 + $0x4c] sm:$0xf]
  %v2098 = vld [vmem:[%s2077 + $0x50] sm:$0xf]
  %v2099 = vld [vmem:[%s2077 + $0x54] sm:$0xf]
  %v2100 = vld [vmem:[%s2077 + $0x58] sm:$0xf]
  %v2101 = vld [vmem:[%s2077 + $0x5c] sm:$0xf]
  %v2102 = vld [vmem:[%s2077 + $0x60] sm:$0xf]
  %v2103 = vld [vmem:[%s2077 + $0x64] sm:$0xf]
  %v2104 = vld [vmem:[%s2077 + $0x68] sm:$0xf]
  %v2105 = vld [vmem:[%s2077 + $0x6c] sm:$0xf]
  %v2106 = vld [vmem:[%s2077 + $0x70] sm:$0xf]
  %v2107 = vld [vmem:[%s2077 + $0x74] sm:$0xf]
  %v2108 = vld [vmem:[%s2077 + $0x78] sm:$0xf]
  %v2109 = vld [vmem:[%s2077 + $0x7c] sm:$0xf]
  %v2110 = vld [vmem:[%s2077 + $0x80] sm:$0xf]
  %v2111 = vld [vmem:[%s2077 + $0x84] sm:$0xf]
  %v2112 = vld [vmem:[%s2077 + $0x88] sm:$0xf]
  %v2113 = vld [vmem:[%s2077 + $0x8c] sm:$0xf]
  %v2114 = vld [vmem:[%s2077 + $0x90] sm:$0xf]
  %v2115 = vld [vmem:[%s2077 + $0x94] sm:$0xf]
  %v2116 = vld [vmem:[%s2077 + $0x98] sm:$0xf]
  %v2117 = vld [vmem:[%s2077 + $0x9c] sm:$0xf]
  %v2118 = vld [vmem:[%s2077 + $0xa0] sm:$0xf]
  %v2119 = vld [vmem:[%s2077 + $0xa4] sm:$0xf]
  %v2120 = vld [vmem:[%s2077 + $0xa8] sm:$0xf]
  %v2121 = vld [vmem:[%s2077 + $0xac] sm:$0xf]
  %v2122 = vld [vmem:[%s2077 + $0xb0] sm:$0xf]
  %v2123 = vld [vmem:[%s2077 + $0xb4] sm:$0xf]
  %v2124 = vld [vmem:[%s2077 + $0xb8] sm:$0xf]
  %v2125 = vld [vmem:[%s2077 + $0xbc] sm:$0xf]
  %v2126 = vld [vmem:[%s2077 + $0xc0] sm:$0xf]
  %v2127 = vld [vmem:[%s2077 + $0xc4] sm:$0xf]
  %v2128 = vld [vmem:[%s2077 + $0xc8] sm:$0xf]
  %v2129 = vld [vmem:[%s2077 + $0xcc] sm:$0xf]
  %v2130 = vld [vmem:[%s2077 + $0xd0] sm:$0xf]
  %v2131 = vld [vmem:[%s2077 + $0xd4] sm:$0xf]
  %v2132 = vld [vmem:[%s2077 + $0xd8] sm:$0xf]
  %v2133 = vld [vmem:[%s2077 + $0xdc] sm:$0xf]
  %v2134 = vld [vmem:[%s2077 + $0xe0] sm:$0xf]
  %v2135 = vld [vmem:[%s2077 + $0xe4] sm:$0xf]
  %v2136 = vld [vmem:[%s2077 + $0xe8] sm:$0xf]
  %v2137 = vld [vmem:[%s2077 + $0xec] sm:$0xf]
  %v2138 = vld [vmem:[%s2077 + $0xf0] sm:$0xf]
  %v2139 = vld [vmem:[%s2077 + $0xf4] sm:$0xf]
  %v2140 = vld [vmem:[%s2077 + $0xf8] sm:$0xf]
  %v2141 = vld [vmem:[%s2077 + $0xfc] sm:$0xf]
  %v2142 = vld [vmem:[%s2077 + $0x100] sm:$0xf]
  %v2143 = vld [vmem:[%s2077 + $0x104] sm:$0xf]
  %v2144 = vld [vmem:[%s2077 + $0x108] sm:$0xf]
  %v2145 = vld [vmem:[%s2077 + $0x10c] sm:$0xf]
  %v2146 = vld [vmem:[%s2077 + $0x110] sm:$0xf]
  %v2147 = vld [vmem:[%s2077 + $0x114] sm:$0xf]
  %v2148 = vld [vmem:[%s2077 + $0x118] sm:$0xf]
  %v2149 = vld [vmem:[%s2077 + $0x11c] sm:$0xf]
  %v2150 = vld [vmem:[%s2077 + $0x120] sm:$0xf]
  %v2151 = vld [vmem:[%s2077 + $0x124] sm:$0xf]
  %v2152 = vld [vmem:[%s2077 + $0x128] sm:$0xf]
  %v2153 = vld [vmem:[%s2077 + $0x12c] sm:$0xf]
  %v2154 = vld [vmem:[%s2077 + $0x130] sm:$0xf]
  %v2155 = vld [vmem:[%s2077 + $0x134] sm:$0xf]
  %v2156 = vld [vmem:[%s2077 + $0x138] sm:$0xf]
  %v2157 = vld [vmem:[%s2077 + $0x13c] sm:$0xf]
  %v2158 = vld [vmem:[%s2077 + $0x140] sm:$0xf]
  %v2159 = vld [vmem:[%s2077 + $0x144] sm:$0xf]
  %v2160 = vld [vmem:[%s2077 + $0x148] sm:$0xf]
  %v2161 = vld [vmem:[%s2077 + $0x14c] sm:$0xf]
  %v2162 = vld [vmem:[%s2077 + $0x150] sm:$0xf]
  %v2163 = vld [vmem:[%s2077 + $0x154] sm:$0xf]
  %v2164 = vld [vmem:[%s2077 + $0x158] sm:$0xf]
  %v2165 = vld [vmem:[%s2077 + $0x15c] sm:$0xf]
  %v2166 = vld [vmem:[%s2077 + $0x160] sm:$0xf]
  %v2167 = vld [vmem:[%s2077 + $0x164] sm:$0xf]
  %v2168 = vld [vmem:[%s2077 + $0x168] sm:$0xf]
  %v2169 = vld [vmem:[%s2077 + $0x16c] sm:$0xf]
  %v2170 = vld [vmem:[%s2077 + $0x170] sm:$0xf]
  %v2171 = vld [vmem:[%s2077 + $0x174] sm:$0xf]
  %v2172 = vld [vmem:[%s2077 + $0x178] sm:$0xf]
  %v2173 = vld [vmem:[%s2077 + $0x17c] sm:$0xf]
  %v2174 = vld [vmem:[%s2077 + $0x180] sm:$0xf]
  %v2175 = vld [vmem:[%s2077 + $0x184] sm:$0xf]
  %v2176 = vld [vmem:[%s2077 + $0x188] sm:$0xf]
  %v2177 = vld [vmem:[%s2077 + $0x18c] sm:$0xf]
  %v2178 = vld [vmem:[%s2077 + $0x190] sm:$0xf]
  %v2179 = vld [vmem:[%s2077 + $0x194] sm:$0xf]
  %v2180 = vld [vmem:[%s2077 + $0x198] sm:$0xf]
  %v2181 = vld [vmem:[%s2077 + $0x19c] sm:$0xf]
  %v2182 = vld [vmem:[%s2077 + $0x1a0] sm:$0xf]
  %v2183 = vld [vmem:[%s2077 + $0x1a4] sm:$0xf]
  %v2184 = vld [vmem:[%s2077 + $0x1a8] sm:$0xf]
  %v2185 = vld [vmem:[%s2077 + $0x1ac] sm:$0xf]
  %v2186 = vld [vmem:[%s2077 + $0x1b0] sm:$0xf]
  %v2187 = vld [vmem:[%s2077 + $0x1b4] sm:$0xf]
  %v2188 = vld [vmem:[%s2077 + $0x1b8] sm:$0xf]
  %v2189 = vld [vmem:[%s2077 + $0x1bc] sm:$0xf]
  %v2190 = vld [vmem:[%s2077 + $0x1c0] sm:$0xf]
  %v2191 = vld [vmem:[%s2077 + $0x1c4] sm:$0xf]
  %v2192 = vld [vmem:[%s2077 + $0x1c8] sm:$0xf]
  %v2193 = vld [vmem:[%s2077 + $0x1cc] sm:$0xf]
  %v2194 = vld [vmem:[%s2077 + $0x1d0] sm:$0xf]
  %v2195 = vld [vmem:[%s2077 + $0x1d4] sm:$0xf]
  %v2196 = vld [vmem:[%s2077 + $0x1d8] sm:$0xf]
  %v2197 = vld [vmem:[%s2077 + $0x1dc] sm:$0xf]
  %v2198 = vld [vmem:[%s2077 + $0x1e0] sm:$0xf]
  %v2199 = vld [vmem:[%s2077 + $0x1e4] sm:$0xf]
  %v2200 = vld [vmem:[%s2077 + $0x1e8] sm:$0xf]
  %v2201 = vld [vmem:[%s2077 + $0x1ec] sm:$0xf]
  %v2202 = vld [vmem:[%s2077 + $0x1f0] sm:$0xf]
  %v2203 = vld [vmem:[%s2077 + $0x1f4] sm:$0xf]
  %v2204 = vld [vmem:[%s2077 + $0x1f8] sm:$0xf]
  %v2205 = vld [vmem:[%s2077 + $0x1fc] sm:$0xf]
  %v2334 = vunpack.c.l.b16 %v2078
  %v2335 = vunpack.c.l.b16 %v2079
  %v2336 = vunpack.c.l.b16 %v2080
  %v2337 = vunpack.c.l.b16 %v2081
  %v2338 = vunpack.c.l.b16 %v2082
  %v2339 = vunpack.c.l.b16 %v2083
  %v2340 = vunpack.c.l.b16 %v2084
  %v2341 = vunpack.c.l.b16 %v2085
  %v2342 = vunpack.c.l.b16 %v2086
  %v2343 = vunpack.c.l.b16 %v2087
  %v2344 = vunpack.c.l.b16 %v2088
  %v2345 = vunpack.c.l.b16 %v2089
  %v2346 = vunpack.c.l.b16 %v2090
  %v2347 = vunpack.c.l.b16 %v2091
  %v2348 = vunpack.c.l.b16 %v2092
  %v2349 = vunpack.c.l.b16 %v2093
  %v2350 = vunpack.c.l.b16 %v2094
  %v2351 = vunpack.c.l.b16 %v2095
  %v2352 = vunpack.c.l.b16 %v2096
  %v2353 = vunpack.c.l.b16 %v2097
  %v2354 = vunpack.c.l.b16 %v2098
  %v2355 = vunpack.c.l.b16 %v2099
  %v2356 = vunpack.c.l.b16 %v2100
  %v2357 = vunpack.c.l.b16 %v2101
  %v2358 = vunpack.c.l.b16 %v2102
  %v2359 = vunpack.c.l.b16 %v2103
  %v2360 = vunpack.c.l.b16 %v2104
  %v2361 = vunpack.c.l.b16 %v2105
  %v2362 = vunpack.c.l.b16 %v2106
  %v2363 = vunpack.c.l.b16 %v2107
  %v2364 = vunpack.c.l.b16 %v2108
  %v2365 = vunpack.c.l.b16 %v2109
  %v2366 = vunpack.c.l.b16 %v2110
  %v2367 = vunpack.c.l.b16 %v2111
  %v2368 = vunpack.c.l.b16 %v2112
  %v2369 = vunpack.c.l.b16 %v2113
  %v2370 = vunpack.c.l.b16 %v2114
  %v2371 = vunpack.c.l.b16 %v2115
  %v2372 = vunpack.c.l.b16 %v2116
  %v2373 = vunpack.c.l.b16 %v2117
  %v2374 = vunpack.c.l.b16 %v2118
  %v2375 = vunpack.c.l.b16 %v2119
  %v2376 = vunpack.c.l.b16 %v2120
  %v2377 = vunpack.c.l.b16 %v2121
  %v2378 = vunpack.c.l.b16 %v2122
  %v2379 = vunpack.c.l.b16 %v2123
  %v2380 = vunpack.c.l.b16 %v2124
  %v2381 = vunpack.c.l.b16 %v2125
  %v2382 = vunpack.c.l.b16 %v2126
  %v2383 = vunpack.c.l.b16 %v2127
  %v2384 = vunpack.c.l.b16 %v2128
  %v2385 = vunpack.c.l.b16 %v2129
  %v2386 = vunpack.c.l.b16 %v2130
  %v2387 = vunpack.c.l.b16 %v2131
  %v2388 = vunpack.c.l.b16 %v2132
  %v2389 = vunpack.c.l.b16 %v2133
  %v2390 = vunpack.c.l.b16 %v2134
  %v2391 = vunpack.c.l.b16 %v2135
  %v2392 = vunpack.c.l.b16 %v2136
  %v2393 = vunpack.c.l.b16 %v2137
  %v2394 = vunpack.c.l.b16 %v2138
  %v2395 = vunpack.c.l.b16 %v2139
  %v2396 = vunpack.c.l.b16 %v2140
  %v2397 = vunpack.c.l.b16 %v2141
  %v2398 = vunpack.c.l.b16 %v2142
  %v2399 = vunpack.c.l.b16 %v2143
  %v2400 = vunpack.c.l.b16 %v2144
  %v2401 = vunpack.c.l.b16 %v2145
  %v2402 = vunpack.c.l.b16 %v2146
  %v2403 = vunpack.c.l.b16 %v2147
  %v2404 = vunpack.c.l.b16 %v2148
  %v2405 = vunpack.c.l.b16 %v2149
  %v2406 = vunpack.c.l.b16 %v2150
  %v2407 = vunpack.c.l.b16 %v2151
  %v2408 = vunpack.c.l.b16 %v2152
  %v2409 = vunpack.c.l.b16 %v2153
  %v2410 = vunpack.c.l.b16 %v2154
  %v2411 = vunpack.c.l.b16 %v2155
  %v2412 = vunpack.c.l.b16 %v2156
  %v2413 = vunpack.c.l.b16 %v2157
  %v2414 = vunpack.c.l.b16 %v2158
  %v2415 = vunpack.c.l.b16 %v2159
  %v2416 = vunpack.c.l.b16 %v2160
  %v2417 = vunpack.c.l.b16 %v2161
  %v2418 = vunpack.c.l.b16 %v2162
  %v2419 = vunpack.c.l.b16 %v2163
  %v2420 = vunpack.c.l.b16 %v2164
  %v2421 = vunpack.c.l.b16 %v2165
  %v2422 = vunpack.c.l.b16 %v2166
  %v2423 = vunpack.c.l.b16 %v2167
  %v2424 = vunpack.c.l.b16 %v2168
  %v2425 = vunpack.c.l.b16 %v2169
  %v2426 = vunpack.c.l.b16 %v2170
  %v2427 = vunpack.c.l.b16 %v2171
  %v2428 = vunpack.c.l.b16 %v2172
  %v2429 = vunpack.c.l.b16 %v2173
  %v2430 = vunpack.c.l.b16 %v2174
  %v2431 = vunpack.c.l.b16 %v2175
  %v2432 = vunpack.c.l.b16 %v2176
  %v2433 = vunpack.c.l.b16 %v2177
  %v2434 = vunpack.c.l.b16 %v2178
  %v2435 = vunpack.c.l.b16 %v2179
  %v2436 = vunpack.c.l.b16 %v2180
  %v2437 = vunpack.c.l.b16 %v2181
  %v2438 = vunpack.c.l.b16 %v2182
  %v2439 = vunpack.c.l.b16 %v2183
  %v2440 = vunpack.c.l.b16 %v2184
  %v2441 = vunpack.c.l.b16 %v2185
  %v2442 = vunpack.c.l.b16 %v2186
  %v2443 = vunpack.c.l.b16 %v2187
  %v2444 = vunpack.c.l.b16 %v2188
  %v2445 = vunpack.c.l.b16 %v2189
  %v2446 = vunpack.c.l.b16 %v2190
  %v2447 = vunpack.c.l.b16 %v2191
  %v2448 = vunpack.c.l.b16 %v2192
  %v2449 = vunpack.c.l.b16 %v2193
  %v2450 = vunpack.c.l.b16 %v2194
  %v2451 = vunpack.c.l.b16 %v2195
  %v2452 = vunpack.c.l.b16 %v2196
  %v2453 = vunpack.c.l.b16 %v2197
  %v2454 = vunpack.c.l.b16 %v2198
  %v2455 = vunpack.c.l.b16 %v2199
  %v2456 = vunpack.c.l.b16 %v2200
  %v2457 = vunpack.c.l.b16 %v2201
  %v2458 = vunpack.c.l.b16 %v2202
  %v2459 = vunpack.c.l.b16 %v2203
  %v2460 = vunpack.c.l.b16 %v2204
  %v2461 = vunpack.c.l.b16 %v2205
  %v2462 = vpack.c.b16 %v2335, %v2334
  %v2463 = vpack.c.b16 %v2337, %v2336
  %v2464 = vpack.c.b16 %v2339, %v2338
  %v2465 = vpack.c.b16 %v2341, %v2340
  %v2466 = vpack.c.b16 %v2343, %v2342
  %v2467 = vpack.c.b16 %v2345, %v2344
  %v2468 = vpack.c.b16 %v2347, %v2346
  %v2469 = vpack.c.b16 %v2349, %v2348
  %v2470 = vpack.c.b16 %v2351, %v2350
  %v2471 = vpack.c.b16 %v2353, %v2352
  %v2472 = vpack.c.b16 %v2355, %v2354
  %v2473 = vpack.c.b16 %v2357, %v2356
  %v2474 = vpack.c.b16 %v2359, %v2358
  %v2475 = vpack.c.b16 %v2361, %v2360
  %v2476 = vpack.c.b16 %v2363, %v2362
  %v2477 = vpack.c.b16 %v2365, %v2364
  %v2478 = vpack.c.b16 %v2367, %v2366
  %v2479 = vpack.c.b16 %v2369, %v2368
  %v2480 = vpack.c.b16 %v2371, %v2370
  %v2481 = vpack.c.b16 %v2373, %v2372
  %v2482 = vpack.c.b16 %v2375, %v2374
  %v2483 = vpack.c.b16 %v2377, %v2376
  %v2484 = vpack.c.b16 %v2379, %v2378
  %v2485 = vpack.c.b16 %v2381, %v2380
  %v2486 = vpack.c.b16 %v2383, %v2382
  %v2487 = vpack.c.b16 %v2385, %v2384
  %v2488 = vpack.c.b16 %v2387, %v2386
  %v2489 = vpack.c.b16 %v2389, %v2388
  %v2490 = vpack.c.b16 %v2391, %v2390
  %v2491 = vpack.c.b16 %v2393, %v2392
  %v2492 = vpack.c.b16 %v2395, %v2394
  %v2493 = vpack.c.b16 %v2397, %v2396
  %v2494 = vpack.c.b16 %v2399, %v2398
  %v2495 = vpack.c.b16 %v2401, %v2400
  %v2496 = vpack.c.b16 %v2403, %v2402
  %v2497 = vpack.c.b16 %v2405, %v2404
  %v2498 = vpack.c.b16 %v2407, %v2406
  %v2499 = vpack.c.b16 %v2409, %v2408
  %v2500 = vpack.c.b16 %v2411, %v2410
  %v2501 = vpack.c.b16 %v2413, %v2412
  %v2502 = vpack.c.b16 %v2415, %v2414
  %v2503 = vpack.c.b16 %v2417, %v2416
  %v2504 = vpack.c.b16 %v2419, %v2418
  %v2505 = vpack.c.b16 %v2421, %v2420
  %v2506 = vpack.c.b16 %v2423, %v2422
  %v2507 = vpack.c.b16 %v2425, %v2424
  %v2508 = vpack.c.b16 %v2427, %v2426
  %v2509 = vpack.c.b16 %v2429, %v2428
  %v2510 = vpack.c.b16 %v2431, %v2430
  %v2511 = vpack.c.b16 %v2433, %v2432
  %v2512 = vpack.c.b16 %v2435, %v2434
  %v2513 = vpack.c.b16 %v2437, %v2436
  %v2514 = vpack.c.b16 %v2439, %v2438
  %v2515 = vpack.c.b16 %v2441, %v2440
  %v2516 = vpack.c.b16 %v2443, %v2442
  %v2517 = vpack.c.b16 %v2445, %v2444
  %v2518 = vpack.c.b16 %v2447, %v2446
  %v2519 = vpack.c.b16 %v2449, %v2448
  %v2520 = vpack.c.b16 %v2451, %v2450
  %v2521 = vpack.c.b16 %v2453, %v2452
  %v2522 = vpack.c.b16 %v2455, %v2454
  %v2523 = vpack.c.b16 %v2457, %v2456
  %v2524 = vpack.c.b16 %v2459, %v2458
  %v2525 = vpack.c.b16 %v2461, %v2460
  %2590 = vmatprep.subr.bf16.mxu0 0
  %2591 = vmatpush1.bf16.msra.mxu0 %v2462
  %2592 = vmatprep.subr.bf16.mxu0 0
  %2593 = vmatpush1.bf16.msra.mxu0 %v2463
  %2594 = vmatprep.subr.bf16.mxu0 0
  %2595 = vmatpush1.bf16.msra.mxu0 %v2464
  %2596 = vmatprep.subr.bf16.mxu0 0
  %2597 = vmatpush1.bf16.msra.mxu0 %v2465
  %2598 = vmatprep.subr.bf16.mxu0 0
  %2599 = vmatpush1.bf16.msra.mxu0 %v2466
  %2600 = vmatprep.subr.bf16.mxu0 0
  %2601 = vmatpush1.bf16.msra.mxu0 %v2467
  %2602 = vmatprep.subr.bf16.mxu0 0
  %2603 = vmatpush1.bf16.msra.mxu0 %v2468
  %2604 = vmatprep.subr.bf16.mxu0 0
  %2605 = vmatpush1.bf16.msra.mxu0 %v2469
  %2606 = vmatprep.subr.bf16.mxu0 0
  %2607 = vmatpush1.bf16.msra.mxu0 %v2470
  %2608 = vmatprep.subr.bf16.mxu0 0
  %2609 = vmatpush1.bf16.msra.mxu0 %v2471
  %2610 = vmatprep.subr.bf16.mxu0 0
  %2611 = vmatpush1.bf16.msra.mxu0 %v2472
  %2612 = vmatprep.subr.bf16.mxu0 0
  %2613 = vmatpush1.bf16.msra.mxu0 %v2473
  %2614 = vmatprep.subr.bf16.mxu0 0
  %2615 = vmatpush1.bf16.msra.mxu0 %v2474
  %2616 = vmatprep.subr.bf16.mxu0 0
  %2617 = vmatpush1.bf16.msra.mxu0 %v2475
  %2618 = vmatprep.subr.bf16.mxu0 0
  %2619 = vmatpush1.bf16.msra.mxu0 %v2476
  %2620 = vmatprep.subr.bf16.mxu0 0
  %2621 = vmatpush1.bf16.msra.mxu0 %v2477
  %2622 = vmatprep.mubr.bf16.mxu0 %v167
  %2623 = vmatmul.mubr.bf16.gmra.mrb[0].mxu0 %v166
  %v2624 = vpop.f32.mrb[0].mxu0
  %v2625 = vadd.f32 %v152, %v2624
  %v2626 = vpop.f32.mrb[0].mxu0
  %v2627 = vpop.f32.mrb[0].mxu0
  %v2628 = vpop.f32.mrb[0].mxu0
  %2629 = vdwg.mxu0
  %2630 = vmatprep.subr.bf16.mxu0 0
  %2631 = vmatpush1.bf16.msra.mxu0 %v2478
  %2632 = vmatprep.subr.bf16.mxu0 0
  %2633 = vmatpush1.bf16.msra.mxu0 %v2479
  %2634 = vmatprep.subr.bf16.mxu0 0
  %2635 = vmatpush1.bf16.msra.mxu0 %v2480
  %2636 = vmatprep.subr.bf16.mxu0 0
  %2637 = vmatpush1.bf16.msra.mxu0 %v2481
  %2638 = vmatprep.subr.bf16.mxu0 0
  %2639 = vmatpush1.bf16.msra.mxu0 %v2482
  %2640 = vmatprep.subr.bf16.mxu0 0
  %2641 = vmatpush1.bf16.msra.mxu0 %v2483
  %2642 = vmatprep.subr.bf16.mxu0 0
  %2643 = vmatpush1.bf16.msra.mxu0 %v2484
  %2644 = vmatprep.subr.bf16.mxu0 0
  %2645 = vmatpush1.bf16.msra.mxu0 %v2485
  %2646 = vmatprep.subr.bf16.mxu0 0
  %2647 = vmatpush1.bf16.msra.mxu0 %v2486
  %2648 = vmatprep.subr.bf16.mxu0 0
  %2649 = vmatpush1.bf16.msra.mxu0 %v2487
  %2650 = vmatprep.subr.bf16.mxu0 0
  %2651 = vmatpush1.bf16.msra.mxu0 %v2488
  %2652 = vmatprep.subr.bf16.mxu0 0
  %2653 = vmatpush1.bf16.msra.mxu0 %v2489
  %2654 = vmatprep.subr.bf16.mxu0 0
  %2655 = vmatpush1.bf16.msra.mxu0 %v2490
  %2656 = vmatprep.subr.bf16.mxu0 0
  %2657 = vmatpush1.bf16.msra.mxu0 %v2491
  %2658 = vmatprep.subr.bf16.mxu0 0
  %2659 = vmatpush1.bf16.msra.mxu0 %v2492
  %2660 = vmatprep.subr.bf16.mxu0 0
  %2661 = vmatpush1.bf16.msra.mxu0 %v2493
  %2662 = vmatprep.mubr.bf16.mxu0 %v169
  %2663 = vmatmul.mubr.bf16.gmra.mrb[0].mxu0 %v168
  %v2664 = vpop.f32.mrb[0].mxu0
  %v2665 = vadd.f32 %v2625, %v2664
  %v2666 = vpop.f32.mrb[0].mxu0
  %v2667 = vpop.f32.mrb[0].mxu0
  %v2668 = vpop.f32.mrb[0].mxu0
  %2669 = vdwg.mxu0
  %2670 = vmatprep.subr.bf16.mxu0 0
  %2671 = vmatpush1.bf16.msra.mxu0 %v2494
  %2672 = vmatprep.subr.bf16.mxu0 0
  %2673 = vmatpush1.bf16.msra.mxu0 %v2495
  %2674 = vmatprep.subr.bf16.mxu0 0
  %2675 = vmatpush1.bf16.msra.mxu0 %v2496
  %2676 = vmatprep.subr.bf16.mxu0 0
  %2677 = vmatpush1.bf16.msra.mxu0 %v2497
  %2678 = vmatprep.subr.bf16.mxu0 0
  %2679 = vmatpush1.bf16.msra.mxu0 %v2498
  %2680 = vmatprep.subr.bf16.mxu0 0
  %2681 = vmatpush1.bf16.msra.mxu0 %v2499
  %2682 = vmatprep.subr.bf16.mxu0 0
  %2683 = vmatpush1.bf16.msra.mxu0 %v2500
  %2684 = vmatprep.subr.bf16.mxu0 0
  %2685 = vmatpush1.bf16.msra.mxu0 %v2501
  %2686 = vmatprep.subr.bf16.mxu0 0
  %2687 = vmatpush1.bf16.msra.mxu0 %v2502
  %2688 = vmatprep.subr.bf16.mxu0 0
  %2689 = vmatpush1.bf16.msra.mxu0 %v2503
  %2690 = vmatprep.subr.bf16.mxu0 0
  %2691 = vmatpush1.bf16.msra.mxu0 %v2504
  %2692 = vmatprep.subr.bf16.mxu0 0
  %2693 = vmatpush1.bf16.msra.mxu0 %v2505
  %2694 = vmatprep.subr.bf16.mxu0 0
  %2695 = vmatpush1.bf16.msra.mxu0 %v2506
  %2696 = vmatprep.subr.bf16.mxu0 0
  %2697 = vmatpush1.bf16.msra.mxu0 %v2507
  %2698 = vmatprep.subr.bf16.mxu0 0
  %2699 = vmatpush1.bf16.msra.mxu0 %v2508
  %2700 = vmatprep.subr.bf16.mxu0 0
  %2701 = vmatpush1.bf16.msra.mxu0 %v2509
  %2702 = vmatprep.mubr.bf16.mxu0 %v171
  %2703 = vmatmul.mubr.bf16.gmra.mrb[0].mxu0 %v170
  %v2704 = vpop.f32.mrb[0].mxu0
  %v2705 = vadd.f32 %v2665, %v2704
  %v2706 = vpop.f32.mrb[0].mxu0
  %v2707 = vpop.f32.mrb[0].mxu0
  %v2708 = vpop.f32.mrb[0].mxu0
  %2709 = vdwg.mxu0
  %2710 = vmatprep.subr.bf16.mxu0 0
  %2711 = vmatpush1.bf16.msra.mxu0 %v2510
  %2712 = vmatprep.subr.bf16.mxu0 0
  %2713 = vmatpush1.bf16.msra.mxu0 %v2511
  %2714 = vmatprep.subr.bf16.mxu0 0
  %2715 = vmatpush1.bf16.msra.mxu0 %v2512
  %2716 = vmatprep.subr.bf16.mxu0 0
  %2717 = vmatpush1.bf16.msra.mxu0 %v2513
  %2718 = vmatprep.subr.bf16.mxu0 0
  %2719 = vmatpush1.bf16.msra.mxu0 %v2514
  %2720 = vmatprep.subr.bf16.mxu0 0
  %2721 = vmatpush1.bf16.msra.mxu0 %v2515
  %2722 = vmatprep.subr.bf16.mxu0 0
  %2723 = vmatpush1.bf16.msra.mxu0 %v2516
  %2724 = vmatprep.subr.bf16.mxu0 0
  %2725 = vmatpush1.bf16.msra.mxu0 %v2517
  %2726 = vmatprep.subr.bf16.mxu0 0
  %2727 = vmatpush1.bf16.msra.mxu0 %v2518
  %2728 = vmatprep.subr.bf16.mxu0 0
  %2729 = vmatpush1.bf16.msra.mxu0 %v2519
  %2730 = vmatprep.subr.bf16.mxu0 0
  %2731 = vmatpush1.bf16.msra.mxu0 %v2520
  %2732 = vmatprep.subr.bf16.mxu0 0
  %2733 = vmatpush1.bf16.msra.mxu0 %v2521
  %2734 = vmatprep.subr.bf16.mxu0 0
  %2735 = vmatpush1.bf16.msra.mxu0 %v2522
  %2736 = vmatprep.subr.bf16.mxu0 0
  %2737 = vmatpush1.bf16.msra.mxu0 %v2523
  %2738 = vmatprep.subr.bf16.mxu0 0
  %2739 = vmatpush1.bf16.msra.mxu0 %v2524
  %2740 = vmatprep.subr.bf16.mxu0 0
  %2741 = vmatpush1.bf16.msra.mxu0 %v2525
  %2742 = vmatprep.mubr.bf16.mxu0 %v173
  %2743 = vmatmul.mubr.bf16.gmra.mrb[0].mxu0 %v172
  %v2744 = vpop.f32.mrb[0].mxu0
  %v2745 = vadd.f32 %v2705, %v2744
  %v2746 = vpop.f32.mrb[0].mxu0
  %v2747 = vpop.f32.mrb[0].mxu0
  %v2748 = vpop.f32.mrb[0].mxu0
  %2749 = vdwg.mxu0
  %v2750 = vmax.f32 %v2745, 0.0
  %v2751 = vmax.f32 %v2076, %v2750
  %v2752 = vpack.c.bf16 %v2751, %v2751
  %2753 = vst [vmem:[%s3] sm:$0xf] %v2752
  // Predicated region
  $region14: #{vae_forward.11} parent=0 // pred_check
    _
  $region15: #{vae_forward.11} parent=0 // pred_check_branch
    %2755 = sbr.rel (0) target = $region17
  $region16: #{vae_forward.11} parent=0 // pred_region
    _
  $region17: #{vae_forward.11} parent=0 // pred_fallthru
    _
  // Predicated region
  $region18: #{vae_forward.11} parent=0 // pred_check
    _
  $region19: #{vae_forward.11} parent=0 // pred_check_branch
    %2757 = sbr.rel (0) target = $region21
  $region20: #{vae_forward.11} parent=0 // pred_region
    _
  $region21: #{vae_forward.11} parent=0 // pred_fallthru
    _

// kernel: vae_forward.14
$region0: #{vae_forward.14}
  #allocation0 [shape = 'u32[]', space=smem, size = 0x4, offset = 0x4, fixed_abs, tag = 'smem constant byte address 0x4 - core index']
  #allocation1 [shape = 'u32[144,128]{1,0:T(1,128)}', space=vmem, size = 0x12000, scoped, tag = 'internal scratch']
  %s0 = inlined_call_operand.vmem [shape: bf16[2,288], index: 0, kind: input, shape index: {}]
  %s1 = inlined_call_operand.vmem [shape: bf16[288,512], index: 1, kind: input, shape index: {}]
  %s2 = inlined_call_operand.vmem [shape: f32[1,512], index: 2, kind: input, shape index: {}]
  %s3 = inlined_call_operand.vmem [shape: bf16[2,512], index: 3, kind: output, shape index: {}]
  %s4 = sld [smem:[#allocation0]]
  $region22: #{vae_forward.14} parent=0
    _
  %s6 = ssub.s32 1, %s4
  %s7 = scalar_select 0, %s6, %s4
  // Predicated region
  $region2: #{vae_forward.14} parent=0 // pred_check
    _
  $region3: #{vae_forward.14} parent=0 // pred_check_branch
    %9 = sbr.rel (0) target = $region5
  $region4: #{vae_forward.14} parent=0 // pred_region
    _
  $region5: #{vae_forward.14} parent=0 // pred_fallthru
    _
  // Predicated region
  $region6: #{vae_forward.14} parent=0 // pred_check
    _
  $region7: #{vae_forward.14} parent=0 // pred_check_branch
    %11 = sbr.rel (0) target = $region9
  $region8: #{vae_forward.14} parent=0 // pred_region
    _
  $region9: #{vae_forward.14} parent=0 // pred_fallthru
    _
  // Predicated region
  $region10: #{vae_forward.14} parent=0 // pred_check
    _
  $region11: #{vae_forward.14} parent=0 // pred_check_branch
    %13 = sbr.rel (0) target = $region13
  $region12: #{vae_forward.14} parent=0 // pred_region
    _
  $region13: #{vae_forward.14} parent=0 // pred_fallthru
    _
  %v15 = vld [vmem:[%s0] sm:$0x7]
  %v16 = vld [vmem:[%s1] sm:$0xff]
  %v17 = vld [vmem:[%s1 + $0x8] sm:$0xff]
  %v18 = vld [vmem:[%s1 + $0x10] sm:$0xff]
  %v19 = vld [vmem:[%s1 + $0x18] sm:$0xff]
  %v20 = vld [vmem:[%s1 + $0x20] sm:$0xff]
  %v21 = vld [vmem:[%s1 + $0x28] sm:$0xff]
  %v22 = vld [vmem:[%s1 + $0x30] sm:$0xff]
  %v23 = vld [vmem:[%s1 + $0x38] sm:$0xff]
  %v24 = vld [vmem:[%s1 + $0x40] sm:$0xff]
  %v25 = vld [vmem:[%s1 + $0x48] sm:$0xff]
  %v26 = vld [vmem:[%s1 + $0x50] sm:$0xff]
  %v27 = vld [vmem:[%s1 + $0x58] sm:$0xff]
  %v28 = vld [vmem:[%s1 + $0x60] sm:$0xff]
  %v29 = vld [vmem:[%s1 + $0x68] sm:$0xff]
  %v30 = vld [vmem:[%s1 + $0x70] sm:$0xff]
  %v31 = vld [vmem:[%s1 + $0x78] sm:$0xff]
  %v32 = vld [vmem:[%s1 + $0x80] sm:$0xff]
  %v33 = vld [vmem:[%s1 + $0x88] sm:$0xff]
  %v34 = vld [vmem:[%s1 + $0x90] sm:$0xff]
  %v35 = vld [vmem:[%s1 + $0x98] sm:$0xff]
  %v36 = vld [vmem:[%s1 + $0xa0] sm:$0xff]
  %v37 = vld [vmem:[%s1 + $0xa8] sm:$0xff]
  %v38 = vld [vmem:[%s1 + $0xb0] sm:$0xff]
  %v39 = vld [vmem:[%s1 + $0xb8] sm:$0xff]
  %v40 = vld [vmem:[%s1 + $0xc0] sm:$0xff]
  %v41 = vld [vmem:[%s1 + $0xc8] sm:$0xff]
  %v42 = vld [vmem:[%s1 + $0xd0] sm:$0xff]
  %v43 = vld [vmem:[%s1 + $0xd8] sm:$0xff]
  %v44 = vld [vmem:[%s1 + $0xe0] sm:$0xff]
  %v45 = vld [vmem:[%s1 + $0xe8] sm:$0xff]
  %v46 = vld [vmem:[%s1 + $0xf0] sm:$0xff]
  %v47 = vld [vmem:[%s1 + $0xf8] sm:$0xff]
  %v48 = vld [vmem:[%s1 + $0x100] sm:$0xff]
  %v49 = vld [vmem:[%s1 + $0x108] sm:$0xff]
  %v50 = vld [vmem:[%s1 + $0x110] sm:$0xff]
  %v51 = vld [vmem:[%s1 + $0x118] sm:$0xff]
  %v52 = vld [vmem:[%s1 + $0x120] sm:$0xff]
  %v53 = vld [vmem:[%s1 + $0x128] sm:$0xff]
  %v54 = vld [vmem:[%s1 + $0x130] sm:$0xff]
  %v55 = vld [vmem:[%s1 + $0x138] sm:$0xff]
  %v56 = vld [vmem:[%s1 + $0x140] sm:$0xff]
  %v57 = vld [vmem:[%s1 + $0x148] sm:$0xff]
  %v58 = vld [vmem:[%s1 + $0x150] sm:$0xff]
  %v59 = vld [vmem:[%s1 + $0x158] sm:$0xff]
  %v60 = vld [vmem:[%s1 + $0x160] sm:$0xff]
  %v61 = vld [vmem:[%s1 + $0x168] sm:$0xff]
  %v62 = vld [vmem:[%s1 + $0x170] sm:$0xff]
  %v63 = vld [vmem:[%s1 + $0x178] sm:$0xff]
  %v64 = vld [vmem:[%s1 + $0x180] sm:$0xff]
  %v65 = vld [vmem:[%s1 + $0x188] sm:$0xff]
  %v66 = vld [vmem:[%s1 + $0x190] sm:$0xff]
  %v67 = vld [vmem:[%s1 + $0x198] sm:$0xff]
  %v68 = vld [vmem:[%s1 + $0x1a0] sm:$0xff]
  %v69 = vld [vmem:[%s1 + $0x1a8] sm:$0xff]
  %v70 = vld [vmem:[%s1 + $0x1b0] sm:$0xff]
  %v71 = vld [vmem:[%s1 + $0x1b8] sm:$0xff]
  %v72 = vld [vmem:[%s1 + $0x1c0] sm:$0xff]
  %v73 = vld [vmem:[%s1 + $0x1c8] sm:$0xff]
  %v74 = vld [vmem:[%s1 + $0x1d0] sm:$0xff]
  %v75 = vld [vmem:[%s1 + $0x1d8] sm:$0xff]
  %v76 = vld [vmem:[%s1 + $0x1e0] sm:$0xff]
  %v77 = vld [vmem:[%s1 + $0x1e8] sm:$0xff]
  %v78 = vld [vmem:[%s1 + $0x1f0] sm:$0xff]
  %v79 = vld [vmem:[%s1 + $0x1f8] sm:$0xff]
  %v80 = vld [vmem:[%s1 + $0x200] sm:$0xff]
  %v81 = vld [vmem:[%s1 + $0x208] sm:$0xff]
  %v82 = vld [vmem:[%s1 + $0x210] sm:$0xff]
  %v83 = vld [vmem:[%s1 + $0x218] sm:$0xff]
  %v84 = vld [vmem:[%s1 + $0x220] sm:$0xff]
  %v85 = vld [vmem:[%s1 + $0x228] sm:$0xff]
  %v86 = vld [vmem:[%s1 + $0x230] sm:$0xff]
  %v87 = vld [vmem:[%s1 + $0x238] sm:$0xff]
  %v88 = vld [vmem:[%s2] sm:$0xf]
  %v90 = vlaneseq
  %v91 = vshrl.u32 %v90, 7
  %v92 = vsub.s32 0, %v91
  %v93 = vrot.slane %v88, %v92
  %v94 = vlaneseq
  %v95 = vshrl.u32 %v94, 7
  %v96 = vsub.s32 1, %v95
  %v97 = vrot.slane %v88, %v96
  %v98 = vlaneseq
  %v99 = vshrl.u32 %v98, 7
  %v100 = vsub.s32 2, %v99
  %v101 = vrot.slane %v88, %v100
  %v102 = vlaneseq
  %v103 = vshrl.u32 %v102, 7
  %v104 = vsub.s32 3, %v103
  %v105 = vrot.slane %v88, %v104
  %v112 = vunpack.c.l.s4 1966171168
  %v113 = vunpack.c.0.s8 %v112
  %v114 = vlaneseq
  %v115 = vshrl.u32 %v114, 7
  %v116 = vsub.s32 %v113, %v115
  %v117 = vrot.slane %v15, %v116
  %v118 = vcombine.high %v117, %v117
  %v120 = vunpack.c.l.s4 1966171168
  %v121 = vunpack.c.0.s8 %v120
  %v122 = vlaneseq
  %v123 = vshrl.u32 %v122, 7
  %v124 = vsub.s32 %v121, %v123
  %v125 = vrot.slane %v117, %v124
  %v127 = vunpack.c.l.s4 1966171168
  %v128 = vunpack.c.0.s8 %v127
  %v129 = vlaneseq
  %v130 = vshrl.u32 %v129, 7
  %v131 = vsub.s32 %v128, %v130
  %v132 = vrot.slane %v118, %v131
  %v133 = vcombine.high %v125, %v125
  %v208 = vunpack.c.l.b16 %v16
  %v209 = vunpack.c.h.b16 %v16
  %v210 = vunpack.c.l.b16 %v17
  %v211 = vunpack.c.h.b16 %v17
  %v212 = vunpack.c.l.b16 %v18
  %v213 = vunpack.c.h.b16 %v18
  %v214 = vunpack.c.l.b16 %v19
  %v215 = vunpack.c.h.b16 %v19
  %v216 = vunpack.c.l.b16 %v20
  %v217 = vunpack.c.h.b16 %v20
  %v218 = vunpack.c.l.b16 %v21
  %v219 = vunpack.c.h.b16 %v21
  %v220 = vunpack.c.l.b16 %v22
  %v221 = vunpack.c.h.b16 %v22
  %v222 = vunpack.c.l.b16 %v23
  %v223 = vunpack.c.h.b16 %v23
  %v224 = vunpack.c.l.b16 %v24
  %v225 = vunpack.c.h.b16 %v24
  %v226 = vunpack.c.l.b16 %v25
  %v227 = vunpack.c.h.b16 %v25
  %v228 = vunpack.c.l.b16 %v26
  %v229 = vunpack.c.h.b16 %v26
  %v230 = vunpack.c.l.b16 %v27
  %v231 = vunpack.c.h.b16 %v27
  %v232 = vunpack.c.l.b16 %v28
  %v233 = vunpack.c.h.b16 %v28
  %v234 = vunpack.c.l.b16 %v29
  %v235 = vunpack.c.h.b16 %v29
  %v236 = vunpack.c.l.b16 %v30
  %v237 = vunpack.c.h.b16 %v30
  %v238 = vunpack.c.l.b16 %v31
  %v239 = vunpack.c.h.b16 %v31
  %v240 = vunpack.c.l.b16 %v32
  %v241 = vunpack.c.h.b16 %v32
  %v242 = vunpack.c.l.b16 %v33
  %v243 = vunpack.c.h.b16 %v33
  %v244 = vunpack.c.l.b16 %v34
  %v245 = vunpack.c.h.b16 %v34
  %v246 = vunpack.c.l.b16 %v35
  %v247 = vunpack.c.h.b16 %v35
  %v248 = vunpack.c.l.b16 %v36
  %v249 = vunpack.c.h.b16 %v36
  %v250 = vunpack.c.l.b16 %v37
  %v251 = vunpack.c.h.b16 %v37
  %v252 = vunpack.c.l.b16 %v38
  %v253 = vunpack.c.h.b16 %v38
  %v254 = vunpack.c.l.b16 %v39
  %v255 = vunpack.c.h.b16 %v39
  %v256 = vunpack.c.l.b16 %v40
  %v257 = vunpack.c.h.b16 %v40
  %v258 = vunpack.c.l.b16 %v41
  %v259 = vunpack.c.h.b16 %v41
  %v260 = vunpack.c.l.b16 %v42
  %v261 = vunpack.c.h.b16 %v42
  %v262 = vunpack.c.l.b16 %v43
  %v263 = vunpack.c.h.b16 %v43
  %v264 = vunpack.c.l.b16 %v44
  %v265 = vunpack.c.h.b16 %v44
  %v266 = vunpack.c.l.b16 %v45
  %v267 = vunpack.c.h.b16 %v45
  %v268 = vunpack.c.l.b16 %v46
  %v269 = vunpack.c.h.b16 %v46
  %v270 = vunpack.c.l.b16 %v47
  %v271 = vunpack.c.h.b16 %v47
  %v272 = vunpack.c.l.b16 %v48
  %v273 = vunpack.c.h.b16 %v48
  %v274 = vunpack.c.l.b16 %v49
  %v275 = vunpack.c.h.b16 %v49
  %v276 = vunpack.c.l.b16 %v50
  %v277 = vunpack.c.h.b16 %v50
  %v278 = vunpack.c.l.b16 %v51
  %v279 = vunpack.c.h.b16 %v51
  %v280 = vunpack.c.l.b16 %v52
  %v281 = vunpack.c.h.b16 %v52
  %v282 = vunpack.c.l.b16 %v53
  %v283 = vunpack.c.h.b16 %v53
  %v284 = vunpack.c.l.b16 %v54
  %v285 = vunpack.c.h.b16 %v54
  %v286 = vunpack.c.l.b16 %v55
  %v287 = vunpack.c.h.b16 %v55
  %v288 = vunpack.c.l.b16 %v56
  %v289 = vunpack.c.h.b16 %v56
  %v290 = vunpack.c.l.b16 %v57
  %v291 = vunpack.c.h.b16 %v57
  %v292 = vunpack.c.l.b16 %v58
  %v293 = vunpack.c.h.b16 %v58
  %v294 = vunpack.c.l.b16 %v59
  %v295 = vunpack.c.h.b16 %v59
  %v296 = vunpack.c.l.b16 %v60
  %v297 = vunpack.c.h.b16 %v60
  %v298 = vunpack.c.l.b16 %v61
  %v299 = vunpack.c.h.b16 %v61
  %v300 = vunpack.c.l.b16 %v62
  %v301 = vunpack.c.h.b16 %v62
  %v302 = vunpack.c.l.b16 %v63
  %v303 = vunpack.c.h.b16 %v63
  %v304 = vunpack.c.l.b16 %v64
  %v305 = vunpack.c.h.b16 %v64
  %v306 = vunpack.c.l.b16 %v65
  %v307 = vunpack.c.h.b16 %v65
  %v308 = vunpack.c.l.b16 %v66
  %v309 = vunpack.c.h.b16 %v66
  %v310 = vunpack.c.l.b16 %v67
  %v311 = vunpack.c.h.b16 %v67
  %v312 = vunpack.c.l.b16 %v68
  %v313 = vunpack.c.h.b16 %v68
  %v314 = vunpack.c.l.b16 %v69
  %v315 = vunpack.c.h.b16 %v69
  %v316 = vunpack.c.l.b16 %v70
  %v317 = vunpack.c.h.b16 %v70
  %v318 = vunpack.c.l.b16 %v71
  %v319 = vunpack.c.h.b16 %v71
  %v320 = vunpack.c.l.b16 %v72
  %v321 = vunpack.c.h.b16 %v72
  %v322 = vunpack.c.l.b16 %v73
  %v323 = vunpack.c.h.b16 %v73
  %v324 = vunpack.c.l.b16 %v74
  %v325 = vunpack.c.h.b16 %v74
  %v326 = vunpack.c.l.b16 %v75
  %v327 = vunpack.c.h.b16 %v75
  %v328 = vunpack.c.l.b16 %v76
  %v329 = vunpack.c.h.b16 %v76
  %v330 = vunpack.c.l.b16 %v77
  %v331 = vunpack.c.h.b16 %v77
  %v332 = vunpack.c.l.b16 %v78
  %v333 = vunpack.c.h.b16 %v78
  %v334 = vunpack.c.l.b16 %v79
  %v335 = vunpack.c.h.b16 %v79
  %v336 = vunpack.c.l.b16 %v80
  %v337 = vunpack.c.h.b16 %v80
  %v338 = vunpack.c.l.b16 %v81
  %v339 = vunpack.c.h.b16 %v81
  %v340 = vunpack.c.l.b16 %v82
  %v341 = vunpack.c.h.b16 %v82
  %v342 = vunpack.c.l.b16 %v83
  %v343 = vunpack.c.h.b16 %v83
  %v344 = vunpack.c.l.b16 %v84
  %v345 = vunpack.c.h.b16 %v84
  %v346 = vunpack.c.l.b16 %v85
  %v347 = vunpack.c.h.b16 %v85
  %v348 = vunpack.c.l.b16 %v86
  %v349 = vunpack.c.h.b16 %v86
  %v350 = vunpack.c.l.b16 %v87
  %v351 = vunpack.c.h.b16 %v87
  %v352 = vpack.c.b16 %v212, %v208
  %v353 = vpack.c.b16 %v213, %v209
  %v354 = vpack.c.b16 %v214, %v210
  %v355 = vpack.c.b16 %v215, %v211
  %v356 = vpack.c.b16 %v220, %v216
  %v357 = vpack.c.b16 %v221, %v217
  %v358 = vpack.c.b16 %v222, %v218
  %v359 = vpack.c.b16 %v223, %v219
  %v360 = vpack.c.b16 %v228, %v224
  %v361 = vpack.c.b16 %v229, %v225
  %v362 = vpack.c.b16 %v230, %v226
  %v363 = vpack.c.b16 %v231, %v227
  %v364 = vpack.c.b16 %v236, %v232
  %v365 = vpack.c.b16 %v237, %v233
  %v366 = vpack.c.b16 %v238, %v234
  %v367 = vpack.c.b16 %v239, %v235
  %v368 = vpack.c.b16 %v244, %v240
  %v369 = vpack.c.b16 %v245, %v241
  %v370 = vpack.c.b16 %v246, %v242
  %v371 = vpack.c.b16 %v247, %v243
  %v372 = vpack.c.b16 %v252, %v248
  %v373 = vpack.c.b16 %v253, %v249
  %v374 = vpack.c.b16 %v254, %v250
  %v375 = vpack.c.b16 %v255, %v251
  %v376 = vpack.c.b16 %v260, %v256
  %v377 = vpack.c.b16 %v261, %v257
  %v378 = vpack.c.b16 %v262, %v258
  %v379 = vpack.c.b16 %v263, %v259
  %v380 = vpack.c.b16 %v268, %v264
  %v381 = vpack.c.b16 %v269, %v265
  %v382 = vpack.c.b16 %v270, %v266
  %v383 = vpack.c.b16 %v271, %v267
  %v384 = vpack.c.b16 %v276, %v272
  %v385 = vpack.c.b16 %v277, %v273
  %v386 = vpack.c.b16 %v278, %v274
  %v387 = vpack.c.b16 %v279, %v275
  %v388 = vpack.c.b16 %v284, %v280
  %v389 = vpack.c.b16 %v285, %v281
  %v390 = vpack.c.b16 %v286, %v282
  %v391 = vpack.c.b16 %v287, %v283
  %v392 = vpack.c.b16 %v292, %v288
  %v393 = vpack.c.b16 %v293, %v289
  %v394 = vpack.c.b16 %v294, %v290
  %v395 = vpack.c.b16 %v295, %v291
  %v396 = vpack.c.b16 %v300, %v296
  %v397 = vpack.c.b16 %v301, %v297
  %v398 = vpack.c.b16 %v302, %v298
  %v399 = vpack.c.b16 %v303, %v299
  %v400 = vpack.c.b16 %v308, %v304
  %v401 = vpack.c.b16 %v309, %v305
  %v402 = vpack.c.b16 %v310, %v306
  %v403 = vpack.c.b16 %v311, %v307
  %v404 = vpack.c.b16 %v316, %v312
  %v405 = vpack.c.b16 %v317, %v313
  %v406 = vpack.c.b16 %v318, %v314
  %v407 = vpack.c.b16 %v319, %v315
  %v408 = vpack.c.b16 %v324, %v320
  %v409 = vpack.c.b16 %v325, %v321
  %v410 = vpack.c.b16 %v326, %v322
  %v411 = vpack.c.b16 %v327, %v323
  %v412 = vpack.c.b16 %v332, %v328
  %v413 = vpack.c.b16 %v333, %v329
  %v414 = vpack.c.b16 %v334, %v330
  %v415 = vpack.c.b16 %v335, %v331
  %v416 = vpack.c.b16 %v340, %v336
  %v417 = vpack.c.b16 %v341, %v337
  %v418 = vpack.c.b16 %v342, %v338
  %v419 = vpack.c.b16 %v343, %v339
  %v420 = vpack.c.b16 %v348, %v344
  %v421 = vpack.c.b16 %v349, %v345
  %v422 = vpack.c.b16 %v350, %v346
  %v423 = vpack.c.b16 %v351, %v347
  %vm496 = vcmask 261120
  %v498 = vsel %vm496, %v133, 0
  %500 = vmatprep.subr.bf16.mxu0 %v353
  %501 = vmatpush1.bf16.msra.mxu0 %v352
  %502 = vmatprep.subr.bf16.mxu0 %v357
  %503 = vmatpush1.bf16.msra.mxu0 %v356
  %504 = vmatprep.subr.bf16.mxu0 %v361
  %505 = vmatpush1.bf16.msra.mxu0 %v360
  %506 = vmatprep.subr.bf16.mxu0 %v365
  %507 = vmatpush1.bf16.msra.mxu0 %v364
  %508 = vmatprep.subr.bf16.mxu0 %v369
  %509 = vmatpush1.bf16.msra.mxu0 %v368
  %510 = vmatprep.subr.bf16.mxu0 %v373
  %511 = vmatpush1.bf16.msra.mxu0 %v372
  %512 = vmatprep.subr.bf16.mxu0 %v377
  %513 = vmatpush1.bf16.msra.mxu0 %v376
  %514 = vmatprep.subr.bf16.mxu0 %v381
  %515 = vmatpush1.bf16.msra.mxu0 %v380
  %516 = vmatprep.subr.bf16.mxu0 %v385
  %517 = vmatpush1.bf16.msra.mxu0 %v384
  %518 = vmatprep.subr.bf16.mxu0 %v389
  %519 = vmatpush1.bf16.msra.mxu0 %v388
  %520 = vmatprep.subr.bf16.mxu0 %v393
  %521 = vmatpush1.bf16.msra.mxu0 %v392
  %522 = vmatprep.subr.bf16.mxu0 %v397
  %523 = vmatpush1.bf16.msra.mxu0 %v396
  %524 = vmatprep.subr.bf16.mxu0 %v401
  %525 = vmatpush1.bf16.msra.mxu0 %v400
  %526 = vmatprep.subr.bf16.mxu0 %v405
  %527 = vmatpush1.bf16.msra.mxu0 %v404
  %528 = vmatprep.subr.bf16.mxu0 %v409
  %529 = vmatpush1.bf16.msra.mxu0 %v408
  %530 = vmatprep.subr.bf16.mxu0 %v413
  %531 = vmatpush1.bf16.msra.mxu0 %v412
  %532 = vmatprep.mubr.bf16.mxu0 %v132
  %533 = vmatmul.mubr.bf16.gmra.mrb[0].mxu0 %v125
  %v534 = vpop.f32.mrb[0].mxu0
  %v535 = vadd.f32 %v93, %v534
  %v536 = vpop.f32.mrb[0].mxu0
  %v537 = vadd.f32 %v97, %v536
  %v538 = vpop.f32.mrb[0].mxu0
  %v539 = vpop.f32.mrb[0].mxu0
  %540 = vdwg.mxu0
  %541 = vmatprep.subr.bf16.mxu0 %v417
  %542 = vmatpush1.bf16.msra.mxu0 %v416
  %543 = vmatprep.subr.bf16.mxu0 %v421
  %544 = vmatpush1.bf16.msra.mxu0 %v420
  %545 = vmatprep.subr.bf16.mxu0 0
  %546 = vmatpush1.bf16.msra.mxu0 0
  %547 = vmatprep.subr.bf16.mxu0 0
  %548 = vmatpush1.bf16.msra.mxu0 0
  %549 = vmatprep.subr.bf16.mxu0 0
  %550 = vmatpush1.bf16.msra.mxu0 0
  %551 = vmatprep.subr.bf16.mxu0 0
  %552 = vmatpush1.bf16.msra.mxu0 0
  %553 = vmatprep.subr.bf16.mxu0 0
  %554 = vmatpush1.bf16.msra.mxu0 0
  %555 = vmatprep.subr.bf16.mxu0 0
  %556 = vmatpush1.bf16.msra.mxu0 0
  %557 = vmatprep.subr.bf16.mxu0 0
  %558 = vmatpush1.bf16.msra.mxu0 0
  %559 = vmatprep.subr.bf16.mxu0 0
  %560 = vmatpush1.bf16.msra.mxu0 0
  %561 = vmatprep.subr.bf16.mxu0 0
  %562 = vmatpush1.bf16.msra.mxu0 0
  %563 = vmatprep.subr.bf16.mxu0 0
  %564 = vmatpush1.bf16.msra.mxu0 0
  %565 = vmatprep.subr.bf16.mxu0 0
  %566 = vmatpush1.bf16.msra.mxu0 0
  %567 = vmatprep.subr.bf16.mxu0 0
  %568 = vmatpush1.bf16.msra.mxu0 0
  %569 = vmatprep.subr.bf16.mxu0 0
  %570 = vmatpush1.bf16.msra.mxu0 0
  %571 = vmatprep.subr.bf16.mxu0 0
  %572 = vmatpush1.bf16.msra.mxu0 0
  %573 = vmatprep.mubr.bf16.mxu0 0
  %574 = vmatmul.mubr.bf16.gmra.mrb[0].mxu0 %v498
  %v575 = vpop.f32.mrb[0].mxu0
  %v576 = vadd.f32 %v535, %v575
  %v577 = vpop.f32.mrb[0].mxu0
  %v578 = vadd.f32 %v537, %v577
  %v579 = vpop.f32.mrb[0].mxu0
  %v580 = vpop.f32.mrb[0].mxu0
  %581 = vdwg.mxu0
  %582 = vmatprep.subr.bf16.mxu0 %v355
  %583 = vmatpush1.bf16.msra.mxu0 %v354
  %584 = vmatprep.subr.bf16.mxu0 %v359
  %585 = vmatpush1.bf16.msra.mxu0 %v358
  %586 = vmatprep.subr.bf16.mxu0 %v363
  %587 = vmatpush1.bf16.msra.mxu0 %v362
  %588 = vmatprep.subr.bf16.mxu0 %v367
  %589 = vmatpush1.bf16.msra.mxu0 %v366
  %590 = vmatprep.subr.bf16.mxu0 %v371
  %591 = vmatpush1.bf16.msra.mxu0 %v370
  %592 = vmatprep.subr.bf16.mxu0 %v375
  %593 = vmatpush1.bf16.msra.mxu0 %v374
  %594 = vmatprep.subr.bf16.mxu0 %v379
  %595 = vmatpush1.bf16.msra.mxu0 %v378
  %596 = vmatprep.subr.bf16.mxu0 %v383
  %597 = vmatpush1.bf16.msra.mxu0 %v382
  %598 = vmatprep.subr.bf16.mxu0 %v387
  %599 = vmatpush1.bf16.msra.mxu0 %v386
  %600 = vmatprep.subr.bf16.mxu0 %v391
  %601 = vmatpush1.bf16.msra.mxu0 %v390
  %602 = vmatprep.subr.bf16.mxu0 %v395
  %603 = vmatpush1.bf16.msra.mxu0 %v394
  %604 = vmatprep.subr.bf16.mxu0 %v399
  %605 = vmatpush1.bf16.msra.mxu0 %v398
  %606 = vmatprep.subr.bf16.mxu0 %v403
  %607 = vmatpush1.bf16.msra.mxu0 %v402
  %608 = vmatprep.subr.bf16.mxu0 %v407
  %609 = vmatpush1.bf16.msra.mxu0 %v406
  %610 = vmatprep.subr.bf16.mxu0 %v411
  %611 = vmatpush1.bf16.msra.mxu0 %v410
  %612 = vmatprep.subr.bf16.mxu0 %v415
  %613 = vmatpush1.bf16.msra.mxu0 %v414
  %614 = vmatprep.mubr.bf16.mxu0 %v132
  %615 = vmatmul.mubr.bf16.gmra.mrb[0].mxu0 %v125
  %v616 = vpop.f32.mrb[0].mxu0
  %v617 = vadd.f32 %v101, %v616
  %v618 = vpop.f32.mrb[0].mxu0
  %v619 = vadd.f32 %v105, %v618
  %v620 = vpop.f32.mrb[0].mxu0
  %v621 = vpop.f32.mrb[0].mxu0
  %622 = vdwg.mxu0
  %623 = vmatprep.subr.bf16.mxu0 %v419
  %624 = vmatpush1.bf16.msra.mxu0 %v418
  %625 = vmatprep.subr.bf16.mxu0 %v423
  %626 = vmatpush1.bf16.msra.mxu0 %v422
  %627 = vmatprep.subr.bf16.mxu0 0
  %628 = vmatpush1.bf16.msra.mxu0 0
  %629 = vmatprep.subr.bf16.mxu0 0
  %630 = vmatpush1.bf16.msra.mxu0 0
  %631 = vmatprep.subr.bf16.mxu0 0
  %632 = vmatpush1.bf16.msra.mxu0 0
  %633 = vmatprep.subr.bf16.mxu0 0
  %634 = vmatpush1.bf16.msra.mxu0 0
  %635 = vmatprep.subr.bf16.mxu0 0
  %636 = vmatpush1.bf16.msra.mxu0 0
  %637 = vmatprep.subr.bf16.mxu0 0
  %638 = vmatpush1.bf16.msra.mxu0 0
  %639 = vmatprep.subr.bf16.mxu0 0
  %640 = vmatpush1.bf16.msra.mxu0 0
  %641 = vmatprep.subr.bf16.mxu0 0
  %642 = vmatpush1.bf16.msra.mxu0 0
  %643 = vmatprep.subr.bf16.mxu0 0
  %644 = vmatpush1.bf16.msra.mxu0 0
  %645 = vmatprep.subr.bf16.mxu0 0
  %646 = vmatpush1.bf16.msra.mxu0 0
  %647 = vmatprep.subr.bf16.mxu0 0
  %648 = vmatpush1.bf16.msra.mxu0 0
  %649 = vmatprep.subr.bf16.mxu0 0
  %650 = vmatpush1.bf16.msra.mxu0 0
  %651 = vmatprep.subr.bf16.mxu0 0
  %652 = vmatpush1.bf16.msra.mxu0 0
  %653 = vmatprep.subr.bf16.mxu0 0
  %654 = vmatpush1.bf16.msra.mxu0 0
  %655 = vmatprep.mubr.bf16.mxu0 0
  %656 = vmatmul.mubr.bf16.gmra.mrb[0].mxu0 %v498
  %v657 = vpop.f32.mrb[0].mxu0
  %v658 = vadd.f32 %v617, %v657
  %v659 = vpop.f32.mrb[0].mxu0
  %v660 = vadd.f32 %v619, %v659
  %v661 = vpop.f32.mrb[0].mxu0
  %v662 = vpop.f32.mrb[0].mxu0
  %663 = vdwg.mxu0
  %v664 = vmax.f32 %v576, 0.0
  %v665 = vmax.f32 %v578, 0.0
  %v666 = vmax.f32 %v658, 0.0
  %v667 = vmax.f32 %v660, 0.0
  %v668 = vpack.c.bf16 %v664, %v664
  %v669 = vpack.c.bf16 %v665, %v665
  %v670 = vpack.c.bf16 %v666, %v666
  %v671 = vpack.c.bf16 %v667, %v667
  %v676 = vcombine.low %v668, %v669
  %v677 = vcombine.low %v670, %v671
  %v679 = vunpack.c.l.s4 1966171168
  %v680 = vunpack.c.0.s8 %v679
  %v681 = vlaneseq
  %v682 = vshrl.u32 %v681, 7
  %v683 = vsub.s32 %v680, %v682
  %v684 = vrot.slane %v676, %v683
  %v686 = vunpack.c.l.s4 1966171168
  %v687 = vunpack.c.0.s8 %v686
  %v688 = vlaneseq
  %v689 = vshrl.u32 %v688, 7
  %v690 = vsub.s32 %v687, %v689
  %v691 = vrot.slane %v677, %v690
  %v692 = vcombine.low %v684, %v691
  %v694 = vunpack.c.l.s4 1966171168
  %v695 = vunpack.c.0.s8 %v694
  %v696 = vlaneseq
  %v697 = vshrl.u32 %v696, 7
  %v698 = vsub.s32 %v695, %v697
  %v699 = vrot.slane %v692, %v698
  %701 = vst [vmem:[%s3] sm:$0xf] %v699
  // Predicated region
  $region14: #{vae_forward.14} parent=0 // pred_check
    _
  $region15: #{vae_forward.14} parent=0 // pred_check_branch
    %703 = sbr.rel (0) target = $region17
  $region16: #{vae_forward.14} parent=0 // pred_region
    _
  $region17: #{vae_forward.14} parent=0 // pred_fallthru
    _
  // Predicated region
  $region18: #{vae_forward.14} parent=0 // pred_check
    _
  $region19: #{vae_forward.14} parent=0 // pred_check_branch
    %705 = sbr.rel (0) target = $region21
  $region20: #{vae_forward.14} parent=0 // pred_region
    _
  $region21: #{vae_forward.14} parent=0 // pred_fallthru
    _

// kernel: vae_forward.15
$region0: #{vae_forward.15}
  #allocation0 [shape = 'u32[]', space=smem, size = 0x4, offset = 0x4, fixed_abs, tag = 'smem constant byte address 0x4 - core index']
  #allocation1 [shape = 'u32[144,128]{1,0:T(1,128)}', space=vmem, size = 0x12000, scoped, tag = 'internal scratch']
  %s0 = inlined_call_operand.vmem [shape: bf16[8,1152], index: 0, kind: input, shape index: {}]
  %s1 = inlined_call_operand.vmem [shape: bf16[1152,256], index: 1, kind: input, shape index: {}]
  %s2 = inlined_call_operand.vmem [shape: f32[1,256], index: 2, kind: input, shape index: {}]
  %s3 = inlined_call_operand.vmem [shape: bf16[8,256], index: 3, kind: output, shape index: {}]
  %s4 = sld [smem:[#allocation0]]
  $region22: #{vae_forward.15} parent=0
    _
  %s6 = ssub.s32 1, %s4
  %s7 = scalar_select 0, %s6, %s4
  // Predicated region
  $region2: #{vae_forward.15} parent=0 // pred_check
    _
  $region3: #{vae_forward.15} parent=0 // pred_check_branch
    %9 = sbr.rel (0) target = $region5
  $region4: #{vae_forward.15} parent=0 // pred_region
    _
  $region5: #{vae_forward.15} parent=0 // pred_fallthru
    _
  // Predicated region
  $region6: #{vae_forward.15} parent=0 // pred_check
    _
  $region7: #{vae_forward.15} parent=0 // pred_check_branch
    %11 = sbr.rel (0) target = $region9
  $region8: #{vae_forward.15} parent=0 // pred_region
    _
  $region9: #{vae_forward.15} parent=0 // pred_fallthru
    _
  // Predicated region
  $region10: #{vae_forward.15} parent=0 // pred_check
    _
  $region11: #{vae_forward.15} parent=0 // pred_check_branch
    %13 = sbr.rel (0) target = $region13
  $region12: #{vae_forward.15} parent=0 // pred_region
    _
  $region13: #{vae_forward.15} parent=0 // pred_fallthru
    _
  %v15 = vld [vmem:[%s0] sm:$0xff]
  %v16 = vld [vmem:[%s0 + $0x8] sm:$0xff]
  %v17 = vld [vmem:[%s0 + $0x10] sm:$0xff]
  %v18 = vld [vmem:[%s0 + $0x18] sm:$0xff]
  %v19 = vld [vmem:[%s0 + $0x20] sm:$0xf]
  %v20 = vld [vmem:[%s1] sm:$0xff]
  %v21 = vld [vmem:[%s1 + $0x8] sm:$0xff]
  %v22 = vld [vmem:[%s1 + $0x10] sm:$0xff]
  %v23 = vld [vmem:[%s1 + $0x18] sm:$0xff]
  %v24 = vld [vmem:[%s1 + $0x20] sm:$0xff]
  %v25 = vld [vmem:[%s1 + $0x28] sm:$0xff]
  %v26 = vld [vmem:[%s1 + $0x30] sm:$0xff]
  %v27 = vld [vmem:[%s1 + $0x38] sm:$0xff]
  %v28 = vld [vmem:[%s1 + $0x40] sm:$0xff]
  %v29 = vld [vmem:[%s1 + $0x48] sm:$0xff]
  %v30 = vld [vmem:[%s1 + $0x50] sm:$0xff]
  %v31 = vld [vmem:[%s1 + $0x58] sm:$0xff]
  %v32 = vld [vmem:[%s1 + $0x60] sm:$0xff]
  %v33 = vld [vmem:[%s1 + $0x68] sm:$0xff]
  %v34 = vld [vmem:[%s1 + $0x70] sm:$0xff]
  %v35 = vld [vmem:[%s1 + $0x78] sm:$0xff]
  %v36 = vld [vmem:[%s1 + $0x80] sm:$0xff]
  %v37 = vld [vmem:[%s1 + $0x88] sm:$0xff]
  %v38 = vld [vmem:[%s1 + $0x90] sm:$0xff]
  %v39 = vld [vmem:[%s1 + $0x98] sm:$0xff]
  %v40 = vld [vmem:[%s1 + $0xa0] sm:$0xff]
  %v41 = vld [vmem:[%s1 + $0xa8] sm:$0xff]
  %v42 = vld [vmem:[%s1 + $0xb0] sm:$0xff]
  %v43 = vld [vmem:[%s1 + $0xb8] sm:$0xff]
  %v44 = vld [vmem:[%s1 + $0xc0] sm:$0xff]
  %v45 = vld [vmem:[%s1 + $0xc8] sm:$0xff]
  %v46 = vld [vmem:[%s1 + $0xd0] sm:$0xff]
  %v47 = vld [vmem:[%s1 + $0xd8] sm:$0xff]
  %v48 = vld [vmem:[%s1 + $0xe0] sm:$0xff]
  %v49 = vld [vmem:[%s1 + $0xe8] sm:$0xff]
  %v50 = vld [vmem:[%s1 + $0xf0] sm:$0xff]
  %v51 = vld [vmem:[%s1 + $0xf8] sm:$0xff]
  %v52 = vld [vmem:[%s1 + $0x100] sm:$0xff]
  %v53 = vld [vmem:[%s1 + $0x108] sm:$0xff]
  %v54 = vld [vmem:[%s1 + $0x110] sm:$0xff]
  %v55 = vld [vmem:[%s1 + $0x118] sm:$0xff]
  %v56 = vld [vmem:[%s1 + $0x120] sm:$0xff]
  %v57 = vld [vmem:[%s1 + $0x128] sm:$0xff]
  %v58 = vld [vmem:[%s1 + $0x130] sm:$0xff]
  %v59 = vld [vmem:[%s1 + $0x138] sm:$0xff]
  %v60 = vld [vmem:[%s1 + $0x140] sm:$0xff]
  %v61 = vld [vmem:[%s1 + $0x148] sm:$0xff]
  %v62 = vld [vmem:[%s1 + $0x150] sm:$0xff]
  %v63 = vld [vmem:[%s1 + $0x158] sm:$0xff]
  %v64 = vld [vmem:[%s1 + $0x160] sm:$0xff]
  %v65 = vld [vmem:[%s1 + $0x168] sm:$0xff]
  %v66 = vld [vmem:[%s1 + $0x170] sm:$0xff]
  %v67 = vld [vmem:[%s1 + $0x178] sm:$0xff]
  %v68 = vld [vmem:[%s1 + $0x180] sm:$0xff]
  %v69 = vld [vmem:[%s1 + $0x188] sm:$0xff]
  %v70 = vld [vmem:[%s1 + $0x190] sm:$0xff]
  %v71 = vld [vmem:[%s1 + $0x198] sm:$0xff]
  %v72 = vld [vmem:[%s1 + $0x1a0] sm:$0xff]
  %v73 = vld [vmem:[%s1 + $0x1a8] sm:$0xff]
  %v74 = vld [vmem:[%s1 + $0x1b0] sm:$0xff]
  %v75 = vld [vmem:[%s1 + $0x1b8] sm:$0xff]
  %v76 = vld [vmem:[%s1 + $0x1c0] sm:$0xff]
  %v77 = vld [vmem:[%s1 + $0x1c8] sm:$0xff]
  %v78 = vld [vmem:[%s1 + $0x1d0] sm:$0xff]
  %v79 = vld [vmem:[%s1 + $0x1d8] sm:$0xff]
  %v80 = vld [vmem:[%s1 + $0x1e0] sm:$0xff]
  %v81 = vld [vmem:[%s1 + $0x1e8] sm:$0xff]
  %v82 = vld [vmem:[%s1 + $0x1f0] sm:$0xff]
  %v83 = vld [vmem:[%s1 + $0x1f8] sm:$0xff]
  %v84 = vld [vmem:[%s1 + $0x200] sm:$0xff]
  %v85 = vld [vmem:[%s1 + $0x208] sm:$0xff]
  %v86 = vld [vmem:[%s1 + $0x210] sm:$0xff]
  %v87 = vld [vmem:[%s1 + $0x218] sm:$0xff]
  %v88 = vld [vmem:[%s1 + $0x220] sm:$0xff]
  %v89 = vld [vmem:[%s1 + $0x228] sm:$0xff]
  %v90 = vld [vmem:[%s1 + $0x230] sm:$0xff]
  %v91 = vld [vmem:[%s1 + $0x238] sm:$0xff]
  %v92 = vld [vmem:[%s1 + $0x240] sm:$0xff]
  %v93 = vld [vmem:[%s1 + $0x248] sm:$0xff]
  %v94 = vld [vmem:[%s1 + $0x250] sm:$0xff]
  %v95 = vld [vmem:[%s1 + $0x258] sm:$0xff]
  %v96 = vld [vmem:[%s1 + $0x260] sm:$0xff]
  %v97 = vld [vmem:[%s1 + $0x268] sm:$0xff]
  %v98 = vld [vmem:[%s1 + $0x270] sm:$0xff]
  %v99 = vld [vmem:[%s1 + $0x278] sm:$0xff]
  %v100 = vld [vmem:[%s1 + $0x280] sm:$0xff]
  %v101 = vld [vmem:[%s1 + $0x288] sm:$0xff]
  %v102 = vld [vmem:[%s1 + $0x290] sm:$0xff]
  %v103 = vld [vmem:[%s1 + $0x298] sm:$0xff]
  %v104 = vld [vmem:[%s1 + $0x2a0] sm:$0xff]
  %v105 = vld [vmem:[%s1 + $0x2a8] sm:$0xff]
  %v106 = vld [vmem:[%s1 + $0x2b0] sm:$0xff]
  %v107 = vld [vmem:[%s1 + $0x2b8] sm:$0xff]
  %v108 = vld [vmem:[%s1 + $0x2c0] sm:$0xff]
  %v109 = vld [vmem:[%s1 + $0x2c8] sm:$0xff]
  %v110 = vld [vmem:[%s1 + $0x2d0] sm:$0xff]
  %v111 = vld [vmem:[%s1 + $0x2d8] sm:$0xff]
  %v112 = vld [vmem:[%s1 + $0x2e0] sm:$0xff]
  %v113 = vld [vmem:[%s1 + $0x2e8] sm:$0xff]
  %v114 = vld [vmem:[%s1 + $0x2f0] sm:$0xff]
  %v115 = vld [vmem:[%s1 + $0x2f8] sm:$0xff]
  %v116 = vld [vmem:[%s1 + $0x300] sm:$0xff]
  %v117 = vld [vmem:[%s1 + $0x308] sm:$0xff]
  %v118 = vld [vmem:[%s1 + $0x310] sm:$0xff]
  %v119 = vld [vmem:[%s1 + $0x318] sm:$0xff]
  %v120 = vld [vmem:[%s1 + $0x320] sm:$0xff]
  %v121 = vld [vmem:[%s1 + $0x328] sm:$0xff]
  %v122 = vld [vmem:[%s1 + $0x330] sm:$0xff]
  %v123 = vld [vmem:[%s1 + $0x338] sm:$0xff]
  %v124 = vld [vmem:[%s1 + $0x340] sm:$0xff]
  %v125 = vld [vmem:[%s1 + $0x348] sm:$0xff]
  %v126 = vld [vmem:[%s1 + $0x350] sm:$0xff]
  %v127 = vld [vmem:[%s1 + $0x358] sm:$0xff]
  %v128 = vld [vmem:[%s1 + $0x360] sm:$0xff]
  %v129 = vld [vmem:[%s1 + $0x368] sm:$0xff]
  %v130 = vld [vmem:[%s1 + $0x370] sm:$0xff]
  %v131 = vld [vmem:[%s1 + $0x378] sm:$0xff]
  %v132 = vld [vmem:[%s1 + $0x380] sm:$0xff]
  %v133 = vld [vmem:[%s1 + $0x388] sm:$0xff]
  %v134 = vld [vmem:[%s1 + $0x390] sm:$0xff]
  %v135 = vld [vmem:[%s1 + $0x398] sm:$0xff]
  %v136 = vld [vmem:[%s1 + $0x3a0] sm:$0xff]
  %v137 = vld [vmem:[%s1 + $0x3a8] sm:$0xff]
  %v138 = vld [vmem:[%s1 + $0x3b0] sm:$0xff]
  %v139 = vld [vmem:[%s1 + $0x3b8] sm:$0xff]
  %v140 = vld [vmem:[%s1 + $0x3c0] sm:$0xff]
  %v141 = vld [vmem:[%s1 + $0x3c8] sm:$0xff]
  %v142 = vld [vmem:[%s1 + $0x3d0] sm:$0xff]
  %v143 = vld [vmem:[%s1 + $0x3d8] sm:$0xff]
  %v144 = vld [vmem:[%s1 + $0x3e0] sm:$0xff]
  %v145 = vld [vmem:[%s1 + $0x3e8] sm:$0xff]
  %v146 = vld [vmem:[%s1 + $0x3f0] sm:$0xff]
  %v147 = vld [vmem:[%s1 + $0x3f8] sm:$0xff]
  %v148 = vld [vmem:[%s1 + $0x400] sm:$0xff]
  %v149 = vld [vmem:[%s1 + $0x408] sm:$0xff]
  %v150 = vld [vmem:[%s1 + $0x410] sm:$0xff]
  %v151 = vld [vmem:[%s1 + $0x418] sm:$0xff]
  %v152 = vld [vmem:[%s1 + $0x420] sm:$0xff]
  %v153 = vld [vmem:[%s1 + $0x428] sm:$0xff]
  %v154 = vld [vmem:[%s1 + $0x430] sm:$0xff]
  %v155 = vld [vmem:[%s1 + $0x438] sm:$0xff]
  %v156 = vld [vmem:[%s1 + $0x440] sm:$0xff]
  %v157 = vld [vmem:[%s1 + $0x448] sm:$0xff]
  %v158 = vld [vmem:[%s1 + $0x450] sm:$0xff]
  %v159 = vld [vmem:[%s1 + $0x458] sm:$0xff]
  %v160 = vld [vmem:[%s1 + $0x460] sm:$0xff]
  %v161 = vld [vmem:[%s1 + $0x468] sm:$0xff]
  %v162 = vld [vmem:[%s1 + $0x470] sm:$0xff]
  %v163 = vld [vmem:[%s1 + $0x478] sm:$0xff]
  %v164 = vld [vmem:[%s2] sm:$0x3]
  %v166 = vlaneseq
  %v167 = vshrl.u32 %v166, 7
  %v168 = vsub.s32 0, %v167
  %v169 = vrot.slane %v164, %v168
  %v170 = vlaneseq
  %v171 = vshrl.u32 %v170, 7
  %v172 = vsub.s32 1, %v171
  %v173 = vrot.slane %v164, %v172
  %v181 = vunpack.c.l.b16 %v15
  %v182 = vunpack.c.h.b16 %v15
  %v183 = vunpack.c.l.b16 %v16
  %v184 = vunpack.c.h.b16 %v16
  %v185 = vunpack.c.l.b16 %v17
  %v186 = vunpack.c.h.b16 %v17
  %v187 = vunpack.c.l.b16 %v18
  %v188 = vunpack.c.h.b16 %v18
  %v189 = vunpack.c.l.b16 %v19
  %v190 = vpack.c.b16 %v181, %v181
  %v191 = vpack.c.b16 %v182, %v182
  %v192 = vpack.c.b16 %v183, %v183
  %v193 = vpack.c.b16 %v184, %v184
  %v194 = vpack.c.b16 %v185, %v185
  %v195 = vpack.c.b16 %v186, %v186
  %v196 = vpack.c.b16 %v187, %v187
  %v197 = vpack.c.b16 %v188, %v188
  %v198 = vpack.c.b16 %v189, %v189
  %v352 = vunpack.c.l.b16 %v20
  %v353 = vunpack.c.h.b16 %v20
  %v354 = vunpack.c.l.b16 %v21
  %v355 = vunpack.c.h.b16 %v21
  %v356 = vunpack.c.l.b16 %v22
  %v357 = vunpack.c.h.b16 %v22
  %v358 = vunpack.c.l.b16 %v23
  %v359 = vunpack.c.h.b16 %v23
  %v360 = vunpack.c.l.b16 %v24
  %v361 = vunpack.c.h.b16 %v24
  %v362 = vunpack.c.l.b16 %v25
  %v363 = vunpack.c.h.b16 %v25
  %v364 = vunpack.c.l.b16 %v26
  %v365 = vunpack.c.h.b16 %v26
  %v366 = vunpack.c.l.b16 %v27
  %v367 = vunpack.c.h.b16 %v27
  %v368 = vunpack.c.l.b16 %v28
  %v369 = vunpack.c.h.b16 %v28
  %v370 = vunpack.c.l.b16 %v29
  %v371 = vunpack.c.h.b16 %v29
  %v372 = vunpack.c.l.b16 %v30
  %v373 = vunpack.c.h.b16 %v30
  %v374 = vunpack.c.l.b16 %v31
  %v375 = vunpack.c.h.b16 %v31
  %v376 = vunpack.c.l.b16 %v32
  %v377 = vunpack.c.h.b16 %v32
  %v378 = vunpack.c.l.b16 %v33
  %v379 = vunpack.c.h.b16 %v33
  %v380 = vunpack.c.l.b16 %v34
  %v381 = vunpack.c.h.b16 %v34
  %v382 = vunpack.c.l.b16 %v35
  %v383 = vunpack.c.h.b16 %v35
  %v384 = vunpack.c.l.b16 %v36
  %v385 = vunpack.c.h.b16 %v36
  %v386 = vunpack.c.l.b16 %v37
  %v387 = vunpack.c.h.b16 %v37
  %v388 = vunpack.c.l.b16 %v38
  %v389 = vunpack.c.h.b16 %v38
  %v390 = vunpack.c.l.b16 %v39
  %v391 = vunpack.c.h.b16 %v39
  %v392 = vunpack.c.l.b16 %v40
  %v393 = vunpack.c.h.b16 %v40
  %v394 = vunpack.c.l.b16 %v41
  %v395 = vunpack.c.h.b16 %v41
  %v396 = vunpack.c.l.b16 %v42
  %v397 = vunpack.c.h.b16 %v42
  %v398 = vunpack.c.l.b16 %v43
  %v399 = vunpack.c.h.b16 %v43
  %v400 = vunpack.c.l.b16 %v44
  %v401 = vunpack.c.h.b16 %v44
  %v402 = vunpack.c.l.b16 %v45
  %v403 = vunpack.c.h.b16 %v45
  %v404 = vunpack.c.l.b16 %v46
  %v405 = vunpack.c.h.b16 %v46
  %v406 = vunpack.c.l.b16 %v47
  %v407 = vunpack.c.h.b16 %v47
  %v408 = vunpack.c.l.b16 %v48
  %v409 = vunpack.c.h.b16 %v48
  %v410 = vunpack.c.l.b16 %v49
  %v411 = vunpack.c.h.b16 %v49
  %v412 = vunpack.c.l.b16 %v50
  %v413 = vunpack.c.h.b16 %v50
  %v414 = vunpack.c.l.b16 %v51
  %v415 = vunpack.c.h.b16 %v51
  %v416 = vunpack.c.l.b16 %v52
  %v417 = vunpack.c.h.b16 %v52
  %v418 = vunpack.c.l.b16 %v53
  %v419 = vunpack.c.h.b16 %v53
  %v420 = vunpack.c.l.b16 %v54
  %v421 = vunpack.c.h.b16 %v54
  %v422 = vunpack.c.l.b16 %v55
  %v423 = vunpack.c.h.b16 %v55
  %v424 = vunpack.c.l.b16 %v56
  %v425 = vunpack.c.h.b16 %v56
  %v426 = vunpack.c.l.b16 %v57
  %v427 = vunpack.c.h.b16 %v57
  %v428 = vunpack.c.l.b16 %v58
  %v429 = vunpack.c.h.b16 %v58
  %v430 = vunpack.c.l.b16 %v59
  %v431 = vunpack.c.h.b16 %v59
  %v432 = vunpack.c.l.b16 %v60
  %v433 = vunpack.c.h.b16 %v60
  %v434 = vunpack.c.l.b16 %v61
  %v435 = vunpack.c.h.b16 %v61
  %v436 = vunpack.c.l.b16 %v62
  %v437 = vunpack.c.h.b16 %v62
  %v438 = vunpack.c.l.b16 %v63
  %v439 = vunpack.c.h.b16 %v63
  %v440 = vunpack.c.l.b16 %v64
  %v441 = vunpack.c.h.b16 %v64
  %v442 = vunpack.c.l.b16 %v65
  %v443 = vunpack.c.h.b16 %v65
  %v444 = vunpack.c.l.b16 %v66
  %v445 = vunpack.c.h.b16 %v66
  %v446 = vunpack.c.l.b16 %v67
  %v447 = vunpack.c.h.b16 %v67
  %v448 = vunpack.c.l.b16 %v68
  %v449 = vunpack.c.h.b16 %v68
  %v450 = vunpack.c.l.b16 %v69
  %v451 = vunpack.c.h.b16 %v69
  %v452 = vunpack.c.l.b16 %v70
  %v453 = vunpack.c.h.b16 %v70
  %v454 = vunpack.c.l.b16 %v71
  %v455 = vunpack.c.h.b16 %v71
  %v456 = vunpack.c.l.b16 %v72
  %v457 = vunpack.c.h.b16 %v72
  %v458 = vunpack.c.l.b16 %v73
  %v459 = vunpack.c.h.b16 %v73
  %v460 = vunpack.c.l.b16 %v74
  %v461 = vunpack.c.h.b16 %v74
  %v462 = vunpack.c.l.b16 %v75
  %v463 = vunpack.c.h.b16 %v75
  %v464 = vunpack.c.l.b16 %v76
  %v465 = vunpack.c.h.b16 %v76
  %v466 = vunpack.c.l.b16 %v77
  %v467 = vunpack.c.h.b16 %v77
  %v468 = vunpack.c.l.b16 %v78
  %v469 = vunpack.c.h.b16 %v78
  %v470 = vunpack.c.l.b16 %v79
  %v471 = vunpack.c.h.b16 %v79
  %v472 = vunpack.c.l.b16 %v80
  %v473 = vunpack.c.h.b16 %v80
  %v474 = vunpack.c.l.b16 %v81
  %v475 = vunpack.c.h.b16 %v81
  %v476 = vunpack.c.l.b16 %v82
  %v477 = vunpack.c.h.b16 %v82
  %v478 = vunpack.c.l.b16 %v83
  %v479 = vunpack.c.h.b16 %v83
  %v480 = vunpack.c.l.b16 %v84
  %v481 = vunpack.c.h.b16 %v84
  %v482 = vunpack.c.l.b16 %v85
  %v483 = vunpack.c.h.b16 %v85
  %v484 = vunpack.c.l.b16 %v86
  %v485 = vunpack.c.h.b16 %v86
  %v486 = vunpack.c.l.b16 %v87
  %v487 = vunpack.c.h.b16 %v87
  %v488 = vunpack.c.l.b16 %v88
  %v489 = vunpack.c.h.b16 %v88
  %v490 = vunpack.c.l.b16 %v89
  %v491 = vunpack.c.h.b16 %v89
  %v492 = vunpack.c.l.b16 %v90
  %v493 = vunpack.c.h.b16 %v90
  %v494 = vunpack.c.l.b16 %v91
  %v495 = vunpack.c.h.b16 %v91
  %v496 = vunpack.c.l.b16 %v92
  %v497 = vunpack.c.h.b16 %v92
  %v498 = vunpack.c.l.b16 %v93
  %v499 = vunpack.c.h.b16 %v93
  %v500 = vunpack.c.l.b16 %v94
  %v501 = vunpack.c.h.b16 %v94
  %v502 = vunpack.c.l.b16 %v95
  %v503 = vunpack.c.h.b16 %v95
  %v504 = vunpack.c.l.b16 %v96
  %v505 = vunpack.c.h.b16 %v96
  %v506 = vunpack.c.l.b16 %v97
  %v507 = vunpack.c.h.b16 %v97
  %v508 = vunpack.c.l.b16 %v98
  %v509 = vunpack.c.h.b16 %v98
  %v510 = vunpack.c.l.b16 %v99
  %v511 = vunpack.c.h.b16 %v99
  %v512 = vunpack.c.l.b16 %v100
  %v513 = vunpack.c.h.b16 %v100
  %v514 = vunpack.c.l.b16 %v101
  %v515 = vunpack.c.h.b16 %v101
  %v516 = vunpack.c.l.b16 %v102
  %v517 = vunpack.c.h.b16 %v102
  %v518 = vunpack.c.l.b16 %v103
  %v519 = vunpack.c.h.b16 %v103
  %v520 = vunpack.c.l.b16 %v104
  %v521 = vunpack.c.h.b16 %v104
  %v522 = vunpack.c.l.b16 %v105
  %v523 = vunpack.c.h.b16 %v105
  %v524 = vunpack.c.l.b16 %v106
  %v525 = vunpack.c.h.b16 %v106
  %v526 = vunpack.c.l.b16 %v107
  %v527 = vunpack.c.h.b16 %v107
  %v528 = vunpack.c.l.b16 %v108
  %v529 = vunpack.c.h.b16 %v108
  %v530 = vunpack.c.l.b16 %v109
  %v531 = vunpack.c.h.b16 %v109
  %v532 = vunpack.c.l.b16 %v110
  %v533 = vunpack.c.h.b16 %v110
  %v534 = vunpack.c.l.b16 %v111
  %v535 = vunpack.c.h.b16 %v111
  %v536 = vunpack.c.l.b16 %v112
  %v537 = vunpack.c.h.b16 %v112
  %v538 = vunpack.c.l.b16 %v113
  %v539 = vunpack.c.h.b16 %v113
  %v540 = vunpack.c.l.b16 %v114
  %v541 = vunpack.c.h.b16 %v114
  %v542 = vunpack.c.l.b16 %v115
  %v543 = vunpack.c.h.b16 %v115
  %v544 = vunpack.c.l.b16 %v116
  %v545 = vunpack.c.h.b16 %v116
  %v546 = vunpack.c.l.b16 %v117
  %v547 = vunpack.c.h.b16 %v117
  %v548 = vunpack.c.l.b16 %v118
  %v549 = vunpack.c.h.b16 %v118
  %v550 = vunpack.c.l.b16 %v119
  %v551 = vunpack.c.h.b16 %v119
  %v552 = vunpack.c.l.b16 %v120
  %v553 = vunpack.c.h.b16 %v120
  %v554 = vunpack.c.l.b16 %v121
  %v555 = vunpack.c.h.b16 %v121
  %v556 = vunpack.c.l.b16 %v122
  %v557 = vunpack.c.h.b16 %v122
  %v558 = vunpack.c.l.b16 %v123
  %v559 = vunpack.c.h.b16 %v123
  %v560 = vunpack.c.l.b16 %v124
  %v561 = vunpack.c.h.b16 %v124
  %v562 = vunpack.c.l.b16 %v125
  %v563 = vunpack.c.h.b16 %v125
  %v564 = vunpack.c.l.b16 %v126
  %v565 = vunpack.c.h.b16 %v126
  %v566 = vunpack.c.l.b16 %v127
  %v567 = vunpack.c.h.b16 %v127
  %v568 = vunpack.c.l.b16 %v128
  %v569 = vunpack.c.h.b16 %v128
  %v570 = vunpack.c.l.b16 %v129
  %v571 = vunpack.c.h.b16 %v129
  %v572 = vunpack.c.l.b16 %v130
  %v573 = vunpack.c.h.b16 %v130
  %v574 = vunpack.c.l.b16 %v131
  %v575 = vunpack.c.h.b16 %v131
  %v576 = vunpack.c.l.b16 %v132
  %v577 = vunpack.c.h.b16 %v132
  %v578 = vunpack.c.l.b16 %v133
  %v579 = vunpack.c.h.b16 %v133
  %v580 = vunpack.c.l.b16 %v134
  %v581 = vunpack.c.h.b16 %v134
  %v582 = vunpack.c.l.b16 %v135
  %v583 = vunpack.c.h.b16 %v135
  %v584 = vunpack.c.l.b16 %v136
  %v585 = vunpack.c.h.b16 %v136
  %v586 = vunpack.c.l.b16 %v137
  %v587 = vunpack.c.h.b16 %v137
  %v588 = vunpack.c.l.b16 %v138
  %v589 = vunpack.c.h.b16 %v138
  %v590 = vunpack.c.l.b16 %v139
  %v591 = vunpack.c.h.b16 %v139
  %v592 = vunpack.c.l.b16 %v140
  %v593 = vunpack.c.h.b16 %v140
  %v594 = vunpack.c.l.b16 %v141
  %v595 = vunpack.c.h.b16 %v141
  %v596 = vunpack.c.l.b16 %v142
  %v597 = vunpack.c.h.b16 %v142
  %v598 = vunpack.c.l.b16 %v143
  %v599 = vunpack.c.h.b16 %v143
  %v600 = vunpack.c.l.b16 %v144
  %v601 = vunpack.c.h.b16 %v144
  %v602 = vunpack.c.l.b16 %v145
  %v603 = vunpack.c.h.b16 %v145
  %v604 = vunpack.c.l.b16 %v146
  %v605 = vunpack.c.h.b16 %v146
  %v606 = vunpack.c.l.b16 %v147
  %v607 = vunpack.c.h.b16 %v147
  %v608 = vunpack.c.l.b16 %v148
  %v609 = vunpack.c.h.b16 %v148
  %v610 = vunpack.c.l.b16 %v149
  %v611 = vunpack.c.h.b16 %v149
  %v612 = vunpack.c.l.b16 %v150
  %v613 = vunpack.c.h.b16 %v150
  %v614 = vunpack.c.l.b16 %v151
  %v615 = vunpack.c.h.b16 %v151
  %v616 = vunpack.c.l.b16 %v152
  %v617 = vunpack.c.h.b16 %v152
  %v618 = vunpack.c.l.b16 %v153
  %v619 = vunpack.c.h.b16 %v153
  %v620 = vunpack.c.l.b16 %v154
  %v621 = vunpack.c.h.b16 %v154
  %v622 = vunpack.c.l.b16 %v155
  %v623 = vunpack.c.h.b16 %v155
  %v624 = vunpack.c.l.b16 %v156
  %v625 = vunpack.c.h.b16 %v156
  %v626 = vunpack.c.l.b16 %v157
  %v627 = vunpack.c.h.b16 %v157
  %v628 = vunpack.c.l.b16 %v158
  %v629 = vunpack.c.h.b16 %v158
  %v630 = vunpack.c.l.b16 %v159
  %v631 = vunpack.c.h.b16 %v159
  %v632 = vunpack.c.l.b16 %v160
  %v633 = vunpack.c.h.b16 %v160
  %v634 = vunpack.c.l.b16 %v161
  %v635 = vunpack.c.h.b16 %v161
  %v636 = vunpack.c.l.b16 %v162
  %v637 = vunpack.c.h.b16 %v162
  %v638 = vunpack.c.l.b16 %v163
  %v639 = vunpack.c.h.b16 %v163
  %v640 = vpack.c.b16 %v354, %v352
  %v641 = vpack.c.b16 %v355, %v353
  %v642 = vpack.c.b16 %v358, %v356
  %v643 = vpack.c.b16 %v359, %v357
  %v644 = vpack.c.b16 %v362, %v360
  %v645 = vpack.c.b16 %v363, %v361
  %v646 = vpack.c.b16 %v366, %v364
  %v647 = vpack.c.b16 %v367, %v365
  %v648 = vpack.c.b16 %v370, %v368
  %v649 = vpack.c.b16 %v371, %v369
  %v650 = vpack.c.b16 %v374, %v372
  %v651 = vpack.c.b16 %v375, %v373
  %v652 = vpack.c.b16 %v378, %v376
  %v653 = vpack.c.b16 %v379, %v377
  %v654 = vpack.c.b16 %v382, %v380
  %v655 = vpack.c.b16 %v383, %v381
  %v656 = vpack.c.b16 %v386, %v384
  %v657 = vpack.c.b16 %v387, %v385
  %v658 = vpack.c.b16 %v390, %v388
  %v659 = vpack.c.b16 %v391, %v389
  %v660 = vpack.c.b16 %v394, %v392
  %v661 = vpack.c.b16 %v395, %v393
  %v662 = vpack.c.b16 %v398, %v396
  %v663 = vpack.c.b16 %v399, %v397
  %v664 = vpack.c.b16 %v402, %v400
  %v665 = vpack.c.b16 %v403, %v401
  %v666 = vpack.c.b16 %v406, %v404
  %v667 = vpack.c.b16 %v407, %v405
  %v668 = vpack.c.b16 %v410, %v408
  %v669 = vpack.c.b16 %v411, %v409
  %v670 = vpack.c.b16 %v414, %v412
  %v671 = vpack.c.b16 %v415, %v413
  %v672 = vpack.c.b16 %v418, %v416
  %v673 = vpack.c.b16 %v419, %v417
  %v674 = vpack.c.b16 %v422, %v420
  %v675 = vpack.c.b16 %v423, %v421
  %v676 = vpack.c.b16 %v426, %v424
  %v677 = vpack.c.b16 %v427, %v425
  %v678 = vpack.c.b16 %v430, %v428
  %v679 = vpack.c.b16 %v431, %v429
  %v680 = vpack.c.b16 %v434, %v432
  %v681 = vpack.c.b16 %v435, %v433
  %v682 = vpack.c.b16 %v438, %v436
  %v683 = vpack.c.b16 %v439, %v437
  %v684 = vpack.c.b16 %v442, %v440
  %v685 = vpack.c.b16 %v443, %v441
  %v686 = vpack.c.b16 %v446, %v444
  %v687 = vpack.c.b16 %v447, %v445
  %v688 = vpack.c.b16 %v450, %v448
  %v689 = vpack.c.b16 %v451, %v449
  %v690 = vpack.c.b16 %v454, %v452
  %v691 = vpack.c.b16 %v455, %v453
  %v692 = vpack.c.b16 %v458, %v456
  %v693 = vpack.c.b16 %v459, %v457
  %v694 = vpack.c.b16 %v462, %v460
  %v695 = vpack.c.b16 %v463, %v461
  %v696 = vpack.c.b16 %v466, %v464
  %v697 = vpack.c.b16 %v467, %v465
  %v698 = vpack.c.b16 %v470, %v468
  %v699 = vpack.c.b16 %v471, %v469
  %v700 = vpack.c.b16 %v474, %v472
  %v701 = vpack.c.b16 %v475, %v473
  %v702 = vpack.c.b16 %v478, %v476
  %v703 = vpack.c.b16 %v479, %v477
  %v704 = vpack.c.b16 %v482, %v480
  %v705 = vpack.c.b16 %v483, %v481
  %v706 = vpack.c.b16 %v486, %v484
  %v707 = vpack.c.b16 %v487, %v485
  %v708 = vpack.c.b16 %v490, %v488
  %v709 = vpack.c.b16 %v491, %v489
  %v710 = vpack.c.b16 %v494, %v492
  %v711 = vpack.c.b16 %v495, %v493
  %v712 = vpack.c.b16 %v498, %v496
  %v713 = vpack.c.b16 %v499, %v497
  %v714 = vpack.c.b16 %v502, %v500
  %v715 = vpack.c.b16 %v503, %v501
  %v716 = vpack.c.b16 %v506, %v504
  %v717 = vpack.c.b16 %v507, %v505
  %v718 = vpack.c.b16 %v510, %v508
  %v719 = vpack.c.b16 %v511, %v509
  %v720 = vpack.c.b16 %v514, %v512
  %v721 = vpack.c.b16 %v515, %v513
  %v722 = vpack.c.b16 %v518, %v516
  %v723 = vpack.c.b16 %v519, %v517
  %v724 = vpack.c.b16 %v522, %v520
  %v725 = vpack.c.b16 %v523, %v521
  %v726 = vpack.c.b16 %v526, %v524
  %v727 = vpack.c.b16 %v527, %v525
  %v728 = vpack.c.b16 %v530, %v528
  %v729 = vpack.c.b16 %v531, %v529
  %v730 = vpack.c.b16 %v534, %v532
  %v731 = vpack.c.b16 %v535, %v533
  %v732 = vpack.c.b16 %v538, %v536
  %v733 = vpack.c.b16 %v539, %v537
  %v734 = vpack.c.b16 %v542, %v540
  %v735 = vpack.c.b16 %v543, %v541
  %v736 = vpack.c.b16 %v546, %v544
  %v737 = vpack.c.b16 %v547, %v545
  %v738 = vpack.c.b16 %v550, %v548
  %v739 = vpack.c.b16 %v551, %v549
  %v740 = vpack.c.b16 %v554, %v552
  %v741 = vpack.c.b16 %v555, %v553
  %v742 = vpack.c.b16 %v558, %v556
  %v743 = vpack.c.b16 %v559, %v557
  %v744 = vpack.c.b16 %v562, %v560
  %v745 = vpack.c.b16 %v563, %v561
  %v746 = vpack.c.b16 %v566, %v564
  %v747 = vpack.c.b16 %v567, %v565
  %v748 = vpack.c.b16 %v570, %v568
  %v749 = vpack.c.b16 %v571, %v569
  %v750 = vpack.c.b16 %v574, %v572
  %v751 = vpack.c.b16 %v575, %v573
  %v752 = vpack.c.b16 %v578, %v576
  %v753 = vpack.c.b16 %v579, %v577
  %v754 = vpack.c.b16 %v582, %v580
  %v755 = vpack.c.b16 %v583, %v581
  %v756 = vpack.c.b16 %v586, %v584
  %v757 = vpack.c.b16 %v587, %v585
  %v758 = vpack.c.b16 %v590, %v588
  %v759 = vpack.c.b16 %v591, %v589
  %v760 = vpack.c.b16 %v594, %v592
  %v761 = vpack.c.b16 %v595, %v593
  %v762 = vpack.c.b16 %v598, %v596
  %v763 = vpack.c.b16 %v599, %v597
  %v764 = vpack.c.b16 %v602, %v600
  %v765 = vpack.c.b16 %v603, %v601
  %v766 = vpack.c.b16 %v606, %v604
  %v767 = vpack.c.b16 %v607, %v605
  %v768 = vpack.c.b16 %v610, %v608
  %v769 = vpack.c.b16 %v611, %v609
  %v770 = vpack.c.b16 %v614, %v612
  %v771 = vpack.c.b16 %v615, %v613
  %v772 = vpack.c.b16 %v618, %v616
  %v773 = vpack.c.b16 %v619, %v617
  %v774 = vpack.c.b16 %v622, %v620
  %v775 = vpack.c.b16 %v623, %v621
  %v776 = vpack.c.b16 %v626, %v624
  %v777 = vpack.c.b16 %v627, %v625
  %v778 = vpack.c.b16 %v630, %v628
  %v779 = vpack.c.b16 %v631, %v629
  %v780 = vpack.c.b16 %v634, %v632
  %v781 = vpack.c.b16 %v635, %v633
  %v782 = vpack.c.b16 %v638, %v636
  %v783 = vpack.c.b16 %v639, %v637
  %928 = vmatprep.subr.bf16.mxu0 %v641
  %929 = vmatpush1.bf16.msra.mxu0 %v640
  %930 = vmatprep.subr.bf16.mxu0 %v643
  %931 = vmatpush1.bf16.msra.mxu0 %v642
  %932 = vmatprep.subr.bf16.mxu0 %v645
  %933 = vmatpush1.bf16.msra.mxu0 %v644
  %934 = vmatprep.subr.bf16.mxu0 %v647
  %935 = vmatpush1.bf16.msra.mxu0 %v646
  %936 = vmatprep.subr.bf16.mxu0 %v649
  %937 = vmatpush1.bf16.msra.mxu0 %v648
  %938 = vmatprep.subr.bf16.mxu0 %v651
  %939 = vmatpush1.bf16.msra.mxu0 %v650
  %940 = vmatprep.subr.bf16.mxu0 %v653
  %941 = vmatpush1.bf16.msra.mxu0 %v652
  %942 = vmatprep.subr.bf16.mxu0 %v655
  %943 = vmatpush1.bf16.msra.mxu0 %v654
  %944 = vmatprep.subr.bf16.mxu0 %v657
  %945 = vmatpush1.bf16.msra.mxu0 %v656
  %946 = vmatprep.subr.bf16.mxu0 %v659
  %947 = vmatpush1.bf16.msra.mxu0 %v658
  %948 = vmatprep.subr.bf16.mxu0 %v661
  %949 = vmatpush1.bf16.msra.mxu0 %v660
  %950 = vmatprep.subr.bf16.mxu0 %v663
  %951 = vmatpush1.bf16.msra.mxu0 %v662
  %952 = vmatprep.subr.bf16.mxu0 %v665
  %953 = vmatpush1.bf16.msra.mxu0 %v664
  %954 = vmatprep.subr.bf16.mxu0 %v667
  %955 = vmatpush1.bf16.msra.mxu0 %v666
  %956 = vmatprep.subr.bf16.mxu0 %v669
  %957 = vmatpush1.bf16.msra.mxu0 %v668
  %958 = vmatprep.subr.bf16.mxu0 %v671
  %959 = vmatpush1.bf16.msra.mxu0 %v670
  %960 = vmatprep.mubr.bf16.mxu0 %v191
  %961 = vmatmul.mubr.bf16.gmra.mrb[0].mxu0 %v190
  %v962 = vpop.f32.mrb[0].mxu0
  %v963 = vadd.f32 %v169, %v962
  %v964 = vpop.f32.mrb[0].mxu0
  %v965 = vadd.f32 %v173, %v964
  %v966 = vpop.f32.mrb[0].mxu0
  %v967 = vpop.f32.mrb[0].mxu0
  %968 = vdwg.mxu0
  %969 = vmatprep.subr.bf16.mxu0 %v673
  %970 = vmatpush1.bf16.msra.mxu0 %v672
  %971 = vmatprep.subr.bf16.mxu0 %v675
  %972 = vmatpush1.bf16.msra.mxu0 %v674
  %973 = vmatprep.subr.bf16.mxu0 %v677
  %974 = vmatpush1.bf16.msra.mxu0 %v676
  %975 = vmatprep.subr.bf16.mxu0 %v679
  %976 = vmatpush1.bf16.msra.mxu0 %v678
  %977 = vmatprep.subr.bf16.mxu0 %v681
  %978 = vmatpush1.bf16.msra.mxu0 %v680
  %979 = vmatprep.subr.bf16.mxu0 %v683
  %980 = vmatpush1.bf16.msra.mxu0 %v682
  %981 = vmatprep.subr.bf16.mxu0 %v685
  %982 = vmatpush1.bf16.msra.mxu0 %v684
  %983 = vmatprep.subr.bf16.mxu0 %v687
  %984 = vmatpush1.bf16.msra.mxu0 %v686
  %985 = vmatprep.subr.bf16.mxu0 %v689
  %986 = vmatpush1.bf16.msra.mxu0 %v688
  %987 = vmatprep.subr.bf16.mxu0 %v691
  %988 = vmatpush1.bf16.msra.mxu0 %v690
  %989 = vmatprep.subr.bf16.mxu0 %v693
  %990 = vmatpush1.bf16.msra.mxu0 %v692
  %991 = vmatprep.subr.bf16.mxu0 %v695
  %992 = vmatpush1.bf16.msra.mxu0 %v694
  %993 = vmatprep.subr.bf16.mxu0 %v697
  %994 = vmatpush1.bf16.msra.mxu0 %v696
  %995 = vmatprep.subr.bf16.mxu0 %v699
  %996 = vmatpush1.bf16.msra.mxu0 %v698
  %997 = vmatprep.subr.bf16.mxu0 %v701
  %998 = vmatpush1.bf16.msra.mxu0 %v700
  %999 = vmatprep.subr.bf16.mxu0 %v703
  %1000 = vmatpush1.bf16.msra.mxu0 %v702
  %1001 = vmatprep.mubr.bf16.mxu0 %v193
  %1002 = vmatmul.mubr.bf16.gmra.mrb[0].mxu0 %v192
  %v1003 = vpop.f32.mrb[0].mxu0
  %v1004 = vadd.f32 %v963, %v1003
  %v1005 = vpop.f32.mrb[0].mxu0
  %v1006 = vadd.f32 %v965, %v1005
  %v1007 = vpop.f32.mrb[0].mxu0
  %v1008 = vpop.f32.mrb[0].mxu0
  %1009 = vdwg.mxu0
  %1010 = vmatprep.subr.bf16.mxu0 %v705
  %1011 = vmatpush1.bf16.msra.mxu0 %v704
  %1012 = vmatprep.subr.bf16.mxu0 %v707
  %1013 = vmatpush1.bf16.msra.mxu0 %v706
  %1014 = vmatprep.subr.bf16.mxu0 %v709
  %1015 = vmatpush1.bf16.msra.mxu0 %v708
  %1016 = vmatprep.subr.bf16.mxu0 %v711
  %1017 = vmatpush1.bf16.msra.mxu0 %v710
  %1018 = vmatprep.subr.bf16.mxu0 %v713
  %1019 = vmatpush1.bf16.msra.mxu0 %v712
  %1020 = vmatprep.subr.bf16.mxu0 %v715
  %1021 = vmatpush1.bf16.msra.mxu0 %v714
  %1022 = vmatprep.subr.bf16.mxu0 %v717
  %1023 = vmatpush1.bf16.msra.mxu0 %v716
  %1024 = vmatprep.subr.bf16.mxu0 %v719
  %1025 = vmatpush1.bf16.msra.mxu0 %v718
  %1026 = vmatprep.subr.bf16.mxu0 %v721
  %1027 = vmatpush1.bf16.msra.mxu0 %v720
  %1028 = vmatprep.subr.bf16.mxu0 %v723
  %1029 = vmatpush1.bf16.msra.mxu0 %v722
  %1030 = vmatprep.subr.bf16.mxu0 %v725
  %1031 = vmatpush1.bf16.msra.mxu0 %v724
  %1032 = vmatprep.subr.bf16.mxu0 %v727
  %1033 = vmatpush1.bf16.msra.mxu0 %v726
  %1034 = vmatprep.subr.bf16.mxu0 %v729
  %1035 = vmatpush1.bf16.msra.mxu0 %v728
  %1036 = vmatprep.subr.bf16.mxu0 %v731
  %1037 = vmatpush1.bf16.msra.mxu0 %v730
  %1038 = vmatprep.subr.bf16.mxu0 %v733
  %1039 = vmatpush1.bf16.msra.mxu0 %v732
  %1040 = vmatprep.subr.bf16.mxu0 %v735
  %1041 = vmatpush1.bf16.msra.mxu0 %v734
  %1042 = vmatprep.mubr.bf16.mxu0 %v195
  %1043 = vmatmul.mubr.bf16.gmra.mrb[0].mxu0 %v194
  %v1044 = vpop.f32.mrb[0].mxu0
  %v1045 = vadd.f32 %v1004, %v1044
  %v1046 = vpop.f32.mrb[0].mxu0
  %v1047 = vadd.f32 %v1006, %v1046
  %v1048 = vpop.f32.mrb[0].mxu0
  %v1049 = vpop.f32.mrb[0].mxu0
  %1050 = vdwg.mxu0
  %1051 = vmatprep.subr.bf16.mxu0 %v737
  %1052 = vmatpush1.bf16.msra.mxu0 %v736
  %1053 = vmatprep.subr.bf16.mxu0 %v739
  %1054 = vmatpush1.bf16.msra.mxu0 %v738
  %1055 = vmatprep.subr.bf16.mxu0 %v741
  %1056 = vmatpush1.bf16.msra.mxu0 %v740
  %1057 = vmatprep.subr.bf16.mxu0 %v743
  %1058 = vmatpush1.bf16.msra.mxu0 %v742
  %1059 = vmatprep.subr.bf16.mxu0 %v745
  %1060 = vmatpush1.bf16.msra.mxu0 %v744
  %1061 = vmatprep.subr.bf16.mxu0 %v747
  %1062 = vmatpush1.bf16.msra.mxu0 %v746
  %1063 = vmatprep.subr.bf16.mxu0 %v749
  %1064 = vmatpush1.bf16.msra.mxu0 %v748
  %1065 = vmatprep.subr.bf16.mxu0 %v751
  %1066 = vmatpush1.bf16.msra.mxu0 %v750
  %1067 = vmatprep.subr.bf16.mxu0 %v753
  %1068 = vmatpush1.bf16.msra.mxu0 %v752
  %1069 = vmatprep.subr.bf16.mxu0 %v755
  %1070 = vmatpush1.bf16.msra.mxu0 %v754
  %1071 = vmatprep.subr.bf16.mxu0 %v757
  %1072 = vmatpush1.bf16.msra.mxu0 %v756
  %1073 = vmatprep.subr.bf16.mxu0 %v759
  %1074 = vmatpush1.bf16.msra.mxu0 %v758
  %1075 = vmatprep.subr.bf16.mxu0 %v761
  %1076 = vmatpush1.bf16.msra.mxu0 %v760
  %1077 = vmatprep.subr.bf16.mxu0 %v763
  %1078 = vmatpush1.bf16.msra.mxu0 %v762
  %1079 = vmatprep.subr.bf16.mxu0 %v765
  %1080 = vmatpush1.bf16.msra.mxu0 %v764
  %1081 = vmatprep.subr.bf16.mxu0 %v767
  %1082 = vmatpush1.bf16.msra.mxu0 %v766
  %1083 = vmatprep.mubr.bf16.mxu0 %v197
  %1084 = vmatmul.mubr.bf16.gmra.mrb[0].mxu0 %v196
  %v1085 = vpop.f32.mrb[0].mxu0
  %v1086 = vadd.f32 %v1045, %v1085
  %v1087 = vpop.f32.mrb[0].mxu0
  %v1088 = vadd.f32 %v1047, %v1087
  %v1089 = vpop.f32.mrb[0].mxu0
  %v1090 = vpop.f32.mrb[0].mxu0
  %1091 = vdwg.mxu0
  %1092 = vmatprep.subr.bf16.mxu0 %v769
  %1093 = vmatpush1.bf16.msra.mxu0 %v768
  %1094 = vmatprep.subr.bf16.mxu0 %v771
  %1095 = vmatpush1.bf16.msra.mxu0 %v770
  %1096 = vmatprep.subr.bf16.mxu0 %v773
  %1097 = vmatpush1.bf16.msra.mxu0 %v772
  %1098 = vmatprep.subr.bf16.mxu0 %v775
  %1099 = vmatpush1.bf16.msra.mxu0 %v774
  %1100 = vmatprep.subr.bf16.mxu0 %v777
  %1101 = vmatpush1.bf16.msra.mxu0 %v776
  %1102 = vmatprep.subr.bf16.mxu0 %v779
  %1103 = vmatpush1.bf16.msra.mxu0 %v778
  %1104 = vmatprep.subr.bf16.mxu0 %v781
  %1105 = vmatpush1.bf16.msra.mxu0 %v780
  %1106 = vmatprep.subr.bf16.mxu0 %v783
  %1107 = vmatpush1.bf16.msra.mxu0 %v782
  %1108 = vmatprep.subr.bf16.mxu0 0
  %1109 = vmatpush1.bf16.msra.mxu0 0
  %1110 = vmatprep.subr.bf16.mxu0 0
  %1111 = vmatpush1.bf16.msra.mxu0 0
  %1112 = vmatprep.subr.bf16.mxu0 0
  %1113 = vmatpush1.bf16.msra.mxu0 0
  %1114 = vmatprep.subr.bf16.mxu0 0
  %1115 = vmatpush1.bf16.msra.mxu0 0
  %1116 = vmatprep.subr.bf16.mxu0 0
  %1117 = vmatpush1.bf16.msra.mxu0 0
  %1118 = vmatprep.subr.bf16.mxu0 0
  %1119 = vmatpush1.bf16.msra.mxu0 0
  %1120 = vmatprep.subr.bf16.mxu0 0
  %1121 = vmatpush1.bf16.msra.mxu0 0
  %1122 = vmatprep.subr.bf16.mxu0 0
  %1123 = vmatpush1.bf16.msra.mxu0 0
  %1124 = vmatprep.mubr.bf16.mxu0 0
  %1125 = vmatmul.mubr.bf16.gmra.mrb[0].mxu0 %v198
  %v1126 = vpop.f32.mrb[0].mxu0
  %v1127 = vadd.f32 %v1086, %v1126
  %v1128 = vpop.f32.mrb[0].mxu0
  %v1129 = vadd.f32 %v1088, %v1128
  %v1130 = vpop.f32.mrb[0].mxu0
  %v1131 = vpop.f32.mrb[0].mxu0
  %1132 = vdwg.mxu0
  %v1133 = vmax.f32 %v1127, 0.0
  %v1134 = vmax.f32 %v1129, 0.0
  %v1135 = vpack.c.bf16 %v1133, %v1133
  %v1136 = vpack.c.bf16 %v1134, %v1134
  %v1139 = vunpack.c.l.b16 %v1135
  %v1140 = vunpack.c.l.b16 %v1136
  %v1141 = vpack.c.b16 %v1140, %v1139
  %1143 = vst [vmem:[%s3] sm:$0xff] %v1141
  // Predicated region
  $region14: #{vae_forward.15} parent=0 // pred_check
    _
  $region15: #{vae_forward.15} parent=0 // pred_check_branch
    %1145 = sbr.rel (0) target = $region17
  $region16: #{vae_forward.15} parent=0 // pred_region
    _
  $region17: #{vae_forward.15} parent=0 // pred_fallthru
    _
  // Predicated region
  $region18: #{vae_forward.15} parent=0 // pred_check
    _
  $region19: #{vae_forward.15} parent=0 // pred_check_branch
    %1147 = sbr.rel (0) target = $region21
  $region20: #{vae_forward.15} parent=0 // pred_region
    _
  $region21: #{vae_forward.15} parent=0 // pred_fallthru
    _

// kernel: vae_forward.16
$region0: #{vae_forward.16}
  #allocation0 [shape = 'u32[]', space=smem, size = 0x4, offset = 0x4, fixed_abs, tag = 'smem constant byte address 0x4 - core index']
  #allocation1 [shape = 'u32[144,128]{1,0:T(1,128)}', space=vmem, size = 0x12000, scoped, tag = 'internal scratch']
  %s0 = inlined_call_operand.vmem [shape: bf16[32,576], index: 0, kind: input, shape index: {}]
  %s1 = inlined_call_operand.vmem [shape: bf16[576,128], index: 1, kind: input, shape index: {}]
  %s2 = inlined_call_operand.vmem [shape: f32[1,128], index: 2, kind: input, shape index: {}]
  %s3 = inlined_call_operand.vmem [shape: bf16[32,128], index: 3, kind: output, shape index: {}]
  %s4 = sld [smem:[#allocation0]]
  $region22: #{vae_forward.16} parent=0
    _
  %s6 = ssub.s32 1, %s4
  %s7 = scalar_select 0, %s6, %s4
  // Predicated region
  $region2: #{vae_forward.16} parent=0 // pred_check
    _
  $region3: #{vae_forward.16} parent=0 // pred_check_branch
    %9 = sbr.rel (0) target = $region5
  $region4: #{vae_forward.16} parent=0 // pred_region
    _
  $region5: #{vae_forward.16} parent=0 // pred_fallthru
    _
  // Predicated region
  $region6: #{vae_forward.16} parent=0 // pred_check
    _
  $region7: #{vae_forward.16} parent=0 // pred_check_branch
    %11 = sbr.rel (0) target = $region9
  $region8: #{vae_forward.16} parent=0 // pred_region
    _
  $region9: #{vae_forward.16} parent=0 // pred_fallthru
    _
  // Predicated region
  $region10: #{vae_forward.16} parent=0 // pred_check
    _
  $region11: #{vae_forward.16} parent=0 // pred_check_branch
    %13 = sbr.rel (0) target = $region13
  $region12: #{vae_forward.16} parent=0 // pred_region
    _
  $region13: #{vae_forward.16} parent=0 // pred_fallthru
    _
  %v15 = vld [vmem:[%s0] sm:$0xff]
  %v16 = vld [vmem:[%s0 + $0x8] sm:$0xff]
  %v17 = vld [vmem:[%s0 + $0x10] sm:$0xf]
  %v18 = vld [vmem:[%s0 + $0x14] sm:$0xff]
  %v19 = vld [vmem:[%s0 + $0x1c] sm:$0xff]
  %v20 = vld [vmem:[%s0 + $0x24] sm:$0xf]
  %v21 = vld [vmem:[%s0 + $0x28] sm:$0xff]
  %v22 = vld [vmem:[%s0 + $0x30] sm:$0xff]
  %v23 = vld [vmem:[%s0 + $0x38] sm:$0xf]
  %v24 = vld [vmem:[%s0 + $0x3c] sm:$0xff]
  %v25 = vld [vmem:[%s0 + $0x44] sm:$0xff]
  %v26 = vld [vmem:[%s0 + $0x4c] sm:$0xf]
  %v27 = vld [vmem:[%s1] sm:$0xf]
  %v28 = vld [vmem:[%s1 + $0x4] sm:$0xf]
  %v29 = vld [vmem:[%s1 + $0x8] sm:$0xf]
  %v30 = vld [vmem:[%s1 + $0xc] sm:$0xf]
  %v31 = vld [vmem:[%s1 + $0x10] sm:$0xf]
  %v32 = vld [vmem:[%s1 + $0x14] sm:$0xf]
  %v33 = vld [vmem:[%s1 + $0x18] sm:$0xf]
  %v34 = vld [vmem:[%s1 + $0x1c] sm:$0xf]
  %v35 = vld [vmem:[%s1 + $0x20] sm:$0xf]
  %v36 = vld [vmem:[%s1 + $0x24] sm:$0xf]
  %v37 = vld [vmem:[%s1 + $0x28] sm:$0xf]
  %v38 = vld [vmem:[%s1 + $0x2c] sm:$0xf]
  %v39 = vld [vmem:[%s1 + $0x30] sm:$0xf]
  %v40 = vld [vmem:[%s1 + $0x34] sm:$0xf]
  %v41 = vld [vmem:[%s1 + $0x38] sm:$0xf]
  %v42 = vld [vmem:[%s1 + $0x3c] sm:$0xf]
  %v43 = vld [vmem:[%s1 + $0x40] sm:$0xf]
  %v44 = vld [vmem:[%s1 + $0x44] sm:$0xf]
  %v45 = vld [vmem:[%s1 + $0x48] sm:$0xf]
  %v46 = vld [vmem:[%s1 + $0x4c] sm:$0xf]
  %v47 = vld [vmem:[%s1 + $0x50] sm:$0xf]
  %v48 = vld [vmem:[%s1 + $0x54] sm:$0xf]
  %v49 = vld [vmem:[%s1 + $0x58] sm:$0xf]
  %v50 = vld [vmem:[%s1 + $0x5c] sm:$0xf]
  %v51 = vld [vmem:[%s1 + $0x60] sm:$0xf]
  %v52 = vld [vmem:[%s1 + $0x64] sm:$0xf]
  %v53 = vld [vmem:[%s1 + $0x68] sm:$0xf]
  %v54 = vld [vmem:[%s1 + $0x6c] sm:$0xf]
  %v55 = vld [vmem:[%s1 + $0x70] sm:$0xf]
  %v56 = vld [vmem:[%s1 + $0x74] sm:$0xf]
  %v57 = vld [vmem:[%s1 + $0x78] sm:$0xf]
  %v58 = vld [vmem:[%s1 + $0x7c] sm:$0xf]
  %v59 = vld [vmem:[%s1 + $0x80] sm:$0xf]
  %v60 = vld [vmem:[%s1 + $0x84] sm:$0xf]
  %v61 = vld [vmem:[%s1 + $0x88] sm:$0xf]
  %v62 = vld [vmem:[%s1 + $0x8c] sm:$0xf]
  %v63 = vld [vmem:[%s1 + $0x90] sm:$0xf]
  %v64 = vld [vmem:[%s1 + $0x94] sm:$0xf]
  %v65 = vld [vmem:[%s1 + $0x98] sm:$0xf]
  %v66 = vld [vmem:[%s1 + $0x9c] sm:$0xf]
  %v67 = vld [vmem:[%s1 + $0xa0] sm:$0xf]
  %v68 = vld [vmem:[%s1 + $0xa4] sm:$0xf]
  %v69 = vld [vmem:[%s1 + $0xa8] sm:$0xf]
  %v70 = vld [vmem:[%s1 + $0xac] sm:$0xf]
  %v71 = vld [vmem:[%s1 + $0xb0] sm:$0xf]
  %v72 = vld [vmem:[%s1 + $0xb4] sm:$0xf]
  %v73 = vld [vmem:[%s1 + $0xb8] sm:$0xf]
  %v74 = vld [vmem:[%s1 + $0xbc] sm:$0xf]
  %v75 = vld [vmem:[%s1 + $0xc0] sm:$0xf]
  %v76 = vld [vmem:[%s1 + $0xc4] sm:$0xf]
  %v77 = vld [vmem:[%s1 + $0xc8] sm:$0xf]
  %v78 = vld [vmem:[%s1 + $0xcc] sm:$0xf]
  %v79 = vld [vmem:[%s1 + $0xd0] sm:$0xf]
  %v80 = vld [vmem:[%s1 + $0xd4] sm:$0xf]
  %v81 = vld [vmem:[%s1 + $0xd8] sm:$0xf]
  %v82 = vld [vmem:[%s1 + $0xdc] sm:$0xf]
  %v83 = vld [vmem:[%s1 + $0xe0] sm:$0xf]
  %v84 = vld [vmem:[%s1 + $0xe4] sm:$0xf]
  %v85 = vld [vmem:[%s1 + $0xe8] sm:$0xf]
  %v86 = vld [vmem:[%s1 + $0xec] sm:$0xf]
  %v87 = vld [vmem:[%s1 + $0xf0] sm:$0xf]
  %v88 = vld [vmem:[%s1 + $0xf4] sm:$0xf]
  %v89 = vld [vmem:[%s1 + $0xf8] sm:$0xf]
  %v90 = vld [vmem:[%s1 + $0xfc] sm:$0xf]
  %v91 = vld [vmem:[%s1 + $0x100] sm:$0xf]
  %v92 = vld [vmem:[%s1 + $0x104] sm:$0xf]
  %v93 = vld [vmem:[%s1 + $0x108] sm:$0xf]
  %v94 = vld [vmem:[%s1 + $0x10c] sm:$0xf]
  %v95 = vld [vmem:[%s1 + $0x110] sm:$0xf]
  %v96 = vld [vmem:[%s1 + $0x114] sm:$0xf]
  %v97 = vld [vmem:[%s1 + $0x118] sm:$0xf]
  %v98 = vld [vmem:[%s1 + $0x11c] sm:$0xf]
  %v99 = vld [vmem:[%s2] sm:$0x1]
  %v101 = vlaneseq
  %v102 = vshrl.u32 %v101, 7
  %v103 = vsub.s32 0, %v102
  %v104 = vrot.slane %v99, %v103
  %v118 = vunpack.c.l.b16 %v15
  %v119 = vunpack.c.h.b16 %v15
  %v120 = vunpack.c.l.b16 %v16
  %v121 = vunpack.c.h.b16 %v16
  %v122 = vunpack.c.l.b16 %v17
  %v123 = vunpack.c.l.b16 %v18
  %v124 = vunpack.c.h.b16 %v18
  %v125 = vunpack.c.l.b16 %v19
  %v126 = vunpack.c.h.b16 %v19
  %v127 = vunpack.c.l.b16 %v20
  %v128 = vunpack.c.l.b16 %v21
  %v129 = vunpack.c.h.b16 %v21
  %v130 = vunpack.c.l.b16 %v22
  %v131 = vunpack.c.h.b16 %v22
  %v132 = vunpack.c.l.b16 %v23
  %v133 = vunpack.c.l.b16 %v24
  %v134 = vunpack.c.h.b16 %v24
  %v135 = vunpack.c.l.b16 %v25
  %v136 = vunpack.c.h.b16 %v25
  %v137 = vunpack.c.l.b16 %v26
  %v138 = vpack.c.b16 %v123, %v118
  %v139 = vpack.c.b16 %v124, %v119
  %v140 = vpack.c.b16 %v125, %v120
  %v141 = vpack.c.b16 %v126, %v121
  %v142 = vpack.c.b16 %v127, %v122
  %v143 = vpack.c.b16 %v133, %v128
  %v144 = vpack.c.b16 %v134, %v129
  %v145 = vpack.c.b16 %v135, %v130
  %v146 = vpack.c.b16 %v136, %v131
  %v147 = vpack.c.b16 %v137, %v132
  %v228 = vunpack.c.l.b16 %v27
  %v229 = vunpack.c.l.b16 %v28
  %v230 = vunpack.c.l.b16 %v29
  %v231 = vunpack.c.l.b16 %v30
  %v232 = vunpack.c.l.b16 %v31
  %v233 = vunpack.c.l.b16 %v32
  %v234 = vunpack.c.l.b16 %v33
  %v235 = vunpack.c.l.b16 %v34
  %v236 = vunpack.c.l.b16 %v35
  %v237 = vunpack.c.l.b16 %v36
  %v238 = vunpack.c.l.b16 %v37
  %v239 = vunpack.c.l.b16 %v38
  %v240 = vunpack.c.l.b16 %v39
  %v241 = vunpack.c.l.b16 %v40
  %v242 = vunpack.c.l.b16 %v41
  %v243 = vunpack.c.l.b16 %v42
  %v244 = vunpack.c.l.b16 %v43
  %v245 = vunpack.c.l.b16 %v44
  %v246 = vunpack.c.l.b16 %v45
  %v247 = vunpack.c.l.b16 %v46
  %v248 = vunpack.c.l.b16 %v47
  %v249 = vunpack.c.l.b16 %v48
  %v250 = vunpack.c.l.b16 %v49
  %v251 = vunpack.c.l.b16 %v50
  %v252 = vunpack.c.l.b16 %v51
  %v253 = vunpack.c.l.b16 %v52
  %v254 = vunpack.c.l.b16 %v53
  %v255 = vunpack.c.l.b16 %v54
  %v256 = vunpack.c.l.b16 %v55
  %v257 = vunpack.c.l.b16 %v56
  %v258 = vunpack.c.l.b16 %v57
  %v259 = vunpack.c.l.b16 %v58
  %v260 = vunpack.c.l.b16 %v59
  %v261 = vunpack.c.l.b16 %v60
  %v262 = vunpack.c.l.b16 %v61
  %v263 = vunpack.c.l.b16 %v62
  %v264 = vunpack.c.l.b16 %v63
  %v265 = vunpack.c.l.b16 %v64
  %v266 = vunpack.c.l.b16 %v65
  %v267 = vunpack.c.l.b16 %v66
  %v268 = vunpack.c.l.b16 %v67
  %v269 = vunpack.c.l.b16 %v68
  %v270 = vunpack.c.l.b16 %v69
  %v271 = vunpack.c.l.b16 %v70
  %v272 = vunpack.c.l.b16 %v71
  %v273 = vunpack.c.l.b16 %v72
  %v274 = vunpack.c.l.b16 %v73
  %v275 = vunpack.c.l.b16 %v74
  %v276 = vunpack.c.l.b16 %v75
  %v277 = vunpack.c.l.b16 %v76
  %v278 = vunpack.c.l.b16 %v77
  %v279 = vunpack.c.l.b16 %v78
  %v280 = vunpack.c.l.b16 %v79
  %v281 = vunpack.c.l.b16 %v80
  %v282 = vunpack.c.l.b16 %v81
  %v283 = vunpack.c.l.b16 %v82
  %v284 = vunpack.c.l.b16 %v83
  %v285 = vunpack.c.l.b16 %v84
  %v286 = vunpack.c.l.b16 %v85
  %v287 = vunpack.c.l.b16 %v86
  %v288 = vunpack.c.l.b16 %v87
  %v289 = vunpack.c.l.b16 %v88
  %v290 = vunpack.c.l.b16 %v89
  %v291 = vunpack.c.l.b16 %v90
  %v292 = vunpack.c.l.b16 %v91
  %v293 = vunpack.c.l.b16 %v92
  %v294 = vunpack.c.l.b16 %v93
  %v295 = vunpack.c.l.b16 %v94
  %v296 = vunpack.c.l.b16 %v95
  %v297 = vunpack.c.l.b16 %v96
  %v298 = vunpack.c.l.b16 %v97
  %v299 = vunpack.c.l.b16 %v98
  %v300 = vpack.c.b16 %v229, %v228
  %v301 = vpack.c.b16 %v231, %v230
  %v302 = vpack.c.b16 %v233, %v232
  %v303 = vpack.c.b16 %v235, %v234
  %v304 = vpack.c.b16 %v237, %v236
  %v305 = vpack.c.b16 %v239, %v238
  %v306 = vpack.c.b16 %v241, %v240
  %v307 = vpack.c.b16 %v243, %v242
  %v308 = vpack.c.b16 %v245, %v244
  %v309 = vpack.c.b16 %v247, %v246
  %v310 = vpack.c.b16 %v249, %v248
  %v311 = vpack.c.b16 %v251, %v250
  %v312 = vpack.c.b16 %v253, %v252
  %v313 = vpack.c.b16 %v255, %v254
  %v314 = vpack.c.b16 %v257, %v256
  %v315 = vpack.c.b16 %v259, %v258
  %v316 = vpack.c.b16 %v261, %v260
  %v317 = vpack.c.b16 %v263, %v262
  %v318 = vpack.c.b16 %v265, %v264
  %v319 = vpack.c.b16 %v267, %v266
  %v320 = vpack.c.b16 %v269, %v268
  %v321 = vpack.c.b16 %v271, %v270
  %v322 = vpack.c.b16 %v273, %v272
  %v323 = vpack.c.b16 %v275, %v274
  %v324 = vpack.c.b16 %v277, %v276
  %v325 = vpack.c.b16 %v279, %v278
  %v326 = vpack.c.b16 %v281, %v280
  %v327 = vpack.c.b16 %v283, %v282
  %v328 = vpack.c.b16 %v285, %v284
  %v329 = vpack.c.b16 %v287, %v286
  %v330 = vpack.c.b16 %v289, %v288
  %v331 = vpack.c.b16 %v291, %v290
  %v332 = vpack.c.b16 %v293, %v292
  %v333 = vpack.c.b16 %v295, %v294
  %v334 = vpack.c.b16 %v297, %v296
  %v335 = vpack.c.b16 %v299, %v298
  %vm372 = vcmask 523264
  %v374 = vsel %vm372, %v142, 0
  %v377 = vsel %vm372, %v147, 0
  %379 = vmatprep.subr.bf16.mxu0 0
  %380 = vmatpush1.bf16.msra.mxu0 %v300
  %381 = vmatprep.subr.bf16.mxu0 0
  %382 = vmatpush1.bf16.msra.mxu0 %v301
  %383 = vmatprep.subr.bf16.mxu0 0
  %384 = vmatpush1.bf16.msra.mxu0 %v302
  %385 = vmatprep.subr.bf16.mxu0 0
  %386 = vmatpush1.bf16.msra.mxu0 %v303
  %387 = vmatprep.subr.bf16.mxu0 0
  %388 = vmatpush1.bf16.msra.mxu0 %v304
  %389 = vmatprep.subr.bf16.mxu0 0
  %390 = vmatpush1.bf16.msra.mxu0 %v305
  %391 = vmatprep.subr.bf16.mxu0 0
  %392 = vmatpush1.bf16.msra.mxu0 %v306
  %393 = vmatprep.subr.bf16.mxu0 0
  %394 = vmatpush1.bf16.msra.mxu0 %v307
  %395 = vmatprep.subr.bf16.mxu0 0
  %396 = vmatpush1.bf16.msra.mxu0 %v308
  %397 = vmatprep.subr.bf16.mxu0 0
  %398 = vmatpush1.bf16.msra.mxu0 %v309
  %399 = vmatprep.subr.bf16.mxu0 0
  %400 = vmatpush1.bf16.msra.mxu0 %v310
  %401 = vmatprep.subr.bf16.mxu0 0
  %402 = vmatpush1.bf16.msra.mxu0 %v311
  %403 = vmatprep.subr.bf16.mxu0 0
  %404 = vmatpush1.bf16.msra.mxu0 %v312
  %405 = vmatprep.subr.bf16.mxu0 0
  %406 = vmatpush1.bf16.msra.mxu0 %v313
  %407 = vmatprep.subr.bf16.mxu0 0
  %408 = vmatpush1.bf16.msra.mxu0 %v314
  %409 = vmatprep.subr.bf16.mxu0 0
  %410 = vmatpush1.bf16.msra.mxu0 %v315
  %411 = vmatprep.mubr.bf16.mxu0 %v139
  %412 = vmatmul.mubr.bf16.gmra.mrb[0].mxu0 %v138
  %v413 = vpop.f32.mrb[0].mxu0
  %v414 = vadd.f32 %v104, %v413
  %v415 = vpop.f32.mrb[0].mxu0
  %v416 = vpop.f32.mrb[0].mxu0
  %v417 = vadd.f32 %v104, %v416
  %v418 = vpop.f32.mrb[0].mxu0
  %419 = vmatprep.mubr.bf16.mxu0 %v144
  %420 = vmatmul.mubr.bf16.gmra.mrb[0].mxu0 %v143
  %v421 = vpop.f32.mrb[0].mxu0
  %v422 = vadd.f32 %v104, %v421
  %v423 = vpop.f32.mrb[0].mxu0
  %v424 = vpop.f32.mrb[0].mxu0
  %v425 = vadd.f32 %v104, %v424
  %v426 = vpop.f32.mrb[0].mxu0
  %427 = vdwg.mxu0
  %428 = vmatprep.subr.bf16.mxu0 0
  %429 = vmatpush1.bf16.msra.mxu0 %v316
  %430 = vmatprep.subr.bf16.mxu0 0
  %431 = vmatpush1.bf16.msra.mxu0 %v317
  %432 = vmatprep.subr.bf16.mxu0 0
  %433 = vmatpush1.bf16.msra.mxu0 %v318
  %434 = vmatprep.subr.bf16.mxu0 0
  %435 = vmatpush1.bf16.msra.mxu0 %v319
  %436 = vmatprep.subr.bf16.mxu0 0
  %437 = vmatpush1.bf16.msra.mxu0 %v320
  %438 = vmatprep.subr.bf16.mxu0 0
  %439 = vmatpush1.bf16.msra.mxu0 %v321
  %440 = vmatprep.subr.bf16.mxu0 0
  %441 = vmatpush1.bf16.msra.mxu0 %v322
  %442 = vmatprep.subr.bf16.mxu0 0
  %443 = vmatpush1.bf16.msra.mxu0 %v323
  %444 = vmatprep.subr.bf16.mxu0 0
  %445 = vmatpush1.bf16.msra.mxu0 %v324
  %446 = vmatprep.subr.bf16.mxu0 0
  %447 = vmatpush1.bf16.msra.mxu0 %v325
  %448 = vmatprep.subr.bf16.mxu0 0
  %449 = vmatpush1.bf16.msra.mxu0 %v326
  %450 = vmatprep.subr.bf16.mxu0 0
  %451 = vmatpush1.bf16.msra.mxu0 %v327
  %452 = vmatprep.subr.bf16.mxu0 0
  %453 = vmatpush1.bf16.msra.mxu0 %v328
  %454 = vmatprep.subr.bf16.mxu0 0
  %455 = vmatpush1.bf16.msra.mxu0 %v329
  %456 = vmatprep.subr.bf16.mxu0 0
  %457 = vmatpush1.bf16.msra.mxu0 %v330
  %458 = vmatprep.subr.bf16.mxu0 0
  %459 = vmatpush1.bf16.msra.mxu0 %v331
  %460 = vmatprep.mubr.bf16.mxu0 %v141
  %461 = vmatmul.mubr.bf16.gmra.mrb[0].mxu0 %v140
  %v462 = vpop.f32.mrb[0].mxu0
  %v463 = vadd.f32 %v414, %v462
  %v464 = vpop.f32.mrb[0].mxu0
  %v465 = vpop.f32.mrb[0].mxu0
  %v466 = vadd.f32 %v417, %v465
  %v467 = vpop.f32.mrb[0].mxu0
  %468 = vmatprep.mubr.bf16.mxu0 %v146
  %469 = vmatmul.mubr.bf16.gmra.mrb[0].mxu0 %v145
  %v470 = vpop.f32.mrb[0].mxu0
  %v471 = vadd.f32 %v422, %v470
  %v472 = vpop.f32.mrb[0].mxu0
  %v473 = vpop.f32.mrb[0].mxu0
  %v474 = vadd.f32 %v425, %v473
  %v475 = vpop.f32.mrb[0].mxu0
  %476 = vdwg.mxu0
  %477 = vmatprep.subr.bf16.mxu0 0
  %478 = vmatpush1.bf16.msra.mxu0 %v332
  %479 = vmatprep.subr.bf16.mxu0 0
  %480 = vmatpush1.bf16.msra.mxu0 %v333
  %481 = vmatprep.subr.bf16.mxu0 0
  %482 = vmatpush1.bf16.msra.mxu0 %v334
  %483 = vmatprep.subr.bf16.mxu0 0
  %484 = vmatpush1.bf16.msra.mxu0 %v335
  %485 = vmatprep.subr.bf16.mxu0 0
  %486 = vmatpush1.bf16.msra.mxu0 0
  %487 = vmatprep.subr.bf16.mxu0 0
  %488 = vmatpush1.bf16.msra.mxu0 0
  %489 = vmatprep.subr.bf16.mxu0 0
  %490 = vmatpush1.bf16.msra.mxu0 0
  %491 = vmatprep.subr.bf16.mxu0 0
  %492 = vmatpush1.bf16.msra.mxu0 0
  %493 = vmatprep.subr.bf16.mxu0 0
  %494 = vmatpush1.bf16.msra.mxu0 0
  %495 = vmatprep.subr.bf16.mxu0 0
  %496 = vmatpush1.bf16.msra.mxu0 0
  %497 = vmatprep.subr.bf16.mxu0 0
  %498 = vmatpush1.bf16.msra.mxu0 0
  %499 = vmatprep.subr.bf16.mxu0 0
  %500 = vmatpush1.bf16.msra.mxu0 0
  %501 = vmatprep.subr.bf16.mxu0 0
  %502 = vmatpush1.bf16.msra.mxu0 0
  %503 = vmatprep.subr.bf16.mxu0 0
  %504 = vmatpush1.bf16.msra.mxu0 0
  %505 = vmatprep.subr.bf16.mxu0 0
  %506 = vmatpush1.bf16.msra.mxu0 0
  %507 = vmatprep.subr.bf16.mxu0 0
  %508 = vmatpush1.bf16.msra.mxu0 0
  %509 = vmatprep.mubr.bf16.mxu0 0
  %510 = vmatmul.mubr.bf16.gmra.mrb[0].mxu0 %v374
  %v511 = vpop.f32.mrb[0].mxu0
  %v512 = vadd.f32 %v463, %v511
  %v513 = vpop.f32.mrb[0].mxu0
  %v514 = vpop.f32.mrb[0].mxu0
  %v515 = vadd.f32 %v466, %v514
  %v516 = vpop.f32.mrb[0].mxu0
  %517 = vmatprep.mubr.bf16.mxu0 0
  %518 = vmatmul.mubr.bf16.gmra.mrb[0].mxu0 %v377
  %v519 = vpop.f32.mrb[0].mxu0
  %v520 = vadd.f32 %v471, %v519
  %v521 = vpop.f32.mrb[0].mxu0
  %v522 = vpop.f32.mrb[0].mxu0
  %v523 = vadd.f32 %v474, %v522
  %v524 = vpop.f32.mrb[0].mxu0
  %525 = vdwg.mxu0
  %v526 = vmax.f32 %v512, 0.0
  %v527 = vmax.f32 %v515, 0.0
  %v528 = vmax.f32 %v520, 0.0
  %v529 = vmax.f32 %v523, 0.0
  %v530 = vpack.c.bf16 %v527, %v526
  %v531 = vpack.c.bf16 %v529, %v528
  %v534 = vunpack.c.l.b16 %v530
  %v535 = vunpack.c.h.b16 %v530
  %v536 = vunpack.c.l.b16 %v531
  %v537 = vunpack.c.h.b16 %v531
  %v538 = vpack.c.b16 %v534, %v534
  %v539 = vpack.c.b16 %v535, %v535
  %v540 = vpack.c.b16 %v536, %v536
  %v541 = vpack.c.b16 %v537, %v537
  %546 = vst [vmem:[%s3] sm:$0xf] %v538
  %547 = vst [vmem:[%s3 + $0x4] sm:$0xf] %v539
  %548 = vst [vmem:[%s3 + $0x8] sm:$0xf] %v540
  %549 = vst [vmem:[%s3 + $0xc] sm:$0xf] %v541
  // Predicated region
  $region14: #{vae_forward.16} parent=0 // pred_check
    _
  $region15: #{vae_forward.16} parent=0 // pred_check_branch
    %551 = sbr.rel (0) target = $region17
  $region16: #{vae_forward.16} parent=0 // pred_region
    _
  $region17: #{vae_forward.16} parent=0 // pred_fallthru
    _
  // Predicated region
  $region18: #{vae_forward.16} parent=0 // pred_check
    _
  $region19: #{vae_forward.16} parent=0 // pred_check_branch
    %553 = sbr.rel (0) target = $region21
  $region20: #{vae_forward.16} parent=0 // pred_region
    _
  $region21: #{vae_forward.16} parent=0 // pred_fallthru
    _

// kernel: vae_forward.12
$region0: #{vae_forward.12}
  #allocation0 [shape = 'u32[]', space=smem, size = 0x4, offset = 0x4, fixed_abs, tag = 'smem constant byte address 0x4 - core index']
  #allocation1 [shape = 'u32[144,128]{1,0:T(1,128)}', space=vmem, size = 0x12000, scoped, tag = 'internal scratch']
  %s0 = inlined_call_operand.vmem [shape: bf16[2,2048], index: 0, kind: input, shape index: {}]
  %s1 = inlined_call_operand.vmem [shape: bf16[4,2048,32], index: 1, kind: input, shape index: {}]
  %s2 = inlined_call_operand.vmem [shape: f32[1,32], index: 2, kind: input, shape index: {}]
  %s3 = inlined_call_operand.vmem [shape: bf16[2,32], index: 3, kind: output, shape index: {}]
  %s4 = sld [smem:[#allocation0]]
  $region22: #{vae_forward.12} parent=0
    _
  %s6 = ssub.s32 1, %s4
  %s7 = scalar_select 0, %s6, %s4
  // Predicated region
  $region2: #{vae_forward.12} parent=0 // pred_check
    _
  $region3: #{vae_forward.12} parent=0 // pred_check_branch
    %9 = sbr.rel (0) target = $region5
  $region4: #{vae_forward.12} parent=0 // pred_region
    _
  $region5: #{vae_forward.12} parent=0 // pred_fallthru
    _
  // Predicated region
  $region6: #{vae_forward.12} parent=0 // pred_check
    _
  $region7: #{vae_forward.12} parent=0 // pred_check_branch
    %11 = sbr.rel (0) target = $region9
  $region8: #{vae_forward.12} parent=0 // pred_region
    _
  $region9: #{vae_forward.12} parent=0 // pred_fallthru
    _
  // Predicated region
  $region10: #{vae_forward.12} parent=0 // pred_check
    _
  $region11: #{vae_forward.12} parent=0 // pred_check_branch
    %13 = sbr.rel (0) target = $region13
  $region12: #{vae_forward.12} parent=0 // pred_region
    _
  $region13: #{vae_forward.12} parent=0 // pred_fallthru
    _
  %v15 = vld [vmem:[%s0] sm:$0xff]
  %v16 = vld [vmem:[%s0 + $0x8] sm:$0xff]
  %v17 = vld [vmem:[%s2] sm:$0x1]
  %v18 = vld [vmem:[%s1] sm:$0xf]
  %v19 = vld [vmem:[%s1 + $0x4] sm:$0xf]
  %v20 = vld [vmem:[%s1 + $0x8] sm:$0xf]
  %v21 = vld [vmem:[%s1 + $0xc] sm:$0xf]
  %v22 = vld [vmem:[%s1 + $0x10] sm:$0xf]
  %v23 = vld [vmem:[%s1 + $0x14] sm:$0xf]
  %v24 = vld [vmem:[%s1 + $0x18] sm:$0xf]
  %v25 = vld [vmem:[%s1 + $0x1c] sm:$0xf]
  %v26 = vld [vmem:[%s1 + $0x20] sm:$0xf]
  %v27 = vld [vmem:[%s1 + $0x24] sm:$0xf]
  %v28 = vld [vmem:[%s1 + $0x28] sm:$0xf]
  %v29 = vld [vmem:[%s1 + $0x2c] sm:$0xf]
  %v30 = vld [vmem:[%s1 + $0x30] sm:$0xf]
  %v31 = vld [vmem:[%s1 + $0x34] sm:$0xf]
  %v32 = vld [vmem:[%s1 + $0x38] sm:$0xf]
  %v33 = vld [vmem:[%s1 + $0x3c] sm:$0xf]
  %v34 = vld [vmem:[%s1 + $0x40] sm:$0xf]
  %v35 = vld [vmem:[%s1 + $0x44] sm:$0xf]
  %v36 = vld [vmem:[%s1 + $0x48] sm:$0xf]
  %v37 = vld [vmem:[%s1 + $0x4c] sm:$0xf]
  %v38 = vld [vmem:[%s1 + $0x50] sm:$0xf]
  %v39 = vld [vmem:[%s1 + $0x54] sm:$0xf]
  %v40 = vld [vmem:[%s1 + $0x58] sm:$0xf]
  %v41 = vld [vmem:[%s1 + $0x5c] sm:$0xf]
  %v42 = vld [vmem:[%s1 + $0x60] sm:$0xf]
  %v43 = vld [vmem:[%s1 + $0x64] sm:$0xf]
  %v44 = vld [vmem:[%s1 + $0x68] sm:$0xf]
  %v45 = vld [vmem:[%s1 + $0x6c] sm:$0xf]
  %v46 = vld [vmem:[%s1 + $0x70] sm:$0xf]
  %v47 = vld [vmem:[%s1 + $0x74] sm:$0xf]
  %v48 = vld [vmem:[%s1 + $0x78] sm:$0xf]
  %v49 = vld [vmem:[%s1 + $0x7c] sm:$0xf]
  %v50 = vld [vmem:[%s1 + $0x80] sm:$0xf]
  %v51 = vld [vmem:[%s1 + $0x84] sm:$0xf]
  %v52 = vld [vmem:[%s1 + $0x88] sm:$0xf]
  %v53 = vld [vmem:[%s1 + $0x8c] sm:$0xf]
  %v54 = vld [vmem:[%s1 + $0x90] sm:$0xf]
  %v55 = vld [vmem:[%s1 + $0x94] sm:$0xf]
  %v56 = vld [vmem:[%s1 + $0x98] sm:$0xf]
  %v57 = vld [vmem:[%s1 + $0x9c] sm:$0xf]
  %v58 = vld [vmem:[%s1 + $0xa0] sm:$0xf]
  %v59 = vld [vmem:[%s1 + $0xa4] sm:$0xf]
  %v60 = vld [vmem:[%s1 + $0xa8] sm:$0xf]
  %v61 = vld [vmem:[%s1 + $0xac] sm:$0xf]
  %v62 = vld [vmem:[%s1 + $0xb0] sm:$0xf]
  %v63 = vld [vmem:[%s1 + $0xb4] sm:$0xf]
  %v64 = vld [vmem:[%s1 + $0xb8] sm:$0xf]
  %v65 = vld [vmem:[%s1 + $0xbc] sm:$0xf]
  %v66 = vld [vmem:[%s1 + $0xc0] sm:$0xf]
  %v67 = vld [vmem:[%s1 + $0xc4] sm:$0xf]
  %v68 = vld [vmem:[%s1 + $0xc8] sm:$0xf]
  %v69 = vld [vmem:[%s1 + $0xcc] sm:$0xf]
  %v70 = vld [vmem:[%s1 + $0xd0] sm:$0xf]
  %v71 = vld [vmem:[%s1 + $0xd4] sm:$0xf]
  %v72 = vld [vmem:[%s1 + $0xd8] sm:$0xf]
  %v73 = vld [vmem:[%s1 + $0xdc] sm:$0xf]
  %v74 = vld [vmem:[%s1 + $0xe0] sm:$0xf]
  %v75 = vld [vmem:[%s1 + $0xe4] sm:$0xf]
  %v76 = vld [vmem:[%s1 + $0xe8] sm:$0xf]
  %v77 = vld [vmem:[%s1 + $0xec] sm:$0xf]
  %v78 = vld [vmem:[%s1 + $0xf0] sm:$0xf]
  %v79 = vld [vmem:[%s1 + $0xf4] sm:$0xf]
  %v80 = vld [vmem:[%s1 + $0xf8] sm:$0xf]
  %v81 = vld [vmem:[%s1 + $0xfc] sm:$0xf]
  %v82 = vld [vmem:[%s1 + $0x100] sm:$0xf]
  %v83 = vld [vmem:[%s1 + $0x104] sm:$0xf]
  %v84 = vld [vmem:[%s1 + $0x108] sm:$0xf]
  %v85 = vld [vmem:[%s1 + $0x10c] sm:$0xf]
  %v86 = vld [vmem:[%s1 + $0x110] sm:$0xf]
  %v87 = vld [vmem:[%s1 + $0x114] sm:$0xf]
  %v88 = vld [vmem:[%s1 + $0x118] sm:$0xf]
  %v89 = vld [vmem:[%s1 + $0x11c] sm:$0xf]
  %v90 = vld [vmem:[%s1 + $0x120] sm:$0xf]
  %v91 = vld [vmem:[%s1 + $0x124] sm:$0xf]
  %v92 = vld [vmem:[%s1 + $0x128] sm:$0xf]
  %v93 = vld [vmem:[%s1 + $0x12c] sm:$0xf]
  %v94 = vld [vmem:[%s1 + $0x130] sm:$0xf]
  %v95 = vld [vmem:[%s1 + $0x134] sm:$0xf]
  %v96 = vld [vmem:[%s1 + $0x138] sm:$0xf]
  %v97 = vld [vmem:[%s1 + $0x13c] sm:$0xf]
  %v98 = vld [vmem:[%s1 + $0x140] sm:$0xf]
  %v99 = vld [vmem:[%s1 + $0x144] sm:$0xf]
  %v100 = vld [vmem:[%s1 + $0x148] sm:$0xf]
  %v101 = vld [vmem:[%s1 + $0x14c] sm:$0xf]
  %v102 = vld [vmem:[%s1 + $0x150] sm:$0xf]
  %v103 = vld [vmem:[%s1 + $0x154] sm:$0xf]
  %v104 = vld [vmem:[%s1 + $0x158] sm:$0xf]
  %v105 = vld [vmem:[%s1 + $0x15c] sm:$0xf]
  %v106 = vld [vmem:[%s1 + $0x160] sm:$0xf]
  %v107 = vld [vmem:[%s1 + $0x164] sm:$0xf]
  %v108 = vld [vmem:[%s1 + $0x168] sm:$0xf]
  %v109 = vld [vmem:[%s1 + $0x16c] sm:$0xf]
  %v110 = vld [vmem:[%s1 + $0x170] sm:$0xf]
  %v111 = vld [vmem:[%s1 + $0x174] sm:$0xf]
  %v112 = vld [vmem:[%s1 + $0x178] sm:$0xf]
  %v113 = vld [vmem:[%s1 + $0x17c] sm:$0xf]
  %v114 = vld [vmem:[%s1 + $0x180] sm:$0xf]
  %v115 = vld [vmem:[%s1 + $0x184] sm:$0xf]
  %v116 = vld [vmem:[%s1 + $0x188] sm:$0xf]
  %v117 = vld [vmem:[%s1 + $0x18c] sm:$0xf]
  %v118 = vld [vmem:[%s1 + $0x190] sm:$0xf]
  %v119 = vld [vmem:[%s1 + $0x194] sm:$0xf]
  %v120 = vld [vmem:[%s1 + $0x198] sm:$0xf]
  %v121 = vld [vmem:[%s1 + $0x19c] sm:$0xf]
  %v122 = vld [vmem:[%s1 + $0x1a0] sm:$0xf]
  %v123 = vld [vmem:[%s1 + $0x1a4] sm:$0xf]
  %v124 = vld [vmem:[%s1 + $0x1a8] sm:$0xf]
  %v125 = vld [vmem:[%s1 + $0x1ac] sm:$0xf]
  %v126 = vld [vmem:[%s1 + $0x1b0] sm:$0xf]
  %v127 = vld [vmem:[%s1 + $0x1b4] sm:$0xf]
  %v128 = vld [vmem:[%s1 + $0x1b8] sm:$0xf]
  %v129 = vld [vmem:[%s1 + $0x1bc] sm:$0xf]
  %v130 = vld [vmem:[%s1 + $0x1c0] sm:$0xf]
  %v131 = vld [vmem:[%s1 + $0x1c4] sm:$0xf]
  %v132 = vld [vmem:[%s1 + $0x1c8] sm:$0xf]
  %v133 = vld [vmem:[%s1 + $0x1cc] sm:$0xf]
  %v134 = vld [vmem:[%s1 + $0x1d0] sm:$0xf]
  %v135 = vld [vmem:[%s1 + $0x1d4] sm:$0xf]
  %v136 = vld [vmem:[%s1 + $0x1d8] sm:$0xf]
  %v137 = vld [vmem:[%s1 + $0x1dc] sm:$0xf]
  %v138 = vld [vmem:[%s1 + $0x1e0] sm:$0xf]
  %v139 = vld [vmem:[%s1 + $0x1e4] sm:$0xf]
  %v140 = vld [vmem:[%s1 + $0x1e8] sm:$0xf]
  %v141 = vld [vmem:[%s1 + $0x1ec] sm:$0xf]
  %v142 = vld [vmem:[%s1 + $0x1f0] sm:$0xf]
  %v143 = vld [vmem:[%s1 + $0x1f4] sm:$0xf]
  %v144 = vld [vmem:[%s1 + $0x1f8] sm:$0xf]
  %v145 = vld [vmem:[%s1 + $0x1fc] sm:$0xf]
  %v146 = vld [vmem:[%s1 + $0x200] sm:$0xf]
  %v147 = vld [vmem:[%s1 + $0x204] sm:$0xf]
  %v148 = vld [vmem:[%s1 + $0x208] sm:$0xf]
  %v149 = vld [vmem:[%s1 + $0x20c] sm:$0xf]
  %v150 = vld [vmem:[%s1 + $0x210] sm:$0xf]
  %v151 = vld [vmem:[%s1 + $0x214] sm:$0xf]
  %v152 = vld [vmem:[%s1 + $0x218] sm:$0xf]
  %v153 = vld [vmem:[%s1 + $0x21c] sm:$0xf]
  %v154 = vld [vmem:[%s1 + $0x220] sm:$0xf]
  %v155 = vld [vmem:[%s1 + $0x224] sm:$0xf]
  %v156 = vld [vmem:[%s1 + $0x228] sm:$0xf]
  %v157 = vld [vmem:[%s1 + $0x22c] sm:$0xf]
  %v158 = vld [vmem:[%s1 + $0x230] sm:$0xf]
  %v159 = vld [vmem:[%s1 + $0x234] sm:$0xf]
  %v160 = vld [vmem:[%s1 + $0x238] sm:$0xf]
  %v161 = vld [vmem:[%s1 + $0x23c] sm:$0xf]
  %v162 = vld [vmem:[%s1 + $0x240] sm:$0xf]
  %v163 = vld [vmem:[%s1 + $0x244] sm:$0xf]
  %v164 = vld [vmem:[%s1 + $0x248] sm:$0xf]
  %v165 = vld [vmem:[%s1 + $0x24c] sm:$0xf]
  %v166 = vld [vmem:[%s1 + $0x250] sm:$0xf]
  %v167 = vld [vmem:[%s1 + $0x254] sm:$0xf]
  %v168 = vld [vmem:[%s1 + $0x258] sm:$0xf]
  %v169 = vld [vmem:[%s1 + $0x25c] sm:$0xf]
  %v170 = vld [vmem:[%s1 + $0x260] sm:$0xf]
  %v171 = vld [vmem:[%s1 + $0x264] sm:$0xf]
  %v172 = vld [vmem:[%s1 + $0x268] sm:$0xf]
  %v173 = vld [vmem:[%s1 + $0x26c] sm:$0xf]
  %v174 = vld [vmem:[%s1 + $0x270] sm:$0xf]
  %v175 = vld [vmem:[%s1 + $0x274] sm:$0xf]
  %v176 = vld [vmem:[%s1 + $0x278] sm:$0xf]
  %v177 = vld [vmem:[%s1 + $0x27c] sm:$0xf]
  %v178 = vld [vmem:[%s1 + $0x280] sm:$0xf]
  %v179 = vld [vmem:[%s1 + $0x284] sm:$0xf]
  %v180 = vld [vmem:[%s1 + $0x288] sm:$0xf]
  %v181 = vld [vmem:[%s1 + $0x28c] sm:$0xf]
  %v182 = vld [vmem:[%s1 + $0x290] sm:$0xf]
  %v183 = vld [vmem:[%s1 + $0x294] sm:$0xf]
  %v184 = vld [vmem:[%s1 + $0x298] sm:$0xf]
  %v185 = vld [vmem:[%s1 + $0x29c] sm:$0xf]
  %v186 = vld [vmem:[%s1 + $0x2a0] sm:$0xf]
  %v187 = vld [vmem:[%s1 + $0x2a4] sm:$0xf]
  %v188 = vld [vmem:[%s1 + $0x2a8] sm:$0xf]
  %v189 = vld [vmem:[%s1 + $0x2ac] sm:$0xf]
  %v190 = vld [vmem:[%s1 + $0x2b0] sm:$0xf]
  %v191 = vld [vmem:[%s1 + $0x2b4] sm:$0xf]
  %v192 = vld [vmem:[%s1 + $0x2b8] sm:$0xf]
  %v193 = vld [vmem:[%s1 + $0x2bc] sm:$0xf]
  %v194 = vld [vmem:[%s1 + $0x2c0] sm:$0xf]
  %v195 = vld [vmem:[%s1 + $0x2c4] sm:$0xf]
  %v196 = vld [vmem:[%s1 + $0x2c8] sm:$0xf]
  %v197 = vld [vmem:[%s1 + $0x2cc] sm:$0xf]
  %v198 = vld [vmem:[%s1 + $0x2d0] sm:$0xf]
  %v199 = vld [vmem:[%s1 + $0x2d4] sm:$0xf]
  %v200 = vld [vmem:[%s1 + $0x2d8] sm:$0xf]
  %v201 = vld [vmem:[%s1 + $0x2dc] sm:$0xf]
  %v202 = vld [vmem:[%s1 + $0x2e0] sm:$0xf]
  %v203 = vld [vmem:[%s1 + $0x2e4] sm:$0xf]
  %v204 = vld [vmem:[%s1 + $0x2e8] sm:$0xf]
  %v205 = vld [vmem:[%s1 + $0x2ec] sm:$0xf]
  %v206 = vld [vmem:[%s1 + $0x2f0] sm:$0xf]
  %v207 = vld [vmem:[%s1 + $0x2f4] sm:$0xf]
  %v208 = vld [vmem:[%s1 + $0x2f8] sm:$0xf]
  %v209 = vld [vmem:[%s1 + $0x2fc] sm:$0xf]
  %v210 = vld [vmem:[%s1 + $0x300] sm:$0xf]
  %v211 = vld [vmem:[%s1 + $0x304] sm:$0xf]
  %v212 = vld [vmem:[%s1 + $0x308] sm:$0xf]
  %v213 = vld [vmem:[%s1 + $0x30c] sm:$0xf]
  %v214 = vld [vmem:[%s1 + $0x310] sm:$0xf]
  %v215 = vld [vmem:[%s1 + $0x314] sm:$0xf]
  %v216 = vld [vmem:[%s1 + $0x318] sm:$0xf]
  %v217 = vld [vmem:[%s1 + $0x31c] sm:$0xf]
  %v218 = vld [vmem:[%s1 + $0x320] sm:$0xf]
  %v219 = vld [vmem:[%s1 + $0x324] sm:$0xf]
  %v220 = vld [vmem:[%s1 + $0x328] sm:$0xf]
  %v221 = vld [vmem:[%s1 + $0x32c] sm:$0xf]
  %v222 = vld [vmem:[%s1 + $0x330] sm:$0xf]
  %v223 = vld [vmem:[%s1 + $0x334] sm:$0xf]
  %v224 = vld [vmem:[%s1 + $0x338] sm:$0xf]
  %v225 = vld [vmem:[%s1 + $0x33c] sm:$0xf]
  %v226 = vld [vmem:[%s1 + $0x340] sm:$0xf]
  %v227 = vld [vmem:[%s1 + $0x344] sm:$0xf]
  %v228 = vld [vmem:[%s1 + $0x348] sm:$0xf]
  %v229 = vld [vmem:[%s1 + $0x34c] sm:$0xf]
  %v230 = vld [vmem:[%s1 + $0x350] sm:$0xf]
  %v231 = vld [vmem:[%s1 + $0x354] sm:$0xf]
  %v232 = vld [vmem:[%s1 + $0x358] sm:$0xf]
  %v233 = vld [vmem:[%s1 + $0x35c] sm:$0xf]
  %v234 = vld [vmem:[%s1 + $0x360] sm:$0xf]
  %v235 = vld [vmem:[%s1 + $0x364] sm:$0xf]
  %v236 = vld [vmem:[%s1 + $0x368] sm:$0xf]
  %v237 = vld [vmem:[%s1 + $0x36c] sm:$0xf]
  %v238 = vld [vmem:[%s1 + $0x370] sm:$0xf]
  %v239 = vld [vmem:[%s1 + $0x374] sm:$0xf]
  %v240 = vld [vmem:[%s1 + $0x378] sm:$0xf]
  %v241 = vld [vmem:[%s1 + $0x37c] sm:$0xf]
  %v242 = vld [vmem:[%s1 + $0x380] sm:$0xf]
  %v243 = vld [vmem:[%s1 + $0x384] sm:$0xf]
  %v244 = vld [vmem:[%s1 + $0x388] sm:$0xf]
  %v245 = vld [vmem:[%s1 + $0x38c] sm:$0xf]
  %v246 = vld [vmem:[%s1 + $0x390] sm:$0xf]
  %v247 = vld [vmem:[%s1 + $0x394] sm:$0xf]
  %v248 = vld [vmem:[%s1 + $0x398] sm:$0xf]
  %v249 = vld [vmem:[%s1 + $0x39c] sm:$0xf]
  %v250 = vld [vmem:[%s1 + $0x3a0] sm:$0xf]
  %v251 = vld [vmem:[%s1 + $0x3a4] sm:$0xf]
  %v252 = vld [vmem:[%s1 + $0x3a8] sm:$0xf]
  %v253 = vld [vmem:[%s1 + $0x3ac] sm:$0xf]
  %v254 = vld [vmem:[%s1 + $0x3b0] sm:$0xf]
  %v255 = vld [vmem:[%s1 + $0x3b4] sm:$0xf]
  %v256 = vld [vmem:[%s1 + $0x3b8] sm:$0xf]
  %v257 = vld [vmem:[%s1 + $0x3bc] sm:$0xf]
  %v258 = vld [vmem:[%s1 + $0x3c0] sm:$0xf]
  %v259 = vld [vmem:[%s1 + $0x3c4] sm:$0xf]
  %v260 = vld [vmem:[%s1 + $0x3c8] sm:$0xf]
  %v261 = vld [vmem:[%s1 + $0x3cc] sm:$0xf]
  %v262 = vld [vmem:[%s1 + $0x3d0] sm:$0xf]
  %v263 = vld [vmem:[%s1 + $0x3d4] sm:$0xf]
  %v264 = vld [vmem:[%s1 + $0x3d8] sm:$0xf]
  %v265 = vld [vmem:[%s1 + $0x3dc] sm:$0xf]
  %v266 = vld [vmem:[%s1 + $0x3e0] sm:$0xf]
  %v267 = vld [vmem:[%s1 + $0x3e4] sm:$0xf]
  %v268 = vld [vmem:[%s1 + $0x3e8] sm:$0xf]
  %v269 = vld [vmem:[%s1 + $0x3ec] sm:$0xf]
  %v270 = vld [vmem:[%s1 + $0x3f0] sm:$0xf]
  %v271 = vld [vmem:[%s1 + $0x3f4] sm:$0xf]
  %v272 = vld [vmem:[%s1 + $0x3f8] sm:$0xf]
  %v273 = vld [vmem:[%s1 + $0x3fc] sm:$0xf]
  %v275 = vlaneseq
  %v276 = vshrl.u32 %v275, 7
  %v277 = vsub.s32 0, %v276
  %v278 = vrot.slane %v17, %v277
  %v282 = vcombine.high %v15, %v15
  %v284 = vunpack.c.l.s4 1966171168
  %v285 = vunpack.c.0.s8 %v284
  %v286 = vlaneseq
  %v287 = vshrl.u32 %v286, 7
  %v288 = vsub.s32 %v285, %v287
  %v289 = vrot.slane %v15, %v288
  %v291 = vunpack.c.l.s4 1966171168
  %v292 = vunpack.c.0.s8 %v291
  %v293 = vlaneseq
  %v294 = vshrl.u32 %v293, 7
  %v295 = vsub.s32 %v292, %v294
  %v296 = vrot.slane %v282, %v295
  %v297 = vcombine.high %v289, %v289
  %v298 = vcombine.high %v296, %v296
  %v300 = vunpack.c.l.s4 1966171168
  %v301 = vunpack.c.0.s8 %v300
  %v302 = vlaneseq
  %v303 = vshrl.u32 %v302, 7
  %v304 = vsub.s32 %v301, %v303
  %v305 = vrot.slane %v289, %v304
  %v307 = vunpack.c.l.s4 1966171168
  %v308 = vunpack.c.0.s8 %v307
  %v309 = vlaneseq
  %v310 = vshrl.u32 %v309, 7
  %v311 = vsub.s32 %v308, %v310
  %v312 = vrot.slane %v296, %v311
  %v314 = vunpack.c.l.s4 1966171168
  %v315 = vunpack.c.0.s8 %v314
  %v316 = vlaneseq
  %v317 = vshrl.u32 %v316, 7
  %v318 = vsub.s32 %v315, %v317
  %v319 = vrot.slane %v297, %v318
  %v321 = vunpack.c.l.s4 1966171168
  %v322 = vunpack.c.0.s8 %v321
  %v323 = vlaneseq
  %v324 = vshrl.u32 %v323, 7
  %v325 = vsub.s32 %v322, %v324
  %v326 = vrot.slane %v298, %v325
  %v327 = vcombine.high %v305, %v305
  %v328 = vcombine.high %v312, %v312
  %v329 = vcombine.high %v319, %v319
  %v330 = vcombine.high %v326, %v326
  %v331 = vcombine.high %v16, %v16
  %v333 = vunpack.c.l.s4 1966171168
  %v334 = vunpack.c.0.s8 %v333
  %v335 = vlaneseq
  %v336 = vshrl.u32 %v335, 7
  %v337 = vsub.s32 %v334, %v336
  %v338 = vrot.slane %v16, %v337
  %v340 = vunpack.c.l.s4 1966171168
  %v341 = vunpack.c.0.s8 %v340
  %v342 = vlaneseq
  %v343 = vshrl.u32 %v342, 7
  %v344 = vsub.s32 %v341, %v343
  %v345 = vrot.slane %v331, %v344
  %v346 = vcombine.high %v338, %v338
  %v347 = vcombine.high %v345, %v345
  %v349 = vunpack.c.l.s4 1966171168
  %v350 = vunpack.c.0.s8 %v349
  %v351 = vlaneseq
  %v352 = vshrl.u32 %v351, 7
  %v353 = vsub.s32 %v350, %v352
  %v354 = vrot.slane %v338, %v353
  %v356 = vunpack.c.l.s4 1966171168
  %v357 = vunpack.c.0.s8 %v356
  %v358 = vlaneseq
  %v359 = vshrl.u32 %v358, 7
  %v360 = vsub.s32 %v357, %v359
  %v361 = vrot.slane %v345, %v360
  %v363 = vunpack.c.l.s4 1966171168
  %v364 = vunpack.c.0.s8 %v363
  %v365 = vlaneseq
  %v366 = vshrl.u32 %v365, 7
  %v367 = vsub.s32 %v364, %v366
  %v368 = vrot.slane %v346, %v367
  %v370 = vunpack.c.l.s4 1966171168
  %v371 = vunpack.c.0.s8 %v370
  %v372 = vlaneseq
  %v373 = vshrl.u32 %v372, 7
  %v374 = vsub.s32 %v371, %v373
  %v375 = vrot.slane %v347, %v374
  %v376 = vcombine.high %v354, %v354
  %v377 = vcombine.high %v361, %v361
  %v378 = vcombine.high %v368, %v368
  %v379 = vcombine.high %v375, %v375
  %v652 = vunpack.c.l.b16 %v18
  %v653 = vunpack.c.l.b16 %v19
  %v654 = vunpack.c.l.b16 %v20
  %v655 = vunpack.c.l.b16 %v21
  %v656 = vunpack.c.l.b16 %v22
  %v657 = vunpack.c.l.b16 %v23
  %v658 = vunpack.c.l.b16 %v24
  %v659 = vunpack.c.l.b16 %v25
  %v660 = vunpack.c.l.b16 %v26
  %v661 = vunpack.c.l.b16 %v27
  %v662 = vunpack.c.l.b16 %v28
  %v663 = vunpack.c.l.b16 %v29
  %v664 = vunpack.c.l.b16 %v30
  %v665 = vunpack.c.l.b16 %v31
  %v666 = vunpack.c.l.b16 %v32
  %v667 = vunpack.c.l.b16 %v33
  %v668 = vunpack.c.l.b16 %v34
  %v669 = vunpack.c.l.b16 %v35
  %v670 = vunpack.c.l.b16 %v36
  %v671 = vunpack.c.l.b16 %v37
  %v672 = vunpack.c.l.b16 %v38
  %v673 = vunpack.c.l.b16 %v39
  %v674 = vunpack.c.l.b16 %v40
  %v675 = vunpack.c.l.b16 %v41
  %v676 = vunpack.c.l.b16 %v42
  %v677 = vunpack.c.l.b16 %v43
  %v678 = vunpack.c.l.b16 %v44
  %v679 = vunpack.c.l.b16 %v45
  %v680 = vunpack.c.l.b16 %v46
  %v681 = vunpack.c.l.b16 %v47
  %v682 = vunpack.c.l.b16 %v48
  %v683 = vunpack.c.l.b16 %v49
  %v684 = vunpack.c.l.b16 %v50
  %v685 = vunpack.c.l.b16 %v51
  %v686 = vunpack.c.l.b16 %v52
  %v687 = vunpack.c.l.b16 %v53
  %v688 = vunpack.c.l.b16 %v54
  %v689 = vunpack.c.l.b16 %v55
  %v690 = vunpack.c.l.b16 %v56
  %v691 = vunpack.c.l.b16 %v57
  %v692 = vunpack.c.l.b16 %v58
  %v693 = vunpack.c.l.b16 %v59
  %v694 = vunpack.c.l.b16 %v60
  %v695 = vunpack.c.l.b16 %v61
  %v696 = vunpack.c.l.b16 %v62
  %v697 = vunpack.c.l.b16 %v63
  %v698 = vunpack.c.l.b16 %v64
  %v699 = vunpack.c.l.b16 %v65
  %v700 = vunpack.c.l.b16 %v66
  %v701 = vunpack.c.l.b16 %v67
  %v702 = vunpack.c.l.b16 %v68
  %v703 = vunpack.c.l.b16 %v69
  %v704 = vunpack.c.l.b16 %v70
  %v705 = vunpack.c.l.b16 %v71
  %v706 = vunpack.c.l.b16 %v72
  %v707 = vunpack.c.l.b16 %v73
  %v708 = vunpack.c.l.b16 %v74
  %v709 = vunpack.c.l.b16 %v75
  %v710 = vunpack.c.l.b16 %v76
  %v711 = vunpack.c.l.b16 %v77
  %v712 = vunpack.c.l.b16 %v78
  %v713 = vunpack.c.l.b16 %v79
  %v714 = vunpack.c.l.b16 %v80
  %v715 = vunpack.c.l.b16 %v81
  %v716 = vunpack.c.l.b16 %v82
  %v717 = vunpack.c.l.b16 %v83
  %v718 = vunpack.c.l.b16 %v84
  %v719 = vunpack.c.l.b16 %v85
  %v720 = vunpack.c.l.b16 %v86
  %v721 = vunpack.c.l.b16 %v87
  %v722 = vunpack.c.l.b16 %v88
  %v723 = vunpack.c.l.b16 %v89
  %v724 = vunpack.c.l.b16 %v90
  %v725 = vunpack.c.l.b16 %v91
  %v726 = vunpack.c.l.b16 %v92
  %v727 = vunpack.c.l.b16 %v93
  %v728 = vunpack.c.l.b16 %v94
  %v729 = vunpack.c.l.b16 %v95
  %v730 = vunpack.c.l.b16 %v96
  %v731 = vunpack.c.l.b16 %v97
  %v732 = vunpack.c.l.b16 %v98
  %v733 = vunpack.c.l.b16 %v99
  %v734 = vunpack.c.l.b16 %v100
  %v735 = vunpack.c.l.b16 %v101
  %v736 = vunpack.c.l.b16 %v102
  %v737 = vunpack.c.l.b16 %v103
  %v738 = vunpack.c.l.b16 %v104
  %v739 = vunpack.c.l.b16 %v105
  %v740 = vunpack.c.l.b16 %v106
  %v741 = vunpack.c.l.b16 %v107
  %v742 = vunpack.c.l.b16 %v108
  %v743 = vunpack.c.l.b16 %v109
  %v744 = vunpack.c.l.b16 %v110
  %v745 = vunpack.c.l.b16 %v111
  %v746 = vunpack.c.l.b16 %v112
  %v747 = vunpack.c.l.b16 %v113
  %v748 = vunpack.c.l.b16 %v114
  %v749 = vunpack.c.l.b16 %v115
  %v750 = vunpack.c.l.b16 %v116
  %v751 = vunpack.c.l.b16 %v117
  %v752 = vunpack.c.l.b16 %v118
  %v753 = vunpack.c.l.b16 %v119
  %v754 = vunpack.c.l.b16 %v120
  %v755 = vunpack.c.l.b16 %v121
  %v756 = vunpack.c.l.b16 %v122
  %v757 = vunpack.c.l.b16 %v123
  %v758 = vunpack.c.l.b16 %v124
  %v759 = vunpack.c.l.b16 %v125
  %v760 = vunpack.c.l.b16 %v126
  %v761 = vunpack.c.l.b16 %v127
  %v762 = vunpack.c.l.b16 %v128
  %v763 = vunpack.c.l.b16 %v129
  %v764 = vunpack.c.l.b16 %v130
  %v765 = vunpack.c.l.b16 %v131
  %v766 = vunpack.c.l.b16 %v132
  %v767 = vunpack.c.l.b16 %v133
  %v768 = vunpack.c.l.b16 %v134
  %v769 = vunpack.c.l.b16 %v135
  %v770 = vunpack.c.l.b16 %v136
  %v771 = vunpack.c.l.b16 %v137
  %v772 = vunpack.c.l.b16 %v138
  %v773 = vunpack.c.l.b16 %v139
  %v774 = vunpack.c.l.b16 %v140
  %v775 = vunpack.c.l.b16 %v141
  %v776 = vunpack.c.l.b16 %v142
  %v777 = vunpack.c.l.b16 %v143
  %v778 = vunpack.c.l.b16 %v144
  %v779 = vunpack.c.l.b16 %v145
  %v780 = vunpack.c.l.b16 %v146
  %v781 = vunpack.c.l.b16 %v147
  %v782 = vunpack.c.l.b16 %v148
  %v783 = vunpack.c.l.b16 %v149
  %v784 = vunpack.c.l.b16 %v150
  %v785 = vunpack.c.l.b16 %v151
  %v786 = vunpack.c.l.b16 %v152
  %v787 = vunpack.c.l.b16 %v153
  %v788 = vunpack.c.l.b16 %v154
  %v789 = vunpack.c.l.b16 %v155
  %v790 = vunpack.c.l.b16 %v156
  %v791 = vunpack.c.l.b16 %v157
  %v792 = vunpack.c.l.b16 %v158
  %v793 = vunpack.c.l.b16 %v159
  %v794 = vunpack.c.l.b16 %v160
  %v795 = vunpack.c.l.b16 %v161
  %v796 = vunpack.c.l.b16 %v162
  %v797 = vunpack.c.l.b16 %v163
  %v798 = vunpack.c.l.b16 %v164
  %v799 = vunpack.c.l.b16 %v165
  %v800 = vunpack.c.l.b16 %v166
  %v801 = vunpack.c.l.b16 %v167
  %v802 = vunpack.c.l.b16 %v168
  %v803 = vunpack.c.l.b16 %v169
  %v804 = vunpack.c.l.b16 %v170
  %v805 = vunpack.c.l.b16 %v171
  %v806 = vunpack.c.l.b16 %v172
  %v807 = vunpack.c.l.b16 %v173
  %v808 = vunpack.c.l.b16 %v174
  %v809 = vunpack.c.l.b16 %v175
  %v810 = vunpack.c.l.b16 %v176
  %v811 = vunpack.c.l.b16 %v177
  %v812 = vunpack.c.l.b16 %v178
  %v813 = vunpack.c.l.b16 %v179
  %v814 = vunpack.c.l.b16 %v180
  %v815 = vunpack.c.l.b16 %v181
  %v816 = vunpack.c.l.b16 %v182
  %v817 = vunpack.c.l.b16 %v183
  %v818 = vunpack.c.l.b16 %v184
  %v819 = vunpack.c.l.b16 %v185
  %v820 = vunpack.c.l.b16 %v186
  %v821 = vunpack.c.l.b16 %v187
  %v822 = vunpack.c.l.b16 %v188
  %v823 = vunpack.c.l.b16 %v189
  %v824 = vunpack.c.l.b16 %v190
  %v825 = vunpack.c.l.b16 %v191
  %v826 = vunpack.c.l.b16 %v192
  %v827 = vunpack.c.l.b16 %v193
  %v828 = vunpack.c.l.b16 %v194
  %v829 = vunpack.c.l.b16 %v195
  %v830 = vunpack.c.l.b16 %v196
  %v831 = vunpack.c.l.b16 %v197
  %v832 = vunpack.c.l.b16 %v198
  %v833 = vunpack.c.l.b16 %v199
  %v834 = vunpack.c.l.b16 %v200
  %v835 = vunpack.c.l.b16 %v201
  %v836 = vunpack.c.l.b16 %v202
  %v837 = vunpack.c.l.b16 %v203
  %v838 = vunpack.c.l.b16 %v204
  %v839 = vunpack.c.l.b16 %v205
  %v840 = vunpack.c.l.b16 %v206
  %v841 = vunpack.c.l.b16 %v207
  %v842 = vunpack.c.l.b16 %v208
  %v843 = vunpack.c.l.b16 %v209
  %v844 = vunpack.c.l.b16 %v210
  %v845 = vunpack.c.l.b16 %v211
  %v846 = vunpack.c.l.b16 %v212
  %v847 = vunpack.c.l.b16 %v213
  %v848 = vunpack.c.l.b16 %v214
  %v849 = vunpack.c.l.b16 %v215
  %v850 = vunpack.c.l.b16 %v216
  %v851 = vunpack.c.l.b16 %v217
  %v852 = vunpack.c.l.b16 %v218
  %v853 = vunpack.c.l.b16 %v219
  %v854 = vunpack.c.l.b16 %v220
  %v855 = vunpack.c.l.b16 %v221
  %v856 = vunpack.c.l.b16 %v222
  %v857 = vunpack.c.l.b16 %v223
  %v858 = vunpack.c.l.b16 %v224
  %v859 = vunpack.c.l.b16 %v225
  %v860 = vunpack.c.l.b16 %v226
  %v861 = vunpack.c.l.b16 %v227
  %v862 = vunpack.c.l.b16 %v228
  %v863 = vunpack.c.l.b16 %v229
  %v864 = vunpack.c.l.b16 %v230
  %v865 = vunpack.c.l.b16 %v231
  %v866 = vunpack.c.l.b16 %v232
  %v867 = vunpack.c.l.b16 %v233
  %v868 = vunpack.c.l.b16 %v234
  %v869 = vunpack.c.l.b16 %v235
  %v870 = vunpack.c.l.b16 %v236
  %v871 = vunpack.c.l.b16 %v237
  %v872 = vunpack.c.l.b16 %v238
  %v873 = vunpack.c.l.b16 %v239
  %v874 = vunpack.c.l.b16 %v240
  %v875 = vunpack.c.l.b16 %v241
  %v876 = vunpack.c.l.b16 %v242
  %v877 = vunpack.c.l.b16 %v243
  %v878 = vunpack.c.l.b16 %v244
  %v879 = vunpack.c.l.b16 %v245
  %v880 = vunpack.c.l.b16 %v246
  %v881 = vunpack.c.l.b16 %v247
  %v882 = vunpack.c.l.b16 %v248
  %v883 = vunpack.c.l.b16 %v249
  %v884 = vunpack.c.l.b16 %v250
  %v885 = vunpack.c.l.b16 %v251
  %v886 = vunpack.c.l.b16 %v252
  %v887 = vunpack.c.l.b16 %v253
  %v888 = vunpack.c.l.b16 %v254
  %v889 = vunpack.c.l.b16 %v255
  %v890 = vunpack.c.l.b16 %v256
  %v891 = vunpack.c.l.b16 %v257
  %v892 = vunpack.c.l.b16 %v258
  %v893 = vunpack.c.l.b16 %v259
  %v894 = vunpack.c.l.b16 %v260
  %v895 = vunpack.c.l.b16 %v261
  %v896 = vunpack.c.l.b16 %v262
  %v897 = vunpack.c.l.b16 %v263
  %v898 = vunpack.c.l.b16 %v264
  %v899 = vunpack.c.l.b16 %v265
  %v900 = vunpack.c.l.b16 %v266
  %v901 = vunpack.c.l.b16 %v267
  %v902 = vunpack.c.l.b16 %v268
  %v903 = vunpack.c.l.b16 %v269
  %v904 = vunpack.c.l.b16 %v270
  %v905 = vunpack.c.l.b16 %v271
  %v906 = vunpack.c.l.b16 %v272
  %v907 = vunpack.c.l.b16 %v273
  %v908 = vpack.c.b16 %v653, %v652
  %v909 = vpack.c.b16 %v655, %v654
  %v910 = vpack.c.b16 %v657, %v656
  %v911 = vpack.c.b16 %v659, %v658
  %v912 = vpack.c.b16 %v661, %v660
  %v913 = vpack.c.b16 %v663, %v662
  %v914 = vpack.c.b16 %v665, %v664
  %v915 = vpack.c.b16 %v667, %v666
  %v916 = vpack.c.b16 %v669, %v668
  %v917 = vpack.c.b16 %v671, %v670
  %v918 = vpack.c.b16 %v673, %v672
  %v919 = vpack.c.b16 %v675, %v674
  %v920 = vpack.c.b16 %v677, %v676
  %v921 = vpack.c.b16 %v679, %v678
  %v922 = vpack.c.b16 %v681, %v680
  %v923 = vpack.c.b16 %v683, %v682
  %v924 = vpack.c.b16 %v685, %v684
  %v925 = vpack.c.b16 %v687, %v686
  %v926 = vpack.c.b16 %v689, %v688
  %v927 = vpack.c.b16 %v691, %v690
  %v928 = vpack.c.b16 %v693, %v692
  %v929 = vpack.c.b16 %v695, %v694
  %v930 = vpack.c.b16 %v697, %v696
  %v931 = vpack.c.b16 %v699, %v698
  %v932 = vpack.c.b16 %v701, %v700
  %v933 = vpack.c.b16 %v703, %v702
  %v934 = vpack.c.b16 %v705, %v704
  %v935 = vpack.c.b16 %v707, %v706
  %v936 = vpack.c.b16 %v709, %v708
  %v937 = vpack.c.b16 %v711, %v710
  %v938 = vpack.c.b16 %v713, %v712
  %v939 = vpack.c.b16 %v715, %v714
  %v940 = vpack.c.b16 %v717, %v716
  %v941 = vpack.c.b16 %v719, %v718
  %v942 = vpack.c.b16 %v721, %v720
  %v943 = vpack.c.b16 %v723, %v722
  %v944 = vpack.c.b16 %v725, %v724
  %v945 = vpack.c.b16 %v727, %v726
  %v946 = vpack.c.b16 %v729, %v728
  %v947 = vpack.c.b16 %v731, %v730
  %v948 = vpack.c.b16 %v733, %v732
  %v949 = vpack.c.b16 %v735, %v734
  %v950 = vpack.c.b16 %v737, %v736
  %v951 = vpack.c.b16 %v739, %v738
  %v952 = vpack.c.b16 %v741, %v740
  %v953 = vpack.c.b16 %v743, %v742
  %v954 = vpack.c.b16 %v745, %v744
  %v955 = vpack.c.b16 %v747, %v746
  %v956 = vpack.c.b16 %v749, %v748
  %v957 = vpack.c.b16 %v751, %v750
  %v958 = vpack.c.b16 %v753, %v752
  %v959 = vpack.c.b16 %v755, %v754
  %v960 = vpack.c.b16 %v757, %v756
  %v961 = vpack.c.b16 %v759, %v758
  %v962 = vpack.c.b16 %v761, %v760
  %v963 = vpack.c.b16 %v763, %v762
  %v964 = vpack.c.b16 %v765, %v764
  %v965 = vpack.c.b16 %v767, %v766
  %v966 = vpack.c.b16 %v769, %v768
  %v967 = vpack.c.b16 %v771, %v770
  %v968 = vpack.c.b16 %v773, %v772
  %v969 = vpack.c.b16 %v775, %v774
  %v970 = vpack.c.b16 %v777, %v776
  %v971 = vpack.c.b16 %v779, %v778
  %v972 = vpack.c.b16 %v781, %v780
  %v973 = vpack.c.b16 %v783, %v782
  %v974 = vpack.c.b16 %v785, %v784
  %v975 = vpack.c.b16 %v787, %v786
  %v976 = vpack.c.b16 %v789, %v788
  %v977 = vpack.c.b16 %v791, %v790
  %v978 = vpack.c.b16 %v793, %v792
  %v979 = vpack.c.b16 %v795, %v794
  %v980 = vpack.c.b16 %v797, %v796
  %v981 = vpack.c.b16 %v799, %v798
  %v982 = vpack.c.b16 %v801, %v800
  %v983 = vpack.c.b16 %v803, %v802
  %v984 = vpack.c.b16 %v805, %v804
  %v985 = vpack.c.b16 %v807, %v806
  %v986 = vpack.c.b16 %v809, %v808
  %v987 = vpack.c.b16 %v811, %v810
  %v988 = vpack.c.b16 %v813, %v812
  %v989 = vpack.c.b16 %v815, %v814
  %v990 = vpack.c.b16 %v817, %v816
  %v991 = vpack.c.b16 %v819, %v818
  %v992 = vpack.c.b16 %v821, %v820
  %v993 = vpack.c.b16 %v823, %v822
  %v994 = vpack.c.b16 %v825, %v824
  %v995 = vpack.c.b16 %v827, %v826
  %v996 = vpack.c.b16 %v829, %v828
  %v997 = vpack.c.b16 %v831, %v830
  %v998 = vpack.c.b16 %v833, %v832
  %v999 = vpack.c.b16 %v835, %v834
  %v1000 = vpack.c.b16 %v837, %v836
  %v1001 = vpack.c.b16 %v839, %v838
  %v1002 = vpack.c.b16 %v841, %v840
  %v1003 = vpack.c.b16 %v843, %v842
  %v1004 = vpack.c.b16 %v845, %v844
  %v1005 = vpack.c.b16 %v847, %v846
  %v1006 = vpack.c.b16 %v849, %v848
  %v1007 = vpack.c.b16 %v851, %v850
  %v1008 = vpack.c.b16 %v853, %v852
  %v1009 = vpack.c.b16 %v855, %v854
  %v1010 = vpack.c.b16 %v857, %v856
  %v1011 = vpack.c.b16 %v859, %v858
  %v1012 = vpack.c.b16 %v861, %v860
  %v1013 = vpack.c.b16 %v863, %v862
  %v1014 = vpack.c.b16 %v865, %v864
  %v1015 = vpack.c.b16 %v867, %v866
  %v1016 = vpack.c.b16 %v869, %v868
  %v1017 = vpack.c.b16 %v871, %v870
  %v1018 = vpack.c.b16 %v873, %v872
  %v1019 = vpack.c.b16 %v875, %v874
  %v1020 = vpack.c.b16 %v877, %v876
  %v1021 = vpack.c.b16 %v879, %v878
  %v1022 = vpack.c.b16 %v881, %v880
  %v1023 = vpack.c.b16 %v883, %v882
  %v1024 = vpack.c.b16 %v885, %v884
  %v1025 = vpack.c.b16 %v887, %v886
  %v1026 = vpack.c.b16 %v889, %v888
  %v1027 = vpack.c.b16 %v891, %v890
  %v1028 = vpack.c.b16 %v893, %v892
  %v1029 = vpack.c.b16 %v895, %v894
  %v1030 = vpack.c.b16 %v897, %v896
  %v1031 = vpack.c.b16 %v899, %v898
  %v1032 = vpack.c.b16 %v901, %v900
  %v1033 = vpack.c.b16 %v903, %v902
  %v1034 = vpack.c.b16 %v905, %v904
  %v1035 = vpack.c.b16 %v907, %v906
  %1164 = vmatprep.subr.bf16.mxu0 0
  %1165 = vmatpush1.bf16.msra.mxu0 %v908
  %1166 = vmatprep.subr.bf16.mxu0 0
  %1167 = vmatpush1.bf16.msra.mxu0 %v909
  %1168 = vmatprep.subr.bf16.mxu0 0
  %1169 = vmatpush1.bf16.msra.mxu0 %v910
  %1170 = vmatprep.subr.bf16.mxu0 0
  %1171 = vmatpush1.bf16.msra.mxu0 %v911
  %1172 = vmatprep.subr.bf16.mxu0 0
  %1173 = vmatpush1.bf16.msra.mxu0 %v912
  %1174 = vmatprep.subr.bf16.mxu0 0
  %1175 = vmatpush1.bf16.msra.mxu0 %v913
  %1176 = vmatprep.subr.bf16.mxu0 0
  %1177 = vmatpush1.bf16.msra.mxu0 %v914
  %1178 = vmatprep.subr.bf16.mxu0 0
  %1179 = vmatpush1.bf16.msra.mxu0 %v915
  %1180 = vmatprep.subr.bf16.mxu0 0
  %1181 = vmatpush1.bf16.msra.mxu0 %v916
  %1182 = vmatprep.subr.bf16.mxu0 0
  %1183 = vmatpush1.bf16.msra.mxu0 %v917
  %1184 = vmatprep.subr.bf16.mxu0 0
  %1185 = vmatpush1.bf16.msra.mxu0 %v918
  %1186 = vmatprep.subr.bf16.mxu0 0
  %1187 = vmatpush1.bf16.msra.mxu0 %v919
  %1188 = vmatprep.subr.bf16.mxu0 0
  %1189 = vmatpush1.bf16.msra.mxu0 %v920
  %1190 = vmatprep.subr.bf16.mxu0 0
  %1191 = vmatpush1.bf16.msra.mxu0 %v921
  %1192 = vmatprep.subr.bf16.mxu0 0
  %1193 = vmatpush1.bf16.msra.mxu0 %v922
  %1194 = vmatprep.subr.bf16.mxu0 0
  %1195 = vmatpush1.bf16.msra.mxu0 %v923
  %1196 = vmatprep.mubr.bf16.mxu0 %v319
  %1197 = vmatmul.mubr.bf16.gmra.mrb[0].mxu0 %v305
  %v1198 = vpop.f32.mrb[0].mxu0
  %v1199 = vadd.f32 %v278, %v1198
  %v1200 = vpop.f32.mrb[0].mxu0
  %v1201 = vpop.f32.mrb[0].mxu0
  %v1202 = vpop.f32.mrb[0].mxu0
  %1203 = vdwg.mxu0
  %1204 = vmatprep.subr.bf16.mxu0 0
  %1205 = vmatpush1.bf16.msra.mxu0 %v924
  %1206 = vmatprep.subr.bf16.mxu0 0
  %1207 = vmatpush1.bf16.msra.mxu0 %v925
  %1208 = vmatprep.subr.bf16.mxu0 0
  %1209 = vmatpush1.bf16.msra.mxu0 %v926
  %1210 = vmatprep.subr.bf16.mxu0 0
  %1211 = vmatpush1.bf16.msra.mxu0 %v927
  %1212 = vmatprep.subr.bf16.mxu0 0
  %1213 = vmatpush1.bf16.msra.mxu0 %v928
  %1214 = vmatprep.subr.bf16.mxu0 0
  %1215 = vmatpush1.bf16.msra.mxu0 %v929
  %1216 = vmatprep.subr.bf16.mxu0 0
  %1217 = vmatpush1.bf16.msra.mxu0 %v930
  %1218 = vmatprep.subr.bf16.mxu0 0
  %1219 = vmatpush1.bf16.msra.mxu0 %v931
  %1220 = vmatprep.subr.bf16.mxu0 0
  %1221 = vmatpush1.bf16.msra.mxu0 %v932
  %1222 = vmatprep.subr.bf16.mxu0 0
  %1223 = vmatpush1.bf16.msra.mxu0 %v933
  %1224 = vmatprep.subr.bf16.mxu0 0
  %1225 = vmatpush1.bf16.msra.mxu0 %v934
  %1226 = vmatprep.subr.bf16.mxu0 0
  %1227 = vmatpush1.bf16.msra.mxu0 %v935
  %1228 = vmatprep.subr.bf16.mxu0 0
  %1229 = vmatpush1.bf16.msra.mxu0 %v936
  %1230 = vmatprep.subr.bf16.mxu0 0
  %1231 = vmatpush1.bf16.msra.mxu0 %v937
  %1232 = vmatprep.subr.bf16.mxu0 0
  %1233 = vmatpush1.bf16.msra.mxu0 %v938
  %1234 = vmatprep.subr.bf16.mxu0 0
  %1235 = vmatpush1.bf16.msra.mxu0 %v939
  %1236 = vmatprep.mubr.bf16.mxu0 %v329
  %1237 = vmatmul.mubr.bf16.gmra.mrb[0].mxu0 %v327
  %v1238 = vpop.f32.mrb[0].mxu0
  %v1239 = vadd.f32 %v1199, %v1238
  %v1240 = vpop.f32.mrb[0].mxu0
  %v1241 = vpop.f32.mrb[0].mxu0
  %v1242 = vpop.f32.mrb[0].mxu0
  %1243 = vdwg.mxu0
  %1244 = vmatprep.subr.bf16.mxu0 0
  %1245 = vmatpush1.bf16.msra.mxu0 %v940
  %1246 = vmatprep.subr.bf16.mxu0 0
  %1247 = vmatpush1.bf16.msra.mxu0 %v941
  %1248 = vmatprep.subr.bf16.mxu0 0
  %1249 = vmatpush1.bf16.msra.mxu0 %v942
  %1250 = vmatprep.subr.bf16.mxu0 0
  %1251 = vmatpush1.bf16.msra.mxu0 %v943
  %1252 = vmatprep.subr.bf16.mxu0 0
  %1253 = vmatpush1.bf16.msra.mxu0 %v944
  %1254 = vmatprep.subr.bf16.mxu0 0
  %1255 = vmatpush1.bf16.msra.mxu0 %v945
  %1256 = vmatprep.subr.bf16.mxu0 0
  %1257 = vmatpush1.bf16.msra.mxu0 %v946
  %1258 = vmatprep.subr.bf16.mxu0 0
  %1259 = vmatpush1.bf16.msra.mxu0 %v947
  %1260 = vmatprep.subr.bf16.mxu0 0
  %1261 = vmatpush1.bf16.msra.mxu0 %v948
  %1262 = vmatprep.subr.bf16.mxu0 0
  %1263 = vmatpush1.bf16.msra.mxu0 %v949
  %1264 = vmatprep.subr.bf16.mxu0 0
  %1265 = vmatpush1.bf16.msra.mxu0 %v950
  %1266 = vmatprep.subr.bf16.mxu0 0
  %1267 = vmatpush1.bf16.msra.mxu0 %v951
  %1268 = vmatprep.subr.bf16.mxu0 0
  %1269 = vmatpush1.bf16.msra.mxu0 %v952
  %1270 = vmatprep.subr.bf16.mxu0 0
  %1271 = vmatpush1.bf16.msra.mxu0 %v953
  %1272 = vmatprep.subr.bf16.mxu0 0
  %1273 = vmatpush1.bf16.msra.mxu0 %v954
  %1274 = vmatprep.subr.bf16.mxu0 0
  %1275 = vmatpush1.bf16.msra.mxu0 %v955
  %1276 = vmatprep.mubr.bf16.mxu0 %v326
  %1277 = vmatmul.mubr.bf16.gmra.mrb[0].mxu0 %v312
  %v1278 = vpop.f32.mrb[0].mxu0
  %v1279 = vadd.f32 %v1239, %v1278
  %v1280 = vpop.f32.mrb[0].mxu0
  %v1281 = vpop.f32.mrb[0].mxu0
  %v1282 = vpop.f32.mrb[0].mxu0
  %1283 = vdwg.mxu0
  %1284 = vmatprep.subr.bf16.mxu0 0
  %1285 = vmatpush1.bf16.msra.mxu0 %v956
  %1286 = vmatprep.subr.bf16.mxu0 0
  %1287 = vmatpush1.bf16.msra.mxu0 %v957
  %1288 = vmatprep.subr.bf16.mxu0 0
  %1289 = vmatpush1.bf16.msra.mxu0 %v958
  %1290 = vmatprep.subr.bf16.mxu0 0
  %1291 = vmatpush1.bf16.msra.mxu0 %v959
  %1292 = vmatprep.subr.bf16.mxu0 0
  %1293 = vmatpush1.bf16.msra.mxu0 %v960
  %1294 = vmatprep.subr.bf16.mxu0 0
  %1295 = vmatpush1.bf16.msra.mxu0 %v961
  %1296 = vmatprep.subr.bf16.mxu0 0
  %1297 = vmatpush1.bf16.msra.mxu0 %v962
  %1298 = vmatprep.subr.bf16.mxu0 0
  %1299 = vmatpush1.bf16.msra.mxu0 %v963
  %1300 = vmatprep.subr.bf16.mxu0 0
  %1301 = vmatpush1.bf16.msra.mxu0 %v964
  %1302 = vmatprep.subr.bf16.mxu0 0
  %1303 = vmatpush1.bf16.msra.mxu0 %v965
  %1304 = vmatprep.subr.bf16.mxu0 0
  %1305 = vmatpush1.bf16.msra.mxu0 %v966
  %1306 = vmatprep.subr.bf16.mxu0 0
  %1307 = vmatpush1.bf16.msra.mxu0 %v967
  %1308 = vmatprep.subr.bf16.mxu0 0
  %1309 = vmatpush1.bf16.msra.mxu0 %v968
  %1310 = vmatprep.subr.bf16.mxu0 0
  %1311 = vmatpush1.bf16.msra.mxu0 %v969
  %1312 = vmatprep.subr.bf16.mxu0 0
  %1313 = vmatpush1.bf16.msra.mxu0 %v970
  %1314 = vmatprep.subr.bf16.mxu0 0
  %1315 = vmatpush1.bf16.msra.mxu0 %v971
  %1316 = vmatprep.mubr.bf16.mxu0 %v330
  %1317 = vmatmul.mubr.bf16.gmra.mrb[0].mxu0 %v328
  %v1318 = vpop.f32.mrb[0].mxu0
  %v1319 = vadd.f32 %v1279, %v1318
  %v1320 = vpop.f32.mrb[0].mxu0
  %v1321 = vpop.f32.mrb[0].mxu0
  %v1322 = vpop.f32.mrb[0].mxu0
  %1323 = vdwg.mxu0
  %1324 = vmatprep.subr.bf16.mxu0 0
  %1325 = vmatpush1.bf16.msra.mxu0 %v972
  %1326 = vmatprep.subr.bf16.mxu0 0
  %1327 = vmatpush1.bf16.msra.mxu0 %v973
  %1328 = vmatprep.subr.bf16.mxu0 0
  %1329 = vmatpush1.bf16.msra.mxu0 %v974
  %1330 = vmatprep.subr.bf16.mxu0 0
  %1331 = vmatpush1.bf16.msra.mxu0 %v975
  %1332 = vmatprep.subr.bf16.mxu0 0
  %1333 = vmatpush1.bf16.msra.mxu0 %v976
  %1334 = vmatprep.subr.bf16.mxu0 0
  %1335 = vmatpush1.bf16.msra.mxu0 %v977
  %1336 = vmatprep.subr.bf16.mxu0 0
  %1337 = vmatpush1.bf16.msra.mxu0 %v978
  %1338 = vmatprep.subr.bf16.mxu0 0
  %1339 = vmatpush1.bf16.msra.mxu0 %v979
  %1340 = vmatprep.subr.bf16.mxu0 0
  %1341 = vmatpush1.bf16.msra.mxu0 %v980
  %1342 = vmatprep.subr.bf16.mxu0 0
  %1343 = vmatpush1.bf16.msra.mxu0 %v981
  %1344 = vmatprep.subr.bf16.mxu0 0
  %1345 = vmatpush1.bf16.msra.mxu0 %v982
  %1346 = vmatprep.subr.bf16.mxu0 0
  %1347 = vmatpush1.bf16.msra.mxu0 %v983
  %1348 = vmatprep.subr.bf16.mxu0 0
  %1349 = vmatpush1.bf16.msra.mxu0 %v984
  %1350 = vmatprep.subr.bf16.mxu0 0
  %1351 = vmatpush1.bf16.msra.mxu0 %v985
  %1352 = vmatprep.subr.bf16.mxu0 0
  %1353 = vmatpush1.bf16.msra.mxu0 %v986
  %1354 = vmatprep.subr.bf16.mxu0 0
  %1355 = vmatpush1.bf16.msra.mxu0 %v987
  %1356 = vmatprep.mubr.bf16.mxu0 %v368
  %1357 = vmatmul.mubr.bf16.gmra.mrb[0].mxu0 %v354
  %v1358 = vpop.f32.mrb[0].mxu0
  %v1359 = vadd.f32 %v1319, %v1358
  %v1360 = vpop.f32.mrb[0].mxu0
  %v1361 = vpop.f32.mrb[0].mxu0
  %v1362 = vpop.f32.mrb[0].mxu0
  %1363 = vdwg.mxu0
  %1364 = vmatprep.subr.bf16.mxu0 0
  %1365 = vmatpush1.bf16.msra.mxu0 %v988
  %1366 = vmatprep.subr.bf16.mxu0 0
  %1367 = vmatpush1.bf16.msra.mxu0 %v989
  %1368 = vmatprep.subr.bf16.mxu0 0
  %1369 = vmatpush1.bf16.msra.mxu0 %v990
  %1370 = vmatprep.subr.bf16.mxu0 0
  %1371 = vmatpush1.bf16.msra.mxu0 %v991
  %1372 = vmatprep.subr.bf16.mxu0 0
  %1373 = vmatpush1.bf16.msra.mxu0 %v992
  %1374 = vmatprep.subr.bf16.mxu0 0
  %1375 = vmatpush1.bf16.msra.mxu0 %v993
  %1376 = vmatprep.subr.bf16.mxu0 0
  %1377 = vmatpush1.bf16.msra.mxu0 %v994
  %1378 = vmatprep.subr.bf16.mxu0 0
  %1379 = vmatpush1.bf16.msra.mxu0 %v995
  %1380 = vmatprep.subr.bf16.mxu0 0
  %1381 = vmatpush1.bf16.msra.mxu0 %v996
  %1382 = vmatprep.subr.bf16.mxu0 0
  %1383 = vmatpush1.bf16.msra.mxu0 %v997
  %1384 = vmatprep.subr.bf16.mxu0 0
  %1385 = vmatpush1.bf16.msra.mxu0 %v998
  %1386 = vmatprep.subr.bf16.mxu0 0
  %1387 = vmatpush1.bf16.msra.mxu0 %v999
  %1388 = vmatprep.subr.bf16.mxu0 0
  %1389 = vmatpush1.bf16.msra.mxu0 %v1000
  %1390 = vmatprep.subr.bf16.mxu0 0
  %1391 = vmatpush1.bf16.msra.mxu0 %v1001
  %1392 = vmatprep.subr.bf16.mxu0 0
  %1393 = vmatpush1.bf16.msra.mxu0 %v1002
  %1394 = vmatprep.subr.bf16.mxu0 0
  %1395 = vmatpush1.bf16.msra.mxu0 %v1003
  %1396 = vmatprep.mubr.bf16.mxu0 %v378
  %1397 = vmatmul.mubr.bf16.gmra.mrb[0].mxu0 %v376
  %v1398 = vpop.f32.mrb[0].mxu0
  %v1399 = vadd.f32 %v1359, %v1398
  %v1400 = vpop.f32.mrb[0].mxu0
  %v1401 = vpop.f32.mrb[0].mxu0
  %v1402 = vpop.f32.mrb[0].mxu0
  %1403 = vdwg.mxu0
  %1404 = vmatprep.subr.bf16.mxu0 0
  %1405 = vmatpush1.bf16.msra.mxu0 %v1004
  %1406 = vmatprep.subr.bf16.mxu0 0
  %1407 = vmatpush1.bf16.msra.mxu0 %v1005
  %1408 = vmatprep.subr.bf16.mxu0 0
  %1409 = vmatpush1.bf16.msra.mxu0 %v1006
  %1410 = vmatprep.subr.bf16.mxu0 0
  %1411 = vmatpush1.bf16.msra.mxu0 %v1007
  %1412 = vmatprep.subr.bf16.mxu0 0
  %1413 = vmatpush1.bf16.msra.mxu0 %v1008
  %1414 = vmatprep.subr.bf16.mxu0 0
  %1415 = vmatpush1.bf16.msra.mxu0 %v1009
  %1416 = vmatprep.subr.bf16.mxu0 0
  %1417 = vmatpush1.bf16.msra.mxu0 %v1010
  %1418 = vmatprep.subr.bf16.mxu0 0
  %1419 = vmatpush1.bf16.msra.mxu0 %v1011
  %1420 = vmatprep.subr.bf16.mxu0 0
  %1421 = vmatpush1.bf16.msra.mxu0 %v1012
  %1422 = vmatprep.subr.bf16.mxu0 0
  %1423 = vmatpush1.bf16.msra.mxu0 %v1013
  %1424 = vmatprep.subr.bf16.mxu0 0
  %1425 = vmatpush1.bf16.msra.mxu0 %v1014
  %1426 = vmatprep.subr.bf16.mxu0 0
  %1427 = vmatpush1.bf16.msra.mxu0 %v1015
  %1428 = vmatprep.subr.bf16.mxu0 0
  %1429 = vmatpush1.bf16.msra.mxu0 %v1016
  %1430 = vmatprep.subr.bf16.mxu0 0
  %1431 = vmatpush1.bf16.msra.mxu0 %v1017
  %1432 = vmatprep.subr.bf16.mxu0 0
  %1433 = vmatpush1.bf16.msra.mxu0 %v1018
  %1434 = vmatprep.subr.bf16.mxu0 0
  %1435 = vmatpush1.bf16.msra.mxu0 %v1019
  %1436 = vmatprep.mubr.bf16.mxu0 %v375
  %1437 = vmatmul.mubr.bf16.gmra.mrb[0].mxu0 %v361
  %v1438 = vpop.f32.mrb[0].mxu0
  %v1439 = vadd.f32 %v1399, %v1438
  %v1440 = vpop.f32.mrb[0].mxu0
  %v1441 = vpop.f32.mrb[0].mxu0
  %v1442 = vpop.f32.mrb[0].mxu0
  %1443 = vdwg.mxu0
  %1444 = vmatprep.subr.bf16.mxu0 0
  %1445 = vmatpush1.bf16.msra.mxu0 %v1020
  %1446 = vmatprep.subr.bf16.mxu0 0
  %1447 = vmatpush1.bf16.msra.mxu0 %v1021
  %1448 = vmatprep.subr.bf16.mxu0 0
  %1449 = vmatpush1.bf16.msra.mxu0 %v1022
  %1450 = vmatprep.subr.bf16.mxu0 0
  %1451 = vmatpush1.bf16.msra.mxu0 %v1023
  %1452 = vmatprep.subr.bf16.mxu0 0
  %1453 = vmatpush1.bf16.msra.mxu0 %v1024
  %1454 = vmatprep.subr.bf16.mxu0 0
  %1455 = vmatpush1.bf16.msra.mxu0 %v1025
  %1456 = vmatprep.subr.bf16.mxu0 0
  %1457 = vmatpush1.bf16.msra.mxu0 %v1026
  %1458 = vmatprep.subr.bf16.mxu0 0
  %1459 = vmatpush1.bf16.msra.mxu0 %v1027
  %1460 = vmatprep.subr.bf16.mxu0 0
  %1461 = vmatpush1.bf16.msra.mxu0 %v1028
  %1462 = vmatprep.subr.bf16.mxu0 0
  %1463 = vmatpush1.bf16.msra.mxu0 %v1029
  %1464 = vmatprep.subr.bf16.mxu0 0
  %1465 = vmatpush1.bf16.msra.mxu0 %v1030
  %1466 = vmatprep.subr.bf16.mxu0 0
  %1467 = vmatpush1.bf16.msra.mxu0 %v1031
  %1468 = vmatprep.subr.bf16.mxu0 0
  %1469 = vmatpush1.bf16.msra.mxu0 %v1032
  %1470 = vmatprep.subr.bf16.mxu0 0
  %1471 = vmatpush1.bf16.msra.mxu0 %v1033
  %1472 = vmatprep.subr.bf16.mxu0 0
  %1473 = vmatpush1.bf16.msra.mxu0 %v1034
  %1474 = vmatprep.subr.bf16.mxu0 0
  %1475 = vmatpush1.bf16.msra.mxu0 %v1035
  %1476 = vmatprep.mubr.bf16.mxu0 %v379
  %1477 = vmatmul.mubr.bf16.gmra.mrb[0].mxu0 %v377
  %v1478 = vpop.f32.mrb[0].mxu0
  %v1479 = vadd.f32 %v1439, %v1478
  %v1480 = vpop.f32.mrb[0].mxu0
  %v1481 = vpop.f32.mrb[0].mxu0
  %v1482 = vpop.f32.mrb[0].mxu0
  %1483 = vdwg.mxu0
  %v1484 = vmax.f32 %v1479, 0.0
  %s1485 = scalar_lea.vmem %s1, 1024
  %v1486 = vld [vmem:[%s1485] sm:$0xf]
  %v1487 = vld [vmem:[%s1485 + $0x4] sm:$0xf]
  %v1488 = vld [vmem:[%s1485 + $0x8] sm:$0xf]
  %v1489 = vld [vmem:[%s1485 + $0xc] sm:$0xf]
  %v1490 = vld [vmem:[%s1485 + $0x10] sm:$0xf]
  %v1491 = vld [vmem:[%s1485 + $0x14] sm:$0xf]
  %v1492 = vld [vmem:[%s1485 + $0x18] sm:$0xf]
  %v1493 = vld [vmem:[%s1485 + $0x1c] sm:$0xf]
  %v1494 = vld [vmem:[%s1485 + $0x20] sm:$0xf]
  %v1495 = vld [vmem:[%s1485 + $0x24] sm:$0xf]
  %v1496 = vld [vmem:[%s1485 + $0x28] sm:$0xf]
  %v1497 = vld [vmem:[%s1485 + $0x2c] sm:$0xf]
  %v1498 = vld [vmem:[%s1485 + $0x30] sm:$0xf]
  %v1499 = vld [vmem:[%s1485 + $0x34] sm:$0xf]
  %v1500 = vld [vmem:[%s1485 + $0x38] sm:$0xf]
  %v1501 = vld [vmem:[%s1485 + $0x3c] sm:$0xf]
  %v1502 = vld [vmem:[%s1485 + $0x40] sm:$0xf]
  %v1503 = vld [vmem:[%s1485 + $0x44] sm:$0xf]
  %v1504 = vld [vmem:[%s1485 + $0x48] sm:$0xf]
  %v1505 = vld [vmem:[%s1485 + $0x4c] sm:$0xf]
  %v1506 = vld [vmem:[%s1485 + $0x50] sm:$0xf]
  %v1507 = vld [vmem:[%s1485 + $0x54] sm:$0xf]
  %v1508 = vld [vmem:[%s1485 + $0x58] sm:$0xf]
  %v1509 = vld [vmem:[%s1485 + $0x5c] sm:$0xf]
  %v1510 = vld [vmem:[%s1485 + $0x60] sm:$0xf]
  %v1511 = vld [vmem:[%s1485 + $0x64] sm:$0xf]
  %v1512 = vld [vmem:[%s1485 + $0x68] sm:$0xf]
  %v1513 = vld [vmem:[%s1485 + $0x6c] sm:$0xf]
  %v1514 = vld [vmem:[%s1485 + $0x70] sm:$0xf]
  %v1515 = vld [vmem:[%s1485 + $0x74] sm:$0xf]
  %v1516 = vld [vmem:[%s1485 + $0x78] sm:$0xf]
  %v1517 = vld [vmem:[%s1485 + $0x7c] sm:$0xf]
  %v1518 = vld [vmem:[%s1485 + $0x80] sm:$0xf]
  %v1519 = vld [vmem:[%s1485 + $0x84] sm:$0xf]
  %v1520 = vld [vmem:[%s1485 + $0x88] sm:$0xf]
  %v1521 = vld [vmem:[%s1485 + $0x8c] sm:$0xf]
  %v1522 = vld [vmem:[%s1485 + $0x90] sm:$0xf]
  %v1523 = vld [vmem:[%s1485 + $0x94] sm:$0xf]
  %v1524 = vld [vmem:[%s1485 + $0x98] sm:$0xf]
  %v1525 = vld [vmem:[%s1485 + $0x9c] sm:$0xf]
  %v1526 = vld [vmem:[%s1485 + $0xa0] sm:$0xf]
  %v1527 = vld [vmem:[%s1485 + $0xa4] sm:$0xf]
  %v1528 = vld [vmem:[%s1485 + $0xa8] sm:$0xf]
  %v1529 = vld [vmem:[%s1485 + $0xac] sm:$0xf]
  %v1530 = vld [vmem:[%s1485 + $0xb0] sm:$0xf]
  %v1531 = vld [vmem:[%s1485 + $0xb4] sm:$0xf]
  %v1532 = vld [vmem:[%s1485 + $0xb8] sm:$0xf]
  %v1533 = vld [vmem:[%s1485 + $0xbc] sm:$0xf]
  %v1534 = vld [vmem:[%s1485 + $0xc0] sm:$0xf]
  %v1535 = vld [vmem:[%s1485 + $0xc4] sm:$0xf]
  %v1536 = vld [vmem:[%s1485 + $0xc8] sm:$0xf]
  %v1537 = vld [vmem:[%s1485 + $0xcc] sm:$0xf]
  %v1538 = vld [vmem:[%s1485 + $0xd0] sm:$0xf]
  %v1539 = vld [vmem:[%s1485 + $0xd4] sm:$0xf]
  %v1540 = vld [vmem:[%s1485 + $0xd8] sm:$0xf]
  %v1541 = vld [vmem:[%s1485 + $0xdc] sm:$0xf]
  %v1542 = vld [vmem:[%s1485 + $0xe0] sm:$0xf]
  %v1543 = vld [vmem:[%s1485 + $0xe4] sm:$0xf]
  %v1544 = vld [vmem:[%s1485 + $0xe8] sm:$0xf]
  %v1545 = vld [vmem:[%s1485 + $0xec] sm:$0xf]
  %v1546 = vld [vmem:[%s1485 + $0xf0] sm:$0xf]
  %v1547 = vld [vmem:[%s1485 + $0xf4] sm:$0xf]
  %v1548 = vld [vmem:[%s1485 + $0xf8] sm:$0xf]
  %v1549 = vld [vmem:[%s1485 + $0xfc] sm:$0xf]
  %v1550 = vld [vmem:[%s1485 + $0x100] sm:$0xf]
  %v1551 = vld [vmem:[%s1485 + $0x104] sm:$0xf]
  %v1552 = vld [vmem:[%s1485 + $0x108] sm:$0xf]
  %v1553 = vld [vmem:[%s1485 + $0x10c] sm:$0xf]
  %v1554 = vld [vmem:[%s1485 + $0x110] sm:$0xf]
  %v1555 = vld [vmem:[%s1485 + $0x114] sm:$0xf]
  %v1556 = vld [vmem:[%s1485 + $0x118] sm:$0xf]
  %v1557 = vld [vmem:[%s1485 + $0x11c] sm:$0xf]
  %v1558 = vld [vmem:[%s1485 + $0x120] sm:$0xf]
  %v1559 = vld [vmem:[%s1485 + $0x124] sm:$0xf]
  %v1560 = vld [vmem:[%s1485 + $0x128] sm:$0xf]
  %v1561 = vld [vmem:[%s1485 + $0x12c] sm:$0xf]
  %v1562 = vld [vmem:[%s1485 + $0x130] sm:$0xf]
  %v1563 = vld [vmem:[%s1485 + $0x134] sm:$0xf]
  %v1564 = vld [vmem:[%s1485 + $0x138] sm:$0xf]
  %v1565 = vld [vmem:[%s1485 + $0x13c] sm:$0xf]
  %v1566 = vld [vmem:[%s1485 + $0x140] sm:$0xf]
  %v1567 = vld [vmem:[%s1485 + $0x144] sm:$0xf]
  %v1568 = vld [vmem:[%s1485 + $0x148] sm:$0xf]
  %v1569 = vld [vmem:[%s1485 + $0x14c] sm:$0xf]
  %v1570 = vld [vmem:[%s1485 + $0x150] sm:$0xf]
  %v1571 = vld [vmem:[%s1485 + $0x154] sm:$0xf]
  %v1572 = vld [vmem:[%s1485 + $0x158] sm:$0xf]
  %v1573 = vld [vmem:[%s1485 + $0x15c] sm:$0xf]
  %v1574 = vld [vmem:[%s1485 + $0x160] sm:$0xf]
  %v1575 = vld [vmem:[%s1485 + $0x164] sm:$0xf]
  %v1576 = vld [vmem:[%s1485 + $0x168] sm:$0xf]
  %v1577 = vld [vmem:[%s1485 + $0x16c] sm:$0xf]
  %v1578 = vld [vmem:[%s1485 + $0x170] sm:$0xf]
  %v1579 = vld [vmem:[%s1485 + $0x174] sm:$0xf]
  %v1580 = vld [vmem:[%s1485 + $0x178] sm:$0xf]
  %v1581 = vld [vmem:[%s1485 + $0x17c] sm:$0xf]
  %v1582 = vld [vmem:[%s1485 + $0x180] sm:$0xf]
  %v1583 = vld [vmem:[%s1485 + $0x184] sm:$0xf]
  %v1584 = vld [vmem:[%s1485 + $0x188] sm:$0xf]
  %v1585 = vld [vmem:[%s1485 + $0x18c] sm:$0xf]
  %v1586 = vld [vmem:[%s1485 + $0x190] sm:$0xf]
  %v1587 = vld [vmem:[%s1485 + $0x194] sm:$0xf]
  %v1588 = vld [vmem:[%s1485 + $0x198] sm:$0xf]
  %v1589 = vld [vmem:[%s1485 + $0x19c] sm:$0xf]
  %v1590 = vld [vmem:[%s1485 + $0x1a0] sm:$0xf]
  %v1591 = vld [vmem:[%s1485 + $0x1a4] sm:$0xf]
  %v1592 = vld [vmem:[%s1485 + $0x1a8] sm:$0xf]
  %v1593 = vld [vmem:[%s1485 + $0x1ac] sm:$0xf]
  %v1594 = vld [vmem:[%s1485 + $0x1b0] sm:$0xf]
  %v1595 = vld [vmem:[%s1485 + $0x1b4] sm:$0xf]
  %v1596 = vld [vmem:[%s1485 + $0x1b8] sm:$0xf]
  %v1597 = vld [vmem:[%s1485 + $0x1bc] sm:$0xf]
  %v1598 = vld [vmem:[%s1485 + $0x1c0] sm:$0xf]
  %v1599 = vld [vmem:[%s1485 + $0x1c4] sm:$0xf]
  %v1600 = vld [vmem:[%s1485 + $0x1c8] sm:$0xf]
  %v1601 = vld [vmem:[%s1485 + $0x1cc] sm:$0xf]
  %v1602 = vld [vmem:[%s1485 + $0x1d0] sm:$0xf]
  %v1603 = vld [vmem:[%s1485 + $0x1d4] sm:$0xf]
  %v1604 = vld [vmem:[%s1485 + $0x1d8] sm:$0xf]
  %v1605 = vld [vmem:[%s1485 + $0x1dc] sm:$0xf]
  %v1606 = vld [vmem:[%s1485 + $0x1e0] sm:$0xf]
  %v1607 = vld [vmem:[%s1485 + $0x1e4] sm:$0xf]
  %v1608 = vld [vmem:[%s1485 + $0x1e8] sm:$0xf]
  %v1609 = vld [vmem:[%s1485 + $0x1ec] sm:$0xf]
  %v1610 = vld [vmem:[%s1485 + $0x1f0] sm:$0xf]
  %v1611 = vld [vmem:[%s1485 + $0x1f4] sm:$0xf]
  %v1612 = vld [vmem:[%s1485 + $0x1f8] sm:$0xf]
  %v1613 = vld [vmem:[%s1485 + $0x1fc] sm:$0xf]
  %v1614 = vld [vmem:[%s1485 + $0x200] sm:$0xf]
  %v1615 = vld [vmem:[%s1485 + $0x204] sm:$0xf]
  %v1616 = vld [vmem:[%s1485 + $0x208] sm:$0xf]
  %v1617 = vld [vmem:[%s1485 + $0x20c] sm:$0xf]
  %v1618 = vld [vmem:[%s1485 + $0x210] sm:$0xf]
  %v1619 = vld [vmem:[%s1485 + $0x214] sm:$0xf]
  %v1620 = vld [vmem:[%s1485 + $0x218] sm:$0xf]
  %v1621 = vld [vmem:[%s1485 + $0x21c] sm:$0xf]
  %v1622 = vld [vmem:[%s1485 + $0x220] sm:$0xf]
  %v1623 = vld [vmem:[%s1485 + $0x224] sm:$0xf]
  %v1624 = vld [vmem:[%s1485 + $0x228] sm:$0xf]
  %v1625 = vld [vmem:[%s1485 + $0x22c] sm:$0xf]
  %v1626 = vld [vmem:[%s1485 + $0x230] sm:$0xf]
  %v1627 = vld [vmem:[%s1485 + $0x234] sm:$0xf]
  %v1628 = vld [vmem:[%s1485 + $0x238] sm:$0xf]
  %v1629 = vld [vmem:[%s1485 + $0x23c] sm:$0xf]
  %v1630 = vld [vmem:[%s1485 + $0x240] sm:$0xf]
  %v1631 = vld [vmem:[%s1485 + $0x244] sm:$0xf]
  %v1632 = vld [vmem:[%s1485 + $0x248] sm:$0xf]
  %v1633 = vld [vmem:[%s1485 + $0x24c] sm:$0xf]
  %v1634 = vld [vmem:[%s1485 + $0x250] sm:$0xf]
  %v1635 = vld [vmem:[%s1485 + $0x254] sm:$0xf]
  %v1636 = vld [vmem:[%s1485 + $0x258] sm:$0xf]
  %v1637 = vld [vmem:[%s1485 + $0x25c] sm:$0xf]
  %v1638 = vld [vmem:[%s1485 + $0x260] sm:$0xf]
  %v1639 = vld [vmem:[%s1485 + $0x264] sm:$0xf]
  %v1640 = vld [vmem:[%s1485 + $0x268] sm:$0xf]
  %v1641 = vld [vmem:[%s1485 + $0x26c] sm:$0xf]
  %v1642 = vld [vmem:[%s1485 + $0x270] sm:$0xf]
  %v1643 = vld [vmem:[%s1485 + $0x274] sm:$0xf]
  %v1644 = vld [vmem:[%s1485 + $0x278] sm:$0xf]
  %v1645 = vld [vmem:[%s1485 + $0x27c] sm:$0xf]
  %v1646 = vld [vmem:[%s1485 + $0x280] sm:$0xf]
  %v1647 = vld [vmem:[%s1485 + $0x284] sm:$0xf]
  %v1648 = vld [vmem:[%s1485 + $0x288] sm:$0xf]
  %v1649 = vld [vmem:[%s1485 + $0x28c] sm:$0xf]
  %v1650 = vld [vmem:[%s1485 + $0x290] sm:$0xf]
  %v1651 = vld [vmem:[%s1485 + $0x294] sm:$0xf]
  %v1652 = vld [vmem:[%s1485 + $0x298] sm:$0xf]
  %v1653 = vld [vmem:[%s1485 + $0x29c] sm:$0xf]
  %v1654 = vld [vmem:[%s1485 + $0x2a0] sm:$0xf]
  %v1655 = vld [vmem:[%s1485 + $0x2a4] sm:$0xf]
  %v1656 = vld [vmem:[%s1485 + $0x2a8] sm:$0xf]
  %v1657 = vld [vmem:[%s1485 + $0x2ac] sm:$0xf]
  %v1658 = vld [vmem:[%s1485 + $0x2b0] sm:$0xf]
  %v1659 = vld [vmem:[%s1485 + $0x2b4] sm:$0xf]
  %v1660 = vld [vmem:[%s1485 + $0x2b8] sm:$0xf]
  %v1661 = vld [vmem:[%s1485 + $0x2bc] sm:$0xf]
  %v1662 = vld [vmem:[%s1485 + $0x2c0] sm:$0xf]
  %v1663 = vld [vmem:[%s1485 + $0x2c4] sm:$0xf]
  %v1664 = vld [vmem:[%s1485 + $0x2c8] sm:$0xf]
  %v1665 = vld [vmem:[%s1485 + $0x2cc] sm:$0xf]
  %v1666 = vld [vmem:[%s1485 + $0x2d0] sm:$0xf]
  %v1667 = vld [vmem:[%s1485 + $0x2d4] sm:$0xf]
  %v1668 = vld [vmem:[%s1485 + $0x2d8] sm:$0xf]
  %v1669 = vld [vmem:[%s1485 + $0x2dc] sm:$0xf]
  %v1670 = vld [vmem:[%s1485 + $0x2e0] sm:$0xf]
  %v1671 = vld [vmem:[%s1485 + $0x2e4] sm:$0xf]
  %v1672 = vld [vmem:[%s1485 + $0x2e8] sm:$0xf]
  %v1673 = vld [vmem:[%s1485 + $0x2ec] sm:$0xf]
  %v1674 = vld [vmem:[%s1485 + $0x2f0] sm:$0xf]
  %v1675 = vld [vmem:[%s1485 + $0x2f4] sm:$0xf]
  %v1676 = vld [vmem:[%s1485 + $0x2f8] sm:$0xf]
  %v1677 = vld [vmem:[%s1485 + $0x2fc] sm:$0xf]
  %v1678 = vld [vmem:[%s1485 + $0x300] sm:$0xf]
  %v1679 = vld [vmem:[%s1485 + $0x304] sm:$0xf]
  %v1680 = vld [vmem:[%s1485 + $0x308] sm:$0xf]
  %v1681 = vld [vmem:[%s1485 + $0x30c] sm:$0xf]
  %v1682 = vld [vmem:[%s1485 + $0x310] sm:$0xf]
  %v1683 = vld [vmem:[%s1485 + $0x314] sm:$0xf]
  %v1684 = vld [vmem:[%s1485 + $0x318] sm:$0xf]
  %v1685 = vld [vmem:[%s1485 + $0x31c] sm:$0xf]
  %v1686 = vld [vmem:[%s1485 + $0x320] sm:$0xf]
  %v1687 = vld [vmem:[%s1485 + $0x324] sm:$0xf]
  %v1688 = vld [vmem:[%s1485 + $0x328] sm:$0xf]
  %v1689 = vld [vmem:[%s1485 + $0x32c] sm:$0xf]
  %v1690 = vld [vmem:[%s1485 + $0x330] sm:$0xf]
  %v1691 = vld [vmem:[%s1485 + $0x334] sm:$0xf]
  %v1692 = vld [vmem:[%s1485 + $0x338] sm:$0xf]
  %v1693 = vld [vmem:[%s1485 + $0x33c] sm:$0xf]
  %v1694 = vld [vmem:[%s1485 + $0x340] sm:$0xf]
  %v1695 = vld [vmem:[%s1485 + $0x344] sm:$0xf]
  %v1696 = vld [vmem:[%s1485 + $0x348] sm:$0xf]
  %v1697 = vld [vmem:[%s1485 + $0x34c] sm:$0xf]
  %v1698 = vld [vmem:[%s1485 + $0x350] sm:$0xf]
  %v1699 = vld [vmem:[%s1485 + $0x354] sm:$0xf]
  %v1700 = vld [vmem:[%s1485 + $0x358] sm:$0xf]
  %v1701 = vld [vmem:[%s1485 + $0x35c] sm:$0xf]
  %v1702 = vld [vmem:[%s1485 + $0x360] sm:$0xf]
  %v1703 = vld [vmem:[%s1485 + $0x364] sm:$0xf]
  %v1704 = vld [vmem:[%s1485 + $0x368] sm:$0xf]
  %v1705 = vld [vmem:[%s1485 + $0x36c] sm:$0xf]
  %v1706 = vld [vmem:[%s1485 + $0x370] sm:$0xf]
  %v1707 = vld [vmem:[%s1485 + $0x374] sm:$0xf]
  %v1708 = vld [vmem:[%s1485 + $0x378] sm:$0xf]
  %v1709 = vld [vmem:[%s1485 + $0x37c] sm:$0xf]
  %v1710 = vld [vmem:[%s1485 + $0x380] sm:$0xf]
  %v1711 = vld [vmem:[%s1485 + $0x384] sm:$0xf]
  %v1712 = vld [vmem:[%s1485 + $0x388] sm:$0xf]
  %v1713 = vld [vmem:[%s1485 + $0x38c] sm:$0xf]
  %v1714 = vld [vmem:[%s1485 + $0x390] sm:$0xf]
  %v1715 = vld [vmem:[%s1485 + $0x394] sm:$0xf]
  %v1716 = vld [vmem:[%s1485 + $0x398] sm:$0xf]
  %v1717 = vld [vmem:[%s1485 + $0x39c] sm:$0xf]
  %v1718 = vld [vmem:[%s1485 + $0x3a0] sm:$0xf]
  %v1719 = vld [vmem:[%s1485 + $0x3a4] sm:$0xf]
  %v1720 = vld [vmem:[%s1485 + $0x3a8] sm:$0xf]
  %v1721 = vld [vmem:[%s1485 + $0x3ac] sm:$0xf]
  %v1722 = vld [vmem:[%s1485 + $0x3b0] sm:$0xf]
  %v1723 = vld [vmem:[%s1485 + $0x3b4] sm:$0xf]
  %v1724 = vld [vmem:[%s1485 + $0x3b8] sm:$0xf]
  %v1725 = vld [vmem:[%s1485 + $0x3bc] sm:$0xf]
  %v1726 = vld [vmem:[%s1485 + $0x3c0] sm:$0xf]
  %v1727 = vld [vmem:[%s1485 + $0x3c4] sm:$0xf]
  %v1728 = vld [vmem:[%s1485 + $0x3c8] sm:$0xf]
  %v1729 = vld [vmem:[%s1485 + $0x3cc] sm:$0xf]
  %v1730 = vld [vmem:[%s1485 + $0x3d0] sm:$0xf]
  %v1731 = vld [vmem:[%s1485 + $0x3d4] sm:$0xf]
  %v1732 = vld [vmem:[%s1485 + $0x3d8] sm:$0xf]
  %v1733 = vld [vmem:[%s1485 + $0x3dc] sm:$0xf]
  %v1734 = vld [vmem:[%s1485 + $0x3e0] sm:$0xf]
  %v1735 = vld [vmem:[%s1485 + $0x3e4] sm:$0xf]
  %v1736 = vld [vmem:[%s1485 + $0x3e8] sm:$0xf]
  %v1737 = vld [vmem:[%s1485 + $0x3ec] sm:$0xf]
  %v1738 = vld [vmem:[%s1485 + $0x3f0] sm:$0xf]
  %v1739 = vld [vmem:[%s1485 + $0x3f4] sm:$0xf]
  %v1740 = vld [vmem:[%s1485 + $0x3f8] sm:$0xf]
  %v1741 = vld [vmem:[%s1485 + $0x3fc] sm:$0xf]
  %v1998 = vunpack.c.l.b16 %v1486
  %v1999 = vunpack.c.l.b16 %v1487
  %v2000 = vunpack.c.l.b16 %v1488
  %v2001 = vunpack.c.l.b16 %v1489
  %v2002 = vunpack.c.l.b16 %v1490
  %v2003 = vunpack.c.l.b16 %v1491
  %v2004 = vunpack.c.l.b16 %v1492
  %v2005 = vunpack.c.l.b16 %v1493
  %v2006 = vunpack.c.l.b16 %v1494
  %v2007 = vunpack.c.l.b16 %v1495
  %v2008 = vunpack.c.l.b16 %v1496
  %v2009 = vunpack.c.l.b16 %v1497
  %v2010 = vunpack.c.l.b16 %v1498
  %v2011 = vunpack.c.l.b16 %v1499
  %v2012 = vunpack.c.l.b16 %v1500
  %v2013 = vunpack.c.l.b16 %v1501
  %v2014 = vunpack.c.l.b16 %v1502
  %v2015 = vunpack.c.l.b16 %v1503
  %v2016 = vunpack.c.l.b16 %v1504
  %v2017 = vunpack.c.l.b16 %v1505
  %v2018 = vunpack.c.l.b16 %v1506
  %v2019 = vunpack.c.l.b16 %v1507
  %v2020 = vunpack.c.l.b16 %v1508
  %v2021 = vunpack.c.l.b16 %v1509
  %v2022 = vunpack.c.l.b16 %v1510
  %v2023 = vunpack.c.l.b16 %v1511
  %v2024 = vunpack.c.l.b16 %v1512
  %v2025 = vunpack.c.l.b16 %v1513
  %v2026 = vunpack.c.l.b16 %v1514
  %v2027 = vunpack.c.l.b16 %v1515
  %v2028 = vunpack.c.l.b16 %v1516
  %v2029 = vunpack.c.l.b16 %v1517
  %v2030 = vunpack.c.l.b16 %v1518
  %v2031 = vunpack.c.l.b16 %v1519
  %v2032 = vunpack.c.l.b16 %v1520
  %v2033 = vunpack.c.l.b16 %v1521
  %v2034 = vunpack.c.l.b16 %v1522
  %v2035 = vunpack.c.l.b16 %v1523
  %v2036 = vunpack.c.l.b16 %v1524
  %v2037 = vunpack.c.l.b16 %v1525
  %v2038 = vunpack.c.l.b16 %v1526
  %v2039 = vunpack.c.l.b16 %v1527
  %v2040 = vunpack.c.l.b16 %v1528
  %v2041 = vunpack.c.l.b16 %v1529
  %v2042 = vunpack.c.l.b16 %v1530
  %v2043 = vunpack.c.l.b16 %v1531
  %v2044 = vunpack.c.l.b16 %v1532
  %v2045 = vunpack.c.l.b16 %v1533
  %v2046 = vunpack.c.l.b16 %v1534
  %v2047 = vunpack.c.l.b16 %v1535
  %v2048 = vunpack.c.l.b16 %v1536
  %v2049 = vunpack.c.l.b16 %v1537
  %v2050 = vunpack.c.l.b16 %v1538
  %v2051 = vunpack.c.l.b16 %v1539
  %v2052 = vunpack.c.l.b16 %v1540
  %v2053 = vunpack.c.l.b16 %v1541
  %v2054 = vunpack.c.l.b16 %v1542
  %v2055 = vunpack.c.l.b16 %v1543
  %v2056 = vunpack.c.l.b16 %v1544
  %v2057 = vunpack.c.l.b16 %v1545
  %v2058 = vunpack.c.l.b16 %v1546
  %v2059 = vunpack.c.l.b16 %v1547
  %v2060 = vunpack.c.l.b16 %v1548
  %v2061 = vunpack.c.l.b16 %v1549
  %v2062 = vunpack.c.l.b16 %v1550
  %v2063 = vunpack.c.l.b16 %v1551
  %v2064 = vunpack.c.l.b16 %v1552
  %v2065 = vunpack.c.l.b16 %v1553
  %v2066 = vunpack.c.l.b16 %v1554
  %v2067 = vunpack.c.l.b16 %v1555
  %v2068 = vunpack.c.l.b16 %v1556
  %v2069 = vunpack.c.l.b16 %v1557
  %v2070 = vunpack.c.l.b16 %v1558
  %v2071 = vunpack.c.l.b16 %v1559
  %v2072 = vunpack.c.l.b16 %v1560
  %v2073 = vunpack.c.l.b16 %v1561
  %v2074 = vunpack.c.l.b16 %v1562
  %v2075 = vunpack.c.l.b16 %v1563
  %v2076 = vunpack.c.l.b16 %v1564
  %v2077 = vunpack.c.l.b16 %v1565
  %v2078 = vunpack.c.l.b16 %v1566
  %v2079 = vunpack.c.l.b16 %v1567
  %v2080 = vunpack.c.l.b16 %v1568
  %v2081 = vunpack.c.l.b16 %v1569
  %v2082 = vunpack.c.l.b16 %v1570
  %v2083 = vunpack.c.l.b16 %v1571
  %v2084 = vunpack.c.l.b16 %v1572
  %v2085 = vunpack.c.l.b16 %v1573
  %v2086 = vunpack.c.l.b16 %v1574
  %v2087 = vunpack.c.l.b16 %v1575
  %v2088 = vunpack.c.l.b16 %v1576
  %v2089 = vunpack.c.l.b16 %v1577
  %v2090 = vunpack.c.l.b16 %v1578
  %v2091 = vunpack.c.l.b16 %v1579
  %v2092 = vunpack.c.l.b16 %v1580
  %v2093 = vunpack.c.l.b16 %v1581
  %v2094 = vunpack.c.l.b16 %v1582
  %v2095 = vunpack.c.l.b16 %v1583
  %v2096 = vunpack.c.l.b16 %v1584
  %v2097 = vunpack.c.l.b16 %v1585
  %v2098 = vunpack.c.l.b16 %v1586
  %v2099 = vunpack.c.l.b16 %v1587
  %v2100 = vunpack.c.l.b16 %v1588
  %v2101 = vunpack.c.l.b16 %v1589
  %v2102 = vunpack.c.l.b16 %v1590
  %v2103 = vunpack.c.l.b16 %v1591
  %v2104 = vunpack.c.l.b16 %v1592
  %v2105 = vunpack.c.l.b16 %v1593
  %v2106 = vunpack.c.l.b16 %v1594
  %v2107 = vunpack.c.l.b16 %v1595
  %v2108 = vunpack.c.l.b16 %v1596
  %v2109 = vunpack.c.l.b16 %v1597
  %v2110 = vunpack.c.l.b16 %v1598
  %v2111 = vunpack.c.l.b16 %v1599
  %v2112 = vunpack.c.l.b16 %v1600
  %v2113 = vunpack.c.l.b16 %v1601
  %v2114 = vunpack.c.l.b16 %v1602
  %v2115 = vunpack.c.l.b16 %v1603
  %v2116 = vunpack.c.l.b16 %v1604
  %v2117 = vunpack.c.l.b16 %v1605
  %v2118 = vunpack.c.l.b16 %v1606
  %v2119 = vunpack.c.l.b16 %v1607
  %v2120 = vunpack.c.l.b16 %v1608
  %v2121 = vunpack.c.l.b16 %v1609
  %v2122 = vunpack.c.l.b16 %v1610
  %v2123 = vunpack.c.l.b16 %v1611
  %v2124 = vunpack.c.l.b16 %v1612
  %v2125 = vunpack.c.l.b16 %v1613
  %v2126 = vunpack.c.l.b16 %v1614
  %v2127 = vunpack.c.l.b16 %v1615
  %v2128 = vunpack.c.l.b16 %v1616
  %v2129 = vunpack.c.l.b16 %v1617
  %v2130 = vunpack.c.l.b16 %v1618
  %v2131 = vunpack.c.l.b16 %v1619
  %v2132 = vunpack.c.l.b16 %v1620
  %v2133 = vunpack.c.l.b16 %v1621
  %v2134 = vunpack.c.l.b16 %v1622
  %v2135 = vunpack.c.l.b16 %v1623
  %v2136 = vunpack.c.l.b16 %v1624
  %v2137 = vunpack.c.l.b16 %v1625
  %v2138 = vunpack.c.l.b16 %v1626
  %v2139 = vunpack.c.l.b16 %v1627
  %v2140 = vunpack.c.l.b16 %v1628
  %v2141 = vunpack.c.l.b16 %v1629
  %v2142 = vunpack.c.l.b16 %v1630
  %v2143 = vunpack.c.l.b16 %v1631
  %v2144 = vunpack.c.l.b16 %v1632
  %v2145 = vunpack.c.l.b16 %v1633
  %v2146 = vunpack.c.l.b16 %v1634
  %v2147 = vunpack.c.l.b16 %v1635
  %v2148 = vunpack.c.l.b16 %v1636
  %v2149 = vunpack.c.l.b16 %v1637
  %v2150 = vunpack.c.l.b16 %v1638
  %v2151 = vunpack.c.l.b16 %v1639
  %v2152 = vunpack.c.l.b16 %v1640
  %v2153 = vunpack.c.l.b16 %v1641
  %v2154 = vunpack.c.l.b16 %v1642
  %v2155 = vunpack.c.l.b16 %v1643
  %v2156 = vunpack.c.l.b16 %v1644
  %v2157 = vunpack.c.l.b16 %v1645
  %v2158 = vunpack.c.l.b16 %v1646
  %v2159 = vunpack.c.l.b16 %v1647
  %v2160 = vunpack.c.l.b16 %v1648
  %v2161 = vunpack.c.l.b16 %v1649
  %v2162 = vunpack.c.l.b16 %v1650
  %v2163 = vunpack.c.l.b16 %v1651
  %v2164 = vunpack.c.l.b16 %v1652
  %v2165 = vunpack.c.l.b16 %v1653
  %v2166 = vunpack.c.l.b16 %v1654
  %v2167 = vunpack.c.l.b16 %v1655
  %v2168 = vunpack.c.l.b16 %v1656
  %v2169 = vunpack.c.l.b16 %v1657
  %v2170 = vunpack.c.l.b16 %v1658
  %v2171 = vunpack.c.l.b16 %v1659
  %v2172 = vunpack.c.l.b16 %v1660
  %v2173 = vunpack.c.l.b16 %v1661
  %v2174 = vunpack.c.l.b16 %v1662
  %v2175 = vunpack.c.l.b16 %v1663
  %v2176 = vunpack.c.l.b16 %v1664
  %v2177 = vunpack.c.l.b16 %v1665
  %v2178 = vunpack.c.l.b16 %v1666
  %v2179 = vunpack.c.l.b16 %v1667
  %v2180 = vunpack.c.l.b16 %v1668
  %v2181 = vunpack.c.l.b16 %v1669
  %v2182 = vunpack.c.l.b16 %v1670
  %v2183 = vunpack.c.l.b16 %v1671
  %v2184 = vunpack.c.l.b16 %v1672
  %v2185 = vunpack.c.l.b16 %v1673
  %v2186 = vunpack.c.l.b16 %v1674
  %v2187 = vunpack.c.l.b16 %v1675
  %v2188 = vunpack.c.l.b16 %v1676
  %v2189 = vunpack.c.l.b16 %v1677
  %v2190 = vunpack.c.l.b16 %v1678
  %v2191 = vunpack.c.l.b16 %v1679
  %v2192 = vunpack.c.l.b16 %v1680
  %v2193 = vunpack.c.l.b16 %v1681
  %v2194 = vunpack.c.l.b16 %v1682
  %v2195 = vunpack.c.l.b16 %v1683
  %v2196 = vunpack.c.l.b16 %v1684
  %v2197 = vunpack.c.l.b16 %v1685
  %v2198 = vunpack.c.l.b16 %v1686
  %v2199 = vunpack.c.l.b16 %v1687
  %v2200 = vunpack.c.l.b16 %v1688
  %v2201 = vunpack.c.l.b16 %v1689
  %v2202 = vunpack.c.l.b16 %v1690
  %v2203 = vunpack.c.l.b16 %v1691
  %v2204 = vunpack.c.l.b16 %v1692
  %v2205 = vunpack.c.l.b16 %v1693
  %v2206 = vunpack.c.l.b16 %v1694
  %v2207 = vunpack.c.l.b16 %v1695
  %v2208 = vunpack.c.l.b16 %v1696
  %v2209 = vunpack.c.l.b16 %v1697
  %v2210 = vunpack.c.l.b16 %v1698
  %v2211 = vunpack.c.l.b16 %v1699
  %v2212 = vunpack.c.l.b16 %v1700
  %v2213 = vunpack.c.l.b16 %v1701
  %v2214 = vunpack.c.l.b16 %v1702
  %v2215 = vunpack.c.l.b16 %v1703
  %v2216 = vunpack.c.l.b16 %v1704
  %v2217 = vunpack.c.l.b16 %v1705
  %v2218 = vunpack.c.l.b16 %v1706
  %v2219 = vunpack.c.l.b16 %v1707
  %v2220 = vunpack.c.l.b16 %v1708
  %v2221 = vunpack.c.l.b16 %v1709
  %v2222 = vunpack.c.l.b16 %v1710
  %v2223 = vunpack.c.l.b16 %v1711
  %v2224 = vunpack.c.l.b16 %v1712
  %v2225 = vunpack.c.l.b16 %v1713
  %v2226 = vunpack.c.l.b16 %v1714
  %v2227 = vunpack.c.l.b16 %v1715
  %v2228 = vunpack.c.l.b16 %v1716
  %v2229 = vunpack.c.l.b16 %v1717
  %v2230 = vunpack.c.l.b16 %v1718
  %v2231 = vunpack.c.l.b16 %v1719
  %v2232 = vunpack.c.l.b16 %v1720
  %v2233 = vunpack.c.l.b16 %v1721
  %v2234 = vunpack.c.l.b16 %v1722
  %v2235 = vunpack.c.l.b16 %v1723
  %v2236 = vunpack.c.l.b16 %v1724
  %v2237 = vunpack.c.l.b16 %v1725
  %v2238 = vunpack.c.l.b16 %v1726
  %v2239 = vunpack.c.l.b16 %v1727
  %v2240 = vunpack.c.l.b16 %v1728
  %v2241 = vunpack.c.l.b16 %v1729
  %v2242 = vunpack.c.l.b16 %v1730
  %v2243 = vunpack.c.l.b16 %v1731
  %v2244 = vunpack.c.l.b16 %v1732
  %v2245 = vunpack.c.l.b16 %v1733
  %v2246 = vunpack.c.l.b16 %v1734
  %v2247 = vunpack.c.l.b16 %v1735
  %v2248 = vunpack.c.l.b16 %v1736
  %v2249 = vunpack.c.l.b16 %v1737
  %v2250 = vunpack.c.l.b16 %v1738
  %v2251 = vunpack.c.l.b16 %v1739
  %v2252 = vunpack.c.l.b16 %v1740
  %v2253 = vunpack.c.l.b16 %v1741
  %v2254 = vpack.c.b16 %v1999, %v1998
  %v2255 = vpack.c.b16 %v2001, %v2000
  %v2256 = vpack.c.b16 %v2003, %v2002
  %v2257 = vpack.c.b16 %v2005, %v2004
  %v2258 = vpack.c.b16 %v2007, %v2006
  %v2259 = vpack.c.b16 %v2009, %v2008
  %v2260 = vpack.c.b16 %v2011, %v2010
  %v2261 = vpack.c.b16 %v2013, %v2012
  %v2262 = vpack.c.b16 %v2015, %v2014
  %v2263 = vpack.c.b16 %v2017, %v2016
  %v2264 = vpack.c.b16 %v2019, %v2018
  %v2265 = vpack.c.b16 %v2021, %v2020
  %v2266 = vpack.c.b16 %v2023, %v2022
  %v2267 = vpack.c.b16 %v2025, %v2024
  %v2268 = vpack.c.b16 %v2027, %v2026
  %v2269 = vpack.c.b16 %v2029, %v2028
  %v2270 = vpack.c.b16 %v2031, %v2030
  %v2271 = vpack.c.b16 %v2033, %v2032
  %v2272 = vpack.c.b16 %v2035, %v2034
  %v2273 = vpack.c.b16 %v2037, %v2036
  %v2274 = vpack.c.b16 %v2039, %v2038
  %v2275 = vpack.c.b16 %v2041, %v2040
  %v2276 = vpack.c.b16 %v2043, %v2042
  %v2277 = vpack.c.b16 %v2045, %v2044
  %v2278 = vpack.c.b16 %v2047, %v2046
  %v2279 = vpack.c.b16 %v2049, %v2048
  %v2280 = vpack.c.b16 %v2051, %v2050
  %v2281 = vpack.c.b16 %v2053, %v2052
  %v2282 = vpack.c.b16 %v2055, %v2054
  %v2283 = vpack.c.b16 %v2057, %v2056
  %v2284 = vpack.c.b16 %v2059, %v2058
  %v2285 = vpack.c.b16 %v2061, %v2060
  %v2286 = vpack.c.b16 %v2063, %v2062
  %v2287 = vpack.c.b16 %v2065, %v2064
  %v2288 = vpack.c.b16 %v2067, %v2066
  %v2289 = vpack.c.b16 %v2069, %v2068
  %v2290 = vpack.c.b16 %v2071, %v2070
  %v2291 = vpack.c.b16 %v2073, %v2072
  %v2292 = vpack.c.b16 %v2075, %v2074
  %v2293 = vpack.c.b16 %v2077, %v2076
  %v2294 = vpack.c.b16 %v2079, %v2078
  %v2295 = vpack.c.b16 %v2081, %v2080
  %v2296 = vpack.c.b16 %v2083, %v2082
  %v2297 = vpack.c.b16 %v2085, %v2084
  %v2298 = vpack.c.b16 %v2087, %v2086
  %v2299 = vpack.c.b16 %v2089, %v2088
  %v2300 = vpack.c.b16 %v2091, %v2090
  %v2301 = vpack.c.b16 %v2093, %v2092
  %v2302 = vpack.c.b16 %v2095, %v2094
  %v2303 = vpack.c.b16 %v2097, %v2096
  %v2304 = vpack.c.b16 %v2099, %v2098
  %v2305 = vpack.c.b16 %v2101, %v2100
  %v2306 = vpack.c.b16 %v2103, %v2102
  %v2307 = vpack.c.b16 %v2105, %v2104
  %v2308 = vpack.c.b16 %v2107, %v2106
  %v2309 = vpack.c.b16 %v2109, %v2108
  %v2310 = vpack.c.b16 %v2111, %v2110
  %v2311 = vpack.c.b16 %v2113, %v2112
  %v2312 = vpack.c.b16 %v2115, %v2114
  %v2313 = vpack.c.b16 %v2117, %v2116
  %v2314 = vpack.c.b16 %v2119, %v2118
  %v2315 = vpack.c.b16 %v2121, %v2120
  %v2316 = vpack.c.b16 %v2123, %v2122
  %v2317 = vpack.c.b16 %v2125, %v2124
  %v2318 = vpack.c.b16 %v2127, %v2126
  %v2319 = vpack.c.b16 %v2129, %v2128
  %v2320 = vpack.c.b16 %v2131, %v2130
  %v2321 = vpack.c.b16 %v2133, %v2132
  %v2322 = vpack.c.b16 %v2135, %v2134
  %v2323 = vpack.c.b16 %v2137, %v2136
  %v2324 = vpack.c.b16 %v2139, %v2138
  %v2325 = vpack.c.b16 %v2141, %v2140
  %v2326 = vpack.c.b16 %v2143, %v2142
  %v2327 = vpack.c.b16 %v2145, %v2144
  %v2328 = vpack.c.b16 %v2147, %v2146
  %v2329 = vpack.c.b16 %v2149, %v2148
  %v2330 = vpack.c.b16 %v2151, %v2150
  %v2331 = vpack.c.b16 %v2153, %v2152
  %v2332 = vpack.c.b16 %v2155, %v2154
  %v2333 = vpack.c.b16 %v2157, %v2156
  %v2334 = vpack.c.b16 %v2159, %v2158
  %v2335 = vpack.c.b16 %v2161, %v2160
  %v2336 = vpack.c.b16 %v2163, %v2162
  %v2337 = vpack.c.b16 %v2165, %v2164
  %v2338 = vpack.c.b16 %v2167, %v2166
  %v2339 = vpack.c.b16 %v2169, %v2168
  %v2340 = vpack.c.b16 %v2171, %v2170
  %v2341 = vpack.c.b16 %v2173, %v2172
  %v2342 = vpack.c.b16 %v2175, %v2174
  %v2343 = vpack.c.b16 %v2177, %v2176
  %v2344 = vpack.c.b16 %v2179, %v2178
  %v2345 = vpack.c.b16 %v2181, %v2180
  %v2346 = vpack.c.b16 %v2183, %v2182
  %v2347 = vpack.c.b16 %v2185, %v2184
  %v2348 = vpack.c.b16 %v2187, %v2186
  %v2349 = vpack.c.b16 %v2189, %v2188
  %v2350 = vpack.c.b16 %v2191, %v2190
  %v2351 = vpack.c.b16 %v2193, %v2192
  %v2352 = vpack.c.b16 %v2195, %v2194
  %v2353 = vpack.c.b16 %v2197, %v2196
  %v2354 = vpack.c.b16 %v2199, %v2198
  %v2355 = vpack.c.b16 %v2201, %v2200
  %v2356 = vpack.c.b16 %v2203, %v2202
  %v2357 = vpack.c.b16 %v2205, %v2204
  %v2358 = vpack.c.b16 %v2207, %v2206
  %v2359 = vpack.c.b16 %v2209, %v2208
  %v2360 = vpack.c.b16 %v2211, %v2210
  %v2361 = vpack.c.b16 %v2213, %v2212
  %v2362 = vpack.c.b16 %v2215, %v2214
  %v2363 = vpack.c.b16 %v2217, %v2216
  %v2364 = vpack.c.b16 %v2219, %v2218
  %v2365 = vpack.c.b16 %v2221, %v2220
  %v2366 = vpack.c.b16 %v2223, %v2222
  %v2367 = vpack.c.b16 %v2225, %v2224
  %v2368 = vpack.c.b16 %v2227, %v2226
  %v2369 = vpack.c.b16 %v2229, %v2228
  %v2370 = vpack.c.b16 %v2231, %v2230
  %v2371 = vpack.c.b16 %v2233, %v2232
  %v2372 = vpack.c.b16 %v2235, %v2234
  %v2373 = vpack.c.b16 %v2237, %v2236
  %v2374 = vpack.c.b16 %v2239, %v2238
  %v2375 = vpack.c.b16 %v2241, %v2240
  %v2376 = vpack.c.b16 %v2243, %v2242
  %v2377 = vpack.c.b16 %v2245, %v2244
  %v2378 = vpack.c.b16 %v2247, %v2246
  %v2379 = vpack.c.b16 %v2249, %v2248
  %v2380 = vpack.c.b16 %v2251, %v2250
  %v2381 = vpack.c.b16 %v2253, %v2252
  %2510 = vmatprep.subr.bf16.mxu0 0
  %2511 = vmatpush1.bf16.msra.mxu0 %v2254
  %2512 = vmatprep.subr.bf16.mxu0 0
  %2513 = vmatpush1.bf16.msra.mxu0 %v2255
  %2514 = vmatprep.subr.bf16.mxu0 0
  %2515 = vmatpush1.bf16.msra.mxu0 %v2256
  %2516 = vmatprep.subr.bf16.mxu0 0
  %2517 = vmatpush1.bf16.msra.mxu0 %v2257
  %2518 = vmatprep.subr.bf16.mxu0 0
  %2519 = vmatpush1.bf16.msra.mxu0 %v2258
  %2520 = vmatprep.subr.bf16.mxu0 0
  %2521 = vmatpush1.bf16.msra.mxu0 %v2259
  %2522 = vmatprep.subr.bf16.mxu0 0
  %2523 = vmatpush1.bf16.msra.mxu0 %v2260
  %2524 = vmatprep.subr.bf16.mxu0 0
  %2525 = vmatpush1.bf16.msra.mxu0 %v2261
  %2526 = vmatprep.subr.bf16.mxu0 0
  %2527 = vmatpush1.bf16.msra.mxu0 %v2262
  %2528 = vmatprep.subr.bf16.mxu0 0
  %2529 = vmatpush1.bf16.msra.mxu0 %v2263
  %2530 = vmatprep.subr.bf16.mxu0 0
  %2531 = vmatpush1.bf16.msra.mxu0 %v2264
  %2532 = vmatprep.subr.bf16.mxu0 0
  %2533 = vmatpush1.bf16.msra.mxu0 %v2265
  %2534 = vmatprep.subr.bf16.mxu0 0
  %2535 = vmatpush1.bf16.msra.mxu0 %v2266
  %2536 = vmatprep.subr.bf16.mxu0 0
  %2537 = vmatpush1.bf16.msra.mxu0 %v2267
  %2538 = vmatprep.subr.bf16.mxu0 0
  %2539 = vmatpush1.bf16.msra.mxu0 %v2268
  %2540 = vmatprep.subr.bf16.mxu0 0
  %2541 = vmatpush1.bf16.msra.mxu0 %v2269
  %2542 = vmatprep.mubr.bf16.mxu0 %v319
  %2543 = vmatmul.mubr.bf16.gmra.mrb[0].mxu0 %v305
  %v2544 = vpop.f32.mrb[0].mxu0
  %v2545 = vadd.f32 %v278, %v2544
  %v2546 = vpop.f32.mrb[0].mxu0
  %v2547 = vpop.f32.mrb[0].mxu0
  %v2548 = vpop.f32.mrb[0].mxu0
  %2549 = vdwg.mxu0
  %2550 = vmatprep.subr.bf16.mxu0 0
  %2551 = vmatpush1.bf16.msra.mxu0 %v2270
  %2552 = vmatprep.subr.bf16.mxu0 0
  %2553 = vmatpush1.bf16.msra.mxu0 %v2271
  %2554 = vmatprep.subr.bf16.mxu0 0
  %2555 = vmatpush1.bf16.msra.mxu0 %v2272
  %2556 = vmatprep.subr.bf16.mxu0 0
  %2557 = vmatpush1.bf16.msra.mxu0 %v2273
  %2558 = vmatprep.subr.bf16.mxu0 0
  %2559 = vmatpush1.bf16.msra.mxu0 %v2274
  %2560 = vmatprep.subr.bf16.mxu0 0
  %2561 = vmatpush1.bf16.msra.mxu0 %v2275
  %2562 = vmatprep.subr.bf16.mxu0 0
  %2563 = vmatpush1.bf16.msra.mxu0 %v2276
  %2564 = vmatprep.subr.bf16.mxu0 0
  %2565 = vmatpush1.bf16.msra.mxu0 %v2277
  %2566 = vmatprep.subr.bf16.mxu0 0
  %2567 = vmatpush1.bf16.msra.mxu0 %v2278
  %2568 = vmatprep.subr.bf16.mxu0 0
  %2569 = vmatpush1.bf16.msra.mxu0 %v2279
  %2570 = vmatprep.subr.bf16.mxu0 0
  %2571 = vmatpush1.bf16.msra.mxu0 %v2280
  %2572 = vmatprep.subr.bf16.mxu0 0
  %2573 = vmatpush1.bf16.msra.mxu0 %v2281
  %2574 = vmatprep.subr.bf16.mxu0 0
  %2575 = vmatpush1.bf16.msra.mxu0 %v2282
  %2576 = vmatprep.subr.bf16.mxu0 0
  %2577 = vmatpush1.bf16.msra.mxu0 %v2283
  %2578 = vmatprep.subr.bf16.mxu0 0
  %2579 = vmatpush1.bf16.msra.mxu0 %v2284
  %2580 = vmatprep.subr.bf16.mxu0 0
  %2581 = vmatpush1.bf16.msra.mxu0 %v2285
  %2582 = vmatprep.mubr.bf16.mxu0 %v329
  %2583 = vmatmul.mubr.bf16.gmra.mrb[0].mxu0 %v327
  %v2584 = vpop.f32.mrb[0].mxu0
  %v2585 = vadd.f32 %v2545, %v2584
  %v2586 = vpop.f32.mrb[0].mxu0
  %v2587 = vpop.f32.mrb[0].mxu0
  %v2588 = vpop.f32.mrb[0].mxu0
  %2589 = vdwg.mxu0
  %2590 = vmatprep.subr.bf16.mxu0 0
  %2591 = vmatpush1.bf16.msra.mxu0 %v2286
  %2592 = vmatprep.subr.bf16.mxu0 0
  %2593 = vmatpush1.bf16.msra.mxu0 %v2287
  %2594 = vmatprep.subr.bf16.mxu0 0
  %2595 = vmatpush1.bf16.msra.mxu0 %v2288
  %2596 = vmatprep.subr.bf16.mxu0 0
  %2597 = vmatpush1.bf16.msra.mxu0 %v2289
  %2598 = vmatprep.subr.bf16.mxu0 0
  %2599 = vmatpush1.bf16.msra.mxu0 %v2290
  %2600 = vmatprep.subr.bf16.mxu0 0
  %2601 = vmatpush1.bf16.msra.mxu0 %v2291
  %2602 = vmatprep.subr.bf16.mxu0 0
  %2603 = vmatpush1.bf16.msra.mxu0 %v2292
  %2604 = vmatprep.subr.bf16.mxu0 0
  %2605 = vmatpush1.bf16.msra.mxu0 %v2293
  %2606 = vmatprep.subr.bf16.mxu0 0
  %2607 = vmatpush1.bf16.msra.mxu0 %v2294
  %2608 = vmatprep.subr.bf16.mxu0 0
  %2609 = vmatpush1.bf16.msra.mxu0 %v2295
  %2610 = vmatprep.subr.bf16.mxu0 0
  %2611 = vmatpush1.bf16.msra.mxu0 %v2296
  %2612 = vmatprep.subr.bf16.mxu0 0
  %2613 = vmatpush1.bf16.msra.mxu0 %v2297
  %2614 = vmatprep.subr.bf16.mxu0 0
  %2615 = vmatpush1.bf16.msra.mxu0 %v2298
  %2616 = vmatprep.subr.bf16.mxu0 0
  %2617 = vmatpush1.bf16.msra.mxu0 %v2299
  %2618 = vmatprep.subr.bf16.mxu0 0
  %2619 = vmatpush1.bf16.msra.mxu0 %v2300
  %2620 = vmatprep.subr.bf16.mxu0 0
  %2621 = vmatpush1.bf16.msra.mxu0 %v2301
  %2622 = vmatprep.mubr.bf16.mxu0 %v326
  %2623 = vmatmul.mubr.bf16.gmra.mrb[0].mxu0 %v312
  %v2624 = vpop.f32.mrb[0].mxu0
  %v2625 = vadd.f32 %v2585, %v2624
  %v2626 = vpop.f32.mrb[0].mxu0
  %v2627 = vpop.f32.mrb[0].mxu0
  %v2628 = vpop.f32.mrb[0].mxu0
  %2629 = vdwg.mxu0
  %2630 = vmatprep.subr.bf16.mxu0 0
  %2631 = vmatpush1.bf16.msra.mxu0 %v2302
  %2632 = vmatprep.subr.bf16.mxu0 0
  %2633 = vmatpush1.bf16.msra.mxu0 %v2303
  %2634 = vmatprep.subr.bf16.mxu0 0
  %2635 = vmatpush1.bf16.msra.mxu0 %v2304
  %2636 = vmatprep.subr.bf16.mxu0 0
  %2637 = vmatpush1.bf16.msra.mxu0 %v2305
  %2638 = vmatprep.subr.bf16.mxu0 0
  %2639 = vmatpush1.bf16.msra.mxu0 %v2306
  %2640 = vmatprep.subr.bf16.mxu0 0
  %2641 = vmatpush1.bf16.msra.mxu0 %v2307
  %2642 = vmatprep.subr.bf16.mxu0 0
  %2643 = vmatpush1.bf16.msra.mxu0 %v2308
  %2644 = vmatprep.subr.bf16.mxu0 0
  %2645 = vmatpush1.bf16.msra.mxu0 %v2309
  %2646 = vmatprep.subr.bf16.mxu0 0
  %2647 = vmatpush1.bf16.msra.mxu0 %v2310
  %2648 = vmatprep.subr.bf16.mxu0 0
  %2649 = vmatpush1.bf16.msra.mxu0 %v2311
  %2650 = vmatprep.subr.bf16.mxu0 0
  %2651 = vmatpush1.bf16.msra.mxu0 %v2312
  %2652 = vmatprep.subr.bf16.mxu0 0
  %2653 = vmatpush1.bf16.msra.mxu0 %v2313
  %2654 = vmatprep.subr.bf16.mxu0 0
  %2655 = vmatpush1.bf16.msra.mxu0 %v2314
  %2656 = vmatprep.subr.bf16.mxu0 0
  %2657 = vmatpush1.bf16.msra.mxu0 %v2315
  %2658 = vmatprep.subr.bf16.mxu0 0
  %2659 = vmatpush1.bf16.msra.mxu0 %v2316
  %2660 = vmatprep.subr.bf16.mxu0 0
  %2661 = vmatpush1.bf16.msra.mxu0 %v2317
  %2662 = vmatprep.mubr.bf16.mxu0 %v330
  %2663 = vmatmul.mubr.bf16.gmra.mrb[0].mxu0 %v328
  %v2664 = vpop.f32.mrb[0].mxu0
  %v2665 = vadd.f32 %v2625, %v2664
  %v2666 = vpop.f32.mrb[0].mxu0
  %v2667 = vpop.f32.mrb[0].mxu0
  %v2668 = vpop.f32.mrb[0].mxu0
  %2669 = vdwg.mxu0
  %2670 = vmatprep.subr.bf16.mxu0 0
  %2671 = vmatpush1.bf16.msra.mxu0 %v2318
  %2672 = vmatprep.subr.bf16.mxu0 0
  %2673 = vmatpush1.bf16.msra.mxu0 %v2319
  %2674 = vmatprep.subr.bf16.mxu0 0
  %2675 = vmatpush1.bf16.msra.mxu0 %v2320
  %2676 = vmatprep.subr.bf16.mxu0 0
  %2677 = vmatpush1.bf16.msra.mxu0 %v2321
  %2678 = vmatprep.subr.bf16.mxu0 0
  %2679 = vmatpush1.bf16.msra.mxu0 %v2322
  %2680 = vmatprep.subr.bf16.mxu0 0
  %2681 = vmatpush1.bf16.msra.mxu0 %v2323
  %2682 = vmatprep.subr.bf16.mxu0 0
  %2683 = vmatpush1.bf16.msra.mxu0 %v2324
  %2684 = vmatprep.subr.bf16.mxu0 0
  %2685 = vmatpush1.bf16.msra.mxu0 %v2325
  %2686 = vmatprep.subr.bf16.mxu0 0
  %2687 = vmatpush1.bf16.msra.mxu0 %v2326
  %2688 = vmatprep.subr.bf16.mxu0 0
  %2689 = vmatpush1.bf16.msra.mxu0 %v2327
  %2690 = vmatprep.subr.bf16.mxu0 0
  %2691 = vmatpush1.bf16.msra.mxu0 %v2328
  %2692 = vmatprep.subr.bf16.mxu0 0
  %2693 = vmatpush1.bf16.msra.mxu0 %v2329
  %2694 = vmatprep.subr.bf16.mxu0 0
  %2695 = vmatpush1.bf16.msra.mxu0 %v2330
  %2696 = vmatprep.subr.bf16.mxu0 0
  %2697 = vmatpush1.bf16.msra.mxu0 %v2331
  %2698 = vmatprep.subr.bf16.mxu0 0
  %2699 = vmatpush1.bf16.msra.mxu0 %v2332
  %2700 = vmatprep.subr.bf16.mxu0 0
  %2701 = vmatpush1.bf16.msra.mxu0 %v2333
  %2702 = vmatprep.mubr.bf16.mxu0 %v368
  %2703 = vmatmul.mubr.bf16.gmra.mrb[0].mxu0 %v354
  %v2704 = vpop.f32.mrb[0].mxu0
  %v2705 = vadd.f32 %v2665, %v2704
  %v2706 = vpop.f32.mrb[0].mxu0
  %v2707 = vpop.f32.mrb[0].mxu0
  %v2708 = vpop.f32.mrb[0].mxu0
  %2709 = vdwg.mxu0
  %2710 = vmatprep.subr.bf16.mxu0 0
  %2711 = vmatpush1.bf16.msra.mxu0 %v2334
  %2712 = vmatprep.subr.bf16.mxu0 0
  %2713 = vmatpush1.bf16.msra.mxu0 %v2335
  %2714 = vmatprep.subr.bf16.mxu0 0
  %2715 = vmatpush1.bf16.msra.mxu0 %v2336
  %2716 = vmatprep.subr.bf16.mxu0 0
  %2717 = vmatpush1.bf16.msra.mxu0 %v2337
  %2718 = vmatprep.subr.bf16.mxu0 0
  %2719 = vmatpush1.bf16.msra.mxu0 %v2338
  %2720 = vmatprep.subr.bf16.mxu0 0
  %2721 = vmatpush1.bf16.msra.mxu0 %v2339
  %2722 = vmatprep.subr.bf16.mxu0 0
  %2723 = vmatpush1.bf16.msra.mxu0 %v2340
  %2724 = vmatprep.subr.bf16.mxu0 0
  %2725 = vmatpush1.bf16.msra.mxu0 %v2341
  %2726 = vmatprep.subr.bf16.mxu0 0
  %2727 = vmatpush1.bf16.msra.mxu0 %v2342
  %2728 = vmatprep.subr.bf16.mxu0 0
  %2729 = vmatpush1.bf16.msra.mxu0 %v2343
  %2730 = vmatprep.subr.bf16.mxu0 0
  %2731 = vmatpush1.bf16.msra.mxu0 %v2344
  %2732 = vmatprep.subr.bf16.mxu0 0
  %2733 = vmatpush1.bf16.msra.mxu0 %v2345
  %2734 = vmatprep.subr.bf16.mxu0 0
  %2735 = vmatpush1.bf16.msra.mxu0 %v2346
  %2736 = vmatprep.subr.bf16.mxu0 0
  %2737 = vmatpush1.bf16.msra.mxu0 %v2347
  %2738 = vmatprep.subr.bf16.mxu0 0
  %2739 = vmatpush1.bf16.msra.mxu0 %v2348
  %2740 = vmatprep.subr.bf16.mxu0 0
  %2741 = vmatpush1.bf16.msra.mxu0 %v2349
  %2742 = vmatprep.mubr.bf16.mxu0 %v378
  %2743 = vmatmul.mubr.bf16.gmra.mrb[0].mxu0 %v376
  %v2744 = vpop.f32.mrb[0].mxu0
  %v2745 = vadd.f32 %v2705, %v2744
  %v2746 = vpop.f32.mrb[0].mxu0
  %v2747 = vpop.f32.mrb[0].mxu0
  %v2748 = vpop.f32.mrb[0].mxu0
  %2749 = vdwg.mxu0
  %2750 = vmatprep.subr.bf16.mxu0 0
  %2751 = vmatpush1.bf16.msra.mxu0 %v2350
  %2752 = vmatprep.subr.bf16.mxu0 0
  %2753 = vmatpush1.bf16.msra.mxu0 %v2351
  %2754 = vmatprep.subr.bf16.mxu0 0
  %2755 = vmatpush1.bf16.msra.mxu0 %v2352
  %2756 = vmatprep.subr.bf16.mxu0 0
  %2757 = vmatpush1.bf16.msra.mxu0 %v2353
  %2758 = vmatprep.subr.bf16.mxu0 0
  %2759 = vmatpush1.bf16.msra.mxu0 %v2354
  %2760 = vmatprep.subr.bf16.mxu0 0
  %2761 = vmatpush1.bf16.msra.mxu0 %v2355
  %2762 = vmatprep.subr.bf16.mxu0 0
  %2763 = vmatpush1.bf16.msra.mxu0 %v2356
  %2764 = vmatprep.subr.bf16.mxu0 0
  %2765 = vmatpush1.bf16.msra.mxu0 %v2357
  %2766 = vmatprep.subr.bf16.mxu0 0
  %2767 = vmatpush1.bf16.msra.mxu0 %v2358
  %2768 = vmatprep.subr.bf16.mxu0 0
  %2769 = vmatpush1.bf16.msra.mxu0 %v2359
  %2770 = vmatprep.subr.bf16.mxu0 0
  %2771 = vmatpush1.bf16.msra.mxu0 %v2360
  %2772 = vmatprep.subr.bf16.mxu0 0
  %2773 = vmatpush1.bf16.msra.mxu0 %v2361
  %2774 = vmatprep.subr.bf16.mxu0 0
  %2775 = vmatpush1.bf16.msra.mxu0 %v2362
  %2776 = vmatprep.subr.bf16.mxu0 0
  %2777 = vmatpush1.bf16.msra.mxu0 %v2363
  %2778 = vmatprep.subr.bf16.mxu0 0
  %2779 = vmatpush1.bf16.msra.mxu0 %v2364
  %2780 = vmatprep.subr.bf16.mxu0 0
  %2781 = vmatpush1.bf16.msra.mxu0 %v2365
  %2782 = vmatprep.mubr.bf16.mxu0 %v375
  %2783 = vmatmul.mubr.bf16.gmra.mrb[0].mxu0 %v361
  %v2784 = vpop.f32.mrb[0].mxu0
  %v2785 = vadd.f32 %v2745, %v2784
  %v2786 = vpop.f32.mrb[0].mxu0
  %v2787 = vpop.f32.mrb[0].mxu0
  %v2788 = vpop.f32.mrb[0].mxu0
  %2789 = vdwg.mxu0
  %2790 = vmatprep.subr.bf16.mxu0 0
  %2791 = vmatpush1.bf16.msra.mxu0 %v2366
  %2792 = vmatprep.subr.bf16.mxu0 0
  %2793 = vmatpush1.bf16.msra.mxu0 %v2367
  %2794 = vmatprep.subr.bf16.mxu0 0
  %2795 = vmatpush1.bf16.msra.mxu0 %v2368
  %2796 = vmatprep.subr.bf16.mxu0 0
  %2797 = vmatpush1.bf16.msra.mxu0 %v2369
  %2798 = vmatprep.subr.bf16.mxu0 0
  %2799 = vmatpush1.bf16.msra.mxu0 %v2370
  %2800 = vmatprep.subr.bf16.mxu0 0
  %2801 = vmatpush1.bf16.msra.mxu0 %v2371
  %2802 = vmatprep.subr.bf16.mxu0 0
  %2803 = vmatpush1.bf16.msra.mxu0 %v2372
  %2804 = vmatprep.subr.bf16.mxu0 0
  %2805 = vmatpush1.bf16.msra.mxu0 %v2373
  %2806 = vmatprep.subr.bf16.mxu0 0
  %2807 = vmatpush1.bf16.msra.mxu0 %v2374
  %2808 = vmatprep.subr.bf16.mxu0 0
  %2809 = vmatpush1.bf16.msra.mxu0 %v2375
  %2810 = vmatprep.subr.bf16.mxu0 0
  %2811 = vmatpush1.bf16.msra.mxu0 %v2376
  %2812 = vmatprep.subr.bf16.mxu0 0
  %2813 = vmatpush1.bf16.msra.mxu0 %v2377
  %2814 = vmatprep.subr.bf16.mxu0 0
  %2815 = vmatpush1.bf16.msra.mxu0 %v2378
  %2816 = vmatprep.subr.bf16.mxu0 0
  %2817 = vmatpush1.bf16.msra.mxu0 %v2379
  %2818 = vmatprep.subr.bf16.mxu0 0
  %2819 = vmatpush1.bf16.msra.mxu0 %v2380
  %2820 = vmatprep.subr.bf16.mxu0 0
  %2821 = vmatpush1.bf16.msra.mxu0 %v2381
  %2822 = vmatprep.mubr.bf16.mxu0 %v379
  %2823 = vmatmul.mubr.bf16.gmra.mrb[0].mxu0 %v377
  %v2824 = vpop.f32.mrb[0].mxu0
  %v2825 = vadd.f32 %v2785, %v2824
  %v2826 = vpop.f32.mrb[0].mxu0
  %v2827 = vpop.f32.mrb[0].mxu0
  %v2828 = vpop.f32.mrb[0].mxu0
  %2829 = vdwg.mxu0
  %v2830 = vmax.f32 %v2825, 0.0
  %v2831 = vmax.f32 %v1484, %v2830
  %s2832 = scalar_lea.vmem %s1, 2048
  %v2833 = vld [vmem:[%s2832] sm:$0xf]
  %v2834 = vld [vmem:[%s2832 + $0x4] sm:$0xf]
  %v2835 = vld [vmem:[%s2832 + $0x8] sm:$0xf]
  %v2836 = vld [vmem:[%s2832 + $0xc] sm:$0xf]
  %v2837 = vld [vmem:[%s2832 + $0x10] sm:$0xf]
  %v2838 = vld [vmem:[%s2832 + $0x14] sm:$0xf]
  %v2839 = vld [vmem:[%s2832 + $0x18] sm:$0xf]
  %v2840 = vld [vmem:[%s2832 + $0x1c] sm:$0xf]
  %v2841 = vld [vmem:[%s2832 + $0x20] sm:$0xf]
  %v2842 = vld [vmem:[%s2832 + $0x24] sm:$0xf]
  %v2843 = vld [vmem:[%s2832 + $0x28] sm:$0xf]
  %v2844 = vld [vmem:[%s2832 + $0x2c] sm:$0xf]
  %v2845 = vld [vmem:[%s2832 + $0x30] sm:$0xf]
  %v2846 = vld [vmem:[%s2832 + $0x34] sm:$0xf]
  %v2847 = vld [vmem:[%s2832 + $0x38] sm:$0xf]
  %v2848 = vld [vmem:[%s2832 + $0x3c] sm:$0xf]
  %v2849 = vld [vmem:[%s2832 + $0x40] sm:$0xf]
  %v2850 = vld [vmem:[%s2832 + $0x44] sm:$0xf]
  %v2851 = vld [vmem:[%s2832 + $0x48] sm:$0xf]
  %v2852 = vld [vmem:[%s2832 + $0x4c] sm:$0xf]
  %v2853 = vld [vmem:[%s2832 + $0x50] sm:$0xf]
  %v2854 = vld [vmem:[%s2832 + $0x54] sm:$0xf]
  %v2855 = vld [vmem:[%s2832 + $0x58] sm:$0xf]
  %v2856 = vld [vmem:[%s2832 + $0x5c] sm:$0xf]
  %v2857 = vld [vmem:[%s2832 + $0x60] sm:$0xf]
  %v2858 = vld [vmem:[%s2832 + $0x64] sm:$0xf]
  %v2859 = vld [vmem:[%s2832 + $0x68] sm:$0xf]
  %v2860 = vld [vmem:[%s2832 + $0x6c] sm:$0xf]
  %v2861 = vld [vmem:[%s2832 + $0x70] sm:$0xf]
  %v2862 = vld [vmem:[%s2832 + $0x74] sm:$0xf]
  %v2863 = vld [vmem:[%s2832 + $0x78] sm:$0xf]
  %v2864 = vld [vmem:[%s2832 + $0x7c] sm:$0xf]
  %v2865 = vld [vmem:[%s2832 + $0x80] sm:$0xf]
  %v2866 = vld [vmem:[%s2832 + $0x84] sm:$0xf]
  %v2867 = vld [vmem:[%s2832 + $0x88] sm:$0xf]
  %v2868 = vld [vmem:[%s2832 + $0x8c] sm:$0xf]
  %v2869 = vld [vmem:[%s2832 + $0x90] sm:$0xf]
  %v2870 = vld [vmem:[%s2832 + $0x94] sm:$0xf]
  %v2871 = vld [vmem:[%s2832 + $0x98] sm:$0xf]
  %v2872 = vld [vmem:[%s2832 + $0x9c] sm:$0xf]
  %v2873 = vld [vmem:[%s2832 + $0xa0] sm:$0xf]
  %v2874 = vld [vmem:[%s2832 + $0xa4] sm:$0xf]
  %v2875 = vld [vmem:[%s2832 + $0xa8] sm:$0xf]
  %v2876 = vld [vmem:[%s2832 + $0xac] sm:$0xf]
  %v2877 = vld [vmem:[%s2832 + $0xb0] sm:$0xf]
  %v2878 = vld [vmem:[%s2832 + $0xb4] sm:$0xf]
  %v2879 = vld [vmem:[%s2832 + $0xb8] sm:$0xf]
  %v2880 = vld [vmem:[%s2832 + $0xbc] sm:$0xf]
  %v2881 = vld [vmem:[%s2832 + $0xc0] sm:$0xf]
  %v2882 = vld [vmem:[%s2832 + $0xc4] sm:$0xf]
  %v2883 = vld [vmem:[%s2832 + $0xc8] sm:$0xf]
  %v2884 = vld [vmem:[%s2832 + $0xcc] sm:$0xf]
  %v2885 = vld [vmem:[%s2832 + $0xd0] sm:$0xf]
  %v2886 = vld [vmem:[%s2832 + $0xd4] sm:$0xf]
  %v2887 = vld [vmem:[%s2832 + $0xd8] sm:$0xf]
  %v2888 = vld [vmem:[%s2832 + $0xdc] sm:$0xf]
  %v2889 = vld [vmem:[%s2832 + $0xe0] sm:$0xf]
  %v2890 = vld [vmem:[%s2832 + $0xe4] sm:$0xf]
  %v2891 = vld [vmem:[%s2832 + $0xe8] sm:$0xf]
  %v2892 = vld [vmem:[%s2832 + $0xec] sm:$0xf]
  %v2893 = vld [vmem:[%s2832 + $0xf0] sm:$0xf]
  %v2894 = vld [vmem:[%s2832 + $0xf4] sm:$0xf]
  %v2895 = vld [vmem:[%s2832 + $0xf8] sm:$0xf]
  %v2896 = vld [vmem:[%s2832 + $0xfc] sm:$0xf]
  %v2897 = vld [vmem:[%s2832 + $0x100] sm:$0xf]
  %v2898 = vld [vmem:[%s2832 + $0x104] sm:$0xf]
  %v2899 = vld [vmem:[%s2832 + $0x108] sm:$0xf]
  %v2900 = vld [vmem:[%s2832 + $0x10c] sm:$0xf]
  %v2901 = vld [vmem:[%s2832 + $0x110] sm:$0xf]
  %v2902 = vld [vmem:[%s2832 + $0x114] sm:$0xf]
  %v2903 = vld [vmem:[%s2832 + $0x118] sm:$0xf]
  %v2904 = vld [vmem:[%s2832 + $0x11c] sm:$0xf]
  %v2905 = vld [vmem:[%s2832 + $0x120] sm:$0xf]
  %v2906 = vld [vmem:[%s2832 + $0x124] sm:$0xf]
  %v2907 = vld [vmem:[%s2832 + $0x128] sm:$0xf]
  %v2908 = vld [vmem:[%s2832 + $0x12c] sm:$0xf]
  %v2909 = vld [vmem:[%s2832 + $0x130] sm:$0xf]
  %v2910 = vld [vmem:[%s2832 + $0x134] sm:$0xf]
  %v2911 = vld [vmem:[%s2832 + $0x138] sm:$0xf]
  %v2912 = vld [vmem:[%s2832 + $0x13c] sm:$0xf]
  %v2913 = vld [vmem:[%s2832 + $0x140] sm:$0xf]
  %v2914 = vld [vmem:[%s2832 + $0x144] sm:$0xf]
  %v2915 = vld [vmem:[%s2832 + $0x148] sm:$0xf]
  %v2916 = vld [vmem:[%s2832 + $0x14c] sm:$0xf]
  %v2917 = vld [vmem:[%s2832 + $0x150] sm:$0xf]
  %v2918 = vld [vmem:[%s2832 + $0x154] sm:$0xf]
  %v2919 = vld [vmem:[%s2832 + $0x158] sm:$0xf]
  %v2920 = vld [vmem:[%s2832 + $0x15c] sm:$0xf]
  %v2921 = vld [vmem:[%s2832 + $0x160] sm:$0xf]
  %v2922 = vld [vmem:[%s2832 + $0x164] sm:$0xf]
  %v2923 = vld [vmem:[%s2832 + $0x168] sm:$0xf]
  %v2924 = vld [vmem:[%s2832 + $0x16c] sm:$0xf]
  %v2925 = vld [vmem:[%s2832 + $0x170] sm:$0xf]
  %v2926 = vld [vmem:[%s2832 + $0x174] sm:$0xf]
  %v2927 = vld [vmem:[%s2832 + $0x178] sm:$0xf]
  %v2928 = vld [vmem:[%s2832 + $0x17c] sm:$0xf]
  %v2929 = vld [vmem:[%s2832 + $0x180] sm:$0xf]
  %v2930 = vld [vmem:[%s2832 + $0x184] sm:$0xf]
  %v2931 = vld [vmem:[%s2832 + $0x188] sm:$0xf]
  %v2932 = vld [vmem:[%s2832 + $0x18c] sm:$0xf]
  %v2933 = vld [vmem:[%s2832 + $0x190] sm:$0xf]
  %v2934 = vld [vmem:[%s2832 + $0x194] sm:$0xf]
  %v2935 = vld [vmem:[%s2832 + $0x198] sm:$0xf]
  %v2936 = vld [vmem:[%s2832 + $0x19c] sm:$0xf]
  %v2937 = vld [vmem:[%s2832 + $0x1a0] sm:$0xf]
  %v2938 = vld [vmem:[%s2832 + $0x1a4] sm:$0xf]
  %v2939 = vld [vmem:[%s2832 + $0x1a8] sm:$0xf]
  %v2940 = vld [vmem:[%s2832 + $0x1ac] sm:$0xf]
  %v2941 = vld [vmem:[%s2832 + $0x1b0] sm:$0xf]
  %v2942 = vld [vmem:[%s2832 + $0x1b4] sm:$0xf]
  %v2943 = vld [vmem:[%s2832 + $0x1b8] sm:$0xf]
  %v2944 = vld [vmem:[%s2832 + $0x1bc] sm:$0xf]
  %v2945 = vld [vmem:[%s2832 + $0x1c0] sm:$0xf]
  %v2946 = vld [vmem:[%s2832 + $0x1c4] sm:$0xf]
  %v2947 = vld [vmem:[%s2832 + $0x1c8] sm:$0xf]
  %v2948 = vld [vmem:[%s2832 + $0x1cc] sm:$0xf]
  %v2949 = vld [vmem:[%s2832 + $0x1d0] sm:$0xf]
  %v2950 = vld [vmem:[%s2832 + $0x1d4] sm:$0xf]
  %v2951 = vld [vmem:[%s2832 + $0x1d8] sm:$0xf]
  %v2952 = vld [vmem:[%s2832 + $0x1dc] sm:$0xf]
  %v2953 = vld [vmem:[%s2832 + $0x1e0] sm:$0xf]
  %v2954 = vld [vmem:[%s2832 + $0x1e4] sm:$0xf]
  %v2955 = vld [vmem:[%s2832 + $0x1e8] sm:$0xf]
  %v2956 = vld [vmem:[%s2832 + $0x1ec] sm:$0xf]
  %v2957 = vld [vmem:[%s2832 + $0x1f0] sm:$0xf]
  %v2958 = vld [vmem:[%s2832 + $0x1f4] sm:$0xf]
  %v2959 = vld [vmem:[%s2832 + $0x1f8] sm:$0xf]
  %v2960 = vld [vmem:[%s2832 + $0x1fc] sm:$0xf]
  %v2961 = vld [vmem:[%s2832 + $0x200] sm:$0xf]
  %v2962 = vld [vmem:[%s2832 + $0x204] sm:$0xf]
  %v2963 = vld [vmem:[%s2832 + $0x208] sm:$0xf]
  %v2964 = vld [vmem:[%s2832 + $0x20c] sm:$0xf]
  %v2965 = vld [vmem:[%s2832 + $0x210] sm:$0xf]
  %v2966 = vld [vmem:[%s2832 + $0x214] sm:$0xf]
  %v2967 = vld [vmem:[%s2832 + $0x218] sm:$0xf]
  %v2968 = vld [vmem:[%s2832 + $0x21c] sm:$0xf]
  %v2969 = vld [vmem:[%s2832 + $0x220] sm:$0xf]
  %v2970 = vld [vmem:[%s2832 + $0x224] sm:$0xf]
  %v2971 = vld [vmem:[%s2832 + $0x228] sm:$0xf]
  %v2972 = vld [vmem:[%s2832 + $0x22c] sm:$0xf]
  %v2973 = vld [vmem:[%s2832 + $0x230] sm:$0xf]
  %v2974 = vld [vmem:[%s2832 + $0x234] sm:$0xf]
  %v2975 = vld [vmem:[%s2832 + $0x238] sm:$0xf]
  %v2976 = vld [vmem:[%s2832 + $0x23c] sm:$0xf]
  %v2977 = vld [vmem:[%s2832 + $0x240] sm:$0xf]
  %v2978 = vld [vmem:[%s2832 + $0x244] sm:$0xf]
  %v2979 = vld [vmem:[%s2832 + $0x248] sm:$0xf]
  %v2980 = vld [vmem:[%s2832 + $0x24c] sm:$0xf]
  %v2981 = vld [vmem:[%s2832 + $0x250] sm:$0xf]
  %v2982 = vld [vmem:[%s2832 + $0x254] sm:$0xf]
  %v2983 = vld [vmem:[%s2832 + $0x258] sm:$0xf]
  %v2984 = vld [vmem:[%s2832 + $0x25c] sm:$0xf]
  %v2985 = vld [vmem:[%s2832 + $0x260] sm:$0xf]
  %v2986 = vld [vmem:[%s2832 + $0x264] sm:$0xf]
  %v2987 = vld [vmem:[%s2832 + $0x268] sm:$0xf]
  %v2988 = vld [vmem:[%s2832 + $0x26c] sm:$0xf]
  %v2989 = vld [vmem:[%s2832 + $0x270] sm:$0xf]
  %v2990 = vld [vmem:[%s2832 + $0x274] sm:$0xf]
  %v2991 = vld [vmem:[%s2832 + $0x278] sm:$0xf]
  %v2992 = vld [vmem:[%s2832 + $0x27c] sm:$0xf]
  %v2993 = vld [vmem:[%s2832 + $0x280] sm:$0xf]
  %v2994 = vld [vmem:[%s2832 + $0x284] sm:$0xf]
  %v2995 = vld [vmem:[%s2832 + $0x288] sm:$0xf]
  %v2996 = vld [vmem:[%s2832 + $0x28c] sm:$0xf]
  %v2997 = vld [vmem:[%s2832 + $0x290] sm:$0xf]
  %v2998 = vld [vmem:[%s2832 + $0x294] sm:$0xf]
  %v2999 = vld [vmem:[%s2832 + $0x298] sm:$0xf]
  %v3000 = vld [vmem:[%s2832 + $0x29c] sm:$0xf]
  %v3001 = vld [vmem:[%s2832 + $0x2a0] sm:$0xf]
  %v3002 = vld [vmem:[%s2832 + $0x2a4] sm:$0xf]
  %v3003 = vld [vmem:[%s2832 + $0x2a8] sm:$0xf]
  %v3004 = vld [vmem:[%s2832 + $0x2ac] sm:$0xf]
  %v3005 = vld [vmem:[%s2832 + $0x2b0] sm:$0xf]
  %v3006 = vld [vmem:[%s2832 + $0x2b4] sm:$0xf]
  %v3007 = vld [vmem:[%s2832 + $0x2b8] sm:$0xf]
  %v3008 = vld [vmem:[%s2832 + $0x2bc] sm:$0xf]
  %v3009 = vld [vmem:[%s2832 + $0x2c0] sm:$0xf]
  %v3010 = vld [vmem:[%s2832 + $0x2c4] sm:$0xf]
  %v3011 = vld [vmem:[%s2832 + $0x2c8] sm:$0xf]
  %v3012 = vld [vmem:[%s2832 + $0x2cc] sm:$0xf]
  %v3013 = vld [vmem:[%s2832 + $0x2d0] sm:$0xf]
  %v3014 = vld [vmem:[%s2832 + $0x2d4] sm:$0xf]
  %v3015 = vld [vmem:[%s2832 + $0x2d8] sm:$0xf]
  %v3016 = vld [vmem:[%s2832 + $0x2dc] sm:$0xf]
  %v3017 = vld [vmem:[%s2832 + $0x2e0] sm:$0xf]
  %v3018 = vld [vmem:[%s2832 + $0x2e4] sm:$0xf]
  %v3019 = vld [vmem:[%s2832 + $0x2e8] sm:$0xf]
  %v3020 = vld [vmem:[%s2832 + $0x2ec] sm:$0xf]
  %v3021 = vld [vmem:[%s2832 + $0x2f0] sm:$0xf]
  %v3022 = vld [vmem:[%s2832 + $0x2f4] sm:$0xf]
  %v3023 = vld [vmem:[%s2832 + $0x2f8] sm:$0xf]
  %v3024 = vld [vmem:[%s2832 + $0x2fc] sm:$0xf]
  %v3025 = vld [vmem:[%s2832 + $0x300] sm:$0xf]
  %v3026 = vld [vmem:[%s2832 + $0x304] sm:$0xf]
  %v3027 = vld [vmem:[%s2832 + $0x308] sm:$0xf]
  %v3028 = vld [vmem:[%s2832 + $0x30c] sm:$0xf]
  %v3029 = vld [vmem:[%s2832 + $0x310] sm:$0xf]
  %v3030 = vld [vmem:[%s2832 + $0x314] sm:$0xf]
  %v3031 = vld [vmem:[%s2832 + $0x318] sm:$0xf]
  %v3032 = vld [vmem:[%s2832 + $0x31c] sm:$0xf]
  %v3033 = vld [vmem:[%s2832 + $0x320] sm:$0xf]
  %v3034 = vld [vmem:[%s2832 + $0x324] sm:$0xf]
  %v3035 = vld [vmem:[%s2832 + $0x328] sm:$0xf]
  %v3036 = vld [vmem:[%s2832 + $0x32c] sm:$0xf]
  %v3037 = vld [vmem:[%s2832 + $0x330] sm:$0xf]
  %v3038 = vld [vmem:[%s2832 + $0x334] sm:$0xf]
  %v3039 = vld [vmem:[%s2832 + $0x338] sm:$0xf]
  %v3040 = vld [vmem:[%s2832 + $0x33c] sm:$0xf]
  %v3041 = vld [vmem:[%s2832 + $0x340] sm:$0xf]
  %v3042 = vld [vmem:[%s2832 + $0x344] sm:$0xf]
  %v3043 = vld [vmem:[%s2832 + $0x348] sm:$0xf]
  %v3044 = vld [vmem:[%s2832 + $0x34c] sm:$0xf]
  %v3045 = vld [vmem:[%s2832 + $0x350] sm:$0xf]
  %v3046 = vld [vmem:[%s2832 + $0x354] sm:$0xf]
  %v3047 = vld [vmem:[%s2832 + $0x358] sm:$0xf]
  %v3048 = vld [vmem:[%s2832 + $0x35c] sm:$0xf]
  %v3049 = vld [vmem:[%s2832 + $0x360] sm:$0xf]
  %v3050 = vld [vmem:[%s2832 + $0x364] sm:$0xf]
  %v3051 = vld [vmem:[%s2832 + $0x368] sm:$0xf]
  %v3052 = vld [vmem:[%s2832 + $0x36c] sm:$0xf]
  %v3053 = vld [vmem:[%s2832 + $0x370] sm:$0xf]
  %v3054 = vld [vmem:[%s2832 + $0x374] sm:$0xf]
  %v3055 = vld [vmem:[%s2832 + $0x378] sm:$0xf]
  %v3056 = vld [vmem:[%s2832 + $0x37c] sm:$0xf]
  %v3057 = vld [vmem:[%s2832 + $0x380] sm:$0xf]
  %v3058 = vld [vmem:[%s2832 + $0x384] sm:$0xf]
  %v3059 = vld [vmem:[%s2832 + $0x388] sm:$0xf]
  %v3060 = vld [vmem:[%s2832 + $0x38c] sm:$0xf]
  %v3061 = vld [vmem:[%s2832 + $0x390] sm:$0xf]
  %v3062 = vld [vmem:[%s2832 + $0x394] sm:$0xf]
  %v3063 = vld [vmem:[%s2832 + $0x398] sm:$0xf]
  %v3064 = vld [vmem:[%s2832 + $0x39c] sm:$0xf]
  %v3065 = vld [vmem:[%s2832 + $0x3a0] sm:$0xf]
  %v3066 = vld [vmem:[%s2832 + $0x3a4] sm:$0xf]
  %v3067 = vld [vmem:[%s2832 + $0x3a8] sm:$0xf]
  %v3068 = vld [vmem:[%s2832 + $0x3ac] sm:$0xf]
  %v3069 = vld [vmem:[%s2832 + $0x3b0] sm:$0xf]
  %v3070 = vld [vmem:[%s2832 + $0x3b4] sm:$0xf]
  %v3071 = vld [vmem:[%s2832 + $0x3b8] sm:$0xf]
  %v3072 = vld [vmem:[%s2832 + $0x3bc] sm:$0xf]
  %v3073 = vld [vmem:[%s2832 + $0x3c0] sm:$0xf]
  %v3074 = vld [vmem:[%s2832 + $0x3c4] sm:$0xf]
  %v3075 = vld [vmem:[%s2832 + $0x3c8] sm:$0xf]
  %v3076 = vld [vmem:[%s2832 + $0x3cc] sm:$0xf]
  %v3077 = vld [vmem:[%s2832 + $0x3d0] sm:$0xf]
  %v3078 = vld [vmem:[%s2832 + $0x3d4] sm:$0xf]
  %v3079 = vld [vmem:[%s2832 + $0x3d8] sm:$0xf]
  %v3080 = vld [vmem:[%s2832 + $0x3dc] sm:$0xf]
  %v3081 = vld [vmem:[%s2832 + $0x3e0] sm:$0xf]
  %v3082 = vld [vmem:[%s2832 + $0x3e4] sm:$0xf]
  %v3083 = vld [vmem:[%s2832 + $0x3e8] sm:$0xf]
  %v3084 = vld [vmem:[%s2832 + $0x3ec] sm:$0xf]
  %v3085 = vld [vmem:[%s2832 + $0x3f0] sm:$0xf]
  %v3086 = vld [vmem:[%s2832 + $0x3f4] sm:$0xf]
  %v3087 = vld [vmem:[%s2832 + $0x3f8] sm:$0xf]
  %v3088 = vld [vmem:[%s2832 + $0x3fc] sm:$0xf]
  %v3345 = vunpack.c.l.b16 %v2833
  %v3346 = vunpack.c.l.b16 %v2834
  %v3347 = vunpack.c.l.b16 %v2835
  %v3348 = vunpack.c.l.b16 %v2836
  %v3349 = vunpack.c.l.b16 %v2837
  %v3350 = vunpack.c.l.b16 %v2838
  %v3351 = vunpack.c.l.b16 %v2839
  %v3352 = vunpack.c.l.b16 %v2840
  %v3353 = vunpack.c.l.b16 %v2841
  %v3354 = vunpack.c.l.b16 %v2842
  %v3355 = vunpack.c.l.b16 %v2843
  %v3356 = vunpack.c.l.b16 %v2844
  %v3357 = vunpack.c.l.b16 %v2845
  %v3358 = vunpack.c.l.b16 %v2846
  %v3359 = vunpack.c.l.b16 %v2847
  %v3360 = vunpack.c.l.b16 %v2848
  %v3361 = vunpack.c.l.b16 %v2849
  %v3362 = vunpack.c.l.b16 %v2850
  %v3363 = vunpack.c.l.b16 %v2851
  %v3364 = vunpack.c.l.b16 %v2852
  %v3365 = vunpack.c.l.b16 %v2853
  %v3366 = vunpack.c.l.b16 %v2854
  %v3367 = vunpack.c.l.b16 %v2855
  %v3368 = vunpack.c.l.b16 %v2856
  %v3369 = vunpack.c.l.b16 %v2857
  %v3370 = vunpack.c.l.b16 %v2858
  %v3371 = vunpack.c.l.b16 %v2859
  %v3372 = vunpack.c.l.b16 %v2860
  %v3373 = vunpack.c.l.b16 %v2861
  %v3374 = vunpack.c.l.b16 %v2862
  %v3375 = vunpack.c.l.b16 %v2863
  %v3376 = vunpack.c.l.b16 %v2864
  %v3377 = vunpack.c.l.b16 %v2865
  %v3378 = vunpack.c.l.b16 %v2866
  %v3379 = vunpack.c.l.b16 %v2867
  %v3380 = vunpack.c.l.b16 %v2868
  %v3381 = vunpack.c.l.b16 %v2869
  %v3382 = vunpack.c.l.b16 %v2870
  %v3383 = vunpack.c.l.b16 %v2871
  %v3384 = vunpack.c.l.b16 %v2872
  %v3385 = vunpack.c.l.b16 %v2873
  %v3386 = vunpack.c.l.b16 %v2874
  %v3387 = vunpack.c.l.b16 %v2875
  %v3388 = vunpack.c.l.b16 %v2876
  %v3389 = vunpack.c.l.b16 %v2877
  %v3390 = vunpack.c.l.b16 %v2878
  %v3391 = vunpack.c.l.b16 %v2879
  %v3392 = vunpack.c.l.b16 %v2880
  %v3393 = vunpack.c.l.b16 %v2881
  %v3394 = vunpack.c.l.b16 %v2882
  %v3395 = vunpack.c.l.b16 %v2883
  %v3396 = vunpack.c.l.b16 %v2884
  %v3397 = vunpack.c.l.b16 %v2885
  %v3398 = vunpack.c.l.b16 %v2886
  %v3399 = vunpack.c.l.b16 %v2887
  %v3400 = vunpack.c.l.b16 %v2888
  %v3401 = vunpack.c.l.b16 %v2889
  %v3402 = vunpack.c.l.b16 %v2890
  %v3403 = vunpack.c.l.b16 %v2891
  %v3404 = vunpack.c.l.b16 %v2892
  %v3405 = vunpack.c.l.b16 %v2893
  %v3406 = vunpack.c.l.b16 %v2894
  %v3407 = vunpack.c.l.b16 %v2895
  %v3408 = vunpack.c.l.b16 %v2896
  %v3409 = vunpack.c.l.b16 %v2897
  %v3410 = vunpack.c.l.b16 %v2898
  %v3411 = vunpack.c.l.b16 %v2899
  %v3412 = vunpack.c.l.b16 %v2900
  %v3413 = vunpack.c.l.b16 %v2901
  %v3414 = vunpack.c.l.b16 %v2902
  %v3415 = vunpack.c.l.b16 %v2903
  %v3416 = vunpack.c.l.b16 %v2904
  %v3417 = vunpack.c.l.b16 %v2905
  %v3418 = vunpack.c.l.b16 %v2906
  %v3419 = vunpack.c.l.b16 %v2907
  %v3420 = vunpack.c.l.b16 %v2908
  %v3421 = vunpack.c.l.b16 %v2909
  %v3422 = vunpack.c.l.b16 %v2910
  %v3423 = vunpack.c.l.b16 %v2911
  %v3424 = vunpack.c.l.b16 %v2912
  %v3425 = vunpack.c.l.b16 %v2913
  %v3426 = vunpack.c.l.b16 %v2914
  %v3427 = vunpack.c.l.b16 %v2915
  %v3428 = vunpack.c.l.b16 %v2916
  %v3429 = vunpack.c.l.b16 %v2917
  %v3430 = vunpack.c.l.b16 %v2918
  %v3431 = vunpack.c.l.b16 %v2919
  %v3432 = vunpack.c.l.b16 %v2920
  %v3433 = vunpack.c.l.b16 %v2921
  %v3434 = vunpack.c.l.b16 %v2922
  %v3435 = vunpack.c.l.b16 %v2923
  %v3436 = vunpack.c.l.b16 %v2924
  %v3437 = vunpack.c.l.b16 %v2925
  %v3438 = vunpack.c.l.b16 %v2926
  %v3439 = vunpack.c.l.b16 %v2927
  %v3440 = vunpack.c.l.b16 %v2928
  %v3441 = vunpack.c.l.b16 %v2929
  %v3442 = vunpack.c.l.b16 %v2930
  %v3443 = vunpack.c.l.b16 %v2931
  %v3444 = vunpack.c.l.b16 %v2932
  %v3445 = vunpack.c.l.b16 %v2933
  %v3446 = vunpack.c.l.b16 %v2934
  %v3447 = vunpack.c.l.b16 %v2935
  %v3448 = vunpack.c.l.b16 %v2936
  %v3449 = vunpack.c.l.b16 %v2937
  %v3450 = vunpack.c.l.b16 %v2938
  %v3451 = vunpack.c.l.b16 %v2939
  %v3452 = vunpack.c.l.b16 %v2940
  %v3453 = vunpack.c.l.b16 %v2941
  %v3454 = vunpack.c.l.b16 %v2942
  %v3455 = vunpack.c.l.b16 %v2943
  %v3456 = vunpack.c.l.b16 %v2944
  %v3457 = vunpack.c.l.b16 %v2945
  %v3458 = vunpack.c.l.b16 %v2946
  %v3459 = vunpack.c.l.b16 %v2947
  %v3460 = vunpack.c.l.b16 %v2948
  %v3461 = vunpack.c.l.b16 %v2949
  %v3462 = vunpack.c.l.b16 %v2950
  %v3463 = vunpack.c.l.b16 %v2951
  %v3464 = vunpack.c.l.b16 %v2952
  %v3465 = vunpack.c.l.b16 %v2953
  %v3466 = vunpack.c.l.b16 %v2954
  %v3467 = vunpack.c.l.b16 %v2955
  %v3468 = vunpack.c.l.b16 %v2956
  %v3469 = vunpack.c.l.b16 %v2957
  %v3470 = vunpack.c.l.b16 %v2958
  %v3471 = vunpack.c.l.b16 %v2959
  %v3472 = vunpack.c.l.b16 %v2960
  %v3473 = vunpack.c.l.b16 %v2961
  %v3474 = vunpack.c.l.b16 %v2962
  %v3475 = vunpack.c.l.b16 %v2963
  %v3476 = vunpack.c.l.b16 %v2964
  %v3477 = vunpack.c.l.b16 %v2965
  %v3478 = vunpack.c.l.b16 %v2966
  %v3479 = vunpack.c.l.b16 %v2967
  %v3480 = vunpack.c.l.b16 %v2968
  %v3481 = vunpack.c.l.b16 %v2969
  %v3482 = vunpack.c.l.b16 %v2970
  %v3483 = vunpack.c.l.b16 %v2971
  %v3484 = vunpack.c.l.b16 %v2972
  %v3485 = vunpack.c.l.b16 %v2973
  %v3486 = vunpack.c.l.b16 %v2974
  %v3487 = vunpack.c.l.b16 %v2975
  %v3488 = vunpack.c.l.b16 %v2976
  %v3489 = vunpack.c.l.b16 %v2977
  %v3490 = vunpack.c.l.b16 %v2978
  %v3491 = vunpack.c.l.b16 %v2979
  %v3492 = vunpack.c.l.b16 %v2980
  %v3493 = vunpack.c.l.b16 %v2981
  %v3494 = vunpack.c.l.b16 %v2982
  %v3495 = vunpack.c.l.b16 %v2983
  %v3496 = vunpack.c.l.b16 %v2984
  %v3497 = vunpack.c.l.b16 %v2985
  %v3498 = vunpack.c.l.b16 %v2986
  %v3499 = vunpack.c.l.b16 %v2987
  %v3500 = vunpack.c.l.b16 %v2988
  %v3501 = vunpack.c.l.b16 %v2989
  %v3502 = vunpack.c.l.b16 %v2990
  %v3503 = vunpack.c.l.b16 %v2991
  %v3504 = vunpack.c.l.b16 %v2992
  %v3505 = vunpack.c.l.b16 %v2993
  %v3506 = vunpack.c.l.b16 %v2994
  %v3507 = vunpack.c.l.b16 %v2995
  %v3508 = vunpack.c.l.b16 %v2996
  %v3509 = vunpack.c.l.b16 %v2997
  %v3510 = vunpack.c.l.b16 %v2998
  %v3511 = vunpack.c.l.b16 %v2999
  %v3512 = vunpack.c.l.b16 %v3000
  %v3513 = vunpack.c.l.b16 %v3001
  %v3514 = vunpack.c.l.b16 %v3002
  %v3515 = vunpack.c.l.b16 %v3003
  %v3516 = vunpack.c.l.b16 %v3004
  %v3517 = vunpack.c.l.b16 %v3005
  %v3518 = vunpack.c.l.b16 %v3006
  %v3519 = vunpack.c.l.b16 %v3007
  %v3520 = vunpack.c.l.b16 %v3008
  %v3521 = vunpack.c.l.b16 %v3009
  %v3522 = vunpack.c.l.b16 %v3010
  %v3523 = vunpack.c.l.b16 %v3011
  %v3524 = vunpack.c.l.b16 %v3012
  %v3525 = vunpack.c.l.b16 %v3013
  %v3526 = vunpack.c.l.b16 %v3014
  %v3527 = vunpack.c.l.b16 %v3015
  %v3528 = vunpack.c.l.b16 %v3016
  %v3529 = vunpack.c.l.b16 %v3017
  %v3530 = vunpack.c.l.b16 %v3018
  %v3531 = vunpack.c.l.b16 %v3019
  %v3532 = vunpack.c.l.b16 %v3020
  %v3533 = vunpack.c.l.b16 %v3021
  %v3534 = vunpack.c.l.b16 %v3022
  %v3535 = vunpack.c.l.b16 %v3023
  %v3536 = vunpack.c.l.b16 %v3024
  %v3537 = vunpack.c.l.b16 %v3025
  %v3538 = vunpack.c.l.b16 %v3026
  %v3539 = vunpack.c.l.b16 %v3027
  %v3540 = vunpack.c.l.b16 %v3028
  %v3541 = vunpack.c.l.b16 %v3029
  %v3542 = vunpack.c.l.b16 %v3030
  %v3543 = vunpack.c.l.b16 %v3031
  %v3544 = vunpack.c.l.b16 %v3032
  %v3545 = vunpack.c.l.b16 %v3033
  %v3546 = vunpack.c.l.b16 %v3034
  %v3547 = vunpack.c.l.b16 %v3035
  %v3548 = vunpack.c.l.b16 %v3036
  %v3549 = vunpack.c.l.b16 %v3037
  %v3550 = vunpack.c.l.b16 %v3038
  %v3551 = vunpack.c.l.b16 %v3039
  %v3552 = vunpack.c.l.b16 %v3040
  %v3553 = vunpack.c.l.b16 %v3041
  %v3554 = vunpack.c.l.b16 %v3042
  %v3555 = vunpack.c.l.b16 %v3043
  %v3556 = vunpack.c.l.b16 %v3044
  %v3557 = vunpack.c.l.b16 %v3045
  %v3558 = vunpack.c.l.b16 %v3046
  %v3559 = vunpack.c.l.b16 %v3047
  %v3560 = vunpack.c.l.b16 %v3048
  %v3561 = vunpack.c.l.b16 %v3049
  %v3562 = vunpack.c.l.b16 %v3050
  %v3563 = vunpack.c.l.b16 %v3051
  %v3564 = vunpack.c.l.b16 %v3052
  %v3565 = vunpack.c.l.b16 %v3053
  %v3566 = vunpack.c.l.b16 %v3054
  %v3567 = vunpack.c.l.b16 %v3055
  %v3568 = vunpack.c.l.b16 %v3056
  %v3569 = vunpack.c.l.b16 %v3057
  %v3570 = vunpack.c.l.b16 %v3058
  %v3571 = vunpack.c.l.b16 %v3059
  %v3572 = vunpack.c.l.b16 %v3060
  %v3573 = vunpack.c.l.b16 %v3061
  %v3574 = vunpack.c.l.b16 %v3062
  %v3575 = vunpack.c.l.b16 %v3063
  %v3576 = vunpack.c.l.b16 %v3064
  %v3577 = vunpack.c.l.b16 %v3065
  %v3578 = vunpack.c.l.b16 %v3066
  %v3579 = vunpack.c.l.b16 %v3067
  %v3580 = vunpack.c.l.b16 %v3068
  %v3581 = vunpack.c.l.b16 %v3069
  %v3582 = vunpack.c.l.b16 %v3070
  %v3583 = vunpack.c.l.b16 %v3071
  %v3584 = vunpack.c.l.b16 %v3072
  %v3585 = vunpack.c.l.b16 %v3073
  %v3586 = vunpack.c.l.b16 %v3074
  %v3587 = vunpack.c.l.b16 %v3075
  %v3588 = vunpack.c.l.b16 %v3076
  %v3589 = vunpack.c.l.b16 %v3077
  %v3590 = vunpack.c.l.b16 %v3078
  %v3591 = vunpack.c.l.b16 %v3079
  %v3592 = vunpack.c.l.b16 %v3080
  %v3593 = vunpack.c.l.b16 %v3081
  %v3594 = vunpack.c.l.b16 %v3082
  %v3595 = vunpack.c.l.b16 %v3083
  %v3596 = vunpack.c.l.b16 %v3084
  %v3597 = vunpack.c.l.b16 %v3085
  %v3598 = vunpack.c.l.b16 %v3086
  %v3599 = vunpack.c.l.b16 %v3087
  %v3600 = vunpack.c.l.b16 %v3088
  %v3601 = vpack.c.b16 %v3346, %v3345
  %v3602 = vpack.c.b16 %v3348, %v3347
  %v3603 = vpack.c.b16 %v3350, %v3349
  %v3604 = vpack.c.b16 %v3352, %v3351
  %v3605 = vpack.c.b16 %v3354, %v3353
  %v3606 = vpack.c.b16 %v3356, %v3355
  %v3607 = vpack.c.b16 %v3358, %v3357
  %v3608 = vpack.c.b16 %v3360, %v3359
  %v3609 = vpack.c.b16 %v3362, %v3361
  %v3610 = vpack.c.b16 %v3364, %v3363
  %v3611 = vpack.c.b16 %v3366, %v3365
  %v3612 = vpack.c.b16 %v3368, %v3367
  %v3613 = vpack.c.b16 %v3370, %v3369
  %v3614 = vpack.c.b16 %v3372, %v3371
  %v3615 = vpack.c.b16 %v3374, %v3373
  %v3616 = vpack.c.b16 %v3376, %v3375
  %v3617 = vpack.c.b16 %v3378, %v3377
  %v3618 = vpack.c.b16 %v3380, %v3379
  %v3619 = vpack.c.b16 %v3382, %v3381
  %v3620 = vpack.c.b16 %v3384, %v3383
  %v3621 = vpack.c.b16 %v3386, %v3385
  %v3622 = vpack.c.b16 %v3388, %v3387
  %v3623 = vpack.c.b16 %v3390, %v3389
  %v3624 = vpack.c.b16 %v3392, %v3391
  %v3625 = vpack.c.b16 %v3394, %v3393
  %v3626 = vpack.c.b16 %v3396, %v3395
  %v3627 = vpack.c.b16 %v3398, %v3397
  %v3628 = vpack.c.b16 %v3400, %v3399
  %v3629 = vpack.c.b16 %v3402, %v3401
  %v3630 = vpack.c.b16 %v3404, %v3403
  %v3631 = vpack.c.b16 %v3406, %v3405
  %v3632 = vpack.c.b16 %v3408, %v3407
  %v3633 = vpack.c.b16 %v3410, %v3409
  %v3634 = vpack.c.b16 %v3412, %v3411
  %v3635 = vpack.c.b16 %v3414, %v3413
  %v3636 = vpack.c.b16 %v3416, %v3415
  %v3637 = vpack.c.b16 %v3418, %v3417
  %v3638 = vpack.c.b16 %v3420, %v3419
  %v3639 = vpack.c.b16 %v3422, %v3421
  %v3640 = vpack.c.b16 %v3424, %v3423
  %v3641 = vpack.c.b16 %v3426, %v3425
  %v3642 = vpack.c.b16 %v3428, %v3427
  %v3643 = vpack.c.b16 %v3430, %v3429
  %v3644 = vpack.c.b16 %v3432, %v3431
  %v3645 = vpack.c.b16 %v3434, %v3433
  %v3646 = vpack.c.b16 %v3436, %v3435
  %v3647 = vpack.c.b16 %v3438, %v3437
  %v3648 = vpack.c.b16 %v3440, %v3439
  %v3649 = vpack.c.b16 %v3442, %v3441
  %v3650 = vpack.c.b16 %v3444, %v3443
  %v3651 = vpack.c.b16 %v3446, %v3445
  %v3652 = vpack.c.b16 %v3448, %v3447
  %v3653 = vpack.c.b16 %v3450, %v3449
  %v3654 = vpack.c.b16 %v3452, %v3451
  %v3655 = vpack.c.b16 %v3454, %v3453
  %v3656 = vpack.c.b16 %v3456, %v3455
  %v3657 = vpack.c.b16 %v3458, %v3457
  %v3658 = vpack.c.b16 %v3460, %v3459
  %v3659 = vpack.c.b16 %v3462, %v3461
  %v3660 = vpack.c.b16 %v3464, %v3463
  %v3661 = vpack.c.b16 %v3466, %v3465
  %v3662 = vpack.c.b16 %v3468, %v3467
  %v3663 = vpack.c.b16 %v3470, %v3469
  %v3664 = vpack.c.b16 %v3472, %v3471
  %v3665 = vpack.c.b16 %v3474, %v3473
  %v3666 = vpack.c.b16 %v3476, %v3475
  %v3667 = vpack.c.b16 %v3478, %v3477
  %v3668 = vpack.c.b16 %v3480, %v3479
  %v3669 = vpack.c.b16 %v3482, %v3481
  %v3670 = vpack.c.b16 %v3484, %v3483
  %v3671 = vpack.c.b16 %v3486, %v3485
  %v3672 = vpack.c.b16 %v3488, %v3487
  %v3673 = vpack.c.b16 %v3490, %v3489
  %v3674 = vpack.c.b16 %v3492, %v3491
  %v3675 = vpack.c.b16 %v3494, %v3493
  %v3676 = vpack.c.b16 %v3496, %v3495
  %v3677 = vpack.c.b16 %v3498, %v3497
  %v3678 = vpack.c.b16 %v3500, %v3499
  %v3679 = vpack.c.b16 %v3502, %v3501
  %v3680 = vpack.c.b16 %v3504, %v3503
  %v3681 = vpack.c.b16 %v3506, %v3505
  %v3682 = vpack.c.b16 %v3508, %v3507
  %v3683 = vpack.c.b16 %v3510, %v3509
  %v3684 = vpack.c.b16 %v3512, %v3511
  %v3685 = vpack.c.b16 %v3514, %v3513
  %v3686 = vpack.c.b16 %v3516, %v3515
  %v3687 = vpack.c.b16 %v3518, %v3517
  %v3688 = vpack.c.b16 %v3520, %v3519
  %v3689 = vpack.c.b16 %v3522, %v3521
  %v3690 = vpack.c.b16 %v3524, %v3523
  %v3691 = vpack.c.b16 %v3526, %v3525
  %v3692 = vpack.c.b16 %v3528, %v3527
  %v3693 = vpack.c.b16 %v3530, %v3529
  %v3694 = vpack.c.b16 %v3532, %v3531
  %v3695 = vpack.c.b16 %v3534, %v3533
  %v3696 = vpack.c.b16 %v3536, %v3535
  %v3697 = vpack.c.b16 %v3538, %v3537
  %v3698 = vpack.c.b16 %v3540, %v3539
  %v3699 = vpack.c.b16 %v3542, %v3541
  %v3700 = vpack.c.b16 %v3544, %v3543
  %v3701 = vpack.c.b16 %v3546, %v3545
  %v3702 = vpack.c.b16 %v3548, %v3547
  %v3703 = vpack.c.b16 %v3550, %v3549
  %v3704 = vpack.c.b16 %v3552, %v3551
  %v3705 = vpack.c.b16 %v3554, %v3553
  %v3706 = vpack.c.b16 %v3556, %v3555
  %v3707 = vpack.c.b16 %v3558, %v3557
  %v3708 = vpack.c.b16 %v3560, %v3559
  %v3709 = vpack.c.b16 %v3562, %v3561
  %v3710 = vpack.c.b16 %v3564, %v3563
  %v3711 = vpack.c.b16 %v3566, %v3565
  %v3712 = vpack.c.b16 %v3568, %v3567
  %v3713 = vpack.c.b16 %v3570, %v3569
  %v3714 = vpack.c.b16 %v3572, %v3571
  %v3715 = vpack.c.b16 %v3574, %v3573
  %v3716 = vpack.c.b16 %v3576, %v3575
  %v3717 = vpack.c.b16 %v3578, %v3577
  %v3718 = vpack.c.b16 %v3580, %v3579
  %v3719 = vpack.c.b16 %v3582, %v3581
  %v3720 = vpack.c.b16 %v3584, %v3583
  %v3721 = vpack.c.b16 %v3586, %v3585
  %v3722 = vpack.c.b16 %v3588, %v3587
  %v3723 = vpack.c.b16 %v3590, %v3589
  %v3724 = vpack.c.b16 %v3592, %v3591
  %v3725 = vpack.c.b16 %v3594, %v3593
  %v3726 = vpack.c.b16 %v3596, %v3595
  %v3727 = vpack.c.b16 %v3598, %v3597
  %v3728 = vpack.c.b16 %v3600, %v3599
  %3857 = vmatprep.subr.bf16.mxu0 0
  %3858 = vmatpush1.bf16.msra.mxu0 %v3601
  %3859 = vmatprep.subr.bf16.mxu0 0
  %3860 = vmatpush1.bf16.msra.mxu0 %v3602
  %3861 = vmatprep.subr.bf16.mxu0 0
  %3862 = vmatpush1.bf16.msra.mxu0 %v3603
  %3863 = vmatprep.subr.bf16.mxu0 0
  %3864 = vmatpush1.bf16.msra.mxu0 %v3604
  %3865 = vmatprep.subr.bf16.mxu0 0
  %3866 = vmatpush1.bf16.msra.mxu0 %v3605
  %3867 = vmatprep.subr.bf16.mxu0 0
  %3868 = vmatpush1.bf16.msra.mxu0 %v3606
  %3869 = vmatprep.subr.bf16.mxu0 0
  %3870 = vmatpush1.bf16.msra.mxu0 %v3607
  %3871 = vmatprep.subr.bf16.mxu0 0
  %3872 = vmatpush1.bf16.msra.mxu0 %v3608
  %3873 = vmatprep.subr.bf16.mxu0 0
  %3874 = vmatpush1.bf16.msra.mxu0 %v3609
  %3875 = vmatprep.subr.bf16.mxu0 0
  %3876 = vmatpush1.bf16.msra.mxu0 %v3610
  %3877 = vmatprep.subr.bf16.mxu0 0
  %3878 = vmatpush1.bf16.msra.mxu0 %v3611
  %3879 = vmatprep.subr.bf16.mxu0 0
  %3880 = vmatpush1.bf16.msra.mxu0 %v3612
  %3881 = vmatprep.subr.bf16.mxu0 0
  %3882 = vmatpush1.bf16.msra.mxu0 %v3613
  %3883 = vmatprep.subr.bf16.mxu0 0
  %3884 = vmatpush1.bf16.msra.mxu0 %v3614
  %3885 = vmatprep.subr.bf16.mxu0 0
  %3886 = vmatpush1.bf16.msra.mxu0 %v3615
  %3887 = vmatprep.subr.bf16.mxu0 0
  %3888 = vmatpush1.bf16.msra.mxu0 %v3616
  %3889 = vmatprep.mubr.bf16.mxu0 %v319
  %3890 = vmatmul.mubr.bf16.gmra.mrb[0].mxu0 %v305
  %v3891 = vpop.f32.mrb[0].mxu0
  %v3892 = vadd.f32 %v278, %v3891
  %v3893 = vpop.f32.mrb[0].mxu0
  %v3894 = vpop.f32.mrb[0].mxu0
  %v3895 = vpop.f32.mrb[0].mxu0
  %3896 = vdwg.mxu0
  %3897 = vmatprep.subr.bf16.mxu0 0
  %3898 = vmatpush1.bf16.msra.mxu0 %v3617
  %3899 = vmatprep.subr.bf16.mxu0 0
  %3900 = vmatpush1.bf16.msra.mxu0 %v3618
  %3901 = vmatprep.subr.bf16.mxu0 0
  %3902 = vmatpush1.bf16.msra.mxu0 %v3619
  %3903 = vmatprep.subr.bf16.mxu0 0
  %3904 = vmatpush1.bf16.msra.mxu0 %v3620
  %3905 = vmatprep.subr.bf16.mxu0 0
  %3906 = vmatpush1.bf16.msra.mxu0 %v3621
  %3907 = vmatprep.subr.bf16.mxu0 0
  %3908 = vmatpush1.bf16.msra.mxu0 %v3622
  %3909 = vmatprep.subr.bf16.mxu0 0
  %3910 = vmatpush1.bf16.msra.mxu0 %v3623
  %3911 = vmatprep.subr.bf16.mxu0 0
  %3912 = vmatpush1.bf16.msra.mxu0 %v3624
  %3913 = vmatprep.subr.bf16.mxu0 0
  %3914 = vmatpush1.bf16.msra.mxu0 %v3625
  %3915 = vmatprep.subr.bf16.mxu0 0
  %3916 = vmatpush1.bf16.msra.mxu0 %v3626
  %3917 = vmatprep.subr.bf16.mxu0 0
  %3918 = vmatpush1.bf16.msra.mxu0 %v3627
  %3919 = vmatprep.subr.bf16.mxu0 0
  %3920 = vmatpush1.bf16.msra.mxu0 %v3628
  %3921 = vmatprep.subr.bf16.mxu0 0
  %3922 = vmatpush1.bf16.msra.mxu0 %v3629
  %3923 = vmatprep.subr.bf16.mxu0 0
  %3924 = vmatpush1.bf16.msra.mxu0 %v3630
  %3925 = vmatprep.subr.bf16.mxu0 0
  %3926 = vmatpush1.bf16.msra.mxu0 %v3631
  %3927 = vmatprep.subr.bf16.mxu0 0
  %3928 = vmatpush1.bf16.msra.mxu0 %v3632
  %3929 = vmatprep.mubr.bf16.mxu0 %v329
  %3930 = vmatmul.mubr.bf16.gmra.mrb[0].mxu0 %v327
  %v3931 = vpop.f32.mrb[0].mxu0
  %v3932 = vadd.f32 %v3892, %v3931
  %v3933 = vpop.f32.mrb[0].mxu0
  %v3934 = vpop.f32.mrb[0].mxu0
  %v3935 = vpop.f32.mrb[0].mxu0
  %3936 = vdwg.mxu0
  %3937 = vmatprep.subr.bf16.mxu0 0
  %3938 = vmatpush1.bf16.msra.mxu0 %v3633
  %3939 = vmatprep.subr.bf16.mxu0 0
  %3940 = vmatpush1.bf16.msra.mxu0 %v3634
  %3941 = vmatprep.subr.bf16.mxu0 0
  %3942 = vmatpush1.bf16.msra.mxu0 %v3635
  %3943 = vmatprep.subr.bf16.mxu0 0
  %3944 = vmatpush1.bf16.msra.mxu0 %v3636
  %3945 = vmatprep.subr.bf16.mxu0 0
  %3946 = vmatpush1.bf16.msra.mxu0 %v3637
  %3947 = vmatprep.subr.bf16.mxu0 0
  %3948 = vmatpush1.bf16.msra.mxu0 %v3638
  %3949 = vmatprep.subr.bf16.mxu0 0
  %3950 = vmatpush1.bf16.msra.mxu0 %v3639
  %3951 = vmatprep.subr.bf16.mxu0 0
  %3952 = vmatpush1.bf16.msra.mxu0 %v3640
  %3953 = vmatprep.subr.bf16.mxu0 0
  %3954 = vmatpush1.bf16.msra.mxu0 %v3641
  %3955 = vmatprep.subr.bf16.mxu0 0
  %3956 = vmatpush1.bf16.msra.mxu0 %v3642
  %3957 = vmatprep.subr.bf16.mxu0 0
  %3958 = vmatpush1.bf16.msra.mxu0 %v3643
  %3959 = vmatprep.subr.bf16.mxu0 0
  %3960 = vmatpush1.bf16.msra.mxu0 %v3644
  %3961 = vmatprep.subr.bf16.mxu0 0
  %3962 = vmatpush1.bf16.msra.mxu0 %v3645
  %3963 = vmatprep.subr.bf16.mxu0 0
  %3964 = vmatpush1.bf16.msra.mxu0 %v3646
  %3965 = vmatprep.subr.bf16.mxu0 0
  %3966 = vmatpush1.bf16.msra.mxu0 %v3647
  %3967 = vmatprep.subr.bf16.mxu0 0
  %3968 = vmatpush1.bf16.msra.mxu0 %v3648
  %3969 = vmatprep.mubr.bf16.mxu0 %v326
  %3970 = vmatmul.mubr.bf16.gmra.mrb[0].mxu0 %v312
  %v3971 = vpop.f32.mrb[0].mxu0
  %v3972 = vadd.f32 %v3932, %v3971
  %v3973 = vpop.f32.mrb[0].mxu0
  %v3974 = vpop.f32.mrb[0].mxu0
  %v3975 = vpop.f32.mrb[0].mxu0
  %3976 = vdwg.mxu0
  %3977 = vmatprep.subr.bf16.mxu0 0
  %3978 = vmatpush1.bf16.msra.mxu0 %v3649
  %3979 = vmatprep.subr.bf16.mxu0 0
  %3980 = vmatpush1.bf16.msra.mxu0 %v3650
  %3981 = vmatprep.subr.bf16.mxu0 0
  %3982 = vmatpush1.bf16.msra.mxu0 %v3651
  %3983 = vmatprep.subr.bf16.mxu0 0
  %3984 = vmatpush1.bf16.msra.mxu0 %v3652
  %3985 = vmatprep.subr.bf16.mxu0 0
  %3986 = vmatpush1.bf16.msra.mxu0 %v3653
  %3987 = vmatprep.subr.bf16.mxu0 0
  %3988 = vmatpush1.bf16.msra.mxu0 %v3654
  %3989 = vmatprep.subr.bf16.mxu0 0
  %3990 = vmatpush1.bf16.msra.mxu0 %v3655
  %3991 = vmatprep.subr.bf16.mxu0 0
  %3992 = vmatpush1.bf16.msra.mxu0 %v3656
  %3993 = vmatprep.subr.bf16.mxu0 0
  %3994 = vmatpush1.bf16.msra.mxu0 %v3657
  %3995 = vmatprep.subr.bf16.mxu0 0
  %3996 = vmatpush1.bf16.msra.mxu0 %v3658
  %3997 = vmatprep.subr.bf16.mxu0 0
  %3998 = vmatpush1.bf16.msra.mxu0 %v3659
  %3999 = vmatprep.subr.bf16.mxu0 0
  %4000 = vmatpush1.bf16.msra.mxu0 %v3660
  %4001 = vmatprep.subr.bf16.mxu0 0
  %4002 = vmatpush1.bf16.msra.mxu0 %v3661
  %4003 = vmatprep.subr.bf16.mxu0 0
  %4004 = vmatpush1.bf16.msra.mxu0 %v3662
  %4005 = vmatprep.subr.bf16.mxu0 0
  %4006 = vmatpush1.bf16.msra.mxu0 %v3663
  %4007 = vmatprep.subr.bf16.mxu0 0
  %4008 = vmatpush1.bf16.msra.mxu0 %v3664
  %4009 = vmatprep.mubr.bf16.mxu0 %v330
  %4010 = vmatmul.mubr.bf16.gmra.mrb[0].mxu0 %v328
  %v4011 = vpop.f32.mrb[0].mxu0
  %v4012 = vadd.f32 %v3972, %v4011
  %v4013 = vpop.f32.mrb[0].mxu0
  %v4014 = vpop.f32.mrb[0].mxu0
  %v4015 = vpop.f32.mrb[0].mxu0
  %4016 = vdwg.mxu0
  %4017 = vmatprep.subr.bf16.mxu0 0
  %4018 = vmatpush1.bf16.msra.mxu0 %v3665
  %4019 = vmatprep.subr.bf16.mxu0 0
  %4020 = vmatpush1.bf16.msra.mxu0 %v3666
  %4021 = vmatprep.subr.bf16.mxu0 0
  %4022 = vmatpush1.bf16.msra.mxu0 %v3667
  %4023 = vmatprep.subr.bf16.mxu0 0
  %4024 = vmatpush1.bf16.msra.mxu0 %v3668
  %4025 = vmatprep.subr.bf16.mxu0 0
  %4026 = vmatpush1.bf16.msra.mxu0 %v3669
  %4027 = vmatprep.subr.bf16.mxu0 0
  %4028 = vmatpush1.bf16.msra.mxu0 %v3670
  %4029 = vmatprep.subr.bf16.mxu0 0
  %4030 = vmatpush1.bf16.msra.mxu0 %v3671
  %4031 = vmatprep.subr.bf16.mxu0 0
  %4032 = vmatpush1.bf16.msra.mxu0 %v3672
  %4033 = vmatprep.subr.bf16.mxu0 0
  %4034 = vmatpush1.bf16.msra.mxu0 %v3673
  %4035 = vmatprep.subr.bf16.mxu0 0
  %4036 = vmatpush1.bf16.msra.mxu0 %v3674
  %4037 = vmatprep.subr.bf16.mxu0 0
  %4038 = vmatpush1.bf16.msra.mxu0 %v3675
  %4039 = vmatprep.subr.bf16.mxu0 0
  %4040 = vmatpush1.bf16.msra.mxu0 %v3676
  %4041 = vmatprep.subr.bf16.mxu0 0
  %4042 = vmatpush1.bf16.msra.mxu0 %v3677
  %4043 = vmatprep.subr.bf16.mxu0 0
  %4044 = vmatpush1.bf16.msra.mxu0 %v3678
  %4045 = vmatprep.subr.bf16.mxu0 0
  %4046 = vmatpush1.bf16.msra.mxu0 %v3679
  %4047 = vmatprep.subr.bf16.mxu0 0
  %4048 = vmatpush1.bf16.msra.mxu0 %v3680
  %4049 = vmatprep.mubr.bf16.mxu0 %v368
  %4050 = vmatmul.mubr.bf16.gmra.mrb[0].mxu0 %v354
  %v4051 = vpop.f32.mrb[0].mxu0
  %v4052 = vadd.f32 %v4012, %v4051
  %v4053 = vpop.f32.mrb[0].mxu0
  %v4054 = vpop.f32.mrb[0].mxu0
  %v4055 = vpop.f32.mrb[0].mxu0
  %4056 = vdwg.mxu0
  %4057 = vmatprep.subr.bf16.mxu0 0
  %4058 = vmatpush1.bf16.msra.mxu0 %v3681
  %4059 = vmatprep.subr.bf16.mxu0 0
  %4060 = vmatpush1.bf16.msra.mxu0 %v3682
  %4061 = vmatprep.subr.bf16.mxu0 0
  %4062 = vmatpush1.bf16.msra.mxu0 %v3683
  %4063 = vmatprep.subr.bf16.mxu0 0
  %4064 = vmatpush1.bf16.msra.mxu0 %v3684
  %4065 = vmatprep.subr.bf16.mxu0 0
  %4066 = vmatpush1.bf16.msra.mxu0 %v3685
  %4067 = vmatprep.subr.bf16.mxu0 0
  %4068 = vmatpush1.bf16.msra.mxu0 %v3686
  %4069 = vmatprep.subr.bf16.mxu0 0
  %4070 = vmatpush1.bf16.msra.mxu0 %v3687
  %4071 = vmatprep.subr.bf16.mxu0 0
  %4072 = vmatpush1.bf16.msra.mxu0 %v3688
  %4073 = vmatprep.subr.bf16.mxu0 0
  %4074 = vmatpush1.bf16.msra.mxu0 %v3689
  %4075 = vmatprep.subr.bf16.mxu0 0
  %4076 = vmatpush1.bf16.msra.mxu0 %v3690
  %4077 = vmatprep.subr.bf16.mxu0 0
  %4078 = vmatpush1.bf16.msra.mxu0 %v3691
  %4079 = vmatprep.subr.bf16.mxu0 0
  %4080 = vmatpush1.bf16.msra.mxu0 %v3692
  %4081 = vmatprep.subr.bf16.mxu0 0
  %4082 = vmatpush1.bf16.msra.mxu0 %v3693
  %4083 = vmatprep.subr.bf16.mxu0 0
  %4084 = vmatpush1.bf16.msra.mxu0 %v3694
  %4085 = vmatprep.subr.bf16.mxu0 0
  %4086 = vmatpush1.bf16.msra.mxu0 %v3695
  %4087 = vmatprep.subr.bf16.mxu0 0
  %4088 = vmatpush1.bf16.msra.mxu0 %v3696
  %4089 = vmatprep.mubr.bf16.mxu0 %v378
  %4090 = vmatmul.mubr.bf16.gmra.mrb[0].mxu0 %v376
  %v4091 = vpop.f32.mrb[0].mxu0
  %v4092 = vadd.f32 %v4052, %v4091
  %v4093 = vpop.f32.mrb[0].mxu0
  %v4094 = vpop.f32.mrb[0].mxu0
  %v4095 = vpop.f32.mrb[0].mxu0
  %4096 = vdwg.mxu0
  %4097 = vmatprep.subr.bf16.mxu0 0
  %4098 = vmatpush1.bf16.msra.mxu0 %v3697
  %4099 = vmatprep.subr.bf16.mxu0 0
  %4100 = vmatpush1.bf16.msra.mxu0 %v3698
  %4101 = vmatprep.subr.bf16.mxu0 0
  %4102 = vmatpush1.bf16.msra.mxu0 %v3699
  %4103 = vmatprep.subr.bf16.mxu0 0
  %4104 = vmatpush1.bf16.msra.mxu0 %v3700
  %4105 = vmatprep.subr.bf16.mxu0 0
  %4106 = vmatpush1.bf16.msra.mxu0 %v3701
  %4107 = vmatprep.subr.bf16.mxu0 0
  %4108 = vmatpush1.bf16.msra.mxu0 %v3702
  %4109 = vmatprep.subr.bf16.mxu0 0
  %4110 = vmatpush1.bf16.msra.mxu0 %v3703
  %4111 = vmatprep.subr.bf16.mxu0 0
  %4112 = vmatpush1.bf16.msra.mxu0 %v3704
  %4113 = vmatprep.subr.bf16.mxu0 0
  %4114 = vmatpush1.bf16.msra.mxu0 %v3705
  %4115 = vmatprep.subr.bf16.mxu0 0
  %4116 = vmatpush1.bf16.msra.mxu0 %v3706
  %4117 = vmatprep.subr.bf16.mxu0 0
  %4118 = vmatpush1.bf16.msra.mxu0 %v3707
  %4119 = vmatprep.subr.bf16.mxu0 0
  %4120 = vmatpush1.bf16.msra.mxu0 %v3708
  %4121 = vmatprep.subr.bf16.mxu0 0
  %4122 = vmatpush1.bf16.msra.mxu0 %v3709
  %4123 = vmatprep.subr.bf16.mxu0 0
  %4124 = vmatpush1.bf16.msra.mxu0 %v3710
  %4125 = vmatprep.subr.bf16.mxu0 0
  %4126 = vmatpush1.bf16.msra.mxu0 %v3711
  %4127 = vmatprep.subr.bf16.mxu0 0
  %4128 = vmatpush1.bf16.msra.mxu0 %v3712
  %4129 = vmatprep.mubr.bf16.mxu0 %v375
  %4130 = vmatmul.mubr.bf16.gmra.mrb[0].mxu0 %v361
  %v4131 = vpop.f32.mrb[0].mxu0
  %v4132 = vadd.f32 %v4092, %v4131
  %v4133 = vpop.f32.mrb[0].mxu0
  %v4134 = vpop.f32.mrb[0].mxu0
  %v4135 = vpop.f32.mrb[0].mxu0
  %4136 = vdwg.mxu0
  %4137 = vmatprep.subr.bf16.mxu0 0
  %4138 = vmatpush1.bf16.msra.mxu0 %v3713
  %4139 = vmatprep.subr.bf16.mxu0 0
  %4140 = vmatpush1.bf16.msra.mxu0 %v3714
  %4141 = vmatprep.subr.bf16.mxu0 0
  %4142 = vmatpush1.bf16.msra.mxu0 %v3715
  %4143 = vmatprep.subr.bf16.mxu0 0
  %4144 = vmatpush1.bf16.msra.mxu0 %v3716
  %4145 = vmatprep.subr.bf16.mxu0 0
  %4146 = vmatpush1.bf16.msra.mxu0 %v3717
  %4147 = vmatprep.subr.bf16.mxu0 0
  %4148 = vmatpush1.bf16.msra.mxu0 %v3718
  %4149 = vmatprep.subr.bf16.mxu0 0
  %4150 = vmatpush1.bf16.msra.mxu0 %v3719
  %4151 = vmatprep.subr.bf16.mxu0 0
  %4152 = vmatpush1.bf16.msra.mxu0 %v3720
  %4153 = vmatprep.subr.bf16.mxu0 0
  %4154 = vmatpush1.bf16.msra.mxu0 %v3721
  %4155 = vmatprep.subr.bf16.mxu0 0
  %4156 = vmatpush1.bf16.msra.mxu0 %v3722
  %4157 = vmatprep.subr.bf16.mxu0 0
  %4158 = vmatpush1.bf16.msra.mxu0 %v3723
  %4159 = vmatprep.subr.bf16.mxu0 0
  %4160 = vmatpush1.bf16.msra.mxu0 %v3724
  %4161 = vmatprep.subr.bf16.mxu0 0
  %4162 = vmatpush1.bf16.msra.mxu0 %v3725
  %4163 = vmatprep.subr.bf16.mxu0 0
  %4164 = vmatpush1.bf16.msra.mxu0 %v3726
  %4165 = vmatprep.subr.bf16.mxu0 0
  %4166 = vmatpush1.bf16.msra.mxu0 %v3727
  %4167 = vmatprep.subr.bf16.mxu0 0
  %4168 = vmatpush1.bf16.msra.mxu0 %v3728
  %4169 = vmatprep.mubr.bf16.mxu0 %v379
  %4170 = vmatmul.mubr.bf16.gmra.mrb[0].mxu0 %v377
  %v4171 = vpop.f32.mrb[0].mxu0
  %v4172 = vadd.f32 %v4132, %v4171
  %v4173 = vpop.f32.mrb[0].mxu0
  %v4174 = vpop.f32.mrb[0].mxu0
  %v4175 = vpop.f32.mrb[0].mxu0
  %4176 = vdwg.mxu0
  %v4177 = vmax.f32 %v4172, 0.0
  %v4178 = vmax.f32 %v2831, %v4177
  %s4179 = scalar_lea.vmem %s1, 3072
  %v4180 = vld [vmem:[%s4179] sm:$0xf]
  %v4181 = vld [vmem:[%s4179 + $0x4] sm:$0xf]
  %v4182 = vld [vmem:[%s4179 + $0x8] sm:$0xf]
  %v4183 = vld [vmem:[%s4179 + $0xc] sm:$0xf]
  %v4184 = vld [vmem:[%s4179 + $0x10] sm:$0xf]
  %v4185 = vld [vmem:[%s4179 + $0x14] sm:$0xf]
  %v4186 = vld [vmem:[%s4179 + $0x18] sm:$0xf]
  %v4187 = vld [vmem:[%s4179 + $0x1c] sm:$0xf]
  %v4188 = vld [vmem:[%s4179 + $0x20] sm:$0xf]
  %v4189 = vld [vmem:[%s4179 + $0x24] sm:$0xf]
  %v4190 = vld [vmem:[%s4179 + $0x28] sm:$0xf]
  %v4191 = vld [vmem:[%s4179 + $0x2c] sm:$0xf]
  %v4192 = vld [vmem:[%s4179 + $0x30] sm:$0xf]
  %v4193 = vld [vmem:[%s4179 + $0x34] sm:$0xf]
  %v4194 = vld [vmem:[%s4179 + $0x38] sm:$0xf]
  %v4195 = vld [vmem:[%s4179 + $0x3c] sm:$0xf]
  %v4196 = vld [vmem:[%s4179 + $0x40] sm:$0xf]
  %v4197 = vld [vmem:[%s4179 + $0x44] sm:$0xf]
  %v4198 = vld [vmem:[%s4179 + $0x48] sm:$0xf]
  %v4199 = vld [vmem:[%s4179 + $0x4c] sm:$0xf]
  %v4200 = vld [vmem:[%s4179 + $0x50] sm:$0xf]
  %v4201 = vld [vmem:[%s4179 + $0x54] sm:$0xf]
  %v4202 = vld [vmem:[%s4179 + $0x58] sm:$0xf]
  %v4203 = vld [vmem:[%s4179 + $0x5c] sm:$0xf]
  %v4204 = vld [vmem:[%s4179 + $0x60] sm:$0xf]
  %v4205 = vld [vmem:[%s4179 + $0x64] sm:$0xf]
  %v4206 = vld [vmem:[%s4179 + $0x68] sm:$0xf]
  %v4207 = vld [vmem:[%s4179 + $0x6c] sm:$0xf]
  %v4208 = vld [vmem:[%s4179 + $0x70] sm:$0xf]
  %v4209 = vld [vmem:[%s4179 + $0x74] sm:$0xf]
  %v4210 = vld [vmem:[%s4179 + $0x78] sm:$0xf]
  %v4211 = vld [vmem:[%s4179 + $0x7c] sm:$0xf]
  %v4212 = vld [vmem:[%s4179 + $0x80] sm:$0xf]
  %v4213 = vld [vmem:[%s4179 + $0x84] sm:$0xf]
  %v4214 = vld [vmem:[%s4179 + $0x88] sm:$0xf]
  %v4215 = vld [vmem:[%s4179 + $0x8c] sm:$0xf]
  %v4216 = vld [vmem:[%s4179 + $0x90] sm:$0xf]
  %v4217 = vld [vmem:[%s4179 + $0x94] sm:$0xf]
  %v4218 = vld [vmem:[%s4179 + $0x98] sm:$0xf]
  %v4219 = vld [vmem:[%s4179 + $0x9c] sm:$0xf]
  %v4220 = vld [vmem:[%s4179 + $0xa0] sm:$0xf]
  %v4221 = vld [vmem:[%s4179 + $0xa4] sm:$0xf]
  %v4222 = vld [vmem:[%s4179 + $0xa8] sm:$0xf]
  %v4223 = vld [vmem:[%s4179 + $0xac] sm:$0xf]
  %v4224 = vld [vmem:[%s4179 + $0xb0] sm:$0xf]
  %v4225 = vld [vmem:[%s4179 + $0xb4] sm:$0xf]
  %v4226 = vld [vmem:[%s4179 + $0xb8] sm:$0xf]
  %v4227 = vld [vmem:[%s4179 + $0xbc] sm:$0xf]
  %v4228 = vld [vmem:[%s4179 + $0xc0] sm:$0xf]
  %v4229 = vld [vmem:[%s4179 + $0xc4] sm:$0xf]
  %v4230 = vld [vmem:[%s4179 + $0xc8] sm:$0xf]
  %v4231 = vld [vmem:[%s4179 + $0xcc] sm:$0xf]
  %v4232 = vld [vmem:[%s4179 + $0xd0] sm:$0xf]
  %v4233 = vld [vmem:[%s4179 + $0xd4] sm:$0xf]
  %v4234 = vld [vmem:[%s4179 + $0xd8] sm:$0xf]
  %v4235 = vld [vmem:[%s4179 + $0xdc] sm:$0xf]
  %v4236 = vld [vmem:[%s4179 + $0xe0] sm:$0xf]
  %v4237 = vld [vmem:[%s4179 + $0xe4] sm:$0xf]
  %v4238 = vld [vmem:[%s4179 + $0xe8] sm:$0xf]
  %v4239 = vld [vmem:[%s4179 + $0xec] sm:$0xf]
  %v4240 = vld [vmem:[%s4179 + $0xf0] sm:$0xf]
  %v4241 = vld [vmem:[%s4179 + $0xf4] sm:$0xf]
  %v4242 = vld [vmem:[%s4179 + $0xf8] sm:$0xf]
  %v4243 = vld [vmem:[%s4179 + $0xfc] sm:$0xf]
  %v4244 = vld [vmem:[%s4179 + $0x100] sm:$0xf]
  %v4245 = vld [vmem:[%s4179 + $0x104] sm:$0xf]
  %v4246 = vld [vmem:[%s4179 + $0x108] sm:$0xf]
  %v4247 = vld [vmem:[%s4179 + $0x10c] sm:$0xf]
  %v4248 = vld [vmem:[%s4179 + $0x110] sm:$0xf]
  %v4249 = vld [vmem:[%s4179 + $0x114] sm:$0xf]
  %v4250 = vld [vmem:[%s4179 + $0x118] sm:$0xf]
  %v4251 = vld [vmem:[%s4179 + $0x11c] sm:$0xf]
  %v4252 = vld [vmem:[%s4179 + $0x120] sm:$0xf]
  %v4253 = vld [vmem:[%s4179 + $0x124] sm:$0xf]
  %v4254 = vld [vmem:[%s4179 + $0x128] sm:$0xf]
  %v4255 = vld [vmem:[%s4179 + $0x12c] sm:$0xf]
  %v4256 = vld [vmem:[%s4179 + $0x130] sm:$0xf]
  %v4257 = vld [vmem:[%s4179 + $0x134] sm:$0xf]
  %v4258 = vld [vmem:[%s4179 + $0x138] sm:$0xf]
  %v4259 = vld [vmem:[%s4179 + $0x13c] sm:$0xf]
  %v4260 = vld [vmem:[%s4179 + $0x140] sm:$0xf]
  %v4261 = vld [vmem:[%s4179 + $0x144] sm:$0xf]
  %v4262 = vld [vmem:[%s4179 + $0x148] sm:$0xf]
  %v4263 = vld [vmem:[%s4179 + $0x14c] sm:$0xf]
  %v4264 = vld [vmem:[%s4179 + $0x150] sm:$0xf]
  %v4265 = vld [vmem:[%s4179 + $0x154] sm:$0xf]
  %v4266 = vld [vmem:[%s4179 + $0x158] sm:$0xf]
  %v4267 = vld [vmem:[%s4179 + $0x15c] sm:$0xf]
  %v4268 = vld [vmem:[%s4179 + $0x160] sm:$0xf]
  %v4269 = vld [vmem:[%s4179 + $0x164] sm:$0xf]
  %v4270 = vld [vmem:[%s4179 + $0x168] sm:$0xf]
  %v4271 = vld [vmem:[%s4179 + $0x16c] sm:$0xf]
  %v4272 = vld [vmem:[%s4179 + $0x170] sm:$0xf]
  %v4273 = vld [vmem:[%s4179 + $0x174] sm:$0xf]
  %v4274 = vld [vmem:[%s4179 + $0x178] sm:$0xf]
  %v4275 = vld [vmem:[%s4179 + $0x17c] sm:$0xf]
  %v4276 = vld [vmem:[%s4179 + $0x180] sm:$0xf]
  %v4277 = vld [vmem:[%s4179 + $0x184] sm:$0xf]
  %v4278 = vld [vmem:[%s4179 + $0x188] sm:$0xf]
  %v4279 = vld [vmem:[%s4179 + $0x18c] sm:$0xf]
  %v4280 = vld [vmem:[%s4179 + $0x190] sm:$0xf]
  %v4281 = vld [vmem:[%s4179 + $0x194] sm:$0xf]
  %v4282 = vld [vmem:[%s4179 + $0x198] sm:$0xf]
  %v4283 = vld [vmem:[%s4179 + $0x19c] sm:$0xf]
  %v4284 = vld [vmem:[%s4179 + $0x1a0] sm:$0xf]
  %v4285 = vld [vmem:[%s4179 + $0x1a4] sm:$0xf]
  %v4286 = vld [vmem:[%s4179 + $0x1a8] sm:$0xf]
  %v4287 = vld [vmem:[%s4179 + $0x1ac] sm:$0xf]
  %v4288 = vld [vmem:[%s4179 + $0x1b0] sm:$0xf]
  %v4289 = vld [vmem:[%s4179 + $0x1b4] sm:$0xf]
  %v4290 = vld [vmem:[%s4179 + $0x1b8] sm:$0xf]
  %v4291 = vld [vmem:[%s4179 + $0x1bc] sm:$0xf]
  %v4292 = vld [vmem:[%s4179 + $0x1c0] sm:$0xf]
  %v4293 = vld [vmem:[%s4179 + $0x1c4] sm:$0xf]
  %v4294 = vld [vmem:[%s4179 + $0x1c8] sm:$0xf]
  %v4295 = vld [vmem:[%s4179 + $0x1cc] sm:$0xf]
  %v4296 = vld [vmem:[%s4179 + $0x1d0] sm:$0xf]
  %v4297 = vld [vmem:[%s4179 + $0x1d4] sm:$0xf]
  %v4298 = vld [vmem:[%s4179 + $0x1d8] sm:$0xf]
  %v4299 = vld [vmem:[%s4179 + $0x1dc] sm:$0xf]
  %v4300 = vld [vmem:[%s4179 + $0x1e0] sm:$0xf]
  %v4301 = vld [vmem:[%s4179 + $0x1e4] sm:$0xf]
  %v4302 = vld [vmem:[%s4179 + $0x1e8] sm:$0xf]
  %v4303 = vld [vmem:[%s4179 + $0x1ec] sm:$0xf]
  %v4304 = vld [vmem:[%s4179 + $0x1f0] sm:$0xf]
  %v4305 = vld [vmem:[%s4179 + $0x1f4] sm:$0xf]
  %v4306 = vld [vmem:[%s4179 + $0x1f8] sm:$0xf]
  %v4307 = vld [vmem:[%s4179 + $0x1fc] sm:$0xf]
  %v4308 = vld [vmem:[%s4179 + $0x200] sm:$0xf]
  %v4309 = vld [vmem:[%s4179 + $0x204] sm:$0xf]
  %v4310 = vld [vmem:[%s4179 + $0x208] sm:$0xf]
  %v4311 = vld [vmem:[%s4179 + $0x20c] sm:$0xf]
  %v4312 = vld [vmem:[%s4179 + $0x210] sm:$0xf]
  %v4313 = vld [vmem:[%s4179 + $0x214] sm:$0xf]
  %v4314 = vld [vmem:[%s4179 + $0x218] sm:$0xf]
  %v4315 = vld [vmem:[%s4179 + $0x21c] sm:$0xf]
  %v4316 = vld [vmem:[%s4179 + $0x220] sm:$0xf]
  %v4317 = vld [vmem:[%s4179 + $0x224] sm:$0xf]
  %v4318 = vld [vmem:[%s4179 + $0x228] sm:$0xf]
  %v4319 = vld [vmem:[%s4179 + $0x22c] sm:$0xf]
  %v4320 = vld [vmem:[%s4179 + $0x230] sm:$0xf]
  %v4321 = vld [vmem:[%s4179 + $0x234] sm:$0xf]
  %v4322 = vld [vmem:[%s4179 + $0x238] sm:$0xf]
  %v4323 = vld [vmem:[%s4179 + $0x23c] sm:$0xf]
  %v4324 = vld [vmem:[%s4179 + $0x240] sm:$0xf]
  %v4325 = vld [vmem:[%s4179 + $0x244] sm:$0xf]
  %v4326 = vld [vmem:[%s4179 + $0x248] sm:$0xf]
  %v4327 = vld [vmem:[%s4179 + $0x24c] sm:$0xf]
  %v4328 = vld [vmem:[%s4179 + $0x250] sm:$0xf]
  %v4329 = vld [vmem:[%s4179 + $0x254] sm:$0xf]
  %v4330 = vld [vmem:[%s4179 + $0x258] sm:$0xf]
  %v4331 = vld [vmem:[%s4179 + $0x25c] sm:$0xf]
  %v4332 = vld [vmem:[%s4179 + $0x260] sm:$0xf]
  %v4333 = vld [vmem:[%s4179 + $0x264] sm:$0xf]
  %v4334 = vld [vmem:[%s4179 + $0x268] sm:$0xf]
  %v4335 = vld [vmem:[%s4179 + $0x26c] sm:$0xf]
  %v4336 = vld [vmem:[%s4179 + $0x270] sm:$0xf]
  %v4337 = vld [vmem:[%s4179 + $0x274] sm:$0xf]
  %v4338 = vld [vmem:[%s4179 + $0x278] sm:$0xf]
  %v4339 = vld [vmem:[%s4179 + $0x27c] sm:$0xf]
  %v4340 = vld [vmem:[%s4179 + $0x280] sm:$0xf]
  %v4341 = vld [vmem:[%s4179 + $0x284] sm:$0xf]
  %v4342 = vld [vmem:[%s4179 + $0x288] sm:$0xf]
  %v4343 = vld [vmem:[%s4179 + $0x28c] sm:$0xf]
  %v4344 = vld [vmem:[%s4179 + $0x290] sm:$0xf]
  %v4345 = vld [vmem:[%s4179 + $0x294] sm:$0xf]
  %v4346 = vld [vmem:[%s4179 + $0x298] sm:$0xf]
  %v4347 = vld [vmem:[%s4179 + $0x29c] sm:$0xf]
  %v4348 = vld [vmem:[%s4179 + $0x2a0] sm:$0xf]
  %v4349 = vld [vmem:[%s4179 + $0x2a4] sm:$0xf]
  %v4350 = vld [vmem:[%s4179 + $0x2a8] sm:$0xf]
  %v4351 = vld [vmem:[%s4179 + $0x2ac] sm:$0xf]
  %v4352 = vld [vmem:[%s4179 + $0x2b0] sm:$0xf]
  %v4353 = vld [vmem:[%s4179 + $0x2b4] sm:$0xf]
  %v4354 = vld [vmem:[%s4179 + $0x2b8] sm:$0xf]
  %v4355 = vld [vmem:[%s4179 + $0x2bc] sm:$0xf]
  %v4356 = vld [vmem:[%s4179 + $0x2c0] sm:$0xf]
  %v4357 = vld [vmem:[%s4179 + $0x2c4] sm:$0xf]
  %v4358 = vld [vmem:[%s4179 + $0x2c8] sm:$0xf]
  %v4359 = vld [vmem:[%s4179 + $0x2cc] sm:$0xf]
  %v4360 = vld [vmem:[%s4179 + $0x2d0] sm:$0xf]
  %v4361 = vld [vmem:[%s4179 + $0x2d4] sm:$0xf]
  %v4362 = vld [vmem:[%s4179 + $0x2d8] sm:$0xf]
  %v4363 = vld [vmem:[%s4179 + $0x2dc] sm:$0xf]
  %v4364 = vld [vmem:[%s4179 + $0x2e0] sm:$0xf]
  %v4365 = vld [vmem:[%s4179 + $0x2e4] sm:$0xf]
  %v4366 = vld [vmem:[%s4179 + $0x2e8] sm:$0xf]
  %v4367 = vld [vmem:[%s4179 + $0x2ec] sm:$0xf]
  %v4368 = vld [vmem:[%s4179 + $0x2f0] sm:$0xf]
  %v4369 = vld [vmem:[%s4179 + $0x2f4] sm:$0xf]
  %v4370 = vld [vmem:[%s4179 + $0x2f8] sm:$0xf]
  %v4371 = vld [vmem:[%s4179 + $0x2fc] sm:$0xf]
  %v4372 = vld [vmem:[%s4179 + $0x300] sm:$0xf]
  %v4373 = vld [vmem:[%s4179 + $0x304] sm:$0xf]
  %v4374 = vld [vmem:[%s4179 + $0x308] sm:$0xf]
  %v4375 = vld [vmem:[%s4179 + $0x30c] sm:$0xf]
  %v4376 = vld [vmem:[%s4179 + $0x310] sm:$0xf]
  %v4377 = vld [vmem:[%s4179 + $0x314] sm:$0xf]
  %v4378 = vld [vmem:[%s4179 + $0x318] sm:$0xf]
  %v4379 = vld [vmem:[%s4179 + $0x31c] sm:$0xf]
  %v4380 = vld [vmem:[%s4179 + $0x320] sm:$0xf]
  %v4381 = vld [vmem:[%s4179 + $0x324] sm:$0xf]
  %v4382 = vld [vmem:[%s4179 + $0x328] sm:$0xf]
  %v4383 = vld [vmem:[%s4179 + $0x32c] sm:$0xf]
  %v4384 = vld [vmem:[%s4179 + $0x330] sm:$0xf]
  %v4385 = vld [vmem:[%s4179 + $0x334] sm:$0xf]
  %v4386 = vld [vmem:[%s4179 + $0x338] sm:$0xf]
  %v4387 = vld [vmem:[%s4179 + $0x33c] sm:$0xf]
  %v4388 = vld [vmem:[%s4179 + $0x340] sm:$0xf]
  %v4389 = vld [vmem:[%s4179 + $0x344] sm:$0xf]
  %v4390 = vld [vmem:[%s4179 + $0x348] sm:$0xf]
  %v4391 = vld [vmem:[%s4179 + $0x34c] sm:$0xf]
  %v4392 = vld [vmem:[%s4179 + $0x350] sm:$0xf]
  %v4393 = vld [vmem:[%s4179 + $0x354] sm:$0xf]
  %v4394 = vld [vmem:[%s4179 + $0x358] sm:$0xf]
  %v4395 = vld [vmem:[%s4179 + $0x35c] sm:$0xf]
  %v4396 = vld [vmem:[%s4179 + $0x360] sm:$0xf]
  %v4397 = vld [vmem:[%s4179 + $0x364] sm:$0xf]
  %v4398 = vld [vmem:[%s4179 + $0x368] sm:$0xf]
  %v4399 = vld [vmem:[%s4179 + $0x36c] sm:$0xf]
  %v4400 = vld [vmem:[%s4179 + $0x370] sm:$0xf]
  %v4401 = vld [vmem:[%s4179 + $0x374] sm:$0xf]
  %v4402 = vld [vmem:[%s4179 + $0x378] sm:$0xf]
  %v4403 = vld [vmem:[%s4179 + $0x37c] sm:$0xf]
  %v4404 = vld [vmem:[%s4179 + $0x380] sm:$0xf]
  %v4405 = vld [vmem:[%s4179 + $0x384] sm:$0xf]
  %v4406 = vld [vmem:[%s4179 + $0x388] sm:$0xf]
  %v4407 = vld [vmem:[%s4179 + $0x38c] sm:$0xf]
  %v4408 = vld [vmem:[%s4179 + $0x390] sm:$0xf]
  %v4409 = vld [vmem:[%s4179 + $0x394] sm:$0xf]
  %v4410 = vld [vmem:[%s4179 + $0x398] sm:$0xf]
  %v4411 = vld [vmem:[%s4179 + $0x39c] sm:$0xf]
  %v4412 = vld [vmem:[%s4179 + $0x3a0] sm:$0xf]
  %v4413 = vld [vmem:[%s4179 + $0x3a4] sm:$0xf]
  %v4414 = vld [vmem:[%s4179 + $0x3a8] sm:$0xf]
  %v4415 = vld [vmem:[%s4179 + $0x3ac] sm:$0xf]
  %v4416 = vld [vmem:[%s4179 + $0x3b0] sm:$0xf]
  %v4417 = vld [vmem:[%s4179 + $0x3b4] sm:$0xf]
  %v4418 = vld [vmem:[%s4179 + $0x3b8] sm:$0xf]
  %v4419 = vld [vmem:[%s4179 + $0x3bc] sm:$0xf]
  %v4420 = vld [vmem:[%s4179 + $0x3c0] sm:$0xf]
  %v4421 = vld [vmem:[%s4179 + $0x3c4] sm:$0xf]
  %v4422 = vld [vmem:[%s4179 + $0x3c8] sm:$0xf]
  %v4423 = vld [vmem:[%s4179 + $0x3cc] sm:$0xf]
  %v4424 = vld [vmem:[%s4179 + $0x3d0] sm:$0xf]
  %v4425 = vld [vmem:[%s4179 + $0x3d4] sm:$0xf]
  %v4426 = vld [vmem:[%s4179 + $0x3d8] sm:$0xf]
  %v4427 = vld [vmem:[%s4179 + $0x3dc] sm:$0xf]
  %v4428 = vld [vmem:[%s4179 + $0x3e0] sm:$0xf]
  %v4429 = vld [vmem:[%s4179 + $0x3e4] sm:$0xf]
  %v4430 = vld [vmem:[%s4179 + $0x3e8] sm:$0xf]
  %v4431 = vld [vmem:[%s4179 + $0x3ec] sm:$0xf]
  %v4432 = vld [vmem:[%s4179 + $0x3f0] sm:$0xf]
  %v4433 = vld [vmem:[%s4179 + $0x3f4] sm:$0xf]
  %v4434 = vld [vmem:[%s4179 + $0x3f8] sm:$0xf]
  %v4435 = vld [vmem:[%s4179 + $0x3fc] sm:$0xf]
  %v4692 = vunpack.c.l.b16 %v4180
  %v4693 = vunpack.c.l.b16 %v4181
  %v4694 = vunpack.c.l.b16 %v4182
  %v4695 = vunpack.c.l.b16 %v4183
  %v4696 = vunpack.c.l.b16 %v4184
  %v4697 = vunpack.c.l.b16 %v4185
  %v4698 = vunpack.c.l.b16 %v4186
  %v4699 = vunpack.c.l.b16 %v4187
  %v4700 = vunpack.c.l.b16 %v4188
  %v4701 = vunpack.c.l.b16 %v4189
  %v4702 = vunpack.c.l.b16 %v4190
  %v4703 = vunpack.c.l.b16 %v4191
  %v4704 = vunpack.c.l.b16 %v4192
  %v4705 = vunpack.c.l.b16 %v4193
  %v4706 = vunpack.c.l.b16 %v4194
  %v4707 = vunpack.c.l.b16 %v4195
  %v4708 = vunpack.c.l.b16 %v4196
  %v4709 = vunpack.c.l.b16 %v4197
  %v4710 = vunpack.c.l.b16 %v4198
  %v4711 = vunpack.c.l.b16 %v4199
  %v4712 = vunpack.c.l.b16 %v4200
  %v4713 = vunpack.c.l.b16 %v4201
  %v4714 = vunpack.c.l.b16 %v4202
  %v4715 = vunpack.c.l.b16 %v4203
  %v4716 = vunpack.c.l.b16 %v4204
  %v4717 = vunpack.c.l.b16 %v4205
  %v4718 = vunpack.c.l.b16 %v4206
  %v4719 = vunpack.c.l.b16 %v4207
  %v4720 = vunpack.c.l.b16 %v4208
  %v4721 = vunpack.c.l.b16 %v4209
  %v4722 = vunpack.c.l.b16 %v4210
  %v4723 = vunpack.c.l.b16 %v4211
  %v4724 = vunpack.c.l.b16 %v4212
  %v4725 = vunpack.c.l.b16 %v4213
  %v4726 = vunpack.c.l.b16 %v4214
  %v4727 = vunpack.c.l.b16 %v4215
  %v4728 = vunpack.c.l.b16 %v4216
  %v4729 = vunpack.c.l.b16 %v4217
  %v4730 = vunpack.c.l.b16 %v4218
  %v4731 = vunpack.c.l.b16 %v4219
  %v4732 = vunpack.c.l.b16 %v4220
  %v4733 = vunpack.c.l.b16 %v4221
  %v4734 = vunpack.c.l.b16 %v4222
  %v4735 = vunpack.c.l.b16 %v4223
  %v4736 = vunpack.c.l.b16 %v4224
  %v4737 = vunpack.c.l.b16 %v4225
  %v4738 = vunpack.c.l.b16 %v4226
  %v4739 = vunpack.c.l.b16 %v4227
  %v4740 = vunpack.c.l.b16 %v4228
  %v4741 = vunpack.c.l.b16 %v4229
  %v4742 = vunpack.c.l.b16 %v4230
  %v4743 = vunpack.c.l.b16 %v4231
  %v4744 = vunpack.c.l.b16 %v4232
  %v4745 = vunpack.c.l.b16 %v4233
  %v4746 = vunpack.c.l.b16 %v4234
  %v4747 = vunpack.c.l.b16 %v4235
  %v4748 = vunpack.c.l.b16 %v4236
  %v4749 = vunpack.c.l.b16 %v4237
  %v4750 = vunpack.c.l.b16 %v4238
  %v4751 = vunpack.c.l.b16 %v4239
  %v4752 = vunpack.c.l.b16 %v4240
  %v4753 = vunpack.c.l.b16 %v4241
  %v4754 = vunpack.c.l.b16 %v4242
  %v4755 = vunpack.c.l.b16 %v4243
  %v4756 = vunpack.c.l.b16 %v4244
  %v4757 = vunpack.c.l.b16 %v4245
  %v4758 = vunpack.c.l.b16 %v4246
  %v4759 = vunpack.c.l.b16 %v4247
  %v4760 = vunpack.c.l.b16 %v4248
  %v4761 = vunpack.c.l.b16 %v4249
  %v4762 = vunpack.c.l.b16 %v4250
  %v4763 = vunpack.c.l.b16 %v4251
  %v4764 = vunpack.c.l.b16 %v4252
  %v4765 = vunpack.c.l.b16 %v4253
  %v4766 = vunpack.c.l.b16 %v4254
  %v4767 = vunpack.c.l.b16 %v4255
  %v4768 = vunpack.c.l.b16 %v4256
  %v4769 = vunpack.c.l.b16 %v4257
  %v4770 = vunpack.c.l.b16 %v4258
  %v4771 = vunpack.c.l.b16 %v4259
  %v4772 = vunpack.c.l.b16 %v4260
  %v4773 = vunpack.c.l.b16 %v4261
  %v4774 = vunpack.c.l.b16 %v4262
  %v4775 = vunpack.c.l.b16 %v4263
  %v4776 = vunpack.c.l.b16 %v4264
  %v4777 = vunpack.c.l.b16 %v4265
  %v4778 = vunpack.c.l.b16 %v4266
  %v4779 = vunpack.c.l.b16 %v4267
  %v4780 = vunpack.c.l.b16 %v4268
  %v4781 = vunpack.c.l.b16 %v4269
  %v4782 = vunpack.c.l.b16 %v4270
  %v4783 = vunpack.c.l.b16 %v4271
  %v4784 = vunpack.c.l.b16 %v4272
  %v4785 = vunpack.c.l.b16 %v4273
  %v4786 = vunpack.c.l.b16 %v4274
  %v4787 = vunpack.c.l.b16 %v4275
  %v4788 = vunpack.c.l.b16 %v4276
  %v4789 = vunpack.c.l.b16 %v4277
  %v4790 = vunpack.c.l.b16 %v4278
  %v4791 = vunpack.c.l.b16 %v4279
  %v4792 = vunpack.c.l.b16 %v4280
  %v4793 = vunpack.c.l.b16 %v4281
  %v4794 = vunpack.c.l.b16 %v4282
  %v4795 = vunpack.c.l.b16 %v4283
  %v4796 = vunpack.c.l.b16 %v4284
  %v4797 = vunpack.c.l.b16 %v4285
  %v4798 = vunpack.c.l.b16 %v4286
  %v4799 = vunpack.c.l.b16 %v4287
  %v4800 = vunpack.c.l.b16 %v4288
  %v4801 = vunpack.c.l.b16 %v4289
  %v4802 = vunpack.c.l.b16 %v4290
  %v4803 = vunpack.c.l.b16 %v4291
  %v4804 = vunpack.c.l.b16 %v4292
  %v4805 = vunpack.c.l.b16 %v4293
  %v4806 = vunpack.c.l.b16 %v4294
  %v4807 = vunpack.c.l.b16 %v4295
  %v4808 = vunpack.c.l.b16 %v4296
  %v4809 = vunpack.c.l.b16 %v4297
  %v4810 = vunpack.c.l.b16 %v4298
  %v4811 = vunpack.c.l.b16 %v4299
  %v4812 = vunpack.c.l.b16 %v4300
  %v4813 = vunpack.c.l.b16 %v4301
  %v4814 = vunpack.c.l.b16 %v4302
  %v4815 = vunpack.c.l.b16 %v4303
  %v4816 = vunpack.c.l.b16 %v4304
  %v4817 = vunpack.c.l.b16 %v4305
  %v4818 = vunpack.c.l.b16 %v4306
  %v4819 = vunpack.c.l.b16 %v4307
  %v4820 = vunpack.c.l.b16 %v4308
  %v4821 = vunpack.c.l.b16 %v4309
  %v4822 = vunpack.c.l.b16 %v4310
  %v4823 = vunpack.c.l.b16 %v4311
  %v4824 = vunpack.c.l.b16 %v4312
  %v4825 = vunpack.c.l.b16 %v4313
  %v4826 = vunpack.c.l.b16 %v4314
  %v4827 = vunpack.c.l.b16 %v4315
  %v4828 = vunpack.c.l.b16 %v4316
  %v4829 = vunpack.c.l.b16 %v4317
  %v4830 = vunpack.c.l.b16 %v4318
  %v4831 = vunpack.c.l.b16 %v4319
  %v4832 = vunpack.c.l.b16 %v4320
  %v4833 = vunpack.c.l.b16 %v4321
  %v4834 = vunpack.c.l.b16 %v4322
  %v4835 = vunpack.c.l.b16 %v4323
  %v4836 = vunpack.c.l.b16 %v4324
  %v4837 = vunpack.c.l.b16 %v4325
  %v4838 = vunpack.c.l.b16 %v4326
  %v4839 = vunpack.c.l.b16 %v4327
  %v4840 = vunpack.c.l.b16 %v4328
  %v4841 = vunpack.c.l.b16 %v4329
  %v4842 = vunpack.c.l.b16 %v4330
  %v4843 = vunpack.c.l.b16 %v4331
  %v4844 = vunpack.c.l.b16 %v4332
  %v4845 = vunpack.c.l.b16 %v4333
  %v4846 = vunpack.c.l.b16 %v4334
  %v4847 = vunpack.c.l.b16 %v4335
  %v4848 = vunpack.c.l.b16 %v4336
  %v4849 = vunpack.c.l.b16 %v4337
  %v4850 = vunpack.c.l.b16 %v4338
  %v4851 = vunpack.c.l.b16 %v4339
  %v4852 = vunpack.c.l.b16 %v4340
  %v4853 = vunpack.c.l.b16 %v4341
  %v4854 = vunpack.c.l.b16 %v4342
  %v4855 = vunpack.c.l.b16 %v4343
  %v4856 = vunpack.c.l.b16 %v4344
  %v4857 = vunpack.c.l.b16 %v4345
  %v4858 = vunpack.c.l.b16 %v4346
  %v4859 = vunpack.c.l.b16 %v4347
  %v4860 = vunpack.c.l.b16 %v4348
  %v4861 = vunpack.c.l.b16 %v4349
  %v4862 = vunpack.c.l.b16 %v4350
  %v4863 = vunpack.c.l.b16 %v4351
  %v4864 = vunpack.c.l.b16 %v4352
  %v4865 = vunpack.c.l.b16 %v4353
  %v4866 = vunpack.c.l.b16 %v4354
  %v4867 = vunpack.c.l.b16 %v4355
  %v4868 = vunpack.c.l.b16 %v4356
  %v4869 = vunpack.c.l.b16 %v4357
  %v4870 = vunpack.c.l.b16 %v4358
  %v4871 = vunpack.c.l.b16 %v4359
  %v4872 = vunpack.c.l.b16 %v4360
  %v4873 = vunpack.c.l.b16 %v4361
  %v4874 = vunpack.c.l.b16 %v4362
  %v4875 = vunpack.c.l.b16 %v4363
  %v4876 = vunpack.c.l.b16 %v4364
  %v4877 = vunpack.c.l.b16 %v4365
  %v4878 = vunpack.c.l.b16 %v4366
  %v4879 = vunpack.c.l.b16 %v4367
  %v4880 = vunpack.c.l.b16 %v4368
  %v4881 = vunpack.c.l.b16 %v4369
  %v4882 = vunpack.c.l.b16 %v4370
  %v4883 = vunpack.c.l.b16 %v4371
  %v4884 = vunpack.c.l.b16 %v4372
  %v4885 = vunpack.c.l.b16 %v4373
  %v4886 = vunpack.c.l.b16 %v4374
  %v4887 = vunpack.c.l.b16 %v4375
  %v4888 = vunpack.c.l.b16 %v4376
  %v4889 = vunpack.c.l.b16 %v4377
  %v4890 = vunpack.c.l.b16 %v4378
  %v4891 = vunpack.c.l.b16 %v4379
  %v4892 = vunpack.c.l.b16 %v4380
  %v4893 = vunpack.c.l.b16 %v4381
  %v4894 = vunpack.c.l.b16 %v4382
  %v4895 = vunpack.c.l.b16 %v4383
  %v4896 = vunpack.c.l.b16 %v4384
  %v4897 = vunpack.c.l.b16 %v4385
  %v4898 = vunpack.c.l.b16 %v4386
  %v4899 = vunpack.c.l.b16 %v4387
  %v4900 = vunpack.c.l.b16 %v4388
  %v4901 = vunpack.c.l.b16 %v4389
  %v4902 = vunpack.c.l.b16 %v4390
  %v4903 = vunpack.c.l.b16 %v4391
  %v4904 = vunpack.c.l.b16 %v4392
  %v4905 = vunpack.c.l.b16 %v4393
  %v4906 = vunpack.c.l.b16 %v4394
  %v4907 = vunpack.c.l.b16 %v4395
  %v4908 = vunpack.c.l.b16 %v4396
  %v4909 = vunpack.c.l.b16 %v4397
  %v4910 = vunpack.c.l.b16 %v4398
  %v4911 = vunpack.c.l.b16 %v4399
  %v4912 = vunpack.c.l.b16 %v4400
  %v4913 = vunpack.c.l.b16 %v4401
  %v4914 = vunpack.c.l.b16 %v4402
  %v4915 = vunpack.c.l.b16 %v4403
  %v4916 = vunpack.c.l.b16 %v4404
  %v4917 = vunpack.c.l.b16 %v4405
  %v4918 = vunpack.c.l.b16 %v4406
  %v4919 = vunpack.c.l.b16 %v4407
  %v4920 = vunpack.c.l.b16 %v4408
  %v4921 = vunpack.c.l.b16 %v4409
  %v4922 = vunpack.c.l.b16 %v4410
  %v4923 = vunpack.c.l.b16 %v4411
  %v4924 = vunpack.c.l.b16 %v4412
  %v4925 = vunpack.c.l.b16 %v4413
  %v4926 = vunpack.c.l.b16 %v4414
  %v4927 = vunpack.c.l.b16 %v4415
  %v4928 = vunpack.c.l.b16 %v4416
  %v4929 = vunpack.c.l.b16 %v4417
  %v4930 = vunpack.c.l.b16 %v4418
  %v4931 = vunpack.c.l.b16 %v4419
  %v4932 = vunpack.c.l.b16 %v4420
  %v4933 = vunpack.c.l.b16 %v4421
  %v4934 = vunpack.c.l.b16 %v4422
  %v4935 = vunpack.c.l.b16 %v4423
  %v4936 = vunpack.c.l.b16 %v4424
  %v4937 = vunpack.c.l.b16 %v4425
  %v4938 = vunpack.c.l.b16 %v4426
  %v4939 = vunpack.c.l.b16 %v4427
  %v4940 = vunpack.c.l.b16 %v4428
  %v4941 = vunpack.c.l.b16 %v4429
  %v4942 = vunpack.c.l.b16 %v4430
  %v4943 = vunpack.c.l.b16 %v4431
  %v4944 = vunpack.c.l.b16 %v4432
  %v4945 = vunpack.c.l.b16 %v4433
  %v4946 = vunpack.c.l.b16 %v4434
  %v4947 = vunpack.c.l.b16 %v4435
  %v4948 = vpack.c.b16 %v4693, %v4692
  %v4949 = vpack.c.b16 %v4695, %v4694
  %v4950 = vpack.c.b16 %v4697, %v4696
  %v4951 = vpack.c.b16 %v4699, %v4698
  %v4952 = vpack.c.b16 %v4701, %v4700
  %v4953 = vpack.c.b16 %v4703, %v4702
  %v4954 = vpack.c.b16 %v4705, %v4704
  %v4955 = vpack.c.b16 %v4707, %v4706
  %v4956 = vpack.c.b16 %v4709, %v4708
  %v4957 = vpack.c.b16 %v4711, %v4710
  %v4958 = vpack.c.b16 %v4713, %v4712
  %v4959 = vpack.c.b16 %v4715, %v4714
  %v4960 = vpack.c.b16 %v4717, %v4716
  %v4961 = vpack.c.b16 %v4719, %v4718
  %v4962 = vpack.c.b16 %v4721, %v4720
  %v4963 = vpack.c.b16 %v4723, %v4722
  %v4964 = vpack.c.b16 %v4725, %v4724
  %v4965 = vpack.c.b16 %v4727, %v4726
  %v4966 = vpack.c.b16 %v4729, %v4728
  %v4967 = vpack.c.b16 %v4731, %v4730
  %v4968 = vpack.c.b16 %v4733, %v4732
  %v4969 = vpack.c.b16 %v4735, %v4734
  %v4970 = vpack.c.b16 %v4737, %v4736
  %v4971 = vpack.c.b16 %v4739, %v4738
  %v4972 = vpack.c.b16 %v4741, %v4740
  %v4973 = vpack.c.b16 %v4743, %v4742
  %v4974 = vpack.c.b16 %v4745, %v4744
  %v4975 = vpack.c.b16 %v4747, %v4746
  %v4976 = vpack.c.b16 %v4749, %v4748
  %v4977 = vpack.c.b16 %v4751, %v4750
  %v4978 = vpack.c.b16 %v4753, %v4752
  %v4979 = vpack.c.b16 %v4755, %v4754
  %v4980 = vpack.c.b16 %v4757, %v4756
  %v4981 = vpack.c.b16 %v4759, %v4758
  %v4982 = vpack.c.b16 %v4761, %v4760
  %v4983 = vpack.c.b16 %v4763, %v4762
  %v4984 = vpack.c.b16 %v4765, %v4764
  %v4985 = vpack.c.b16 %v4767, %v4766
  %v4986 = vpack.c.b16 %v4769, %v4768
  %v4987 = vpack.c.b16 %v4771, %v4770
  %v4988 = vpack.c.b16 %v4773, %v4772
  %v4989 = vpack.c.b16 %v4775, %v4774
  %v4990 = vpack.c.b16 %v4777, %v4776
  %v4991 = vpack.c.b16 %v4779, %v4778
  %v4992 = vpack.c.b16 %v4781, %v4780
  %v4993 = vpack.c.b16 %v4783, %v4782
  %v4994 = vpack.c.b16 %v4785, %v4784
  %v4995 = vpack.c.b16 %v4787, %v4786
  %v4996 = vpack.c.b16 %v4789, %v4788
  %v4997 = vpack.c.b16 %v4791, %v4790
  %v4998 = vpack.c.b16 %v4793, %v4792
  %v4999 = vpack.c.b16 %v4795, %v4794
  %v5000 = vpack.c.b16 %v4797, %v4796
  %v5001 = vpack.c.b16 %v4799, %v4798
  %v5002 = vpack.c.b16 %v4801, %v4800
  %v5003 = vpack.c.b16 %v4803, %v4802
  %v5004 = vpack.c.b16 %v4805, %v4804
  %v5005 = vpack.c.b16 %v4807, %v4806
  %v5006 = vpack.c.b16 %v4809, %v4808
  %v5007 = vpack.c.b16 %v4811, %v4810
  %v5008 = vpack.c.b16 %v4813, %v4812
  %v5009 = vpack.c.b16 %v4815, %v4814
  %v5010 = vpack.c.b16 %v4817, %v4816
  %v5011 = vpack.c.b16 %v4819, %v4818
  %v5012 = vpack.c.b16 %v4821, %v4820
  %v5013 = vpack.c.b16 %v4823, %v4822
  %v5014 = vpack.c.b16 %v4825, %v4824
  %v5015 = vpack.c.b16 %v4827, %v4826
  %v5016 = vpack.c.b16 %v4829, %v4828
  %v5017 = vpack.c.b16 %v4831, %v4830
  %v5018 = vpack.c.b16 %v4833, %v4832
  %v5019 = vpack.c.b16 %v4835, %v4834
  %v5020 = vpack.c.b16 %v4837, %v4836
  %v5021 = vpack.c.b16 %v4839, %v4838
  %v5022 = vpack.c.b16 %v4841, %v4840
  %v5023 = vpack.c.b16 %v4843, %v4842
  %v5024 = vpack.c.b16 %v4845, %v4844
  %v5025 = vpack.c.b16 %v4847, %v4846
  %v5026 = vpack.c.b16 %v4849, %v4848
  %v5027 = vpack.c.b16 %v4851, %v4850
  %v5028 = vpack.c.b16 %v4853, %v4852
  %v5029 = vpack.c.b16 %v4855, %v4854
  %v5030 = vpack.c.b16 %v4857, %v4856
  %v5031 = vpack.c.b16 %v4859, %v4858
  %v5032 = vpack.c.b16 %v4861, %v4860
  %v5033 = vpack.c.b16 %v4863, %v4862
  %v5034 = vpack.c.b16 %v4865, %v4864
  %v5035 = vpack.c.b16 %v4867, %v4866
  %v5036 = vpack.c.b16 %v4869, %v4868
  %v5037 = vpack.c.b16 %v4871, %v4870
  %v5038 = vpack.c.b16 %v4873, %v4872
  %v5039 = vpack.c.b16 %v4875, %v4874
  %v5040 = vpack.c.b16 %v4877, %v4876
  %v5041 = vpack.c.b16 %v4879, %v4878
  %v5042 = vpack.c.b16 %v4881, %v4880
  %v5043 = vpack.c.b16 %v4883, %v4882
  %v5044 = vpack.c.b16 %v4885, %v4884
  %v5045 = vpack.c.b16 %v4887, %v4886
  %v5046 = vpack.c.b16 %v4889, %v4888
  %v5047 = vpack.c.b16 %v4891, %v4890
  %v5048 = vpack.c.b16 %v4893, %v4892
  %v5049 = vpack.c.b16 %v4895, %v4894
  %v5050 = vpack.c.b16 %v4897, %v4896
  %v5051 = vpack.c.b16 %v4899, %v4898
  %v5052 = vpack.c.b16 %v4901, %v4900
  %v5053 = vpack.c.b16 %v4903, %v4902
  %v5054 = vpack.c.b16 %v4905, %v4904
  %v5055 = vpack.c.b16 %v4907, %v4906
  %v5056 = vpack.c.b16 %v4909, %v4908
  %v5057 = vpack.c.b16 %v4911, %v4910
  %v5058 = vpack.c.b16 %v4913, %v4912
  %v5059 = vpack.c.b16 %v4915, %v4914
  %v5060 = vpack.c.b16 %v4917, %v4916
  %v5061 = vpack.c.b16 %v4919, %v4918
  %v5062 = vpack.c.b16 %v4921, %v4920
  %v5063 = vpack.c.b16 %v4923, %v4922
  %v5064 = vpack.c.b16 %v4925, %v4924
  %v5065 = vpack.c.b16 %v4927, %v4926
  %v5066 = vpack.c.b16 %v4929, %v4928
  %v5067 = vpack.c.b16 %v4931, %v4930
  %v5068 = vpack.c.b16 %v4933, %v4932
  %v5069 = vpack.c.b16 %v4935, %v4934
  %v5070 = vpack.c.b16 %v4937, %v4936
  %v5071 = vpack.c.b16 %v4939, %v4938
  %v5072 = vpack.c.b16 %v4941, %v4940
  %v5073 = vpack.c.b16 %v4943, %v4942
  %v5074 = vpack.c.b16 %v4945, %v4944
  %v5075 = vpack.c.b16 %v4947, %v4946
  %5204 = vmatprep.subr.bf16.mxu0 0
  %5205 = vmatpush1.bf16.msra.mxu0 %v4948
  %5206 = vmatprep.subr.bf16.mxu0 0
  %5207 = vmatpush1.bf16.msra.mxu0 %v4949
  %5208 = vmatprep.subr.bf16.mxu0 0
  %5209 = vmatpush1.bf16.msra.mxu0 %v4950
  %5210 = vmatprep.subr.bf16.mxu0 0
  %5211 = vmatpush1.bf16.msra.mxu0 %v4951
  %5212 = vmatprep.subr.bf16.mxu0 0
  %5213 = vmatpush1.bf16.msra.mxu0 %v4952
  %5214 = vmatprep.subr.bf16.mxu0 0
  %5215 = vmatpush1.bf16.msra.mxu0 %v4953
  %5216 = vmatprep.subr.bf16.mxu0 0
  %5217 = vmatpush1.bf16.msra.mxu0 %v4954
  %5218 = vmatprep.subr.bf16.mxu0 0
  %5219 = vmatpush1.bf16.msra.mxu0 %v4955
  %5220 = vmatprep.subr.bf16.mxu0 0
  %5221 = vmatpush1.bf16.msra.mxu0 %v4956
  %5222 = vmatprep.subr.bf16.mxu0 0
  %5223 = vmatpush1.bf16.msra.mxu0 %v4957
  %5224 = vmatprep.subr.bf16.mxu0 0
  %5225 = vmatpush1.bf16.msra.mxu0 %v4958
  %5226 = vmatprep.subr.bf16.mxu0 0
  %5227 = vmatpush1.bf16.msra.mxu0 %v4959
  %5228 = vmatprep.subr.bf16.mxu0 0
  %5229 = vmatpush1.bf16.msra.mxu0 %v4960
  %5230 = vmatprep.subr.bf16.mxu0 0
  %5231 = vmatpush1.bf16.msra.mxu0 %v4961
  %5232 = vmatprep.subr.bf16.mxu0 0
  %5233 = vmatpush1.bf16.msra.mxu0 %v4962
  %5234 = vmatprep.subr.bf16.mxu0 0
  %5235 = vmatpush1.bf16.msra.mxu0 %v4963
  %5236 = vmatprep.mubr.bf16.mxu0 %v319
  %5237 = vmatmul.mubr.bf16.gmra.mrb[0].mxu0 %v305
  %v5238 = vpop.f32.mrb[0].mxu0
  %v5239 = vadd.f32 %v278, %v5238
  %v5240 = vpop.f32.mrb[0].mxu0
  %v5241 = vpop.f32.mrb[0].mxu0
  %v5242 = vpop.f32.mrb[0].mxu0
  %5243 = vdwg.mxu0
  %5244 = vmatprep.subr.bf16.mxu0 0
  %5245 = vmatpush1.bf16.msra.mxu0 %v4964
  %5246 = vmatprep.subr.bf16.mxu0 0
  %5247 = vmatpush1.bf16.msra.mxu0 %v4965
  %5248 = vmatprep.subr.bf16.mxu0 0
  %5249 = vmatpush1.bf16.msra.mxu0 %v4966
  %5250 = vmatprep.subr.bf16.mxu0 0
  %5251 = vmatpush1.bf16.msra.mxu0 %v4967
  %5252 = vmatprep.subr.bf16.mxu0 0
  %5253 = vmatpush1.bf16.msra.mxu0 %v4968
  %5254 = vmatprep.subr.bf16.mxu0 0
  %5255 = vmatpush1.bf16.msra.mxu0 %v4969
  %5256 = vmatprep.subr.bf16.mxu0 0
  %5257 = vmatpush1.bf16.msra.mxu0 %v4970
  %5258 = vmatprep.subr.bf16.mxu0 0
  %5259 = vmatpush1.bf16.msra.mxu0 %v4971
  %5260 = vmatprep.subr.bf16.mxu0 0
  %5261 = vmatpush1.bf16.msra.mxu0 %v4972
  %5262 = vmatprep.subr.bf16.mxu0 0
  %5263 = vmatpush1.bf16.msra.mxu0 %v4973
  %5264 = vmatprep.subr.bf16.mxu0 0
  %5265 = vmatpush1.bf16.msra.mxu0 %v4974
  %5266 = vmatprep.subr.bf16.mxu0 0
  %5267 = vmatpush1.bf16.msra.mxu0 %v4975
  %5268 = vmatprep.subr.bf16.mxu0 0
  %5269 = vmatpush1.bf16.msra.mxu0 %v4976
  %5270 = vmatprep.subr.bf16.mxu0 0
  %5271 = vmatpush1.bf16.msra.mxu0 %v4977
  %5272 = vmatprep.subr.bf16.mxu0 0
  %5273 = vmatpush1.bf16.msra.mxu0 %v4978
  %5274 = vmatprep.subr.bf16.mxu0 0
  %5275 = vmatpush1.bf16.msra.mxu0 %v4979
  %5276 = vmatprep.mubr.bf16.mxu0 %v329
  %5277 = vmatmul.mubr.bf16.gmra.mrb[0].mxu0 %v327
  %v5278 = vpop.f32.mrb[0].mxu0
  %v5279 = vadd.f32 %v5239, %v5278
  %v5280 = vpop.f32.mrb[0].mxu0
  %v5281 = vpop.f32.mrb[0].mxu0
  %v5282 = vpop.f32.mrb[0].mxu0
  %5283 = vdwg.mxu0
  %5284 = vmatprep.subr.bf16.mxu0 0
  %5285 = vmatpush1.bf16.msra.mxu0 %v4980
  %5286 = vmatprep.subr.bf16.mxu0 0
  %5287 = vmatpush1.bf16.msra.mxu0 %v4981
  %5288 = vmatprep.subr.bf16.mxu0 0
  %5289 = vmatpush1.bf16.msra.mxu0 %v4982
  %5290 = vmatprep.subr.bf16.mxu0 0
  %5291 = vmatpush1.bf16.msra.mxu0 %v4983
  %5292 = vmatprep.subr.bf16.mxu0 0
  %5293 = vmatpush1.bf16.msra.mxu0 %v4984
  %5294 = vmatprep.subr.bf16.mxu0 0
  %5295 = vmatpush1.bf16.msra.mxu0 %v4985
  %5296 = vmatprep.subr.bf16.mxu0 0
  %5297 = vmatpush1.bf16.msra.mxu0 %v4986
  %5298 = vmatprep.subr.bf16.mxu0 0
  %5299 = vmatpush1.bf16.msra.mxu0 %v4987
  %5300 = vmatprep.subr.bf16.mxu0 0
  %5301 = vmatpush1.bf16.msra.mxu0 %v4988
  %5302 = vmatprep.subr.bf16.mxu0 0
  %5303 = vmatpush1.bf16.msra.mxu0 %v4989
  %5304 = vmatprep.subr.bf16.mxu0 0
  %5305 = vmatpush1.bf16.msra.mxu0 %v4990
  %5306 = vmatprep.subr.bf16.mxu0 0
  %5307 = vmatpush1.bf16.msra.mxu0 %v4991
  %5308 = vmatprep.subr.bf16.mxu0 0
  %5309 = vmatpush1.bf16.msra.mxu0 %v4992
  %5310 = vmatprep.subr.bf16.mxu0 0
  %5311 = vmatpush1.bf16.msra.mxu0 %v4993
  %5312 = vmatprep.subr.bf16.mxu0 0
  %5313 = vmatpush1.bf16.msra.mxu0 %v4994
  %5314 = vmatprep.subr.bf16.mxu0 0
  %5315 = vmatpush1.bf16.msra.mxu0 %v4995
  %5316 = vmatprep.mubr.bf16.mxu0 %v326
  %5317 = vmatmul.mubr.bf16.gmra.mrb[0].mxu0 %v312
  %v5318 = vpop.f32.mrb[0].mxu0
  %v5319 = vadd.f32 %v5279, %v5318
  %v5320 = vpop.f32.mrb[0].mxu0
  %v5321 = vpop.f32.mrb[0].mxu0
  %v5322 = vpop.f32.mrb[0].mxu0
  %5323 = vdwg.mxu0
  %5324 = vmatprep.subr.bf16.mxu0 0
  %5325 = vmatpush1.bf16.msra.mxu0 %v4996
  %5326 = vmatprep.subr.bf16.mxu0 0
  %5327 = vmatpush1.bf16.msra.mxu0 %v4997
  %5328 = vmatprep.subr.bf16.mxu0 0
  %5329 = vmatpush1.bf16.msra.mxu0 %v4998
  %5330 = vmatprep.subr.bf16.mxu0 0
  %5331 = vmatpush1.bf16.msra.mxu0 %v4999
  %5332 = vmatprep.subr.bf16.mxu0 0
  %5333 = vmatpush1.bf16.msra.mxu0 %v5000
  %5334 = vmatprep.subr.bf16.mxu0 0
  %5335 = vmatpush1.bf16.msra.mxu0 %v5001
  %5336 = vmatprep.subr.bf16.mxu0 0
  %5337 = vmatpush1.bf16.msra.mxu0 %v5002
  %5338 = vmatprep.subr.bf16.mxu0 0
  %5339 = vmatpush1.bf16.msra.mxu0 %v5003
  %5340 = vmatprep.subr.bf16.mxu0 0
  %5341 = vmatpush1.bf16.msra.mxu0 %v5004
  %5342 = vmatprep.subr.bf16.mxu0 0
  %5343 = vmatpush1.bf16.msra.mxu0 %v5005
  %5344 = vmatprep.subr.bf16.mxu0 0
  %5345 = vmatpush1.bf16.msra.mxu0 %v5006
  %5346 = vmatprep.subr.bf16.mxu0 0
  %5347 = vmatpush1.bf16.msra.mxu0 %v5007
  %5348 = vmatprep.subr.bf16.mxu0 0
  %5349 = vmatpush1.bf16.msra.mxu0 %v5008
  %5350 = vmatprep.subr.bf16.mxu0 0
  %5351 = vmatpush1.bf16.msra.mxu0 %v5009
  %5352 = vmatprep.subr.bf16.mxu0 0
  %5353 = vmatpush1.bf16.msra.mxu0 %v5010
  %5354 = vmatprep.subr.bf16.mxu0 0
  %5355 = vmatpush1.bf16.msra.mxu0 %v5011
  %5356 = vmatprep.mubr.bf16.mxu0 %v330
  %5357 = vmatmul.mubr.bf16.gmra.mrb[0].mxu0 %v328
  %v5358 = vpop.f32.mrb[0].mxu0
  %v5359 = vadd.f32 %v5319, %v5358
  %v5360 = vpop.f32.mrb[0].mxu0
  %v5361 = vpop.f32.mrb[0].mxu0
  %v5362 = vpop.f32.mrb[0].mxu0
  %5363 = vdwg.mxu0
  %5364 = vmatprep.subr.bf16.mxu0 0
  %5365 = vmatpush1.bf16.msra.mxu0 %v5012
  %5366 = vmatprep.subr.bf16.mxu0 0
  %5367 = vmatpush1.bf16.msra.mxu0 %v5013
  %5368 = vmatprep.subr.bf16.mxu0 0
  %5369 = vmatpush1.bf16.msra.mxu0 %v5014
  %5370 = vmatprep.subr.bf16.mxu0 0
  %5371 = vmatpush1.bf16.msra.mxu0 %v5015
  %5372 = vmatprep.subr.bf16.mxu0 0
  %5373 = vmatpush1.bf16.msra.mxu0 %v5016
  %5374 = vmatprep.subr.bf16.mxu0 0
  %5375 = vmatpush1.bf16.msra.mxu0 %v5017
  %5376 = vmatprep.subr.bf16.mxu0 0
  %5377 = vmatpush1.bf16.msra.mxu0 %v5018
  %5378 = vmatprep.subr.bf16.mxu0 0
  %5379 = vmatpush1.bf16.msra.mxu0 %v5019
  %5380 = vmatprep.subr.bf16.mxu0 0
  %5381 = vmatpush1.bf16.msra.mxu0 %v5020
  %5382 = vmatprep.subr.bf16.mxu0 0
  %5383 = vmatpush1.bf16.msra.mxu0 %v5021
  %5384 = vmatprep.subr.bf16.mxu0 0
  %5385 = vmatpush1.bf16.msra.mxu0 %v5022
  %5386 = vmatprep.subr.bf16.mxu0 0
  %5387 = vmatpush1.bf16.msra.mxu0 %v5023
  %5388 = vmatprep.subr.bf16.mxu0 0
  %5389 = vmatpush1.bf16.msra.mxu0 %v5024
  %5390 = vmatprep.subr.bf16.mxu0 0
  %5391 = vmatpush1.bf16.msra.mxu0 %v5025
  %5392 = vmatprep.subr.bf16.mxu0 0
  %5393 = vmatpush1.bf16.msra.mxu0 %v5026
  %5394 = vmatprep.subr.bf16.mxu0 0
  %5395 = vmatpush1.bf16.msra.mxu0 %v5027
  %5396 = vmatprep.mubr.bf16.mxu0 %v368
  %5397 = vmatmul.mubr.bf16.gmra.mrb[0].mxu0 %v354
  %v5398 = vpop.f32.mrb[0].mxu0
  %v5399 = vadd.f32 %v5359, %v5398
  %v5400 = vpop.f32.mrb[0].mxu0
  %v5401 = vpop.f32.mrb[0].mxu0
  %v5402 = vpop.f32.mrb[0].mxu0
  %5403 = vdwg.mxu0
  %5404 = vmatprep.subr.bf16.mxu0 0
  %5405 = vmatpush1.bf16.msra.mxu0 %v5028
  %5406 = vmatprep.subr.bf16.mxu0 0
  %5407 = vmatpush1.bf16.msra.mxu0 %v5029
  %5408 = vmatprep.subr.bf16.mxu0 0
  %5409 = vmatpush1.bf16.msra.mxu0 %v5030
  %5410 = vmatprep.subr.bf16.mxu0 0
  %5411 = vmatpush1.bf16.msra.mxu0 %v5031
  %5412 = vmatprep.subr.bf16.mxu0 0
  %5413 = vmatpush1.bf16.msra.mxu0 %v5032
  %5414 = vmatprep.subr.bf16.mxu0 0
  %5415 = vmatpush1.bf16.msra.mxu0 %v5033
  %5416 = vmatprep.subr.bf16.mxu0 0
  %5417 = vmatpush1.bf16.msra.mxu0 %v5034
  %5418 = vmatprep.subr.bf16.mxu0 0
  %5419 = vmatpush1.bf16.msra.mxu0 %v5035
  %5420 = vmatprep.subr.bf16.mxu0 0
  %5421 = vmatpush1.bf16.msra.mxu0 %v5036
  %5422 = vmatprep.subr.bf16.mxu0 0
  %5423 = vmatpush1.bf16.msra.mxu0 %v5037
  %5424 = vmatprep.subr.bf16.mxu0 0
  %5425 = vmatpush1.bf16.msra.mxu0 %v5038
  %5426 = vmatprep.subr.bf16.mxu0 0
  %5427 = vmatpush1.bf16.msra.mxu0 %v5039
  %5428 = vmatprep.subr.bf16.mxu0 0
  %5429 = vmatpush1.bf16.msra.mxu0 %v5040
  %5430 = vmatprep.subr.bf16.mxu0 0
  %5431 = vmatpush1.bf16.msra.mxu0 %v5041
  %5432 = vmatprep.subr.bf16.mxu0 0
  %5433 = vmatpush1.bf16.msra.mxu0 %v5042
  %5434 = vmatprep.subr.bf16.mxu0 0
  %5435 = vmatpush1.bf16.msra.mxu0 %v5043
  %5436 = vmatprep.mubr.bf16.mxu0 %v378
  %5437 = vmatmul.mubr.bf16.gmra.mrb[0].mxu0 %v376
  %v5438 = vpop.f32.mrb[0].mxu0
  %v5439 = vadd.f32 %v5399, %v5438
  %v5440 = vpop.f32.mrb[0].mxu0
  %v5441 = vpop.f32.mrb[0].mxu0
  %v5442 = vpop.f32.mrb[0].mxu0
  %5443 = vdwg.mxu0
  %5444 = vmatprep.subr.bf16.mxu0 0
  %5445 = vmatpush1.bf16.msra.mxu0 %v5044
  %5446 = vmatprep.subr.bf16.mxu0 0
  %5447 = vmatpush1.bf16.msra.mxu0 %v5045
  %5448 = vmatprep.subr.bf16.mxu0 0
  %5449 = vmatpush1.bf16.msra.mxu0 %v5046
  %5450 = vmatprep.subr.bf16.mxu0 0
  %5451 = vmatpush1.bf16.msra.mxu0 %v5047
  %5452 = vmatprep.subr.bf16.mxu0 0
  %5453 = vmatpush1.bf16.msra.mxu0 %v5048
  %5454 = vmatprep.subr.bf16.mxu0 0
  %5455 = vmatpush1.bf16.msra.mxu0 %v5049
  %5456 = vmatprep.subr.bf16.mxu0 0
  %5457 = vmatpush1.bf16.msra.mxu0 %v5050
  %5458 = vmatprep.subr.bf16.mxu0 0
  %5459 = vmatpush1.bf16.msra.mxu0 %v5051
  %5460 = vmatprep.subr.bf16.mxu0 0
  %5461 = vmatpush1.bf16.msra.mxu0 %v5052
  %5462 = vmatprep.subr.bf16.mxu0 0
  %5463 = vmatpush1.bf16.msra.mxu0 %v5053
  %5464 = vmatprep.subr.bf16.mxu0 0
  %5465 = vmatpush1.bf16.msra.mxu0 %v5054
  %5466 = vmatprep.subr.bf16.mxu0 0
  %5467 = vmatpush1.bf16.msra.mxu0 %v5055
  %5468 = vmatprep.subr.bf16.mxu0 0
  %5469 = vmatpush1.bf16.msra.mxu0 %v5056
  %5470 = vmatprep.subr.bf16.mxu0 0
  %5471 = vmatpush1.bf16.msra.mxu0 %v5057
  %5472 = vmatprep.subr.bf16.mxu0 0
  %5473 = vmatpush1.bf16.msra.mxu0 %v5058
  %5474 = vmatprep.subr.bf16.mxu0 0
  %5475 = vmatpush1.bf16.msra.mxu0 %v5059
  %5476 = vmatprep.mubr.bf16.mxu0 %v375
  %5477 = vmatmul.mubr.bf16.gmra.mrb[0].mxu0 %v361
  %v5478 = vpop.f32.mrb[0].mxu0
  %v5479 = vadd.f32 %v5439, %v5478
  %v5480 = vpop.f32.mrb[0].mxu0
  %v5481 = vpop.f32.mrb[0].mxu0
  %v5482 = vpop.f32.mrb[0].mxu0
  %5483 = vdwg.mxu0
  %5484 = vmatprep.subr.bf16.mxu0 0
  %5485 = vmatpush1.bf16.msra.mxu0 %v5060
  %5486 = vmatprep.subr.bf16.mxu0 0
  %5487 = vmatpush1.bf16.msra.mxu0 %v5061
  %5488 = vmatprep.subr.bf16.mxu0 0
  %5489 = vmatpush1.bf16.msra.mxu0 %v5062
  %5490 = vmatprep.subr.bf16.mxu0 0
  %5491 = vmatpush1.bf16.msra.mxu0 %v5063
  %5492 = vmatprep.subr.bf16.mxu0 0
  %5493 = vmatpush1.bf16.msra.mxu0 %v5064
  %5494 = vmatprep.subr.bf16.mxu0 0
  %5495 = vmatpush1.bf16.msra.mxu0 %v5065
  %5496 = vmatprep.subr.bf16.mxu0 0
  %5497 = vmatpush1.bf16.msra.mxu0 %v5066
  %5498 = vmatprep.subr.bf16.mxu0 0
  %5499 = vmatpush1.bf16.msra.mxu0 %v5067
  %5500 = vmatprep.subr.bf16.mxu0 0
  %5501 = vmatpush1.bf16.msra.mxu0 %v5068
  %5502 = vmatprep.subr.bf16.mxu0 0
  %5503 = vmatpush1.bf16.msra.mxu0 %v5069
  %5504 = vmatprep.subr.bf16.mxu0 0
  %5505 = vmatpush1.bf16.msra.mxu0 %v5070
  %5506 = vmatprep.subr.bf16.mxu0 0
  %5507 = vmatpush1.bf16.msra.mxu0 %v5071
  %5508 = vmatprep.subr.bf16.mxu0 0
  %5509 = vmatpush1.bf16.msra.mxu0 %v5072
  %5510 = vmatprep.subr.bf16.mxu0 0
  %5511 = vmatpush1.bf16.msra.mxu0 %v5073
  %5512 = vmatprep.subr.bf16.mxu0 0
  %5513 = vmatpush1.bf16.msra.mxu0 %v5074
  %5514 = vmatprep.subr.bf16.mxu0 0
  %5515 = vmatpush1.bf16.msra.mxu0 %v5075
  %5516 = vmatprep.mubr.bf16.mxu0 %v379
  %5517 = vmatmul.mubr.bf16.gmra.mrb[0].mxu0 %v377
  %v5518 = vpop.f32.mrb[0].mxu0
  %v5519 = vadd.f32 %v5479, %v5518
  %v5520 = vpop.f32.mrb[0].mxu0
  %v5521 = vpop.f32.mrb[0].mxu0
  %v5522 = vpop.f32.mrb[0].mxu0
  %5523 = vdwg.mxu0
  %v5524 = vmax.f32 %v5519, 0.0
  %v5525 = vmax.f32 %v4178, %v5524
  %v5526 = vpack.c.bf16 %v5525, %v5525
  %vm5527 = vcmask 253952
  %5528 = vst.msk [vmem:[%s3] sm:$0x1] %vm5527, %v5526
  // Predicated region
  $region14: #{vae_forward.12} parent=0 // pred_check
    _
  $region15: #{vae_forward.12} parent=0 // pred_check_branch
    %5530 = sbr.rel (0) target = $region17
  $region16: #{vae_forward.12} parent=0 // pred_region
    _
  $region17: #{vae_forward.12} parent=0 // pred_fallthru
    _
  // Predicated region
  $region18: #{vae_forward.12} parent=0 // pred_check
    _
  $region19: #{vae_forward.12} parent=0 // pred_check_branch
    %5532 = sbr.rel (0) target = $region21
  $region20: #{vae_forward.12} parent=0 // pred_region
    _
  $region21: #{vae_forward.12} parent=0 // pred_fallthru
    _

// kernel: vae_forward.17
$region0: #{vae_forward.17}
  #allocation0 [shape = 'u32[]', space=smem, size = 0x4, offset = 0x4, fixed_abs, tag = 'smem constant byte address 0x4 - core index']
  #allocation1 [shape = 'u32[144,128]{1,0:T(1,128)}', space=vmem, size = 0x12000, scoped, tag = 'internal scratch']
  %s0 = inlined_call_operand.vmem [shape: bf16[128,288], index: 0, kind: input, shape index: {}]
  %s1 = inlined_call_operand.vmem [shape: bf16[288,128], index: 1, kind: input, shape index: {}]
  %s2 = inlined_call_operand.vmem [shape: f32[1,128], index: 2, kind: input, shape index: {}]
  %s3 = inlined_call_operand.vmem [shape: f32[128,128], index: 3, kind: output, shape index: {}]
  %s4 = sld [smem:[#allocation0]]
  $region22: #{vae_forward.17} parent=0
    _
  %s6 = ssub.s32 1, %s4
  %s7 = scalar_select 0, %s6, %s4
  // Predicated region
  $region2: #{vae_forward.17} parent=0 // pred_check
    _
  $region3: #{vae_forward.17} parent=0 // pred_check_branch
    %9 = sbr.rel (0) target = $region5
  $region4: #{vae_forward.17} parent=0 // pred_region
    _
  $region5: #{vae_forward.17} parent=0 // pred_fallthru
    _
  // Predicated region
  $region6: #{vae_forward.17} parent=0 // pred_check
    _
  $region7: #{vae_forward.17} parent=0 // pred_check_branch
    %11 = sbr.rel (0) target = $region9
  $region8: #{vae_forward.17} parent=0 // pred_region
    _
  $region9: #{vae_forward.17} parent=0 // pred_fallthru
    _
  // Predicated region
  $region10: #{vae_forward.17} parent=0 // pred_check
    _
  $region11: #{vae_forward.17} parent=0 // pred_check_branch
    %13 = sbr.rel (0) target = $region13
  $region12: #{vae_forward.17} parent=0 // pred_region
    _
  $region13: #{vae_forward.17} parent=0 // pred_fallthru
    _
  %v15 = vld [vmem:[%s0] sm:$0xff]
  %v16 = vld [vmem:[%s0 + $0x8] sm:$0xf]
  %v17 = vld [vmem:[%s0 + $0xc] sm:$0xff]
  %v18 = vld [vmem:[%s0 + $0x14] sm:$0xf]
  %v19 = vld [vmem:[%s0 + $0x18] sm:$0xff]
  %v20 = vld [vmem:[%s0 + $0x20] sm:$0xf]
  %v21 = vld [vmem:[%s0 + $0x24] sm:$0xff]
  %v22 = vld [vmem:[%s0 + $0x2c] sm:$0xf]
  %v23 = vld [vmem:[%s0 + $0x30] sm:$0xff]
  %v24 = vld [vmem:[%s0 + $0x38] sm:$0xf]
  %v25 = vld [vmem:[%s0 + $0x3c] sm:$0xff]
  %v26 = vld [vmem:[%s0 + $0x44] sm:$0xf]
  %v27 = vld [vmem:[%s0 + $0x48] sm:$0xff]
  %v28 = vld [vmem:[%s0 + $0x50] sm:$0xf]
  %v29 = vld [vmem:[%s0 + $0x54] sm:$0xff]
  %v30 = vld [vmem:[%s0 + $0x5c] sm:$0xf]
  %v31 = vld [vmem:[%s0 + $0x60] sm:$0xff]
  %v32 = vld [vmem:[%s0 + $0x68] sm:$0xf]
  %v33 = vld [vmem:[%s0 + $0x6c] sm:$0xff]
  %v34 = vld [vmem:[%s0 + $0x74] sm:$0xf]
  %v35 = vld [vmem:[%s0 + $0x78] sm:$0xff]
  %v36 = vld [vmem:[%s0 + $0x80] sm:$0xf]
  %v37 = vld [vmem:[%s0 + $0x84] sm:$0xff]
  %v38 = vld [vmem:[%s0 + $0x8c] sm:$0xf]
  %v39 = vld [vmem:[%s0 + $0x90] sm:$0xff]
  %v40 = vld [vmem:[%s0 + $0x98] sm:$0xf]
  %v41 = vld [vmem:[%s0 + $0x9c] sm:$0xff]
  %v42 = vld [vmem:[%s0 + $0xa4] sm:$0xf]
  %v43 = vld [vmem:[%s0 + $0xa8] sm:$0xff]
  %v44 = vld [vmem:[%s0 + $0xb0] sm:$0xf]
  %v45 = vld [vmem:[%s0 + $0xb4] sm:$0xff]
  %v46 = vld [vmem:[%s0 + $0xbc] sm:$0xf]
  %v47 = vld [vmem:[%s1] sm:$0xf]
  %v48 = vld [vmem:[%s1 + $0x4] sm:$0xf]
  %v49 = vld [vmem:[%s1 + $0x8] sm:$0xf]
  %v50 = vld [vmem:[%s1 + $0xc] sm:$0xf]
  %v51 = vld [vmem:[%s1 + $0x10] sm:$0xf]
  %v52 = vld [vmem:[%s1 + $0x14] sm:$0xf]
  %v53 = vld [vmem:[%s1 + $0x18] sm:$0xf]
  %v54 = vld [vmem:[%s1 + $0x1c] sm:$0xf]
  %v55 = vld [vmem:[%s1 + $0x20] sm:$0xf]
  %v56 = vld [vmem:[%s1 + $0x24] sm:$0xf]
  %v57 = vld [vmem:[%s1 + $0x28] sm:$0xf]
  %v58 = vld [vmem:[%s1 + $0x2c] sm:$0xf]
  %v59 = vld [vmem:[%s1 + $0x30] sm:$0xf]
  %v60 = vld [vmem:[%s1 + $0x34] sm:$0xf]
  %v61 = vld [vmem:[%s1 + $0x38] sm:$0xf]
  %v62 = vld [vmem:[%s1 + $0x3c] sm:$0xf]
  %v63 = vld [vmem:[%s1 + $0x40] sm:$0xf]
  %v64 = vld [vmem:[%s1 + $0x44] sm:$0xf]
  %v65 = vld [vmem:[%s1 + $0x48] sm:$0xf]
  %v66 = vld [vmem:[%s1 + $0x4c] sm:$0xf]
  %v67 = vld [vmem:[%s1 + $0x50] sm:$0xf]
  %v68 = vld [vmem:[%s1 + $0x54] sm:$0xf]
  %v69 = vld [vmem:[%s1 + $0x58] sm:$0xf]
  %v70 = vld [vmem:[%s1 + $0x5c] sm:$0xf]
  %v71 = vld [vmem:[%s1 + $0x60] sm:$0xf]
  %v72 = vld [vmem:[%s1 + $0x64] sm:$0xf]
  %v73 = vld [vmem:[%s1 + $0x68] sm:$0xf]
  %v74 = vld [vmem:[%s1 + $0x6c] sm:$0xf]
  %v75 = vld [vmem:[%s1 + $0x70] sm:$0xf]
  %v76 = vld [vmem:[%s1 + $0x74] sm:$0xf]
  %v77 = vld [vmem:[%s1 + $0x78] sm:$0xf]
  %v78 = vld [vmem:[%s1 + $0x7c] sm:$0xf]
  %v79 = vld [vmem:[%s1 + $0x80] sm:$0xf]
  %v80 = vld [vmem:[%s1 + $0x84] sm:$0xf]
  %v81 = vld [vmem:[%s1 + $0x88] sm:$0xf]
  %v82 = vld [vmem:[%s1 + $0x8c] sm:$0xf]
  %v83 = vld [vmem:[%s2] sm:$0x1]
  %v85 = vlaneseq
  %v86 = vshrl.u32 %v85, 7
  %v87 = vsub.s32 0, %v86
  %v88 = vrot.slane %v83, %v87
  %v122 = vunpack.c.l.b16 %v15
  %v123 = vunpack.c.h.b16 %v15
  %v124 = vunpack.c.l.b16 %v16
  %v125 = vunpack.c.l.b16 %v17
  %v126 = vunpack.c.h.b16 %v17
  %v127 = vunpack.c.l.b16 %v18
  %v128 = vunpack.c.l.b16 %v19
  %v129 = vunpack.c.h.b16 %v19
  %v130 = vunpack.c.l.b16 %v20
  %v131 = vunpack.c.l.b16 %v21
  %v132 = vunpack.c.h.b16 %v21
  %v133 = vunpack.c.l.b16 %v22
  %v134 = vunpack.c.l.b16 %v23
  %v135 = vunpack.c.h.b16 %v23
  %v136 = vunpack.c.l.b16 %v24
  %v137 = vunpack.c.l.b16 %v25
  %v138 = vunpack.c.h.b16 %v25
  %v139 = vunpack.c.l.b16 %v26
  %v140 = vunpack.c.l.b16 %v27
  %v141 = vunpack.c.h.b16 %v27
  %v142 = vunpack.c.l.b16 %v28
  %v143 = vunpack.c.l.b16 %v29
  %v144 = vunpack.c.h.b16 %v29
  %v145 = vunpack.c.l.b16 %v30
  %v146 = vunpack.c.l.b16 %v31
  %v147 = vunpack.c.h.b16 %v31
  %v148 = vunpack.c.l.b16 %v32
  %v149 = vunpack.c.l.b16 %v33
  %v150 = vunpack.c.h.b16 %v33
  %v151 = vunpack.c.l.b16 %v34
  %v152 = vunpack.c.l.b16 %v35
  %v153 = vunpack.c.h.b16 %v35
  %v154 = vunpack.c.l.b16 %v36
  %v155 = vunpack.c.l.b16 %v37
  %v156 = vunpack.c.h.b16 %v37
  %v157 = vunpack.c.l.b16 %v38
  %v158 = vunpack.c.l.b16 %v39
  %v159 = vunpack.c.h.b16 %v39
  %v160 = vunpack.c.l.b16 %v40
  %v161 = vunpack.c.l.b16 %v41
  %v162 = vunpack.c.h.b16 %v41
  %v163 = vunpack.c.l.b16 %v42
  %v164 = vunpack.c.l.b16 %v43
  %v165 = vunpack.c.h.b16 %v43
  %v166 = vunpack.c.l.b16 %v44
  %v167 = vunpack.c.l.b16 %v45
  %v168 = vunpack.c.h.b16 %v45
  %v169 = vunpack.c.l.b16 %v46
  %v170 = vpack.c.b16 %v125, %v122
  %v171 = vpack.c.b16 %v126, %v123
  %v172 = vpack.c.b16 %v127, %v124
  %v173 = vpack.c.b16 %v131, %v128
  %v174 = vpack.c.b16 %v132, %v129
  %v175 = vpack.c.b16 %v133, %v130
  %v176 = vpack.c.b16 %v137, %v134
  %v177 = vpack.c.b16 %v138, %v135
  %v178 = vpack.c.b16 %v139, %v136
  %v179 = vpack.c.b16 %v143, %v140
  %v180 = vpack.c.b16 %v144, %v141
  %v181 = vpack.c.b16 %v145, %v142
  %v182 = vpack.c.b16 %v149, %v146
  %v183 = vpack.c.b16 %v150, %v147
  %v184 = vpack.c.b16 %v151, %v148
  %v185 = vpack.c.b16 %v155, %v152
  %v186 = vpack.c.b16 %v156, %v153
  %v187 = vpack.c.b16 %v157, %v154
  %v188 = vpack.c.b16 %v161, %v158
  %v189 = vpack.c.b16 %v162, %v159
  %v190 = vpack.c.b16 %v163, %v160
  %v191 = vpack.c.b16 %v167, %v164
  %v192 = vpack.c.b16 %v168, %v165
  %v193 = vpack.c.b16 %v169, %v166
  %v246 = vunpack.c.l.b16 %v47
  %v247 = vunpack.c.l.b16 %v48
  %v248 = vunpack.c.l.b16 %v49
  %v249 = vunpack.c.l.b16 %v50
  %v250 = vunpack.c.l.b16 %v51
  %v251 = vunpack.c.l.b16 %v52
  %v252 = vunpack.c.l.b16 %v53
  %v253 = vunpack.c.l.b16 %v54
  %v254 = vunpack.c.l.b16 %v55
  %v255 = vunpack.c.l.b16 %v56
  %v256 = vunpack.c.l.b16 %v57
  %v257 = vunpack.c.l.b16 %v58
  %v258 = vunpack.c.l.b16 %v59
  %v259 = vunpack.c.l.b16 %v60
  %v260 = vunpack.c.l.b16 %v61
  %v261 = vunpack.c.l.b16 %v62
  %v262 = vunpack.c.l.b16 %v63
  %v263 = vunpack.c.l.b16 %v64
  %v264 = vunpack.c.l.b16 %v65
  %v265 = vunpack.c.l.b16 %v66
  %v266 = vunpack.c.l.b16 %v67
  %v267 = vunpack.c.l.b16 %v68
  %v268 = vunpack.c.l.b16 %v69
  %v269 = vunpack.c.l.b16 %v70
  %v270 = vunpack.c.l.b16 %v71
  %v271 = vunpack.c.l.b16 %v72
  %v272 = vunpack.c.l.b16 %v73
  %v273 = vunpack.c.l.b16 %v74
  %v274 = vunpack.c.l.b16 %v75
  %v275 = vunpack.c.l.b16 %v76
  %v276 = vunpack.c.l.b16 %v77
  %v277 = vunpack.c.l.b16 %v78
  %v278 = vunpack.c.l.b16 %v79
  %v279 = vunpack.c.l.b16 %v80
  %v280 = vunpack.c.l.b16 %v81
  %v281 = vunpack.c.l.b16 %v82
  %v282 = vpack.c.b16 %v247, %v246
  %v283 = vpack.c.b16 %v249, %v248
  %v284 = vpack.c.b16 %v251, %v250
  %v285 = vpack.c.b16 %v253, %v252
  %v286 = vpack.c.b16 %v255, %v254
  %v287 = vpack.c.b16 %v257, %v256
  %v288 = vpack.c.b16 %v259, %v258
  %v289 = vpack.c.b16 %v261, %v260
  %v290 = vpack.c.b16 %v263, %v262
  %v291 = vpack.c.b16 %v265, %v264
  %v292 = vpack.c.b16 %v267, %v266
  %v293 = vpack.c.b16 %v269, %v268
  %v294 = vpack.c.b16 %v271, %v270
  %v295 = vpack.c.b16 %v273, %v272
  %v296 = vpack.c.b16 %v275, %v274
  %v297 = vpack.c.b16 %v277, %v276
  %v298 = vpack.c.b16 %v279, %v278
  %v299 = vpack.c.b16 %v281, %v280
  %vm318 = vcmask 261120
  %v320 = vsel %vm318, %v172, 0
  %v323 = vsel %vm318, %v175, 0
  %v326 = vsel %vm318, %v178, 0
  %v329 = vsel %vm318, %v181, 0
  %v332 = vsel %vm318, %v184, 0
  %v335 = vsel %vm318, %v187, 0
  %v338 = vsel %vm318, %v190, 0
  %v341 = vsel %vm318, %v193, 0
  %343 = vmatprep.subr.bf16.mxu0 0
  %344 = vmatpush1.bf16.msra.mxu0 %v282
  %345 = vmatprep.subr.bf16.mxu0 0
  %346 = vmatpush1.bf16.msra.mxu0 %v283
  %347 = vmatprep.subr.bf16.mxu0 0
  %348 = vmatpush1.bf16.msra.mxu0 %v284
  %349 = vmatprep.subr.bf16.mxu0 0
  %350 = vmatpush1.bf16.msra.mxu0 %v285
  %351 = vmatprep.subr.bf16.mxu0 0
  %352 = vmatpush1.bf16.msra.mxu0 %v286
  %353 = vmatprep.subr.bf16.mxu0 0
  %354 = vmatpush1.bf16.msra.mxu0 %v287
  %355 = vmatprep.subr.bf16.mxu0 0
  %356 = vmatpush1.bf16.msra.mxu0 %v288
  %357 = vmatprep.subr.bf16.mxu0 0
  %358 = vmatpush1.bf16.msra.mxu0 %v289
  %359 = vmatprep.subr.bf16.mxu0 0
  %360 = vmatpush1.bf16.msra.mxu0 %v290
  %361 = vmatprep.subr.bf16.mxu0 0
  %362 = vmatpush1.bf16.msra.mxu0 %v291
  %363 = vmatprep.subr.bf16.mxu0 0
  %364 = vmatpush1.bf16.msra.mxu0 %v292
  %365 = vmatprep.subr.bf16.mxu0 0
  %366 = vmatpush1.bf16.msra.mxu0 %v293
  %367 = vmatprep.subr.bf16.mxu0 0
  %368 = vmatpush1.bf16.msra.mxu0 %v294
  %369 = vmatprep.subr.bf16.mxu0 0
  %370 = vmatpush1.bf16.msra.mxu0 %v295
  %371 = vmatprep.subr.bf16.mxu0 0
  %372 = vmatpush1.bf16.msra.mxu0 %v296
  %373 = vmatprep.subr.bf16.mxu0 0
  %374 = vmatpush1.bf16.msra.mxu0 %v297
  %375 = vmatprep.mubr.bf16.mxu0 %v171
  %376 = vmatmul.mubr.bf16.gmra.mrb[0].mxu0 %v170
  %v377 = vpop.f32.mrb[0].mxu0
  %v378 = vadd.f32 %v88, %v377
  %v379 = vpop.f32.mrb[0].mxu0
  %v380 = vpop.f32.mrb[0].mxu0
  %v381 = vadd.f32 %v88, %v380
  %v382 = vpop.f32.mrb[0].mxu0
  %383 = vmatprep.mubr.bf16.mxu0 %v174
  %384 = vmatmul.mubr.bf16.gmra.mrb[0].mxu0 %v173
  %v385 = vpop.f32.mrb[0].mxu0
  %v386 = vadd.f32 %v88, %v385
  %v387 = vpop.f32.mrb[0].mxu0
  %v388 = vpop.f32.mrb[0].mxu0
  %v389 = vadd.f32 %v88, %v388
  %v390 = vpop.f32.mrb[0].mxu0
  %391 = vmatprep.mubr.bf16.mxu0 %v177
  %392 = vmatmul.mubr.bf16.gmra.mrb[0].mxu0 %v176
  %v393 = vpop.f32.mrb[0].mxu0
  %v394 = vadd.f32 %v88, %v393
  %v395 = vpop.f32.mrb[0].mxu0
  %v396 = vpop.f32.mrb[0].mxu0
  %v397 = vadd.f32 %v88, %v396
  %v398 = vpop.f32.mrb[0].mxu0
  %399 = vmatprep.mubr.bf16.mxu0 %v180
  %400 = vmatmul.mubr.bf16.gmra.mrb[0].mxu0 %v179
  %v401 = vpop.f32.mrb[0].mxu0
  %v402 = vadd.f32 %v88, %v401
  %v403 = vpop.f32.mrb[0].mxu0
  %v404 = vpop.f32.mrb[0].mxu0
  %v405 = vadd.f32 %v88, %v404
  %v406 = vpop.f32.mrb[0].mxu0
  %407 = vmatprep.mubr.bf16.mxu0 %v183
  %408 = vmatmul.mubr.bf16.gmra.mrb[0].mxu0 %v182
  %v409 = vpop.f32.mrb[0].mxu0
  %v410 = vadd.f32 %v88, %v409
  %v411 = vpop.f32.mrb[0].mxu0
  %v412 = vpop.f32.mrb[0].mxu0
  %v413 = vadd.f32 %v88, %v412
  %v414 = vpop.f32.mrb[0].mxu0
  %415 = vmatprep.mubr.bf16.mxu0 %v186
  %416 = vmatmul.mubr.bf16.gmra.mrb[0].mxu0 %v185
  %v417 = vpop.f32.mrb[0].mxu0
  %v418 = vadd.f32 %v88, %v417
  %v419 = vpop.f32.mrb[0].mxu0
  %v420 = vpop.f32.mrb[0].mxu0
  %v421 = vadd.f32 %v88, %v420
  %v422 = vpop.f32.mrb[0].mxu0
  %423 = vmatprep.mubr.bf16.mxu0 %v189
  %424 = vmatmul.mubr.bf16.gmra.mrb[0].mxu0 %v188
  %v425 = vpop.f32.mrb[0].mxu0
  %v426 = vadd.f32 %v88, %v425
  %v427 = vpop.f32.mrb[0].mxu0
  %v428 = vpop.f32.mrb[0].mxu0
  %v429 = vadd.f32 %v88, %v428
  %v430 = vpop.f32.mrb[0].mxu0
  %431 = vmatprep.mubr.bf16.mxu0 %v192
  %432 = vmatmul.mubr.bf16.gmra.mrb[0].mxu0 %v191
  %v433 = vpop.f32.mrb[0].mxu0
  %v434 = vadd.f32 %v88, %v433
  %v435 = vpop.f32.mrb[0].mxu0
  %v436 = vpop.f32.mrb[0].mxu0
  %v437 = vadd.f32 %v88, %v436
  %v438 = vpop.f32.mrb[0].mxu0
  %439 = vdwg.mxu0
  %440 = vmatprep.subr.bf16.mxu0 0
  %441 = vmatpush1.bf16.msra.mxu0 %v298
  %442 = vmatprep.subr.bf16.mxu0 0
  %443 = vmatpush1.bf16.msra.mxu0 %v299
  %444 = vmatprep.subr.bf16.mxu0 0
  %445 = vmatpush1.bf16.msra.mxu0 0
  %446 = vmatprep.subr.bf16.mxu0 0
  %447 = vmatpush1.bf16.msra.mxu0 0
  %448 = vmatprep.subr.bf16.mxu0 0
  %449 = vmatpush1.bf16.msra.mxu0 0
  %450 = vmatprep.subr.bf16.mxu0 0
  %451 = vmatpush1.bf16.msra.mxu0 0
  %452 = vmatprep.subr.bf16.mxu0 0
  %453 = vmatpush1.bf16.msra.mxu0 0
  %454 = vmatprep.subr.bf16.mxu0 0
  %455 = vmatpush1.bf16.msra.mxu0 0
  %456 = vmatprep.subr.bf16.mxu0 0
  %457 = vmatpush1.bf16.msra.mxu0 0
  %458 = vmatprep.subr.bf16.mxu0 0
  %459 = vmatpush1.bf16.msra.mxu0 0
  %460 = vmatprep.subr.bf16.mxu0 0
  %461 = vmatpush1.bf16.msra.mxu0 0
  %462 = vmatprep.subr.bf16.mxu0 0
  %463 = vmatpush1.bf16.msra.mxu0 0
  %464 = vmatprep.subr.bf16.mxu0 0
  %465 = vmatpush1.bf16.msra.mxu0 0
  %466 = vmatprep.subr.bf16.mxu0 0
  %467 = vmatpush1.bf16.msra.mxu0 0
  %468 = vmatprep.subr.bf16.mxu0 0
  %469 = vmatpush1.bf16.msra.mxu0 0
  %470 = vmatprep.subr.bf16.mxu0 0
  %471 = vmatpush1.bf16.msra.mxu0 0
  %472 = vmatprep.mubr.bf16.mxu0 0
  %473 = vmatmul.mubr.bf16.gmra.mrb[0].mxu0 %v320
  %v474 = vpop.f32.mrb[0].mxu0
  %v475 = vadd.f32 %v378, %v474
  %v476 = vpop.f32.mrb[0].mxu0
  %v477 = vpop.f32.mrb[0].mxu0
  %v478 = vadd.f32 %v381, %v477
  %v479 = vpop.f32.mrb[0].mxu0
  %480 = vmatprep.mubr.bf16.mxu0 0
  %481 = vmatmul.mubr.bf16.gmra.mrb[0].mxu0 %v323
  %v482 = vpop.f32.mrb[0].mxu0
  %v483 = vadd.f32 %v386, %v482
  %v484 = vpop.f32.mrb[0].mxu0
  %v485 = vpop.f32.mrb[0].mxu0
  %v486 = vadd.f32 %v389, %v485
  %v487 = vpop.f32.mrb[0].mxu0
  %488 = vmatprep.mubr.bf16.mxu0 0
  %489 = vmatmul.mubr.bf16.gmra.mrb[0].mxu0 %v326
  %v490 = vpop.f32.mrb[0].mxu0
  %v491 = vadd.f32 %v394, %v490
  %v492 = vpop.f32.mrb[0].mxu0
  %v493 = vpop.f32.mrb[0].mxu0
  %v494 = vadd.f32 %v397, %v493
  %v495 = vpop.f32.mrb[0].mxu0
  %496 = vmatprep.mubr.bf16.mxu0 0
  %497 = vmatmul.mubr.bf16.gmra.mrb[0].mxu0 %v329
  %v498 = vpop.f32.mrb[0].mxu0
  %v499 = vadd.f32 %v402, %v498
  %v500 = vpop.f32.mrb[0].mxu0
  %v501 = vpop.f32.mrb[0].mxu0
  %v502 = vadd.f32 %v405, %v501
  %v503 = vpop.f32.mrb[0].mxu0
  %504 = vmatprep.mubr.bf16.mxu0 0
  %505 = vmatmul.mubr.bf16.gmra.mrb[0].mxu0 %v332
  %v506 = vpop.f32.mrb[0].mxu0
  %v507 = vadd.f32 %v410, %v506
  %v508 = vpop.f32.mrb[0].mxu0
  %v509 = vpop.f32.mrb[0].mxu0
  %v510 = vadd.f32 %v413, %v509
  %v511 = vpop.f32.mrb[0].mxu0
  %512 = vmatprep.mubr.bf16.mxu0 0
  %513 = vmatmul.mubr.bf16.gmra.mrb[0].mxu0 %v335
  %v514 = vpop.f32.mrb[0].mxu0
  %v515 = vadd.f32 %v418, %v514
  %v516 = vpop.f32.mrb[0].mxu0
  %v517 = vpop.f32.mrb[0].mxu0
  %v518 = vadd.f32 %v421, %v517
  %v519 = vpop.f32.mrb[0].mxu0
  %520 = vmatprep.mubr.bf16.mxu0 0
  %521 = vmatmul.mubr.bf16.gmra.mrb[0].mxu0 %v338
  %v522 = vpop.f32.mrb[0].mxu0
  %v523 = vadd.f32 %v426, %v522
  %v524 = vpop.f32.mrb[0].mxu0
  %v525 = vpop.f32.mrb[0].mxu0
  %v526 = vadd.f32 %v429, %v525
  %v527 = vpop.f32.mrb[0].mxu0
  %528 = vmatprep.mubr.bf16.mxu0 0
  %529 = vmatmul.mubr.bf16.gmra.mrb[0].mxu0 %v341
  %v530 = vpop.f32.mrb[0].mxu0
  %v531 = vadd.f32 %v434, %v530
  %v532 = vpop.f32.mrb[0].mxu0
  %v533 = vpop.f32.mrb[0].mxu0
  %v534 = vadd.f32 %v437, %v533
  %v535 = vpop.f32.mrb[0].mxu0
  %536 = vdwg.mxu0
  %v537 = vmax.f32 %v475, 0.0
  %v538 = vmax.f32 %v478, 0.0
  %v539 = vmax.f32 %v483, 0.0
  %v540 = vmax.f32 %v486, 0.0
  %v541 = vmax.f32 %v491, 0.0
  %v542 = vmax.f32 %v494, 0.0
  %v543 = vmax.f32 %v499, 0.0
  %v544 = vmax.f32 %v502, 0.0
  %v545 = vmax.f32 %v507, 0.0
  %v546 = vmax.f32 %v510, 0.0
  %v547 = vmax.f32 %v515, 0.0
  %v548 = vmax.f32 %v518, 0.0
  %v549 = vmax.f32 %v523, 0.0
  %v550 = vmax.f32 %v526, 0.0
  %v551 = vmax.f32 %v531, 0.0
  %v552 = vmax.f32 %v534, 0.0
  %553 = vst [vmem:[%s3] sm:$0xff] %v537
  %554 = vst [vmem:[%s3 + $0x8] sm:$0xff] %v538
  %555 = vst [vmem:[%s3 + $0x10] sm:$0xff] %v539
  %556 = vst [vmem:[%s3 + $0x18] sm:$0xff] %v540
  %557 = vst [vmem:[%s3 + $0x20] sm:$0xff] %v541
  %558 = vst [vmem:[%s3 + $0x28] sm:$0xff] %v542
  %559 = vst [vmem:[%s3 + $0x30] sm:$0xff] %v543
  %560 = vst [vmem:[%s3 + $0x38] sm:$0xff] %v544
  %561 = vst [vmem:[%s3 + $0x40] sm:$0xff] %v545
  %562 = vst [vmem:[%s3 + $0x48] sm:$0xff] %v546
  %563 = vst [vmem:[%s3 + $0x50] sm:$0xff] %v547
  %564 = vst [vmem:[%s3 + $0x58] sm:$0xff] %v548
  %565 = vst [vmem:[%s3 + $0x60] sm:$0xff] %v549
  %566 = vst [vmem:[%s3 + $0x68] sm:$0xff] %v550
  %567 = vst [vmem:[%s3 + $0x70] sm:$0xff] %v551
  %568 = vst [vmem:[%s3 + $0x78] sm:$0xff] %v552
  // Predicated region
  $region14: #{vae_forward.17} parent=0 // pred_check
    _
  $region15: #{vae_forward.17} parent=0 // pred_check_branch
    %570 = sbr.rel (0) target = $region17
  $region16: #{vae_forward.17} parent=0 // pred_region
    _
  $region17: #{vae_forward.17} parent=0 // pred_fallthru
    _
  // Predicated region
  $region18: #{vae_forward.17} parent=0 // pred_check
    _
  $region19: #{vae_forward.17} parent=0 // pred_check_branch
    %572 = sbr.rel (0) target = $region21
  $region20: #{vae_forward.17} parent=0 // pred_region
    _
  $region21: #{vae_forward.17} parent=0 // pred_fallthru
    _

</llo_original>
